<compile_context>
chip_gen: v7x
topology: tpu7x:2x2x1
jax: 0.10.0
libtpu: 0.0.40
codegen_flags: <defaults>
</compile_context>

<pallas_src>
import functools

import jax
import jax.numpy as jnp
from jax import lax
from jax.experimental import pallas as pl
from jax.experimental.pallas import tpu as pltpu

EPS = 1e-5          # nn.GroupNorm default
GROUPS = 8


# ------------------------------ in-kernel helpers -----------------------------

def _gn(h, bt, P, C, gamma, beta, m, mt):
    """Per-sample GroupNorm on a (bt*P, C) f32 tile (rows are sample-major).

    gamma/beta: (1, C).  m: (C, G) group membership matrix, mt: (G, C).
    Group reductions are tiny matmuls so they ride on the MXU (which has slack).
    """
    G = m.shape[1]
    h3 = h.reshape(bt, P, C)
    s = jnp.sum(h3, axis=1)                                       # (bt, C)
    ss = jnp.sum(h3 * h3, axis=1)                                 # (bt, C)
    n = jnp.float32(P * (C // G))
    mean_g = jnp.dot(s, m, preferred_element_type=jnp.float32) / n           # (bt, G)
    var_g = jnp.dot(ss, m, preferred_element_type=jnp.float32) / n - mean_g * mean_g
    inv_g = lax.rsqrt(var_g + EPS)
    mean_c = jnp.dot(mean_g, mt, preferred_element_type=jnp.float32)         # (bt, C)
    inv_c = jnp.dot(inv_g, mt, preferred_element_type=jnp.float32)           # (bt, C)
    out = (h3 - mean_c[:, None, :]) * inv_c[:, None, :] * gamma + beta
    return out.reshape(bt * P, C)


# ---------------------------------- kernel ------------------------------------

def _fused_kernel(p1_ref, w1_ref, a1_ref, w2_ref, a2_ref, w3_ref, a3_ref,
                  w4_ref, a4_ref, m64_ref, m64t_ref, m128_ref, m128t_ref,
                  o_ref, h1p_ref, h2p_ref, h3p_ref,
                  *, H, W, compute_dtype):
    bt = p1_ref.shape[0]
    Ho, Wo = H // 2, W // 2
    C1 = w1_ref.shape[1]            # 64
    C2 = w2_ref.shape[1]            # 128

    # Padding regions of the scratches must read as zero.  Scratch persists
    # across grid steps (and is per-core under "parallel"), so zero every step.
    h1p_ref[...] = jnp.zeros_like(h1p_ref)
    h2p_ref[...] = jnp.zeros_like(h2p_ref)
    h3p_ref[...] = jnp.zeros_like(h3p_ref)

    m64, m64t = m64_ref[...], m64t_ref[...]
    m128, m128t = m128_ref[...], m128t_ref[...]

    def conv_block(x, w_ref, a_ref, m, mt, P):
        # one K-concatenated matmul + bias + ReLU + per-sample GroupNorm
        h = jnp.dot(x.astype(compute_dtype), w_ref[...].astype(compute_dtype),
                    preferred_element_type=jnp.float32)
        h = jnp.maximum(h + a_ref[0:1, :], 0.0)
        return _gn(h, bt, P, w_ref.shape[1], a_ref[1:2, :], a_ref[2:3, :], m, mt)

    # ---- layer 1: stride-1 conv Cin->64 on HxW (pre-im2col'd, parity order) ----
    P1 = H * W
    x1 = p1_ref[...].reshape(bt * P1, p1_ref.shape[2])
    h1 = conv_block(x1, w1_ref, a1_ref, m64, m64t, P1)
    # Scatter into the zero-padded, parity-split scratch (bt*4, Ho+1, Wo+1, C1).
    # Group g = rp*2 + cp where rp/cp is the parity of the *padded* row/col
    # index: parity-0 (even padded index) interiors start at offset 1.
    h1r = h1.reshape(bt * 4, Ho, Wo, C1)
    off = (1, 0)
    for b in range(bt):
        for rp in range(2):
            for cp in range(2):
                g = rp * 2 + cp
                ro, co = off[rp], off[cp]
                h1p_ref[b * 4 + g, ro:ro + Ho, co:co + Wo, :] = h1r[b * 4 + g]

    # ---- layer 2: stride-2 conv 64->128, output Ho x Wo --------------------
    taps = []
    for kh in range(3):
        for kw in range(3):
            g = (kh % 2) * 2 + (kw % 2)
            rs, cs = kh // 2, kw // 2
            per_b = [h1p_ref[b * 4 + g, rs:rs + Ho, cs:cs + Wo, :]
                     .reshape(Ho * Wo, C1) for b in range(bt)]
            taps.append(jnp.concatenate(per_b, axis=0) if bt > 1 else per_b[0])
    x2 = jnp.concatenate(taps, axis=1)                            # (bt*Ho*Wo, 9*C1)
    h2 = conv_block(x2, w2_ref, a2_ref, m128, m128t, Ho * Wo)
    h2r = h2.reshape(bt, Ho, Wo, C2)
    for b in range(bt):
        h2p_ref[b, 1:Ho + 1, 1:Wo + 1, :] = h2r[b]

    # ---- layers 3 & 4: stride-1 convs 128->128 on Ho x Wo ------------------
    def stride1_taps(hp_ref):
        t = []
        for kh in range(3):
            for kw in range(3):
                per_b = [hp_ref[b, kh:kh + Ho, kw:kw + Wo, :]
                         .reshape(Ho * Wo, C2) for b in range(bt)]
                t.append(jnp.concatenate(per_b, axis=0) if bt > 1 else per_b[0])
        return jnp.concatenate(t, axis=1)                         # (bt*Ho*Wo, 9*C2)

    h3 = conv_block(stride1_taps(h2p_ref), w3_ref, a3_ref, m128, m128t, Ho * Wo)
    h3r = h3.reshape(bt, Ho, Wo, C2)
    for b in range(bt):
        h3p_ref[b, 1:Ho + 1, 1:Wo + 1, :] = h3r[b]

    h4 = conv_block(stride1_taps(h3p_ref), w4_ref, a4_ref, m128, m128t, Ho * Wo)

    # ---- AdaptiveAvgPool2d((1,1)) + SqueezeLastTwo --------------------------
    o_ref[0] = jnp.mean(h4.reshape(bt, Ho * Wo, C2), axis=1)      # (bt, 128)


# --------------------------------- wrapper ------------------------------------

def _l1_patches_parity(x_nhwc):
    """Layer-1 3x3/s1 im2col with output pixels ordered by the parity of their
    layer-2-padded row/col index, so the kernel can scatter the layer-1 output
    into a parity-split padded scratch with contiguous writes only."""
    B, H, W, Cin = x_nhwc.shape
    xp = jnp.pad(x_nhwc, ((0, 0), (1, 1), (1, 1), (0, 0)))
    taps = jnp.concatenate(
        [xp[:, kh:kh + H, kw:kw + W, :] for kh in range(3) for kw in range(3)],
        axis=-1)                                                  # (B, H, W, 9*Cin)
    groups = []
    for rsel in (slice(1, None, 2), slice(0, None, 2)):           # padded-row parity 0, 1
        for csel in (slice(1, None, 2), slice(0, None, 2)):       # padded-col parity 0, 1
            groups.append(taps[:, rsel, csel, :])                 # (B, H//2, W//2, 9*Cin)
    g = jnp.stack(groups, axis=1)                                 # (B, 4, H//2, W//2, 9*Cin)
    return g.reshape(B, H * W, 9 * Cin)


def _group_mask(C, G=GROUPS):
    m = (jnp.arange(C)[:, None] // (C // G)) == jnp.arange(G)[None, :]
    return m.astype(jnp.float32)                                  # (C, G)


def _pick_batch_tile(B, cap=4):
    """Largest tile (<= cap, bounds VMEM/vreg pressure) that still leaves >= 2
    grid steps (keeps both v7x TensorCores fed); else largest divisor of B."""
    divs = [d for d in range(cap, 0, -1) if B % d == 0]
    for d in divs:
        if B // d >= 2:
            return d
    return divs[0]


def mnist_cnn_forward(x_nchw, p, *, batch_tile=None, compute_dtype=jnp.float32):
    """Pallas implementation of MNIST_CNN.forward.  Input NCHW, output (B, 128)."""
    B, Cin, H, W = x_nchw.shape
    assert H % 2 == 0 and W % 2 == 0, "spatial dims must be even (stride-2 conv)"
    Ho, Wo = H // 2, W // 2
    bt = batch_tile or _pick_batch_tile(B)
    assert B % bt == 0
    grid = B // bt

    x = jnp.transpose(x_nchw, (0, 2, 3, 1)).astype(jnp.float32)   # NCHW -> NHWC
    p1 = _l1_patches_parity(x)                                    # (B, H*W, 9*Cin)
    K1 = 9 * Cin

    # K-concatenated weights, (kh, kw, cin)-major rows — matches the kernel taps.
    w1 = p["w1"].reshape(K1, 64)
    w2 = p["w2"].reshape(9 * 64, 128)
    w3 = p["w3"].reshape(9 * 128, 128)
    w4 = p["w4"].reshape(9 * 128, 128)
    a1 = jnp.stack([p["b1"], p["g0"], p["bt0"]])                  # (3, 64)  bias/gamma/beta
    a2 = jnp.stack([p["b2"], p["g1"], p["bt1"]])                  # (3, 128)
    a3 = jnp.stack([p["b3"], p["g2"], p["bt2"]])
    a4 = jnp.stack([p["b4"], p["g3"], p["bt3"]])
    m64, m128 = _group_mask(64), _group_mask(128)

    def cspec(shape):
        zeros = (0,) * len(shape)
        return pl.BlockSpec(shape, lambda i: zeros)

    in_specs = [
        pl.BlockSpec((bt, H * W, K1), lambda i: (i, 0, 0)),       # layer-1 patches
        cspec((K1, 64)), cspec((3, 64)),                          # w1, aux1
        cspec((9 * 64, 128)), cspec((3, 128)),                    # w2, aux2
        cspec((9 * 128, 128)), cspec((3, 128)),                   # w3, aux3
        cspec((9 * 128, 128)), cspec((3, 128)),                   # w4, aux4
        cspec((64, GROUPS)), cspec((GROUPS, 64)),                 # GN masks C=64
        cspec((128, GROUPS)), cspec((GROUPS, 128)),               # GN masks C=128
    ]
    out_specs = pl.BlockSpec((1, bt, 128), lambda i: (i, 0, 0))
    scratch_shapes = [
        pltpu.VMEM((bt * 4, Ho + 1, Wo + 1, 64), jnp.float32),    # parity-split padded h1
        pltpu.VMEM((bt, Ho + 2, Wo + 2, 128), jnp.float32),       # padded h2
        pltpu.VMEM((bt, Ho + 2, Wo + 2, 128), jnp.float32),       # padded h3
    ]

    fn = pl.pallas_call(
        functools.partial(_fused_kernel, H=H, W=W, compute_dtype=compute_dtype),
        grid=(grid,),
        in_specs=in_specs,
        out_specs=out_specs,
        out_shape=jax.ShapeDtypeStruct((grid, bt, 128), jnp.float32),
        scratch_shapes=scratch_shapes,
        compiler_params=pltpu.CompilerParams(
            dimension_semantics=("parallel",),
            vmem_limit_bytes=32 * 1024 * 1024),
    )
    out = fn(p1, w1, a1, w2, a2, w3, a3, w4, a4,
             m64, m64.T, m128, m128.T)
    return out.reshape(B, 128)


# ----------------------------- pure-JAX reference -----------------------------

def _ref_forward(x_nchw, p):
    x = jnp.transpose(x_nchw, (0, 2, 3, 1)).astype(jnp.float32)

    def conv(x, w, b, stride):
        y = lax.conv_general_dilated(x, w, (stride, stride), [(1, 1), (1, 1)],
                                     dimension_numbers=("NHWC", "HWIO", "NHWC"))
        return y + b

    def gn(x, gamma, beta, G):
        B, H, W, C = x.shape
        xg = x.reshape(B, H, W, G, C // G)
        mean = xg.mean(axis=(1, 2, 4), keepdims=True)
        var = ((xg - mean) ** 2).mean(axis=(1, 2, 4), keepdims=True)
        xg = (xg - mean) / jnp.sqrt(var + EPS)
        return xg.reshape(B, H, W, C) * gamma + beta

    x = gn(jax.nn.relu(conv(x, p["w1"], p["b1"], 1)), p["g0"], p["bt0"], 8)
    x = gn(jax.nn.relu(conv(x, p["w2"], p["b2"], 2)), p["g1"], p["bt1"], 8)
    x = gn(jax.nn.relu(conv(x, p["w3"], p["b3"], 1)), p["g2"], p["bt2"], 8)
    x = gn(jax.nn.relu(conv(x, p["w4"], p["b4"], 1)), p["g3"], p["bt3"], 8)
    return x.mean(axis=(1, 2))                                    # (B, 128)


# ---------------------------------- params ------------------------------------

def init_params(key, cin):
    ks = jax.random.split(key, 16)

    def rnd(k, shape, scale=0.1):
        return (scale * jax.random.normal(k, shape)).astype(jnp.float32)

    p = {}
    p["w1"], p["b1"] = rnd(ks[0], (3, 3, cin, 64)), rnd(ks[1], (64,))
    p["g0"], p["bt0"] = 1.0 + rnd(ks[2], (64,)), rnd(ks[3], (64,))
    p["w2"], p["b2"] = rnd(ks[4], (3, 3, 64, 128)), rnd(ks[5], (128,))
    p["g1"], p["bt1"] = 1.0 + rnd(ks[6], (128,)), rnd(ks[7], (128,))
    p["w3"], p["b3"] = rnd(ks[8], (3, 3, 128, 128)), rnd(ks[9], (128,))
    p["g2"], p["bt2"] = 1.0 + rnd(ks[10], (128,)), rnd(ks[11], (128,))
    p["w4"], p["b4"] = rnd(ks[12], (3, 3, 128, 128)), rnd(ks[13], (128,))
    p["g3"], p["bt3"] = 1.0 + rnd(ks[14], (128,)), rnd(ks[15], (128,))
    return p


# ----------------------------------- main --------------------------------------

if __name__ == "__main__":
    B, CIN, S = 4, 3, 16
    key = jax.random.PRNGKey(0)
    kx, kp = jax.random.split(key)
    x = jax.random.normal(kx, (B, CIN, S, S), jnp.float32)        # NCHW like PyTorch
    params = init_params(kp, CIN)

    out = jax.jit(mnist_cnn_forward)(x, params)
    out = jax.block_until_ready(out)

    ref = _ref_forward(x, params)
    assert out.shape == (B, 128), out.shape
    err = float(jnp.max(jnp.abs(out - ref)))
    assert jnp.allclose(out, ref, rtol=3e-3, atol=3e-3), err
    print("KERNEL_OK")
</pallas_src>

<mosaic_0001>
module attributes {stable_mosaic.version = 11 : i64} {
  func.func @_fused_kernel(%arg0: i32, %arg1: memref<2x256x27xf32, #tpu.memory_space<vmem>>, %arg2: memref<27x64xf32, #tpu.memory_space<vmem>>, %arg3: memref<3x64xf32, #tpu.memory_space<vmem>>, %arg4: memref<576x128xf32, #tpu.memory_space<vmem>>, %arg5: memref<3x128xf32, #tpu.memory_space<vmem>>, %arg6: memref<1152x128xf32, #tpu.memory_space<vmem>>, %arg7: memref<3x128xf32, #tpu.memory_space<vmem>>, %arg8: memref<1152x128xf32, #tpu.memory_space<vmem>>, %arg9: memref<3x128xf32, #tpu.memory_space<vmem>>, %arg10: memref<64x8xf32, #tpu.memory_space<vmem>>, %arg11: memref<8x64xf32, #tpu.memory_space<vmem>>, %arg12: memref<128x8xf32, #tpu.memory_space<vmem>>, %arg13: memref<8x128xf32, #tpu.memory_space<vmem>>, %arg14: memref<1x2x128xf32, #tpu.memory_space<vmem>>, %arg15: memref<8x9x9x64xf32, #tpu.memory_space<vmem>>, %arg16: memref<2x10x10x128xf32, #tpu.memory_space<vmem>>, %arg17: memref<2x10x10x128xf32, #tpu.memory_space<vmem>>) attributes {dimension_semantics = [#tpu.dimension_semantics<parallel>], iteration_bounds = array<i64: 2>, scalar_prefetch = 0 : i64, scratch_operands = 3 : i64, tpu.core_type = #tpu.core_type<tc>, window_params = [{transform_indices = @transform_0, window_bounds = array<i64: 2, 256, 27>}, {pipeline_mode = #tpu.pipeline_mode<synchronous>, transform_indices = @transform_1, window_bounds = array<i64: 27, 64>}, {pipeline_mode = #tpu.pipeline_mode<synchronous>, transform_indices = @transform_2, window_bounds = array<i64: 3, 64>}, {pipeline_mode = #tpu.pipeline_mode<synchronous>, transform_indices = @transform_3, window_bounds = array<i64: 576, 128>}, {pipeline_mode = #tpu.pipeline_mode<synchronous>, transform_indices = @transform_4, window_bounds = array<i64: 3, 128>}, {pipeline_mode = #tpu.pipeline_mode<synchronous>, transform_indices = @transform_5, window_bounds = array<i64: 1152, 128>}, {pipeline_mode = #tpu.pipeline_mode<synchronous>, transform_indices = @transform_6, window_bounds = array<i64: 3, 128>}, {pipeline_mode = #tpu.pipeline_mode<synchronous>, transform_indices = @transform_7, window_bounds = array<i64: 1152, 128>}, {pipeline_mode = #tpu.pipeline_mode<synchronous>, transform_indices = @transform_8, window_bounds = array<i64: 3, 128>}, {pipeline_mode = #tpu.pipeline_mode<synchronous>, transform_indices = @transform_9, window_bounds = array<i64: 64, 8>}, {pipeline_mode = #tpu.pipeline_mode<synchronous>, transform_indices = @transform_10, window_bounds = array<i64: 8, 64>}, {pipeline_mode = #tpu.pipeline_mode<synchronous>, transform_indices = @transform_11, window_bounds = array<i64: 128, 8>}, {pipeline_mode = #tpu.pipeline_mode<synchronous>, transform_indices = @transform_12, window_bounds = array<i64: 8, 128>}, {transform_indices = @transform_13, window_bounds = array<i64: 1, 2, 128>}]} {
    %cst = arith.constant 0.000000e+00 : f32
    %0 = vector.broadcast %cst : f32 to vector<8x9x9x64xf32>
    %c0 = arith.constant 0 : index
    %c0_0 = arith.constant 0 : index
    %c0_1 = arith.constant 0 : index
    %c0_2 = arith.constant 0 : index
    %1 = vector.load %arg15[%c0, %c0_0, %c0_1, %c0_2] : memref<8x9x9x64xf32, #tpu.memory_space<vmem>>, vector<8x9x9x64xf32>
    tpu.vector_store %arg15[%c0, %c0_0, %c0_1, %c0_2], %0 {strides = array<i32>} : memref<8x9x9x64xf32, #tpu.memory_space<vmem>>, vector<8x9x9x64xf32>,
    %cst_3 = arith.constant 0.000000e+00 : f32
    %2 = vector.broadcast %cst_3 : f32 to vector<2x10x10x128xf32>
    %c0_4 = arith.constant 0 : index
    %c0_5 = arith.constant 0 : index
    %c0_6 = arith.constant 0 : index
    %c0_7 = arith.constant 0 : index
    %3 = vector.load %arg16[%c0_4, %c0_5, %c0_6, %c0_7] : memref<2x10x10x128xf32, #tpu.memory_space<vmem>>, vector<2x10x10x128xf32>
    tpu.vector_store %arg16[%c0_4, %c0_5, %c0_6, %c0_7], %2 {strides = array<i32>} : memref<2x10x10x128xf32, #tpu.memory_space<vmem>>, vector<2x10x10x128xf32>,
    %cst_8 = arith.constant 0.000000e+00 : f32
    %4 = vector.broadcast %cst_8 : f32 to vector<2x10x10x128xf32>
    %c0_9 = arith.constant 0 : index
    %c0_10 = arith.constant 0 : index
    %c0_11 = arith.constant 0 : index
    %c0_12 = arith.constant 0 : index
    %5 = vector.load %arg17[%c0_9, %c0_10, %c0_11, %c0_12] : memref<2x10x10x128xf32, #tpu.memory_space<vmem>>, vector<2x10x10x128xf32>
    tpu.vector_store %arg17[%c0_9, %c0_10, %c0_11, %c0_12], %4 {strides = array<i32>} : memref<2x10x10x128xf32, #tpu.memory_space<vmem>>, vector<2x10x10x128xf32>,
    %c0_13 = arith.constant 0 : index
    %c0_14 = arith.constant 0 : index
    %6 = vector.load %arg10[%c0_13, %c0_14] : memref<64x8xf32, #tpu.memory_space<vmem>>, vector<64x8xf32>
    %c0_15 = arith.constant 0 : index
    %c0_16 = arith.constant 0 : index
    %7 = vector.load %arg11[%c0_15, %c0_16] : memref<8x64xf32, #tpu.memory_space<vmem>>, vector<8x64xf32>
    %c0_17 = arith.constant 0 : index
    %c0_18 = arith.constant 0 : index
    %8 = vector.load %arg12[%c0_17, %c0_18] : memref<128x8xf32, #tpu.memory_space<vmem>>, vector<128x8xf32>
    %c0_19 = arith.constant 0 : index
    %c0_20 = arith.constant 0 : index
    %9 = vector.load %arg13[%c0_19, %c0_20] : memref<8x128xf32, #tpu.memory_space<vmem>>, vector<8x128xf32>
    %c0_21 = arith.constant 0 : index
    %c0_22 = arith.constant 0 : index
    %c0_23 = arith.constant 0 : index
    %10 = vector.load %arg1[%c0_21, %c0_22, %c0_23] : memref<2x256x27xf32, #tpu.memory_space<vmem>>, vector<2x256x27xf32>
    %11 = vector.shape_cast %10 : vector<2x256x27xf32> to vector<512x27xf32>
    %c0_24 = arith.constant 0 : index
    %c0_25 = arith.constant 0 : index
    %12 = vector.load %arg2[%c0_24, %c0_25] : memref<27x64xf32, #tpu.memory_space<vmem>>, vector<27x64xf32>
    %cst_26 = arith.constant dense<0.000000e+00> : vector<512x64xf32>
    %13 = tpu.matmul %11, %12, %cst_26 {dimension_numbers = #tpu.dot_dimension_numbers<[1], [0], [0], [1], [0, 0, 1, 1], [], []>} : vector<512x27xf32>, vector<27x64xf32>, vector<512x64xf32> -> vector<512x64xf32>
    %c0_27 = arith.constant 0 : index
    %c0_28 = arith.constant 0 : index
    %14 = vector.load %arg3[%c0_27, %c0_28] : memref<3x64xf32, #tpu.memory_space<vmem>>, vector<1x64xf32>
    %15 = vector.broadcast %14 : vector<1x64xf32> to vector<512x64xf32>
    %16 = arith.addf %13, %15 : vector<512x64xf32>
    %cst_29 = arith.constant 0.000000e+00 : f32
    %17 = vector.broadcast %cst_29 : f32 to vector<512x64xf32>
    %18 = arith.maximumf %16, %17 : vector<512x64xf32>
    %c1 = arith.constant 1 : index
    %c0_30 = arith.constant 0 : index
    %19 = vector.load %arg3[%c1, %c0_30] : memref<3x64xf32, #tpu.memory_space<vmem>>, vector<1x64xf32>
    %c2 = arith.constant 2 : index
    %c0_31 = arith.constant 0 : index
    %20 = vector.load %arg3[%c2, %c0_31] : memref<3x64xf32, #tpu.memory_space<vmem>>, vector<1x64xf32>
    %21 = vector.shape_cast %18 : vector<512x64xf32> to vector<2x256x64xf32>
    %cst_32 = arith.constant dense<0.000000e+00> : vector<2x64xf32>
    %22 = vector.multi_reduction <add>, %21, %cst_32 [1] : vector<2x256x64xf32> to vector<2x64xf32>
    %23 = arith.mulf %21, %21 : vector<2x256x64xf32>
    %cst_33 = arith.constant dense<0.000000e+00> : vector<2x64xf32>
    %24 = vector.multi_reduction <add>, %23, %cst_33 [1] : vector<2x256x64xf32> to vector<2x64xf32>
    %cst_34 = arith.constant dense<0.000000e+00> : vector<2x8xf32>
    %25 = tpu.matmul %22, %6, %cst_34 {dimension_numbers = #tpu.dot_dimension_numbers<[1], [0], [0], [1], [0, 0, 1, 1], [], []>} : vector<2x64xf32>, vector<64x8xf32>, vector<2x8xf32> -> vector<2x8xf32>
    %cst_35 = arith.constant 2.048000e+03 : f32
    %26 = vector.broadcast %cst_35 : f32 to vector<2x8xf32>
    %27 = arith.divf %25, %26 : vector<2x8xf32>
    %cst_36 = arith.constant dense<0.000000e+00> : vector<2x8xf32>
    %28 = tpu.matmul %24, %6, %cst_36 {dimension_numbers = #tpu.dot_dimension_numbers<[1], [0], [0], [1], [0, 0, 1, 1], [], []>} : vector<2x64xf32>, vector<64x8xf32>, vector<2x8xf32> -> vector<2x8xf32>
    %cst_37 = arith.constant 2.048000e+03 : f32
    %29 = vector.broadcast %cst_37 : f32 to vector<2x8xf32>
    %30 = arith.divf %28, %29 : vector<2x8xf32>
    %31 = arith.mulf %27, %27 : vector<2x8xf32>
    %32 = arith.subf %30, %31 : vector<2x8xf32>
    %cst_38 = arith.constant 9.99999974E-6 : f32
    %33 = vector.broadcast %cst_38 : f32 to vector<2x8xf32>
    %34 = arith.addf %32, %33 : vector<2x8xf32>
    %35 = math.rsqrt %34 : vector<2x8xf32>
    %cst_39 = arith.constant dense<0.000000e+00> : vector<2x64xf32>
    %36 = tpu.matmul %27, %7, %cst_39 {dimension_numbers = #tpu.dot_dimension_numbers<[1], [0], [0], [1], [0, 0, 1, 1], [], []>} : vector<2x8xf32>, vector<8x64xf32>, vector<2x64xf32> -> vector<2x64xf32>
    %cst_40 = arith.constant dense<0.000000e+00> : vector<2x64xf32>
    %37 = tpu.matmul %35, %7, %cst_40 {dimension_numbers = #tpu.dot_dimension_numbers<[1], [0], [0], [1], [0, 0, 1, 1], [], []>} : vector<2x8xf32>, vector<8x64xf32>, vector<2x64xf32> -> vector<2x64xf32>
    %38 = vector.shape_cast %36 : vector<2x64xf32> to vector<2x1x64xf32>
    %39 = vector.broadcast %38 : vector<2x1x64xf32> to vector<2x256x64xf32>
    %40 = arith.subf %21, %39 : vector<2x256x64xf32>
    %41 = vector.shape_cast %37 : vector<2x64xf32> to vector<2x1x64xf32>
    %42 = vector.broadcast %41 : vector<2x1x64xf32> to vector<2x256x64xf32>
    %43 = arith.mulf %40, %42 : vector<2x256x64xf32>
    %44 = vector.shape_cast %19 : vector<1x64xf32> to vector<1x1x64xf32>
    %45 = vector.broadcast %44 : vector<1x1x64xf32> to vector<2x256x64xf32>
    %46 = arith.mulf %43, %45 : vector<2x256x64xf32>
    %47 = vector.shape_cast %20 : vector<1x64xf32> to vector<1x1x64xf32>
    %48 = vector.broadcast %47 : vector<1x1x64xf32> to vector<2x256x64xf32>
    %49 = arith.addf %46, %48 : vector<2x256x64xf32>
    %50 = vector.shape_cast %49 : vector<2x256x64xf32> to vector<512x64xf32>
    %51 = vector.shape_cast %50 : vector<512x64xf32> to vector<8x8x8x64xf32>
    %52 = vector.extract_strided_slice %51 {offsets = [0, 0, 0, 0], sizes = [1, 8, 8, 64], strides = [1, 1, 1, 1]} : vector<8x8x8x64xf32> to vector<1x8x8x64xf32>
    %53 = vector.shape_cast %52 : vector<1x8x8x64xf32> to vector<8x8x64xf32>
    %c0_41 = arith.constant 0 : index
    %c1_42 = arith.constant 1 : index
    %c1_43 = arith.constant 1 : index
    %c0_44 = arith.constant 0 : index
    %54 = vector.load %arg15[%c0_41, %c1_42, %c1_43, %c0_44] : memref<8x9x9x64xf32, #tpu.memory_space<vmem>>, vector<1x8x8x64xf32>
    %55 = vector.shape_cast %54 : vector<1x8x8x64xf32> to vector<8x8x64xf32>
    %56 = vector.shape_cast %53 : vector<8x8x64xf32> to vector<1x8x8x64xf32>
    tpu.vector_store %arg15[%c0_41, %c1_42, %c1_43, %c0_44], %56 {strides = array<i32>} : memref<8x9x9x64xf32, #tpu.memory_space<vmem>>, vector<1x8x8x64xf32>,
    %57 = vector.extract_strided_slice %51 {offsets = [1, 0, 0, 0], sizes = [1, 8, 8, 64], strides = [1, 1, 1, 1]} : vector<8x8x8x64xf32> to vector<1x8x8x64xf32>
    %58 = vector.shape_cast %57 : vector<1x8x8x64xf32> to vector<8x8x64xf32>
    %c1_45 = arith.constant 1 : index
    %c1_46 = arith.constant 1 : index
    %c0_47 = arith.constant 0 : index
    %c0_48 = arith.constant 0 : index
    %59 = vector.load %arg15[%c1_45, %c1_46, %c0_47, %c0_48] : memref<8x9x9x64xf32, #tpu.memory_space<vmem>>, vector<1x8x8x64xf32>
    %60 = vector.shape_cast %59 : vector<1x8x8x64xf32> to vector<8x8x64xf32>
    %61 = vector.shape_cast %58 : vector<8x8x64xf32> to vector<1x8x8x64xf32>
    tpu.vector_store %arg15[%c1_45, %c1_46, %c0_47, %c0_48], %61 {strides = array<i32>} : memref<8x9x9x64xf32, #tpu.memory_space<vmem>>, vector<1x8x8x64xf32>,
    %62 = vector.extract_strided_slice %51 {offsets = [2, 0, 0, 0], sizes = [1, 8, 8, 64], strides = [1, 1, 1, 1]} : vector<8x8x8x64xf32> to vector<1x8x8x64xf32>
    %63 = vector.shape_cast %62 : vector<1x8x8x64xf32> to vector<8x8x64xf32>
    %c2_49 = arith.constant 2 : index
    %c0_50 = arith.constant 0 : index
    %c1_51 = arith.constant 1 : index
    %c0_52 = arith.constant 0 : index
    %64 = vector.load %arg15[%c2_49, %c0_50, %c1_51, %c0_52] : memref<8x9x9x64xf32, #tpu.memory_space<vmem>>, vector<1x8x8x64xf32>
    %65 = vector.shape_cast %64 : vector<1x8x8x64xf32> to vector<8x8x64xf32>
    %66 = vector.shape_cast %63 : vector<8x8x64xf32> to vector<1x8x8x64xf32>
    tpu.vector_store %arg15[%c2_49, %c0_50, %c1_51, %c0_52], %66 {strides = array<i32>} : memref<8x9x9x64xf32, #tpu.memory_space<vmem>>, vector<1x8x8x64xf32>,
    %67 = vector.extract_strided_slice %51 {offsets = [3, 0, 0, 0], sizes = [1, 8, 8, 64], strides = [1, 1, 1, 1]} : vector<8x8x8x64xf32> to vector<1x8x8x64xf32>
    %68 = vector.shape_cast %67 : vector<1x8x8x64xf32> to vector<8x8x64xf32>
    %c3 = arith.constant 3 : index
    %c0_53 = arith.constant 0 : index
    %c0_54 = arith.constant 0 : index
    %c0_55 = arith.constant 0 : index
    %69 = vector.load %arg15[%c3, %c0_53, %c0_54, %c0_55] : memref<8x9x9x64xf32, #tpu.memory_space<vmem>>, vector<1x8x8x64xf32>
    %70 = vector.shape_cast %69 : vector<1x8x8x64xf32> to vector<8x8x64xf32>
    %71 = vector.shape_cast %68 : vector<8x8x64xf32> to vector<1x8x8x64xf32>
    tpu.vector_store %arg15[%c3, %c0_53, %c0_54, %c0_55], %71 {strides = array<i32>} : memref<8x9x9x64xf32, #tpu.memory_space<vmem>>, vector<1x8x8x64xf32>,
    %72 = vector.extract_strided_slice %51 {offsets = [4, 0, 0, 0], sizes = [1, 8, 8, 64], strides = [1, 1, 1, 1]} : vector<8x8x8x64xf32> to vector<1x8x8x64xf32>
    %73 = vector.shape_cast %72 : vector<1x8x8x64xf32> to vector<8x8x64xf32>
    %c4 = arith.constant 4 : index
    %c1_56 = arith.constant 1 : index
    %c1_57 = arith.constant 1 : index
    %c0_58 = arith.constant 0 : index
    %74 = vector.load %arg15[%c4, %c1_56, %c1_57, %c0_58] : memref<8x9x9x64xf32, #tpu.memory_space<vmem>>, vector<1x8x8x64xf32>
    %75 = vector.shape_cast %74 : vector<1x8x8x64xf32> to vector<8x8x64xf32>
    %76 = vector.shape_cast %73 : vector<8x8x64xf32> to vector<1x8x8x64xf32>
    tpu.vector_store %arg15[%c4, %c1_56, %c1_57, %c0_58], %76 {strides = array<i32>} : memref<8x9x9x64xf32, #tpu.memory_space<vmem>>, vector<1x8x8x64xf32>,
    %77 = vector.extract_strided_slice %51 {offsets = [5, 0, 0, 0], sizes = [1, 8, 8, 64], strides = [1, 1, 1, 1]} : vector<8x8x8x64xf32> to vector<1x8x8x64xf32>
    %78 = vector.shape_cast %77 : vector<1x8x8x64xf32> to vector<8x8x64xf32>
    %c5 = arith.constant 5 : index
    %c1_59 = arith.constant 1 : index
    %c0_60 = arith.constant 0 : index
    %c0_61 = arith.constant 0 : index
    %79 = vector.load %arg15[%c5, %c1_59, %c0_60, %c0_61] : memref<8x9x9x64xf32, #tpu.memory_space<vmem>>, vector<1x8x8x64xf32>
    %80 = vector.shape_cast %79 : vector<1x8x8x64xf32> to vector<8x8x64xf32>
    %81 = vector.shape_cast %78 : vector<8x8x64xf32> to vector<1x8x8x64xf32>
    tpu.vector_store %arg15[%c5, %c1_59, %c0_60, %c0_61], %81 {strides = array<i32>} : memref<8x9x9x64xf32, #tpu.memory_space<vmem>>, vector<1x8x8x64xf32>,
    %82 = vector.extract_strided_slice %51 {offsets = [6, 0, 0, 0], sizes = [1, 8, 8, 64], strides = [1, 1, 1, 1]} : vector<8x8x8x64xf32> to vector<1x8x8x64xf32>
    %83 = vector.shape_cast %82 : vector<1x8x8x64xf32> to vector<8x8x64xf32>
    %c6 = arith.constant 6 : index
    %c0_62 = arith.constant 0 : index
    %c1_63 = arith.constant 1 : index
    %c0_64 = arith.constant 0 : index
    %84 = vector.load %arg15[%c6, %c0_62, %c1_63, %c0_64] : memref<8x9x9x64xf32, #tpu.memory_space<vmem>>, vector<1x8x8x64xf32>
    %85 = vector.shape_cast %84 : vector<1x8x8x64xf32> to vector<8x8x64xf32>
    %86 = vector.shape_cast %83 : vector<8x8x64xf32> to vector<1x8x8x64xf32>
    tpu.vector_store %arg15[%c6, %c0_62, %c1_63, %c0_64], %86 {strides = array<i32>} : memref<8x9x9x64xf32, #tpu.memory_space<vmem>>, vector<1x8x8x64xf32>,
    %87 = vector.extract_strided_slice %51 {offsets = [7, 0, 0, 0], sizes = [1, 8, 8, 64], strides = [1, 1, 1, 1]} : vector<8x8x8x64xf32> to vector<1x8x8x64xf32>
    %88 = vector.shape_cast %87 : vector<1x8x8x64xf32> to vector<8x8x64xf32>
    %c7 = arith.constant 7 : index
    %c0_65 = arith.constant 0 : index
    %c0_66 = arith.constant 0 : index
    %c0_67 = arith.constant 0 : index
    %89 = vector.load %arg15[%c7, %c0_65, %c0_66, %c0_67] : memref<8x9x9x64xf32, #tpu.memory_space<vmem>>, vector<1x8x8x64xf32>
    %90 = vector.shape_cast %89 : vector<1x8x8x64xf32> to vector<8x8x64xf32>
    %91 = vector.shape_cast %88 : vector<8x8x64xf32> to vector<1x8x8x64xf32>
    tpu.vector_store %arg15[%c7, %c0_65, %c0_66, %c0_67], %91 {strides = array<i32>} : memref<8x9x9x64xf32, #tpu.memory_space<vmem>>, vector<1x8x8x64xf32>,
    %c0_68 = arith.constant 0 : index
    %c0_69 = arith.constant 0 : index
    %c0_70 = arith.constant 0 : index
    %c0_71 = arith.constant 0 : index
    %92 = vector.load %arg15[%c0_68, %c0_69, %c0_70, %c0_71] : memref<8x9x9x64xf32, #tpu.memory_space<vmem>>, vector<1x8x8x64xf32>
    %93 = vector.shape_cast %92 : vector<1x8x8x64xf32> to vector<8x8x64xf32>
    %94 = vector.shape_cast %93 : vector<8x8x64xf32> to vector<64x64xf32>
    %c4_72 = arith.constant 4 : index
    %c0_73 = arith.constant 0 : index
    %c0_74 = arith.constant 0 : index
    %c0_75 = arith.constant 0 : index
    %95 = vector.load %arg15[%c4_72, %c0_73, %c0_74, %c0_75] : memref<8x9x9x64xf32, #tpu.memory_space<vmem>>, vector<1x8x8x64xf32>
    %96 = vector.shape_cast %95 : vector<1x8x8x64xf32> to vector<8x8x64xf32>
    %97 = vector.shape_cast %96 : vector<8x8x64xf32> to vector<64x64xf32>
    %98 = tpu.concatenate %94, %97 in 0 : vector<64x64xf32>, vector<64x64xf32> -> vector<128x64xf32>
    %c1_76 = arith.constant 1 : index
    %c0_77 = arith.constant 0 : index
    %c0_78 = arith.constant 0 : index
    %c0_79 = arith.constant 0 : index
    %99 = vector.load %arg15[%c1_76, %c0_77, %c0_78, %c0_79] : memref<8x9x9x64xf32, #tpu.memory_space<vmem>>, vector<1x8x8x64xf32>
    %100 = vector.shape_cast %99 : vector<1x8x8x64xf32> to vector<8x8x64xf32>
    %101 = vector.shape_cast %100 : vector<8x8x64xf32> to vector<64x64xf32>
    %c5_80 = arith.constant 5 : index
    %c0_81 = arith.constant 0 : index
    %c0_82 = arith.constant 0 : index
    %c0_83 = arith.constant 0 : index
    %102 = vector.load %arg15[%c5_80, %c0_81, %c0_82, %c0_83] : memref<8x9x9x64xf32, #tpu.memory_space<vmem>>, vector<1x8x8x64xf32>
    %103 = vector.shape_cast %102 : vector<1x8x8x64xf32> to vector<8x8x64xf32>
    %104 = vector.shape_cast %103 : vector<8x8x64xf32> to vector<64x64xf32>
    %105 = tpu.concatenate %101, %104 in 0 : vector<64x64xf32>, vector<64x64xf32> -> vector<128x64xf32>
    %c0_84 = arith.constant 0 : index
    %c0_85 = arith.constant 0 : index
    %c1_86 = arith.constant 1 : index
    %c0_87 = arith.constant 0 : index
    %106 = vector.load %arg15[%c0_84, %c0_85, %c1_86, %c0_87] : memref<8x9x9x64xf32, #tpu.memory_space<vmem>>, vector<1x8x8x64xf32>
    %107 = vector.shape_cast %106 : vector<1x8x8x64xf32> to vector<8x8x64xf32>
    %108 = vector.shape_cast %107 : vector<8x8x64xf32> to vector<64x64xf32>
    %c4_88 = arith.constant 4 : index
    %c0_89 = arith.constant 0 : index
    %c1_90 = arith.constant 1 : index
    %c0_91 = arith.constant 0 : index
    %109 = vector.load %arg15[%c4_88, %c0_89, %c1_90, %c0_91] : memref<8x9x9x64xf32, #tpu.memory_space<vmem>>, vector<1x8x8x64xf32>
    %110 = vector.shape_cast %109 : vector<1x8x8x64xf32> to vector<8x8x64xf32>
    %111 = vector.shape_cast %110 : vector<8x8x64xf32> to vector<64x64xf32>
    %112 = tpu.concatenate %108, %111 in 0 : vector<64x64xf32>, vector<64x64xf32> -> vector<128x64xf32>
    %c2_92 = arith.constant 2 : index
    %c0_93 = arith.constant 0 : index
    %c0_94 = arith.constant 0 : index
    %c0_95 = arith.constant 0 : index
    %113 = vector.load %arg15[%c2_92, %c0_93, %c0_94, %c0_95] : memref<8x9x9x64xf32, #tpu.memory_space<vmem>>, vector<1x8x8x64xf32>
    %114 = vector.shape_cast %113 : vector<1x8x8x64xf32> to vector<8x8x64xf32>
    %115 = vector.shape_cast %114 : vector<8x8x64xf32> to vector<64x64xf32>
    %c6_96 = arith.constant 6 : index
    %c0_97 = arith.constant 0 : index
    %c0_98 = arith.constant 0 : index
    %c0_99 = arith.constant 0 : index
    %116 = vector.load %arg15[%c6_96, %c0_97, %c0_98, %c0_99] : memref<8x9x9x64xf32, #tpu.memory_space<vmem>>, vector<1x8x8x64xf32>
    %117 = vector.shape_cast %116 : vector<1x8x8x64xf32> to vector<8x8x64xf32>
    %118 = vector.shape_cast %117 : vector<8x8x64xf32> to vector<64x64xf32>
    %119 = tpu.concatenate %115, %118 in 0 : vector<64x64xf32>, vector<64x64xf32> -> vector<128x64xf32>
    %c3_100 = arith.constant 3 : index
    %c0_101 = arith.constant 0 : index
    %c0_102 = arith.constant 0 : index
    %c0_103 = arith.constant 0 : index
    %120 = vector.load %arg15[%c3_100, %c0_101, %c0_102, %c0_103] : memref<8x9x9x64xf32, #tpu.memory_space<vmem>>, vector<1x8x8x64xf32>
    %121 = vector.shape_cast %120 : vector<1x8x8x64xf32> to vector<8x8x64xf32>
    %122 = vector.shape_cast %121 : vector<8x8x64xf32> to vector<64x64xf32>
    %c7_104 = arith.constant 7 : index
    %c0_105 = arith.constant 0 : index
    %c0_106 = arith.constant 0 : index
    %c0_107 = arith.constant 0 : index
    %123 = vector.load %arg15[%c7_104, %c0_105, %c0_106, %c0_107] : memref<8x9x9x64xf32, #tpu.memory_space<vmem>>, vector<1x8x8x64xf32>
    %124 = vector.shape_cast %123 : vector<1x8x8x64xf32> to vector<8x8x64xf32>
    %125 = vector.shape_cast %124 : vector<8x8x64xf32> to vector<64x64xf32>
    %126 = tpu.concatenate %122, %125 in 0 : vector<64x64xf32>, vector<64x64xf32> -> vector<128x64xf32>
    %c2_108 = arith.constant 2 : index
    %c0_109 = arith.constant 0 : index
    %c1_110 = arith.constant 1 : index
    %c0_111 = arith.constant 0 : index
    %127 = vector.load %arg15[%c2_108, %c0_109, %c1_110, %c0_111] : memref<8x9x9x64xf32, #tpu.memory_space<vmem>>, vector<1x8x8x64xf32>
    %128 = vector.shape_cast %127 : vector<1x8x8x64xf32> to vector<8x8x64xf32>
    %129 = vector.shape_cast %128 : vector<8x8x64xf32> to vector<64x64xf32>
    %c6_112 = arith.constant 6 : index
    %c0_113 = arith.constant 0 : index
    %c1_114 = arith.constant 1 : index
    %c0_115 = arith.constant 0 : index
    %130 = vector.load %arg15[%c6_112, %c0_113, %c1_114, %c0_115] : memref<8x9x9x64xf32, #tpu.memory_space<vmem>>, vector<1x8x8x64xf32>
    %131 = vector.shape_cast %130 : vector<1x8x8x64xf32> to vector<8x8x64xf32>
    %132 = vector.shape_cast %131 : vector<8x8x64xf32> to vector<64x64xf32>
    %133 = tpu.concatenate %129, %132 in 0 : vector<64x64xf32>, vector<64x64xf32> -> vector<128x64xf32>
    %c0_116 = arith.constant 0 : index
    %c1_117 = arith.constant 1 : index
    %c0_118 = arith.constant 0 : index
    %c0_119 = arith.constant 0 : index
    %134 = vector.load %arg15[%c0_116, %c1_117, %c0_118, %c0_119] : memref<8x9x9x64xf32, #tpu.memory_space<vmem>>, vector<1x8x8x64xf32>
    %135 = vector.shape_cast %134 : vector<1x8x8x64xf32> to vector<8x8x64xf32>
    %136 = vector.shape_cast %135 : vector<8x8x64xf32> to vector<64x64xf32>
    %c4_120 = arith.constant 4 : index
    %c1_121 = arith.constant 1 : index
    %c0_122 = arith.constant 0 : index
    %c0_123 = arith.constant 0 : index
    %137 = vector.load %arg15[%c4_120, %c1_121, %c0_122, %c0_123] : memref<8x9x9x64xf32, #tpu.memory_space<vmem>>, vector<1x8x8x64xf32>
    %138 = vector.shape_cast %137 : vector<1x8x8x64xf32> to vector<8x8x64xf32>
    %139 = vector.shape_cast %138 : vector<8x8x64xf32> to vector<64x64xf32>
    %140 = tpu.concatenate %136, %139 in 0 : vector<64x64xf32>, vector<64x64xf32> -> vector<128x64xf32>
    %c1_124 = arith.constant 1 : index
    %c1_125 = arith.constant 1 : index
    %c0_126 = arith.constant 0 : index
    %c0_127 = arith.constant 0 : index
    %141 = vector.load %arg15[%c1_124, %c1_125, %c0_126, %c0_127] : memref<8x9x9x64xf32, #tpu.memory_space<vmem>>, vector<1x8x8x64xf32>
    %142 = vector.shape_cast %141 : vector<1x8x8x64xf32> to vector<8x8x64xf32>
    %143 = vector.shape_cast %142 : vector<8x8x64xf32> to vector<64x64xf32>
    %c5_128 = arith.constant 5 : index
    %c1_129 = arith.constant 1 : index
    %c0_130 = arith.constant 0 : index
    %c0_131 = arith.constant 0 : index
    %144 = vector.load %arg15[%c5_128, %c1_129, %c0_130, %c0_131] : memref<8x9x9x64xf32, #tpu.memory_space<vmem>>, vector<1x8x8x64xf32>
    %145 = vector.shape_cast %144 : vector<1x8x8x64xf32> to vector<8x8x64xf32>
    %146 = vector.shape_cast %145 : vector<8x8x64xf32> to vector<64x64xf32>
    %147 = tpu.concatenate %143, %146 in 0 : vector<64x64xf32>, vector<64x64xf32> -> vector<128x64xf32>
    %c0_132 = arith.constant 0 : index
    %c1_133 = arith.constant 1 : index
    %c1_134 = arith.constant 1 : index
    %c0_135 = arith.constant 0 : index
    %148 = vector.load %arg15[%c0_132, %c1_133, %c1_134, %c0_135] : memref<8x9x9x64xf32, #tpu.memory_space<vmem>>, vector<1x8x8x64xf32>
    %149 = vector.shape_cast %148 : vector<1x8x8x64xf32> to vector<8x8x64xf32>
    %150 = vector.shape_cast %149 : vector<8x8x64xf32> to vector<64x64xf32>
    %c4_136 = arith.constant 4 : index
    %c1_137 = arith.constant 1 : index
    %c1_138 = arith.constant 1 : index
    %c0_139 = arith.constant 0 : index
    %151 = vector.load %arg15[%c4_136, %c1_137, %c1_138, %c0_139] : memref<8x9x9x64xf32, #tpu.memory_space<vmem>>, vector<1x8x8x64xf32>
    %152 = vector.shape_cast %151 : vector<1x8x8x64xf32> to vector<8x8x64xf32>
    %153 = vector.shape_cast %152 : vector<8x8x64xf32> to vector<64x64xf32>
    %154 = tpu.concatenate %150, %153 in 0 : vector<64x64xf32>, vector<64x64xf32> -> vector<128x64xf32>
    %155 = tpu.concatenate %98, %105, %112, %119, %126, %133, %140, %147, %154 in 1 : vector<128x64xf32>, vector<128x64xf32>, vector<128x64xf32>, vector<128x64xf32>, vector<128x64xf32>, vector<128x64xf32>, vector<128x64xf32>, vector<128x64xf32>, vector<128x64xf32> -> vector<128x576xf32>
    %c0_140 = arith.constant 0 : index
    %c0_141 = arith.constant 0 : index
    %156 = vector.load %arg4[%c0_140, %c0_141] : memref<576x128xf32, #tpu.memory_space<vmem>>, vector<576x128xf32>
    %cst_142 = arith.constant dense<0.000000e+00> : vector<128x128xf32>
    %157 = tpu.matmul %155, %156, %cst_142 {dimension_numbers = #tpu.dot_dimension_numbers<[1], [0], [0], [1], [0, 0, 1, 1], [], []>} : vector<128x576xf32>, vector<576x128xf32>, vector<128x128xf32> -> vector<128x128xf32>
    %c0_143 = arith.constant 0 : index
    %c0_144 = arith.constant 0 : index
    %158 = vector.load %arg5[%c0_143, %c0_144] : memref<3x128xf32, #tpu.memory_space<vmem>>, vector<1x128xf32>
    %159 = vector.broadcast %158 : vector<1x128xf32> to vector<128x128xf32>
    %160 = arith.addf %157, %159 : vector<128x128xf32>
    %cst_145 = arith.constant 0.000000e+00 : f32
    %161 = vector.broadcast %cst_145 : f32 to vector<128x128xf32>
    %162 = arith.maximumf %160, %161 : vector<128x128xf32>
    %c1_146 = arith.constant 1 : index
    %c0_147 = arith.constant 0 : index
    %163 = vector.load %arg5[%c1_146, %c0_147] : memref<3x128xf32, #tpu.memory_space<vmem>>, vector<1x128xf32>
    %c2_148 = arith.constant 2 : index
    %c0_149 = arith.constant 0 : index
    %164 = vector.load %arg5[%c2_148, %c0_149] : memref<3x128xf32, #tpu.memory_space<vmem>>, vector<1x128xf32>
    %165 = vector.shape_cast %162 : vector<128x128xf32> to vector<2x64x128xf32>
    %cst_150 = arith.constant dense<0.000000e+00> : vector<2x128xf32>
    %166 = vector.multi_reduction <add>, %165, %cst_150 [1] : vector<2x64x128xf32> to vector<2x128xf32>
    %167 = arith.mulf %165, %165 : vector<2x64x128xf32>
    %cst_151 = arith.constant dense<0.000000e+00> : vector<2x128xf32>
    %168 = vector.multi_reduction <add>, %167, %cst_151 [1] : vector<2x64x128xf32> to vector<2x128xf32>
    %cst_152 = arith.constant dense<0.000000e+00> : vector<2x8xf32>
    %169 = tpu.matmul %166, %8, %cst_152 {dimension_numbers = #tpu.dot_dimension_numbers<[1], [0], [0], [1], [0, 0, 1, 1], [], []>} : vector<2x128xf32>, vector<128x8xf32>, vector<2x8xf32> -> vector<2x8xf32>
    %cst_153 = arith.constant 1.024000e+03 : f32
    %170 = vector.broadcast %cst_153 : f32 to vector<2x8xf32>
    %171 = arith.divf %169, %170 : vector<2x8xf32>
    %cst_154 = arith.constant dense<0.000000e+00> : vector<2x8xf32>
    %172 = tpu.matmul %168, %8, %cst_154 {dimension_numbers = #tpu.dot_dimension_numbers<[1], [0], [0], [1], [0, 0, 1, 1], [], []>} : vector<2x128xf32>, vector<128x8xf32>, vector<2x8xf32> -> vector<2x8xf32>
    %cst_155 = arith.constant 1.024000e+03 : f32
    %173 = vector.broadcast %cst_155 : f32 to vector<2x8xf32>
    %174 = arith.divf %172, %173 : vector<2x8xf32>
    %175 = arith.mulf %171, %171 : vector<2x8xf32>
    %176 = arith.subf %174, %175 : vector<2x8xf32>
    %cst_156 = arith.constant 9.99999974E-6 : f32
    %177 = vector.broadcast %cst_156 : f32 to vector<2x8xf32>
    %178 = arith.addf %176, %177 : vector<2x8xf32>
    %179 = math.rsqrt %178 : vector<2x8xf32>
    %cst_157 = arith.constant dense<0.000000e+00> : vector<2x128xf32>
    %180 = tpu.matmul %171, %9, %cst_157 {dimension_numbers = #tpu.dot_dimension_numbers<[1], [0], [0], [1], [0, 0, 1, 1], [], []>} : vector<2x8xf32>, vector<8x128xf32>, vector<2x128xf32> -> vector<2x128xf32>
    %cst_158 = arith.constant dense<0.000000e+00> : vector<2x128xf32>
    %181 = tpu.matmul %179, %9, %cst_158 {dimension_numbers = #tpu.dot_dimension_numbers<[1], [0], [0], [1], [0, 0, 1, 1], [], []>} : vector<2x8xf32>, vector<8x128xf32>, vector<2x128xf32> -> vector<2x128xf32>
    %182 = vector.shape_cast %180 : vector<2x128xf32> to vector<2x1x128xf32>
    %183 = vector.broadcast %182 : vector<2x1x128xf32> to vector<2x64x128xf32>
    %184 = arith.subf %165, %183 : vector<2x64x128xf32>
    %185 = vector.shape_cast %181 : vector<2x128xf32> to vector<2x1x128xf32>
    %186 = vector.broadcast %185 : vector<2x1x128xf32> to vector<2x64x128xf32>
    %187 = arith.mulf %184, %186 : vector<2x64x128xf32>
    %188 = vector.shape_cast %163 : vector<1x128xf32> to vector<1x1x128xf32>
    %189 = vector.broadcast %188 : vector<1x1x128xf32> to vector<2x64x128xf32>
    %190 = arith.mulf %187, %189 : vector<2x64x128xf32>
    %191 = vector.shape_cast %164 : vector<1x128xf32> to vector<1x1x128xf32>
    %192 = vector.broadcast %191 : vector<1x1x128xf32> to vector<2x64x128xf32>
    %193 = arith.addf %190, %192 : vector<2x64x128xf32>
    %194 = vector.shape_cast %193 : vector<2x64x128xf32> to vector<128x128xf32>
    %195 = vector.shape_cast %194 : vector<128x128xf32> to vector<2x8x8x128xf32>
    %196 = vector.extract_strided_slice %195 {offsets = [0, 0, 0, 0], sizes = [1, 8, 8, 128], strides = [1, 1, 1, 1]} : vector<2x8x8x128xf32> to vector<1x8x8x128xf32>
    %197 = vector.shape_cast %196 : vector<1x8x8x128xf32> to vector<8x8x128xf32>
    %c0_159 = arith.constant 0 : index
    %c1_160 = arith.constant 1 : index
    %c1_161 = arith.constant 1 : index
    %c0_162 = arith.constant 0 : index
    %198 = vector.load %arg16[%c0_159, %c1_160, %c1_161, %c0_162] : memref<2x10x10x128xf32, #tpu.memory_space<vmem>>, vector<1x8x8x128xf32>
    %199 = vector.shape_cast %198 : vector<1x8x8x128xf32> to vector<8x8x128xf32>
    %200 = vector.shape_cast %197 : vector<8x8x128xf32> to vector<1x8x8x128xf32>
    tpu.vector_store %arg16[%c0_159, %c1_160, %c1_161, %c0_162], %200 {strides = array<i32>} : memref<2x10x10x128xf32, #tpu.memory_space<vmem>>, vector<1x8x8x128xf32>,
    %201 = vector.extract_strided_slice %195 {offsets = [1, 0, 0, 0], sizes = [1, 8, 8, 128], strides = [1, 1, 1, 1]} : vector<2x8x8x128xf32> to vector<1x8x8x128xf32>
    %202 = vector.shape_cast %201 : vector<1x8x8x128xf32> to vector<8x8x128xf32>
    %c1_163 = arith.constant 1 : index
    %c1_164 = arith.constant 1 : index
    %c1_165 = arith.constant 1 : index
    %c0_166 = arith.constant 0 : index
    %203 = vector.load %arg16[%c1_163, %c1_164, %c1_165, %c0_166] : memref<2x10x10x128xf32, #tpu.memory_space<vmem>>, vector<1x8x8x128xf32>
    %204 = vector.shape_cast %203 : vector<1x8x8x128xf32> to vector<8x8x128xf32>
    %205 = vector.shape_cast %202 : vector<8x8x128xf32> to vector<1x8x8x128xf32>
    tpu.vector_store %arg16[%c1_163, %c1_164, %c1_165, %c0_166], %205 {strides = array<i32>} : memref<2x10x10x128xf32, #tpu.memory_space<vmem>>, vector<1x8x8x128xf32>,
    %c0_167 = arith.constant 0 : index
    %c0_168 = arith.constant 0 : index
    %c0_169 = arith.constant 0 : index
    %c0_170 = arith.constant 0 : index
    %206 = vector.load %arg16[%c0_167, %c0_168, %c0_169, %c0_170] : memref<2x10x10x128xf32, #tpu.memory_space<vmem>>, vector<1x8x8x128xf32>
    %207 = vector.shape_cast %206 : vector<1x8x8x128xf32> to vector<8x8x128xf32>
    %208 = vector.shape_cast %207 : vector<8x8x128xf32> to vector<64x128xf32>
    %c1_171 = arith.constant 1 : index
    %c0_172 = arith.constant 0 : index
    %c0_173 = arith.constant 0 : index
    %c0_174 = arith.constant 0 : index
    %209 = vector.load %arg16[%c1_171, %c0_172, %c0_173, %c0_174] : memref<2x10x10x128xf32, #tpu.memory_space<vmem>>, vector<1x8x8x128xf32>
    %210 = vector.shape_cast %209 : vector<1x8x8x128xf32> to vector<8x8x128xf32>
    %211 = vector.shape_cast %210 : vector<8x8x128xf32> to vector<64x128xf32>
    %212 = tpu.concatenate %208, %211 in 0 : vector<64x128xf32>, vector<64x128xf32> -> vector<128x128xf32>
    %c0_175 = arith.constant 0 : index
    %c0_176 = arith.constant 0 : index
    %c1_177 = arith.constant 1 : index
    %c0_178 = arith.constant 0 : index
    %213 = vector.load %arg16[%c0_175, %c0_176, %c1_177, %c0_178] : memref<2x10x10x128xf32, #tpu.memory_space<vmem>>, vector<1x8x8x128xf32>
    %214 = vector.shape_cast %213 : vector<1x8x8x128xf32> to vector<8x8x128xf32>
    %215 = vector.shape_cast %214 : vector<8x8x128xf32> to vector<64x128xf32>
    %c1_179 = arith.constant 1 : index
    %c0_180 = arith.constant 0 : index
    %c1_181 = arith.constant 1 : index
    %c0_182 = arith.constant 0 : index
    %216 = vector.load %arg16[%c1_179, %c0_180, %c1_181, %c0_182] : memref<2x10x10x128xf32, #tpu.memory_space<vmem>>, vector<1x8x8x128xf32>
    %217 = vector.shape_cast %216 : vector<1x8x8x128xf32> to vector<8x8x128xf32>
    %218 = vector.shape_cast %217 : vector<8x8x128xf32> to vector<64x128xf32>
    %219 = tpu.concatenate %215, %218 in 0 : vector<64x128xf32>, vector<64x128xf32> -> vector<128x128xf32>
    %c0_183 = arith.constant 0 : index
    %c0_184 = arith.constant 0 : index
    %c2_185 = arith.constant 2 : index
    %c0_186 = arith.constant 0 : index
    %220 = vector.load %arg16[%c0_183, %c0_184, %c2_185, %c0_186] : memref<2x10x10x128xf32, #tpu.memory_space<vmem>>, vector<1x8x8x128xf32>
    %221 = vector.shape_cast %220 : vector<1x8x8x128xf32> to vector<8x8x128xf32>
    %222 = vector.shape_cast %221 : vector<8x8x128xf32> to vector<64x128xf32>
    %c1_187 = arith.constant 1 : index
    %c0_188 = arith.constant 0 : index
    %c2_189 = arith.constant 2 : index
    %c0_190 = arith.constant 0 : index
    %223 = vector.load %arg16[%c1_187, %c0_188, %c2_189, %c0_190] : memref<2x10x10x128xf32, #tpu.memory_space<vmem>>, vector<1x8x8x128xf32>
    %224 = vector.shape_cast %223 : vector<1x8x8x128xf32> to vector<8x8x128xf32>
    %225 = vector.shape_cast %224 : vector<8x8x128xf32> to vector<64x128xf32>
    %226 = tpu.concatenate %222, %225 in 0 : vector<64x128xf32>, vector<64x128xf32> -> vector<128x128xf32>
    %c0_191 = arith.constant 0 : index
    %c1_192 = arith.constant 1 : index
    %c0_193 = arith.constant 0 : index
    %c0_194 = arith.constant 0 : index
    %227 = vector.load %arg16[%c0_191, %c1_192, %c0_193, %c0_194] : memref<2x10x10x128xf32, #tpu.memory_space<vmem>>, vector<1x8x8x128xf32>
    %228 = vector.shape_cast %227 : vector<1x8x8x128xf32> to vector<8x8x128xf32>
    %229 = vector.shape_cast %228 : vector<8x8x128xf32> to vector<64x128xf32>
    %c1_195 = arith.constant 1 : index
    %c1_196 = arith.constant 1 : index
    %c0_197 = arith.constant 0 : index
    %c0_198 = arith.constant 0 : index
    %230 = vector.load %arg16[%c1_195, %c1_196, %c0_197, %c0_198] : memref<2x10x10x128xf32, #tpu.memory_space<vmem>>, vector<1x8x8x128xf32>
    %231 = vector.shape_cast %230 : vector<1x8x8x128xf32> to vector<8x8x128xf32>
    %232 = vector.shape_cast %231 : vector<8x8x128xf32> to vector<64x128xf32>
    %233 = tpu.concatenate %229, %232 in 0 : vector<64x128xf32>, vector<64x128xf32> -> vector<128x128xf32>
    %c0_199 = arith.constant 0 : index
    %c1_200 = arith.constant 1 : index
    %c1_201 = arith.constant 1 : index
    %c0_202 = arith.constant 0 : index
    %234 = vector.load %arg16[%c0_199, %c1_200, %c1_201, %c0_202] : memref<2x10x10x128xf32, #tpu.memory_space<vmem>>, vector<1x8x8x128xf32>
    %235 = vector.shape_cast %234 : vector<1x8x8x128xf32> to vector<8x8x128xf32>
    %236 = vector.shape_cast %235 : vector<8x8x128xf32> to vector<64x128xf32>
    %c1_203 = arith.constant 1 : index
    %c1_204 = arith.constant 1 : index
    %c1_205 = arith.constant 1 : index
    %c0_206 = arith.constant 0 : index
    %237 = vector.load %arg16[%c1_203, %c1_204, %c1_205, %c0_206] : memref<2x10x10x128xf32, #tpu.memory_space<vmem>>, vector<1x8x8x128xf32>
    %238 = vector.shape_cast %237 : vector<1x8x8x128xf32> to vector<8x8x128xf32>
    %239 = vector.shape_cast %238 : vector<8x8x128xf32> to vector<64x128xf32>
    %240 = tpu.concatenate %236, %239 in 0 : vector<64x128xf32>, vector<64x128xf32> -> vector<128x128xf32>
    %c0_207 = arith.constant 0 : index
    %c1_208 = arith.constant 1 : index
    %c2_209 = arith.constant 2 : index
    %c0_210 = arith.constant 0 : index
    %241 = vector.load %arg16[%c0_207, %c1_208, %c2_209, %c0_210] : memref<2x10x10x128xf32, #tpu.memory_space<vmem>>, vector<1x8x8x128xf32>
    %242 = vector.shape_cast %241 : vector<1x8x8x128xf32> to vector<8x8x128xf32>
    %243 = vector.shape_cast %242 : vector<8x8x128xf32> to vector<64x128xf32>
    %c1_211 = arith.constant 1 : index
    %c1_212 = arith.constant 1 : index
    %c2_213 = arith.constant 2 : index
    %c0_214 = arith.constant 0 : index
    %244 = vector.load %arg16[%c1_211, %c1_212, %c2_213, %c0_214] : memref<2x10x10x128xf32, #tpu.memory_space<vmem>>, vector<1x8x8x128xf32>
    %245 = vector.shape_cast %244 : vector<1x8x8x128xf32> to vector<8x8x128xf32>
    %246 = vector.shape_cast %245 : vector<8x8x128xf32> to vector<64x128xf32>
    %247 = tpu.concatenate %243, %246 in 0 : vector<64x128xf32>, vector<64x128xf32> -> vector<128x128xf32>
    %c0_215 = arith.constant 0 : index
    %c2_216 = arith.constant 2 : index
    %c0_217 = arith.constant 0 : index
    %c0_218 = arith.constant 0 : index
    %248 = vector.load %arg16[%c0_215, %c2_216, %c0_217, %c0_218] : memref<2x10x10x128xf32, #tpu.memory_space<vmem>>, vector<1x8x8x128xf32>
    %249 = vector.shape_cast %248 : vector<1x8x8x128xf32> to vector<8x8x128xf32>
    %250 = vector.shape_cast %249 : vector<8x8x128xf32> to vector<64x128xf32>
    %c1_219 = arith.constant 1 : index
    %c2_220 = arith.constant 2 : index
    %c0_221 = arith.constant 0 : index
    %c0_222 = arith.constant 0 : index
    %251 = vector.load %arg16[%c1_219, %c2_220, %c0_221, %c0_222] : memref<2x10x10x128xf32, #tpu.memory_space<vmem>>, vector<1x8x8x128xf32>
    %252 = vector.shape_cast %251 : vector<1x8x8x128xf32> to vector<8x8x128xf32>
    %253 = vector.shape_cast %252 : vector<8x8x128xf32> to vector<64x128xf32>
    %254 = tpu.concatenate %250, %253 in 0 : vector<64x128xf32>, vector<64x128xf32> -> vector<128x128xf32>
    %c0_223 = arith.constant 0 : index
    %c2_224 = arith.constant 2 : index
    %c1_225 = arith.constant 1 : index
    %c0_226 = arith.constant 0 : index
    %255 = vector.load %arg16[%c0_223, %c2_224, %c1_225, %c0_226] : memref<2x10x10x128xf32, #tpu.memory_space<vmem>>, vector<1x8x8x128xf32>
    %256 = vector.shape_cast %255 : vector<1x8x8x128xf32> to vector<8x8x128xf32>
    %257 = vector.shape_cast %256 : vector<8x8x128xf32> to vector<64x128xf32>
    %c1_227 = arith.constant 1 : index
    %c2_228 = arith.constant 2 : index
    %c1_229 = arith.constant 1 : index
    %c0_230 = arith.constant 0 : index
    %258 = vector.load %arg16[%c1_227, %c2_228, %c1_229, %c0_230] : memref<2x10x10x128xf32, #tpu.memory_space<vmem>>, vector<1x8x8x128xf32>
    %259 = vector.shape_cast %258 : vector<1x8x8x128xf32> to vector<8x8x128xf32>
    %260 = vector.shape_cast %259 : vector<8x8x128xf32> to vector<64x128xf32>
    %261 = tpu.concatenate %257, %260 in 0 : vector<64x128xf32>, vector<64x128xf32> -> vector<128x128xf32>
    %c0_231 = arith.constant 0 : index
    %c2_232 = arith.constant 2 : index
    %c2_233 = arith.constant 2 : index
    %c0_234 = arith.constant 0 : index
    %262 = vector.load %arg16[%c0_231, %c2_232, %c2_233, %c0_234] : memref<2x10x10x128xf32, #tpu.memory_space<vmem>>, vector<1x8x8x128xf32>
    %263 = vector.shape_cast %262 : vector<1x8x8x128xf32> to vector<8x8x128xf32>
    %264 = vector.shape_cast %263 : vector<8x8x128xf32> to vector<64x128xf32>
    %c1_235 = arith.constant 1 : index
    %c2_236 = arith.constant 2 : index
    %c2_237 = arith.constant 2 : index
    %c0_238 = arith.constant 0 : index
    %265 = vector.load %arg16[%c1_235, %c2_236, %c2_237, %c0_238] : memref<2x10x10x128xf32, #tpu.memory_space<vmem>>, vector<1x8x8x128xf32>
    %266 = vector.shape_cast %265 : vector<1x8x8x128xf32> to vector<8x8x128xf32>
    %267 = vector.shape_cast %266 : vector<8x8x128xf32> to vector<64x128xf32>
    %268 = tpu.concatenate %264, %267 in 0 : vector<64x128xf32>, vector<64x128xf32> -> vector<128x128xf32>
    %269 = tpu.concatenate %212, %219, %226, %233, %240, %247, %254, %261, %268 in 1 : vector<128x128xf32>, vector<128x128xf32>, vector<128x128xf32>, vector<128x128xf32>, vector<128x128xf32>, vector<128x128xf32>, vector<128x128xf32>, vector<128x128xf32>, vector<128x128xf32> -> vector<128x1152xf32>
    %c0_239 = arith.constant 0 : index
    %c0_240 = arith.constant 0 : index
    %270 = vector.load %arg6[%c0_239, %c0_240] : memref<1152x128xf32, #tpu.memory_space<vmem>>, vector<1152x128xf32>
    %cst_241 = arith.constant dense<0.000000e+00> : vector<128x128xf32>
    %271 = tpu.matmul %269, %270, %cst_241 {dimension_numbers = #tpu.dot_dimension_numbers<[1], [0], [0], [1], [0, 0, 1, 1], [], []>} : vector<128x1152xf32>, vector<1152x128xf32>, vector<128x128xf32> -> vector<128x128xf32>
    %c0_242 = arith.constant 0 : index
    %c0_243 = arith.constant 0 : index
    %272 = vector.load %arg7[%c0_242, %c0_243] : memref<3x128xf32, #tpu.memory_space<vmem>>, vector<1x128xf32>
    %273 = vector.broadcast %272 : vector<1x128xf32> to vector<128x128xf32>
    %274 = arith.addf %271, %273 : vector<128x128xf32>
    %cst_244 = arith.constant 0.000000e+00 : f32
    %275 = vector.broadcast %cst_244 : f32 to vector<128x128xf32>
    %276 = arith.maximumf %274, %275 : vector<128x128xf32>
    %c1_245 = arith.constant 1 : index
    %c0_246 = arith.constant 0 : index
    %277 = vector.load %arg7[%c1_245, %c0_246] : memref<3x128xf32, #tpu.memory_space<vmem>>, vector<1x128xf32>
    %c2_247 = arith.constant 2 : index
    %c0_248 = arith.constant 0 : index
    %278 = vector.load %arg7[%c2_247, %c0_248] : memref<3x128xf32, #tpu.memory_space<vmem>>, vector<1x128xf32>
    %279 = vector.shape_cast %276 : vector<128x128xf32> to vector<2x64x128xf32>
    %cst_249 = arith.constant dense<0.000000e+00> : vector<2x128xf32>
    %280 = vector.multi_reduction <add>, %279, %cst_249 [1] : vector<2x64x128xf32> to vector<2x128xf32>
    %281 = arith.mulf %279, %279 : vector<2x64x128xf32>
    %cst_250 = arith.constant dense<0.000000e+00> : vector<2x128xf32>
    %282 = vector.multi_reduction <add>, %281, %cst_250 [1] : vector<2x64x128xf32> to vector<2x128xf32>
    %cst_251 = arith.constant dense<0.000000e+00> : vector<2x8xf32>
    %283 = tpu.matmul %280, %8, %cst_251 {dimension_numbers = #tpu.dot_dimension_numbers<[1], [0], [0], [1], [0, 0, 1, 1], [], []>} : vector<2x128xf32>, vector<128x8xf32>, vector<2x8xf32> -> vector<2x8xf32>
    %cst_252 = arith.constant 1.024000e+03 : f32
    %284 = vector.broadcast %cst_252 : f32 to vector<2x8xf32>
    %285 = arith.divf %283, %284 : vector<2x8xf32>
    %cst_253 = arith.constant dense<0.000000e+00> : vector<2x8xf32>
    %286 = tpu.matmul %282, %8, %cst_253 {dimension_numbers = #tpu.dot_dimension_numbers<[1], [0], [0], [1], [0, 0, 1, 1], [], []>} : vector<2x128xf32>, vector<128x8xf32>, vector<2x8xf32> -> vector<2x8xf32>
    %cst_254 = arith.constant 1.024000e+03 : f32
    %287 = vector.broadcast %cst_254 : f32 to vector<2x8xf32>
    %288 = arith.divf %286, %287 : vector<2x8xf32>
    %289 = arith.mulf %285, %285 : vector<2x8xf32>
    %290 = arith.subf %288, %289 : vector<2x8xf32>
    %cst_255 = arith.constant 9.99999974E-6 : f32
    %291 = vector.broadcast %cst_255 : f32 to vector<2x8xf32>
    %292 = arith.addf %290, %291 : vector<2x8xf32>
    %293 = math.rsqrt %292 : vector<2x8xf32>
    %cst_256 = arith.constant dense<0.000000e+00> : vector<2x128xf32>
    %294 = tpu.matmul %285, %9, %cst_256 {dimension_numbers = #tpu.dot_dimension_numbers<[1], [0], [0], [1], [0, 0, 1, 1], [], []>} : vector<2x8xf32>, vector<8x128xf32>, vector<2x128xf32> -> vector<2x128xf32>
    %cst_257 = arith.constant dense<0.000000e+00> : vector<2x128xf32>
    %295 = tpu.matmul %293, %9, %cst_257 {dimension_numbers = #tpu.dot_dimension_numbers<[1], [0], [0], [1], [0, 0, 1, 1], [], []>} : vector<2x8xf32>, vector<8x128xf32>, vector<2x128xf32> -> vector<2x128xf32>
    %296 = vector.shape_cast %294 : vector<2x128xf32> to vector<2x1x128xf32>
    %297 = vector.broadcast %296 : vector<2x1x128xf32> to vector<2x64x128xf32>
    %298 = arith.subf %279, %297 : vector<2x64x128xf32>
    %299 = vector.shape_cast %295 : vector<2x128xf32> to vector<2x1x128xf32>
    %300 = vector.broadcast %299 : vector<2x1x128xf32> to vector<2x64x128xf32>
    %301 = arith.mulf %298, %300 : vector<2x64x128xf32>
    %302 = vector.shape_cast %277 : vector<1x128xf32> to vector<1x1x128xf32>
    %303 = vector.broadcast %302 : vector<1x1x128xf32> to vector<2x64x128xf32>
    %304 = arith.mulf %301, %303 : vector<2x64x128xf32>
    %305 = vector.shape_cast %278 : vector<1x128xf32> to vector<1x1x128xf32>
    %306 = vector.broadcast %305 : vector<1x1x128xf32> to vector<2x64x128xf32>
    %307 = arith.addf %304, %306 : vector<2x64x128xf32>
    %308 = vector.shape_cast %307 : vector<2x64x128xf32> to vector<128x128xf32>
    %309 = vector.shape_cast %308 : vector<128x128xf32> to vector<2x8x8x128xf32>
    %310 = vector.extract_strided_slice %309 {offsets = [0, 0, 0, 0], sizes = [1, 8, 8, 128], strides = [1, 1, 1, 1]} : vector<2x8x8x128xf32> to vector<1x8x8x128xf32>
    %311 = vector.shape_cast %310 : vector<1x8x8x128xf32> to vector<8x8x128xf32>
    %c0_258 = arith.constant 0 : index
    %c1_259 = arith.constant 1 : index
    %c1_260 = arith.constant 1 : index
    %c0_261 = arith.constant 0 : index
    %312 = vector.load %arg17[%c0_258, %c1_259, %c1_260, %c0_261] : memref<2x10x10x128xf32, #tpu.memory_space<vmem>>, vector<1x8x8x128xf32>
    %313 = vector.shape_cast %312 : vector<1x8x8x128xf32> to vector<8x8x128xf32>
    %314 = vector.shape_cast %311 : vector<8x8x128xf32> to vector<1x8x8x128xf32>
    tpu.vector_store %arg17[%c0_258, %c1_259, %c1_260, %c0_261], %314 {strides = array<i32>} : memref<2x10x10x128xf32, #tpu.memory_space<vmem>>, vector<1x8x8x128xf32>,
    %315 = vector.extract_strided_slice %309 {offsets = [1, 0, 0, 0], sizes = [1, 8, 8, 128], strides = [1, 1, 1, 1]} : vector<2x8x8x128xf32> to vector<1x8x8x128xf32>
    %316 = vector.shape_cast %315 : vector<1x8x8x128xf32> to vector<8x8x128xf32>
    %c1_262 = arith.constant 1 : index
    %c1_263 = arith.constant 1 : index
    %c1_264 = arith.constant 1 : index
    %c0_265 = arith.constant 0 : index
    %317 = vector.load %arg17[%c1_262, %c1_263, %c1_264, %c0_265] : memref<2x10x10x128xf32, #tpu.memory_space<vmem>>, vector<1x8x8x128xf32>
    %318 = vector.shape_cast %317 : vector<1x8x8x128xf32> to vector<8x8x128xf32>
    %319 = vector.shape_cast %316 : vector<8x8x128xf32> to vector<1x8x8x128xf32>
    tpu.vector_store %arg17[%c1_262, %c1_263, %c1_264, %c0_265], %319 {strides = array<i32>} : memref<2x10x10x128xf32, #tpu.memory_space<vmem>>, vector<1x8x8x128xf32>,
    %c0_266 = arith.constant 0 : index
    %c0_267 = arith.constant 0 : index
    %c0_268 = arith.constant 0 : index
    %c0_269 = arith.constant 0 : index
    %320 = vector.load %arg17[%c0_266, %c0_267, %c0_268, %c0_269] : memref<2x10x10x128xf32, #tpu.memory_space<vmem>>, vector<1x8x8x128xf32>
    %321 = vector.shape_cast %320 : vector<1x8x8x128xf32> to vector<8x8x128xf32>
    %322 = vector.shape_cast %321 : vector<8x8x128xf32> to vector<64x128xf32>
    %c1_270 = arith.constant 1 : index
    %c0_271 = arith.constant 0 : index
    %c0_272 = arith.constant 0 : index
    %c0_273 = arith.constant 0 : index
    %323 = vector.load %arg17[%c1_270, %c0_271, %c0_272, %c0_273] : memref<2x10x10x128xf32, #tpu.memory_space<vmem>>, vector<1x8x8x128xf32>
    %324 = vector.shape_cast %323 : vector<1x8x8x128xf32> to vector<8x8x128xf32>
    %325 = vector.shape_cast %324 : vector<8x8x128xf32> to vector<64x128xf32>
    %326 = tpu.concatenate %322, %325 in 0 : vector<64x128xf32>, vector<64x128xf32> -> vector<128x128xf32>
    %c0_274 = arith.constant 0 : index
    %c0_275 = arith.constant 0 : index
    %c1_276 = arith.constant 1 : index
    %c0_277 = arith.constant 0 : index
    %327 = vector.load %arg17[%c0_274, %c0_275, %c1_276, %c0_277] : memref<2x10x10x128xf32, #tpu.memory_space<vmem>>, vector<1x8x8x128xf32>
    %328 = vector.shape_cast %327 : vector<1x8x8x128xf32> to vector<8x8x128xf32>
    %329 = vector.shape_cast %328 : vector<8x8x128xf32> to vector<64x128xf32>
    %c1_278 = arith.constant 1 : index
    %c0_279 = arith.constant 0 : index
    %c1_280 = arith.constant 1 : index
    %c0_281 = arith.constant 0 : index
    %330 = vector.load %arg17[%c1_278, %c0_279, %c1_280, %c0_281] : memref<2x10x10x128xf32, #tpu.memory_space<vmem>>, vector<1x8x8x128xf32>
    %331 = vector.shape_cast %330 : vector<1x8x8x128xf32> to vector<8x8x128xf32>
    %332 = vector.shape_cast %331 : vector<8x8x128xf32> to vector<64x128xf32>
    %333 = tpu.concatenate %329, %332 in 0 : vector<64x128xf32>, vector<64x128xf32> -> vector<128x128xf32>
    %c0_282 = arith.constant 0 : index
    %c0_283 = arith.constant 0 : index
    %c2_284 = arith.constant 2 : index
    %c0_285 = arith.constant 0 : index
    %334 = vector.load %arg17[%c0_282, %c0_283, %c2_284, %c0_285] : memref<2x10x10x128xf32, #tpu.memory_space<vmem>>, vector<1x8x8x128xf32>
    %335 = vector.shape_cast %334 : vector<1x8x8x128xf32> to vector<8x8x128xf32>
    %336 = vector.shape_cast %335 : vector<8x8x128xf32> to vector<64x128xf32>
    %c1_286 = arith.constant 1 : index
    %c0_287 = arith.constant 0 : index
    %c2_288 = arith.constant 2 : index
    %c0_289 = arith.constant 0 : index
    %337 = vector.load %arg17[%c1_286, %c0_287, %c2_288, %c0_289] : memref<2x10x10x128xf32, #tpu.memory_space<vmem>>, vector<1x8x8x128xf32>
    %338 = vector.shape_cast %337 : vector<1x8x8x128xf32> to vector<8x8x128xf32>
    %339 = vector.shape_cast %338 : vector<8x8x128xf32> to vector<64x128xf32>
    %340 = tpu.concatenate %336, %339 in 0 : vector<64x128xf32>, vector<64x128xf32> -> vector<128x128xf32>
    %c0_290 = arith.constant 0 : index
    %c1_291 = arith.constant 1 : index
    %c0_292 = arith.constant 0 : index
    %c0_293 = arith.constant 0 : index
    %341 = vector.load %arg17[%c0_290, %c1_291, %c0_292, %c0_293] : memref<2x10x10x128xf32, #tpu.memory_space<vmem>>, vector<1x8x8x128xf32>
    %342 = vector.shape_cast %341 : vector<1x8x8x128xf32> to vector<8x8x128xf32>
    %343 = vector.shape_cast %342 : vector<8x8x128xf32> to vector<64x128xf32>
    %c1_294 = arith.constant 1 : index
    %c1_295 = arith.constant 1 : index
    %c0_296 = arith.constant 0 : index
    %c0_297 = arith.constant 0 : index
    %344 = vector.load %arg17[%c1_294, %c1_295, %c0_296, %c0_297] : memref<2x10x10x128xf32, #tpu.memory_space<vmem>>, vector<1x8x8x128xf32>
    %345 = vector.shape_cast %344 : vector<1x8x8x128xf32> to vector<8x8x128xf32>
    %346 = vector.shape_cast %345 : vector<8x8x128xf32> to vector<64x128xf32>
    %347 = tpu.concatenate %343, %346 in 0 : vector<64x128xf32>, vector<64x128xf32> -> vector<128x128xf32>
    %c0_298 = arith.constant 0 : index
    %c1_299 = arith.constant 1 : index
    %c1_300 = arith.constant 1 : index
    %c0_301 = arith.constant 0 : index
    %348 = vector.load %arg17[%c0_298, %c1_299, %c1_300, %c0_301] : memref<2x10x10x128xf32, #tpu.memory_space<vmem>>, vector<1x8x8x128xf32>
    %349 = vector.shape_cast %348 : vector<1x8x8x128xf32> to vector<8x8x128xf32>
    %350 = vector.shape_cast %349 : vector<8x8x128xf32> to vector<64x128xf32>
    %c1_302 = arith.constant 1 : index
    %c1_303 = arith.constant 1 : index
    %c1_304 = arith.constant 1 : index
    %c0_305 = arith.constant 0 : index
    %351 = vector.load %arg17[%c1_302, %c1_303, %c1_304, %c0_305] : memref<2x10x10x128xf32, #tpu.memory_space<vmem>>, vector<1x8x8x128xf32>
    %352 = vector.shape_cast %351 : vector<1x8x8x128xf32> to vector<8x8x128xf32>
    %353 = vector.shape_cast %352 : vector<8x8x128xf32> to vector<64x128xf32>
    %354 = tpu.concatenate %350, %353 in 0 : vector<64x128xf32>, vector<64x128xf32> -> vector<128x128xf32>
    %c0_306 = arith.constant 0 : index
    %c1_307 = arith.constant 1 : index
    %c2_308 = arith.constant 2 : index
    %c0_309 = arith.constant 0 : index
    %355 = vector.load %arg17[%c0_306, %c1_307, %c2_308, %c0_309] : memref<2x10x10x128xf32, #tpu.memory_space<vmem>>, vector<1x8x8x128xf32>
    %356 = vector.shape_cast %355 : vector<1x8x8x128xf32> to vector<8x8x128xf32>
    %357 = vector.shape_cast %356 : vector<8x8x128xf32> to vector<64x128xf32>
    %c1_310 = arith.constant 1 : index
    %c1_311 = arith.constant 1 : index
    %c2_312 = arith.constant 2 : index
    %c0_313 = arith.constant 0 : index
    %358 = vector.load %arg17[%c1_310, %c1_311, %c2_312, %c0_313] : memref<2x10x10x128xf32, #tpu.memory_space<vmem>>, vector<1x8x8x128xf32>
    %359 = vector.shape_cast %358 : vector<1x8x8x128xf32> to vector<8x8x128xf32>
    %360 = vector.shape_cast %359 : vector<8x8x128xf32> to vector<64x128xf32>
    %361 = tpu.concatenate %357, %360 in 0 : vector<64x128xf32>, vector<64x128xf32> -> vector<128x128xf32>
    %c0_314 = arith.constant 0 : index
    %c2_315 = arith.constant 2 : index
    %c0_316 = arith.constant 0 : index
    %c0_317 = arith.constant 0 : index
    %362 = vector.load %arg17[%c0_314, %c2_315, %c0_316, %c0_317] : memref<2x10x10x128xf32, #tpu.memory_space<vmem>>, vector<1x8x8x128xf32>
    %363 = vector.shape_cast %362 : vector<1x8x8x128xf32> to vector<8x8x128xf32>
    %364 = vector.shape_cast %363 : vector<8x8x128xf32> to vector<64x128xf32>
    %c1_318 = arith.constant 1 : index
    %c2_319 = arith.constant 2 : index
    %c0_320 = arith.constant 0 : index
    %c0_321 = arith.constant 0 : index
    %365 = vector.load %arg17[%c1_318, %c2_319, %c0_320, %c0_321] : memref<2x10x10x128xf32, #tpu.memory_space<vmem>>, vector<1x8x8x128xf32>
    %366 = vector.shape_cast %365 : vector<1x8x8x128xf32> to vector<8x8x128xf32>
    %367 = vector.shape_cast %366 : vector<8x8x128xf32> to vector<64x128xf32>
    %368 = tpu.concatenate %364, %367 in 0 : vector<64x128xf32>, vector<64x128xf32> -> vector<128x128xf32>
    %c0_322 = arith.constant 0 : index
    %c2_323 = arith.constant 2 : index
    %c1_324 = arith.constant 1 : index
    %c0_325 = arith.constant 0 : index
    %369 = vector.load %arg17[%c0_322, %c2_323, %c1_324, %c0_325] : memref<2x10x10x128xf32, #tpu.memory_space<vmem>>, vector<1x8x8x128xf32>
    %370 = vector.shape_cast %369 : vector<1x8x8x128xf32> to vector<8x8x128xf32>
    %371 = vector.shape_cast %370 : vector<8x8x128xf32> to vector<64x128xf32>
    %c1_326 = arith.constant 1 : index
    %c2_327 = arith.constant 2 : index
    %c1_328 = arith.constant 1 : index
    %c0_329 = arith.constant 0 : index
    %372 = vector.load %arg17[%c1_326, %c2_327, %c1_328, %c0_329] : memref<2x10x10x128xf32, #tpu.memory_space<vmem>>, vector<1x8x8x128xf32>
    %373 = vector.shape_cast %372 : vector<1x8x8x128xf32> to vector<8x8x128xf32>
    %374 = vector.shape_cast %373 : vector<8x8x128xf32> to vector<64x128xf32>
    %375 = tpu.concatenate %371, %374 in 0 : vector<64x128xf32>, vector<64x128xf32> -> vector<128x128xf32>
    %c0_330 = arith.constant 0 : index
    %c2_331 = arith.constant 2 : index
    %c2_332 = arith.constant 2 : index
    %c0_333 = arith.constant 0 : index
    %376 = vector.load %arg17[%c0_330, %c2_331, %c2_332, %c0_333] : memref<2x10x10x128xf32, #tpu.memory_space<vmem>>, vector<1x8x8x128xf32>
    %377 = vector.shape_cast %376 : vector<1x8x8x128xf32> to vector<8x8x128xf32>
    %378 = vector.shape_cast %377 : vector<8x8x128xf32> to vector<64x128xf32>
    %c1_334 = arith.constant 1 : index
    %c2_335 = arith.constant 2 : index
    %c2_336 = arith.constant 2 : index
    %c0_337 = arith.constant 0 : index
    %379 = vector.load %arg17[%c1_334, %c2_335, %c2_336, %c0_337] : memref<2x10x10x128xf32, #tpu.memory_space<vmem>>, vector<1x8x8x128xf32>
    %380 = vector.shape_cast %379 : vector<1x8x8x128xf32> to vector<8x8x128xf32>
    %381 = vector.shape_cast %380 : vector<8x8x128xf32> to vector<64x128xf32>
    %382 = tpu.concatenate %378, %381 in 0 : vector<64x128xf32>, vector<64x128xf32> -> vector<128x128xf32>
    %383 = tpu.concatenate %326, %333, %340, %347, %354, %361, %368, %375, %382 in 1 : vector<128x128xf32>, vector<128x128xf32>, vector<128x128xf32>, vector<128x128xf32>, vector<128x128xf32>, vector<128x128xf32>, vector<128x128xf32>, vector<128x128xf32>, vector<128x128xf32> -> vector<128x1152xf32>
    %c0_338 = arith.constant 0 : index
    %c0_339 = arith.constant 0 : index
    %384 = vector.load %arg8[%c0_338, %c0_339] : memref<1152x128xf32, #tpu.memory_space<vmem>>, vector<1152x128xf32>
    %cst_340 = arith.constant dense<0.000000e+00> : vector<128x128xf32>
    %385 = tpu.matmul %383, %384, %cst_340 {dimension_numbers = #tpu.dot_dimension_numbers<[1], [0], [0], [1], [0, 0, 1, 1], [], []>} : vector<128x1152xf32>, vector<1152x128xf32>, vector<128x128xf32> -> vector<128x128xf32>
    %c0_341 = arith.constant 0 : index
    %c0_342 = arith.constant 0 : index
    %386 = vector.load %arg9[%c0_341, %c0_342] : memref<3x128xf32, #tpu.memory_space<vmem>>, vector<1x128xf32>
    %387 = vector.broadcast %386 : vector<1x128xf32> to vector<128x128xf32>
    %388 = arith.addf %385, %387 : vector<128x128xf32>
    %cst_343 = arith.constant 0.000000e+00 : f32
    %389 = vector.broadcast %cst_343 : f32 to vector<128x128xf32>
    %390 = arith.maximumf %388, %389 : vector<128x128xf32>
    %c1_344 = arith.constant 1 : index
    %c0_345 = arith.constant 0 : index
    %391 = vector.load %arg9[%c1_344, %c0_345] : memref<3x128xf32, #tpu.memory_space<vmem>>, vector<1x128xf32>
    %c2_346 = arith.constant 2 : index
    %c0_347 = arith.constant 0 : index
    %392 = vector.load %arg9[%c2_346, %c0_347] : memref<3x128xf32, #tpu.memory_space<vmem>>, vector<1x128xf32>
    %393 = vector.shape_cast %390 : vector<128x128xf32> to vector<2x64x128xf32>
    %cst_348 = arith.constant dense<0.000000e+00> : vector<2x128xf32>
    %394 = vector.multi_reduction <add>, %393, %cst_348 [1] : vector<2x64x128xf32> to vector<2x128xf32>
    %395 = arith.mulf %393, %393 : vector<2x64x128xf32>
    %cst_349 = arith.constant dense<0.000000e+00> : vector<2x128xf32>
    %396 = vector.multi_reduction <add>, %395, %cst_349 [1] : vector<2x64x128xf32> to vector<2x128xf32>
    %cst_350 = arith.constant dense<0.000000e+00> : vector<2x8xf32>
    %397 = tpu.matmul %394, %8, %cst_350 {dimension_numbers = #tpu.dot_dimension_numbers<[1], [0], [0], [1], [0, 0, 1, 1], [], []>} : vector<2x128xf32>, vector<128x8xf32>, vector<2x8xf32> -> vector<2x8xf32>
    %cst_351 = arith.constant 1.024000e+03 : f32
    %398 = vector.broadcast %cst_351 : f32 to vector<2x8xf32>
    %399 = arith.divf %397, %398 : vector<2x8xf32>
    %cst_352 = arith.constant dense<0.000000e+00> : vector<2x8xf32>
    %400 = tpu.matmul %396, %8, %cst_352 {dimension_numbers = #tpu.dot_dimension_numbers<[1], [0], [0], [1], [0, 0, 1, 1], [], []>} : vector<2x128xf32>, vector<128x8xf32>, vector<2x8xf32> -> vector<2x8xf32>
    %cst_353 = arith.constant 1.024000e+03 : f32
    %401 = vector.broadcast %cst_353 : f32 to vector<2x8xf32>
    %402 = arith.divf %400, %401 : vector<2x8xf32>
    %403 = arith.mulf %399, %399 : vector<2x8xf32>
    %404 = arith.subf %402, %403 : vector<2x8xf32>
    %cst_354 = arith.constant 9.99999974E-6 : f32
    %405 = vector.broadcast %cst_354 : f32 to vector<2x8xf32>
    %406 = arith.addf %404, %405 : vector<2x8xf32>
    %407 = math.rsqrt %406 : vector<2x8xf32>
    %cst_355 = arith.constant dense<0.000000e+00> : vector<2x128xf32>
    %408 = tpu.matmul %399, %9, %cst_355 {dimension_numbers = #tpu.dot_dimension_numbers<[1], [0], [0], [1], [0, 0, 1, 1], [], []>} : vector<2x8xf32>, vector<8x128xf32>, vector<2x128xf32> -> vector<2x128xf32>
    %cst_356 = arith.constant dense<0.000000e+00> : vector<2x128xf32>
    %409 = tpu.matmul %407, %9, %cst_356 {dimension_numbers = #tpu.dot_dimension_numbers<[1], [0], [0], [1], [0, 0, 1, 1], [], []>} : vector<2x8xf32>, vector<8x128xf32>, vector<2x128xf32> -> vector<2x128xf32>
    %410 = vector.shape_cast %408 : vector<2x128xf32> to vector<2x1x128xf32>
    %411 = vector.broadcast %410 : vector<2x1x128xf32> to vector<2x64x128xf32>
    %412 = arith.subf %393, %411 : vector<2x64x128xf32>
    %413 = vector.shape_cast %409 : vector<2x128xf32> to vector<2x1x128xf32>
    %414 = vector.broadcast %413 : vector<2x1x128xf32> to vector<2x64x128xf32>
    %415 = arith.mulf %412, %414 : vector<2x64x128xf32>
    %416 = vector.shape_cast %391 : vector<1x128xf32> to vector<1x1x128xf32>
    %417 = vector.broadcast %416 : vector<1x1x128xf32> to vector<2x64x128xf32>
    %418 = arith.mulf %415, %417 : vector<2x64x128xf32>
    %419 = vector.shape_cast %392 : vector<1x128xf32> to vector<1x1x128xf32>
    %420 = vector.broadcast %419 : vector<1x1x128xf32> to vector<2x64x128xf32>
    %421 = arith.addf %418, %420 : vector<2x64x128xf32>
    %422 = vector.shape_cast %421 : vector<2x64x128xf32> to vector<128x128xf32>
    %423 = vector.shape_cast %422 : vector<128x128xf32> to vector<2x64x128xf32>
    %cst_357 = arith.constant dense<0.000000e+00> : vector<2x128xf32>
    %424 = vector.multi_reduction <add>, %423, %cst_357 [1] : vector<2x64x128xf32> to vector<2x128xf32>
    %cst_358 = arith.constant 6.400000e+01 : f32
    %425 = vector.broadcast %cst_358 : f32 to vector<2x128xf32>
    %426 = arith.divf %424, %425 : vector<2x128xf32>
    %c0_359 = arith.constant 0 : index
    %c0_360 = arith.constant 0 : index
    %c0_361 = arith.constant 0 : index
    %427 = vector.load %arg14[%c0_359, %c0_360, %c0_361] : memref<1x2x128xf32, #tpu.memory_space<vmem>>, vector<1x2x128xf32>
    %428 = vector.shape_cast %427 : vector<1x2x128xf32> to vector<2x128xf32>
    %429 = vector.shape_cast %426 : vector<2x128xf32> to vector<1x2x128xf32>
    tpu.vector_store %arg14[%c0_359, %c0_360, %c0_361], %429 {strides = array<i32>} : memref<1x2x128xf32, #tpu.memory_space<vmem>>, vector<1x2x128xf32>,
    return
  }
  func.func @transform_0(%arg0: i32) -> (i32, i32, i32) {
    %c0_i32 = arith.constant 0 : i32
    %c0_i32_0 = arith.constant 0 : i32
    %c0_i32_1 = arith.constant 0 : i32
    return %arg0, %c0_i32, %c0_i32_0 : i32, i32, i32
  }
  func.func @transform_1(%arg0: i32) -> (i32, i32) {
    %c0_i32 = arith.constant 0 : i32
    %c0_i32_0 = arith.constant 0 : i32
    %c0_i32_1 = arith.constant 0 : i32
    return %c0_i32, %c0_i32_0 : i32, i32
  }
  func.func @transform_2(%arg0: i32) -> (i32, i32) {
    %c0_i32 = arith.constant 0 : i32
    %c0_i32_0 = arith.constant 0 : i32
    %c0_i32_1 = arith.constant 0 : i32
    return %c0_i32, %c0_i32_0 : i32, i32
  }
  func.func @transform_3(%arg0: i32) -> (i32, i32) {
    %c0_i32 = arith.constant 0 : i32
    %c0_i32_0 = arith.constant 0 : i32
    %c0_i32_1 = arith.constant 0 : i32
    return %c0_i32, %c0_i32_0 : i32, i32
  }
  func.func @transform_4(%arg0: i32) -> (i32, i32) {
    %c0_i32 = arith.constant 0 : i32
    %c0_i32_0 = arith.constant 0 : i32
    %c0_i32_1 = arith.constant 0 : i32
    return %c0_i32, %c0_i32_0 : i32, i32
  }
  func.func @transform_5(%arg0: i32) -> (i32, i32) {
    %c0_i32 = arith.constant 0 : i32
    %c0_i32_0 = arith.constant 0 : i32
    %c0_i32_1 = arith.constant 0 : i32
    return %c0_i32, %c0_i32_0 : i32, i32
  }
  func.func @transform_6(%arg0: i32) -> (i32, i32) {
    %c0_i32 = arith.constant 0 : i32
    %c0_i32_0 = arith.constant 0 : i32
    %c0_i32_1 = arith.constant 0 : i32
    return %c0_i32, %c0_i32_0 : i32, i32
  }
  func.func @transform_7(%arg0: i32) -> (i32, i32) {
    %c0_i32 = arith.constant 0 : i32
    %c0_i32_0 = arith.constant 0 : i32
    %c0_i32_1 = arith.constant 0 : i32
    return %c0_i32, %c0_i32_0 : i32, i32
  }
  func.func @transform_8(%arg0: i32) -> (i32, i32) {
    %c0_i32 = arith.constant 0 : i32
    %c0_i32_0 = arith.constant 0 : i32
    %c0_i32_1 = arith.constant 0 : i32
    return %c0_i32, %c0_i32_0 : i32, i32
  }
  func.func @transform_9(%arg0: i32) -> (i32, i32) {
    %c0_i32 = arith.constant 0 : i32
    %c0_i32_0 = arith.constant 0 : i32
    %c0_i32_1 = arith.constant 0 : i32
    return %c0_i32, %c0_i32_0 : i32, i32
  }
  func.func @transform_10(%arg0: i32) -> (i32, i32) {
    %c0_i32 = arith.constant 0 : i32
    %c0_i32_0 = arith.constant 0 : i32
    %c0_i32_1 = arith.constant 0 : i32
    return %c0_i32, %c0_i32_0 : i32, i32
  }
  func.func @transform_11(%arg0: i32) -> (i32, i32) {
    %c0_i32 = arith.constant 0 : i32
    %c0_i32_0 = arith.constant 0 : i32
    %c0_i32_1 = arith.constant 0 : i32
    return %c0_i32, %c0_i32_0 : i32, i32
  }
  func.func @transform_12(%arg0: i32) -> (i32, i32) {
    %c0_i32 = arith.constant 0 : i32
    %c0_i32_0 = arith.constant 0 : i32
    %c0_i32_1 = arith.constant 0 : i32
    return %c0_i32, %c0_i32_0 : i32, i32
  }
  func.func @transform_13(%arg0: i32) -> (i32, i32, i32) {
    %c0_i32 = arith.constant 0 : i32
    %c0_i32_0 = arith.constant 0 : i32
    %c0_i32_1 = arith.constant 0 : i32
    return %arg0, %c0_i32, %c0_i32_0 : i32, i32, i32
  }
}

</mosaic_0001>

<llo_original>
// kernel: mnist_cnn_forward.1
$region0: #{mnist_cnn_forward.1}
  #allocation0 [shape = 'u32[]', space=smem, size = 0x4, offset = 0x4, fixed_abs, tag = 'smem constant byte address 0x4 - core index']
  #allocation1 [shape = 'u32[144,128]{1,0:T(1,128)}', space=vmem, size = 0x12000, scoped, tag = 'internal scratch']
  #allocation2 [shape = 'f32[8,9,9,64]{3,2,1,0:T(8,128)}', space=vmem, size = 0x90000, scoped, tag = 'scratch operand']
  #allocation3 [shape = 'f32[2,10,10,128]{3,2,1,0:T(8,128)}', space=vmem, size = 0x28000, scoped, tag = 'scratch operand']
  #allocation4 [shape = 'f32[2,10,10,128]{3,2,1,0:T(8,128)}', space=vmem, size = 0x28000, scoped, tag = 'scratch operand']
  %s0 = inlined_call_operand.vmem [shape: f32[4,256,27], index: 0, kind: input, shape index: {}]
  %s1 = inlined_call_operand.vmem [shape: f32[27,64], index: 1, kind: input, shape index: {}]
  %s2 = inlined_call_operand.vmem [shape: f32[3,64], index: 2, kind: input, shape index: {}]
  %s3 = inlined_call_operand.vmem [shape: f32[576,128], index: 3, kind: input, shape index: {}]
  %s4 = inlined_call_operand.vmem [shape: f32[3,128], index: 4, kind: input, shape index: {}]
  %s5 = inlined_call_operand.vmem [shape: f32[1152,128], index: 5, kind: input, shape index: {}]
  %s6 = inlined_call_operand.vmem [shape: f32[3,128], index: 6, kind: input, shape index: {}]
  %s7 = inlined_call_operand.vmem [shape: f32[1152,128], index: 7, kind: input, shape index: {}]
  %s8 = inlined_call_operand.vmem [shape: f32[3,128], index: 8, kind: input, shape index: {}]
  %s9 = inlined_call_operand.vmem [shape: f32[64,8], index: 9, kind: input, shape index: {}]
  %s10 = inlined_call_operand.vmem [shape: f32[8,64], index: 10, kind: input, shape index: {}]
  %s11 = inlined_call_operand.vmem [shape: f32[128,8], index: 11, kind: input, shape index: {}]
  %s12 = inlined_call_operand.vmem [shape: f32[8,128], index: 12, kind: input, shape index: {}]
  %s13 = inlined_call_operand.hbm [shape: f32[2,2,128], index: 13, kind: output, shape index: {}]
  %s14 = sld [smem:[#allocation0]]
  $region85: #{mnist_cnn_forward.1} parent=0
    _
  %s16 = ssub.s32 1, %s14
  %s17 = scalar_select 0, %s16, %s14
  $region1: #{mnist_cnn_forward.1} parent=0
    #allocation5 [shape = 'u8[2048]{0}', space=vmem, size = 0x800, scoped, tag = 'output window, operand 0']
    #allocation6 [shape = 's32[2]{0}', space=sflag, size = 0x8, scoped, tag = 'scoped memory for mnist_cnn_forward.1']
    %18 = vsyncpa [#allocation6], 0
    %s19 = scalar_lea.sflag [#allocation6], 1
    %20 = vsyncpa %s19, 0
    loop: start=0, step=1, limit=4
    $region2: #{mnist_cnn_forward.1} parent=1 // loop_pre_header
      _
    $region3: #{mnist_cnn_forward.1} parent=1 // loop_header
      %s22 = sphi 0, %s26
      %p23 = scmp.ge.s32.totalorder %s22, 4
      %s32 = sphi 0, %s34
      %s35 = sphi 0, %s32
      %s36 = sphi 0, %s35
      %s52 = sphi 0, %s36
      %s56 = sphi 0, %s56
      %s58 = sphi 0, %s56
      %s59 = sphi 0, %s58
      %s73 = sphi 0, %s59
      %s77 = sphi 0, %s77
      %s79 = sphi 0, %s77
      %s80 = sphi 0, %s79
      %s94 = sphi 0, %s80
      %s98 = sphi 0, %s98
      %s100 = sphi 0, %s98
      %s101 = sphi 0, %s100
      %s115 = sphi 0, %s101
      %s119 = sphi 0, %s119
      %s121 = sphi 0, %s119
      %s122 = sphi 0, %s121
      %s136 = sphi 0, %s122
      %s140 = sphi 0, %s140
      %s142 = sphi 0, %s140
      %s143 = sphi 0, %s142
      %s157 = sphi 0, %s143
      %s161 = sphi 0, %s161
      %s163 = sphi 0, %s161
      %s164 = sphi 0, %s163
      %s178 = sphi 0, %s164
      %s182 = sphi 0, %s182
      %s184 = sphi 0, %s182
      %s185 = sphi 0, %s184
      %s199 = sphi 0, %s185
      %s203 = sphi 0, %s203
      %s205 = sphi 0, %s203
      %s206 = sphi 0, %s205
      %s220 = sphi 0, %s206
      %s224 = sphi 0, %s224
      %s226 = sphi 0, %s224
      %s227 = sphi 0, %s226
      %s241 = sphi 0, %s227
      %s245 = sphi 0, %s245
      %s247 = sphi 0, %s245
      %s248 = sphi 0, %s247
      %s262 = sphi 0, %s248
      %s266 = sphi 0, %s266
      %s268 = sphi 0, %s266
      %s269 = sphi 0, %s268
      %s283 = sphi 0, %s269
      %s287 = sphi 0, %s287
      %s289 = sphi 0, %s287
      %s290 = sphi 0, %s289
      %s304 = sphi 0, %s290
      %s310 = sphi 0, %s312
      %s313 = sphi 0, %s310
      %s314 = sphi 0, %s313
      %s330 = sphi 0, %s314
    $region4: #{mnist_cnn_forward.1} parent=1 // loop_header_branch
      %25 = sbr.rel (%p23) target = $region8
    $region5: #{mnist_cnn_forward.1} parent=1 // loop_body
      %s27 = ssub.s32 %s22, 1
      %s28 = ssub.s32 %s22, 2
      %s29 = sadd.s32 %s22, 1
      %s30 = ssub.s32 %s22, %s29
      %p31 = scmp.eq.s32.totalorder %s30, 0
      %s33 = sadd.s32 %s32, 1
      %s34 = scalar_select %p31, %s32, %s33
      %p37 = pneg %p31
      %p38 = scmp.eq.s32.totalorder %s22, 1
      %p39 = por %p37, %p38
      %p40 = scmp.ne.s32.totalorder %s32, %s35
      %p41 = scmp.eq.s32.totalorder %s22, 0
      %p42 = por %p40, %p41
      %p43 = scmp.ne.s32.totalorder %s32, %s35
      %p44 = scmp.eq.s32.totalorder %s27, 1
      %p45 = por %p43, %p44
      %p46 = scmp.ne.s32.totalorder %s35, %s36
      %p47 = scmp.eq.s32.totalorder %s27, 0
      %p48 = por %p46, %p47
      %p49 = scmp.ne.s32.totalorder %s35, %s36
      %p50 = scmp.eq.s32.totalorder %s28, 1
      %p51 = por %p49, %p50
      %p53 = scmp.ne.s32.totalorder %s36, %s52
      %p54 = scmp.eq.s32.totalorder %s28, 0
      %p55 = por %p53, %p54
      %s57 = sadd.s32 %s56, 1
      %p60 = scmp.eq.s32.totalorder %s22, 1
      %p61 = scmp.ne.s32.totalorder %s56, %s58
      %p62 = scmp.eq.s32.totalorder %s22, 0
      %p63 = por %p61, %p62
      %p64 = scmp.ne.s32.totalorder %s56, %s58
      %p65 = scmp.eq.s32.totalorder %s27, 1
      %p66 = por %p64, %p65
      %p67 = scmp.ne.s32.totalorder %s58, %s59
      %p68 = scmp.eq.s32.totalorder %s27, 0
      %p69 = por %p67, %p68
      %p70 = scmp.ne.s32.totalorder %s58, %s59
      %p71 = scmp.eq.s32.totalorder %s28, 1
      %p72 = por %p70, %p71
      %p74 = scmp.ne.s32.totalorder %s59, %s73
      %p75 = scmp.eq.s32.totalorder %s28, 0
      %p76 = por %p74, %p75
      %s78 = sadd.s32 %s77, 1
      %p81 = scmp.eq.s32.totalorder %s22, 1
      %p82 = scmp.ne.s32.totalorder %s77, %s79
      %p83 = scmp.eq.s32.totalorder %s22, 0
      %p84 = por %p82, %p83
      %p85 = scmp.ne.s32.totalorder %s77, %s79
      %p86 = scmp.eq.s32.totalorder %s27, 1
      %p87 = por %p85, %p86
      %p88 = scmp.ne.s32.totalorder %s79, %s80
      %p89 = scmp.eq.s32.totalorder %s27, 0
      %p90 = por %p88, %p89
      %p91 = scmp.ne.s32.totalorder %s79, %s80
      %p92 = scmp.eq.s32.totalorder %s28, 1
      %p93 = por %p91, %p92
      %p95 = scmp.ne.s32.totalorder %s80, %s94
      %p96 = scmp.eq.s32.totalorder %s28, 0
      %p97 = por %p95, %p96
      %s99 = sadd.s32 %s98, 1
      %p102 = scmp.eq.s32.totalorder %s22, 1
      %p103 = scmp.ne.s32.totalorder %s98, %s100
      %p104 = scmp.eq.s32.totalorder %s22, 0
      %p105 = por %p103, %p104
      %p106 = scmp.ne.s32.totalorder %s98, %s100
      %p107 = scmp.eq.s32.totalorder %s27, 1
      %p108 = por %p106, %p107
      %p109 = scmp.ne.s32.totalorder %s100, %s101
      %p110 = scmp.eq.s32.totalorder %s27, 0
      %p111 = por %p109, %p110
      %p112 = scmp.ne.s32.totalorder %s100, %s101
      %p113 = scmp.eq.s32.totalorder %s28, 1
      %p114 = por %p112, %p113
      %p116 = scmp.ne.s32.totalorder %s101, %s115
      %p117 = scmp.eq.s32.totalorder %s28, 0
      %p118 = por %p116, %p117
      %s120 = sadd.s32 %s119, 1
      %p123 = scmp.eq.s32.totalorder %s22, 1
      %p124 = scmp.ne.s32.totalorder %s119, %s121
      %p125 = scmp.eq.s32.totalorder %s22, 0
      %p126 = por %p124, %p125
      %p127 = scmp.ne.s32.totalorder %s119, %s121
      %p128 = scmp.eq.s32.totalorder %s27, 1
      %p129 = por %p127, %p128
      %p130 = scmp.ne.s32.totalorder %s121, %s122
      %p131 = scmp.eq.s32.totalorder %s27, 0
      %p132 = por %p130, %p131
      %p133 = scmp.ne.s32.totalorder %s121, %s122
      %p134 = scmp.eq.s32.totalorder %s28, 1
      %p135 = por %p133, %p134
      %p137 = scmp.ne.s32.totalorder %s122, %s136
      %p138 = scmp.eq.s32.totalorder %s28, 0
      %p139 = por %p137, %p138
      %s141 = sadd.s32 %s140, 1
      %p144 = scmp.eq.s32.totalorder %s22, 1
      %p145 = scmp.ne.s32.totalorder %s140, %s142
      %p146 = scmp.eq.s32.totalorder %s22, 0
      %p147 = por %p145, %p146
      %p148 = scmp.ne.s32.totalorder %s140, %s142
      %p149 = scmp.eq.s32.totalorder %s27, 1
      %p150 = por %p148, %p149
      %p151 = scmp.ne.s32.totalorder %s142, %s143
      %p152 = scmp.eq.s32.totalorder %s27, 0
      %p153 = por %p151, %p152
      %p154 = scmp.ne.s32.totalorder %s142, %s143
      %p155 = scmp.eq.s32.totalorder %s28, 1
      %p156 = por %p154, %p155
      %p158 = scmp.ne.s32.totalorder %s143, %s157
      %p159 = scmp.eq.s32.totalorder %s28, 0
      %p160 = por %p158, %p159
      %s162 = sadd.s32 %s161, 1
      %p165 = scmp.eq.s32.totalorder %s22, 1
      %p166 = scmp.ne.s32.totalorder %s161, %s163
      %p167 = scmp.eq.s32.totalorder %s22, 0
      %p168 = por %p166, %p167
      %p169 = scmp.ne.s32.totalorder %s161, %s163
      %p170 = scmp.eq.s32.totalorder %s27, 1
      %p171 = por %p169, %p170
      %p172 = scmp.ne.s32.totalorder %s163, %s164
      %p173 = scmp.eq.s32.totalorder %s27, 0
      %p174 = por %p172, %p173
      %p175 = scmp.ne.s32.totalorder %s163, %s164
      %p176 = scmp.eq.s32.totalorder %s28, 1
      %p177 = por %p175, %p176
      %p179 = scmp.ne.s32.totalorder %s164, %s178
      %p180 = scmp.eq.s32.totalorder %s28, 0
      %p181 = por %p179, %p180
      %s183 = sadd.s32 %s182, 1
      %p186 = scmp.eq.s32.totalorder %s22, 1
      %p187 = scmp.ne.s32.totalorder %s182, %s184
      %p188 = scmp.eq.s32.totalorder %s22, 0
      %p189 = por %p187, %p188
      %p190 = scmp.ne.s32.totalorder %s182, %s184
      %p191 = scmp.eq.s32.totalorder %s27, 1
      %p192 = por %p190, %p191
      %p193 = scmp.ne.s32.totalorder %s184, %s185
      %p194 = scmp.eq.s32.totalorder %s27, 0
      %p195 = por %p193, %p194
      %p196 = scmp.ne.s32.totalorder %s184, %s185
      %p197 = scmp.eq.s32.totalorder %s28, 1
      %p198 = por %p196, %p197
      %p200 = scmp.ne.s32.totalorder %s185, %s199
      %p201 = scmp.eq.s32.totalorder %s28, 0
      %p202 = por %p200, %p201
      %s204 = sadd.s32 %s203, 1
      %p207 = scmp.eq.s32.totalorder %s22, 1
      %p208 = scmp.ne.s32.totalorder %s203, %s205
      %p209 = scmp.eq.s32.totalorder %s22, 0
      %p210 = por %p208, %p209
      %p211 = scmp.ne.s32.totalorder %s203, %s205
      %p212 = scmp.eq.s32.totalorder %s27, 1
      %p213 = por %p211, %p212
      %p214 = scmp.ne.s32.totalorder %s205, %s206
      %p215 = scmp.eq.s32.totalorder %s27, 0
      %p216 = por %p214, %p215
      %p217 = scmp.ne.s32.totalorder %s205, %s206
      %p218 = scmp.eq.s32.totalorder %s28, 1
      %p219 = por %p217, %p218
      %p221 = scmp.ne.s32.totalorder %s206, %s220
      %p222 = scmp.eq.s32.totalorder %s28, 0
      %p223 = por %p221, %p222
      %s225 = sadd.s32 %s224, 1
      %p228 = scmp.eq.s32.totalorder %s22, 1
      %p229 = scmp.ne.s32.totalorder %s224, %s226
      %p230 = scmp.eq.s32.totalorder %s22, 0
      %p231 = por %p229, %p230
      %p232 = scmp.ne.s32.totalorder %s224, %s226
      %p233 = scmp.eq.s32.totalorder %s27, 1
      %p234 = por %p232, %p233
      %p235 = scmp.ne.s32.totalorder %s226, %s227
      %p236 = scmp.eq.s32.totalorder %s27, 0
      %p237 = por %p235, %p236
      %p238 = scmp.ne.s32.totalorder %s226, %s227
      %p239 = scmp.eq.s32.totalorder %s28, 1
      %p240 = por %p238, %p239
      %p242 = scmp.ne.s32.totalorder %s227, %s241
      %p243 = scmp.eq.s32.totalorder %s28, 0
      %p244 = por %p242, %p243
      %s246 = sadd.s32 %s245, 1
      %p249 = scmp.eq.s32.totalorder %s22, 1
      %p250 = scmp.ne.s32.totalorder %s245, %s247
      %p251 = scmp.eq.s32.totalorder %s22, 0
      %p252 = por %p250, %p251
      %p253 = scmp.ne.s32.totalorder %s245, %s247
      %p254 = scmp.eq.s32.totalorder %s27, 1
      %p255 = por %p253, %p254
      %p256 = scmp.ne.s32.totalorder %s247, %s248
      %p257 = scmp.eq.s32.totalorder %s27, 0
      %p258 = por %p256, %p257
      %p259 = scmp.ne.s32.totalorder %s247, %s248
      %p260 = scmp.eq.s32.totalorder %s28, 1
      %p261 = por %p259, %p260
      %p263 = scmp.ne.s32.totalorder %s248, %s262
      %p264 = scmp.eq.s32.totalorder %s28, 0
      %p265 = por %p263, %p264
      %s267 = sadd.s32 %s266, 1
      %p270 = scmp.eq.s32.totalorder %s22, 1
      %p271 = scmp.ne.s32.totalorder %s266, %s268
      %p272 = scmp.eq.s32.totalorder %s22, 0
      %p273 = por %p271, %p272
      %p274 = scmp.ne.s32.totalorder %s266, %s268
      %p275 = scmp.eq.s32.totalorder %s27, 1
      %p276 = por %p274, %p275
      %p277 = scmp.ne.s32.totalorder %s268, %s269
      %p278 = scmp.eq.s32.totalorder %s27, 0
      %p279 = por %p277, %p278
      %p280 = scmp.ne.s32.totalorder %s268, %s269
      %p281 = scmp.eq.s32.totalorder %s28, 1
      %p282 = por %p280, %p281
      %p284 = scmp.ne.s32.totalorder %s269, %s283
      %p285 = scmp.eq.s32.totalorder %s28, 0
      %p286 = por %p284, %p285
      %s288 = sadd.s32 %s287, 1
      %p291 = scmp.eq.s32.totalorder %s22, 1
      %p292 = scmp.ne.s32.totalorder %s287, %s289
      %p293 = scmp.eq.s32.totalorder %s22, 0
      %p294 = por %p292, %p293
      %p295 = scmp.ne.s32.totalorder %s287, %s289
      %p296 = scmp.eq.s32.totalorder %s27, 1
      %p297 = por %p295, %p296
      %p298 = scmp.ne.s32.totalorder %s289, %s290
      %p299 = scmp.eq.s32.totalorder %s27, 0
      %p300 = por %p298, %p299
      %p301 = scmp.ne.s32.totalorder %s289, %s290
      %p302 = scmp.eq.s32.totalorder %s28, 1
      %p303 = por %p301, %p302
      %p305 = scmp.ne.s32.totalorder %s290, %s304
      %p306 = scmp.eq.s32.totalorder %s28, 0
      %p307 = por %p305, %p306
      %s308 = ssub.s32 %s22, %s29
      %p309 = scmp.eq.s32.totalorder %s308, 0
      %s311 = sadd.s32 %s310, 1
      %s312 = scalar_select %p309, %s310, %s311
      %p315 = pneg %p309
      %p316 = scmp.eq.s32.totalorder %s22, 1
      %p317 = por %p315, %p316
      %p318 = scmp.ne.s32.totalorder %s310, %s313
      %p319 = scmp.eq.s32.totalorder %s22, 0
      %p320 = por %p318, %p319
      %p321 = scmp.ne.s32.totalorder %s310, %s313
      %p322 = scmp.eq.s32.totalorder %s27, 1
      %p323 = por %p321, %p322
      %p324 = scmp.ne.s32.totalorder %s313, %s314
      %p325 = scmp.eq.s32.totalorder %s27, 0
      %p326 = por %p324, %p325
      %p327 = scmp.ne.s32.totalorder %s313, %s314
      %p328 = scmp.eq.s32.totalorder %s28, 1
      %p329 = por %p327, %p328
      %p331 = scmp.ne.s32.totalorder %s314, %s330
      %p332 = scmp.eq.s32.totalorder %s28, 0
      %p333 = por %p331, %p332
      %p334 = scmp.le.s32.totalorder 1, %s22
      %p335 = scmp.lt.s32.totalorder %s22, 3
      %p336 = pnand %p334, %p335
      %p337 = pneg %p336
      // Predicated region
      $region9: #{mnist_cnn_forward.1} parent=5 // pred_check
        _
      $region10: #{mnist_cnn_forward.1} parent=5 // pred_check_branch
        %339 = sbr.rel (%p336) target = $region12
      $region11: #{mnist_cnn_forward.1} parent=5 // pred_region
        %s340 = ssub.s32 %s22, 1
        // Predicated region
        $region13: #{mnist_cnn_forward.1} parent=11 // pred_check
          %p341 = pneg %p69
        $region14: #{mnist_cnn_forward.1} parent=11 // pred_check_branch
          %343 = sbr.rel (%p341) target = $region16
        $region15: #{mnist_cnn_forward.1} parent=11 // pred_region
          _
        $region16: #{mnist_cnn_forward.1} parent=11 // pred_fallthru
          _
        // Predicated region
        $region17: #{mnist_cnn_forward.1} parent=11 // pred_check
          %p344 = pneg %p90
        $region18: #{mnist_cnn_forward.1} parent=11 // pred_check_branch
          %346 = sbr.rel (%p344) target = $region20
        $region19: #{mnist_cnn_forward.1} parent=11 // pred_region
          _
        $region20: #{mnist_cnn_forward.1} parent=11 // pred_fallthru
          _
        // Predicated region
        $region21: #{mnist_cnn_forward.1} parent=11 // pred_check
          %p347 = pneg %p111
        $region22: #{mnist_cnn_forward.1} parent=11 // pred_check_branch
          %349 = sbr.rel (%p347) target = $region24
        $region23: #{mnist_cnn_forward.1} parent=11 // pred_region
          _
        $region24: #{mnist_cnn_forward.1} parent=11 // pred_fallthru
          _
        // Predicated region
        $region25: #{mnist_cnn_forward.1} parent=11 // pred_check
          %p350 = pneg %p132
        $region26: #{mnist_cnn_forward.1} parent=11 // pred_check_branch
          %352 = sbr.rel (%p350) target = $region28
        $region27: #{mnist_cnn_forward.1} parent=11 // pred_region
          _
        $region28: #{mnist_cnn_forward.1} parent=11 // pred_fallthru
          _
        // Predicated region
        $region29: #{mnist_cnn_forward.1} parent=11 // pred_check
          %p353 = pneg %p153
        $region30: #{mnist_cnn_forward.1} parent=11 // pred_check_branch
          %355 = sbr.rel (%p353) target = $region32
        $region31: #{mnist_cnn_forward.1} parent=11 // pred_region
          _
        $region32: #{mnist_cnn_forward.1} parent=11 // pred_fallthru
          _
        // Predicated region
        $region33: #{mnist_cnn_forward.1} parent=11 // pred_check
          %p356 = pneg %p174
        $region34: #{mnist_cnn_forward.1} parent=11 // pred_check_branch
          %358 = sbr.rel (%p356) target = $region36
        $region35: #{mnist_cnn_forward.1} parent=11 // pred_region
          _
        $region36: #{mnist_cnn_forward.1} parent=11 // pred_fallthru
          _
        // Predicated region
        $region37: #{mnist_cnn_forward.1} parent=11 // pred_check
          %p359 = pneg %p195
        $region38: #{mnist_cnn_forward.1} parent=11 // pred_check_branch
          %361 = sbr.rel (%p359) target = $region40
        $region39: #{mnist_cnn_forward.1} parent=11 // pred_region
          _
        $region40: #{mnist_cnn_forward.1} parent=11 // pred_fallthru
          _
        // Predicated region
        $region41: #{mnist_cnn_forward.1} parent=11 // pred_check
          %p362 = pneg %p216
        $region42: #{mnist_cnn_forward.1} parent=11 // pred_check_branch
          %364 = sbr.rel (%p362) target = $region44
        $region43: #{mnist_cnn_forward.1} parent=11 // pred_region
          _
        $region44: #{mnist_cnn_forward.1} parent=11 // pred_fallthru
          _
        // Predicated region
        $region45: #{mnist_cnn_forward.1} parent=11 // pred_check
          %p365 = pneg %p237
        $region46: #{mnist_cnn_forward.1} parent=11 // pred_check_branch
          %367 = sbr.rel (%p365) target = $region48
        $region47: #{mnist_cnn_forward.1} parent=11 // pred_region
          _
        $region48: #{mnist_cnn_forward.1} parent=11 // pred_fallthru
          _
        // Predicated region
        $region49: #{mnist_cnn_forward.1} parent=11 // pred_check
          %p368 = pneg %p258
        $region50: #{mnist_cnn_forward.1} parent=11 // pred_check_branch
          %370 = sbr.rel (%p368) target = $region52
        $region51: #{mnist_cnn_forward.1} parent=11 // pred_region
          _
        $region52: #{mnist_cnn_forward.1} parent=11 // pred_fallthru
          _
        // Predicated region
        $region53: #{mnist_cnn_forward.1} parent=11 // pred_check
          %p371 = pneg %p279
        $region54: #{mnist_cnn_forward.1} parent=11 // pred_check_branch
          %373 = sbr.rel (%p371) target = $region56
        $region55: #{mnist_cnn_forward.1} parent=11 // pred_region
          _
        $region56: #{mnist_cnn_forward.1} parent=11 // pred_fallthru
          _
        // Predicated region
        $region57: #{mnist_cnn_forward.1} parent=11 // pred_check
          %p374 = pneg %p300
        $region58: #{mnist_cnn_forward.1} parent=11 // pred_check_branch
          %376 = sbr.rel (%p374) target = $region60
        $region59: #{mnist_cnn_forward.1} parent=11 // pred_region
          _
        $region60: #{mnist_cnn_forward.1} parent=11 // pred_fallthru
          _
      $region12: #{mnist_cnn_forward.1} parent=5 // pred_fallthru
        _
      %p377 = scmp.lt.s32.totalorder %s22, 2
      // Predicated region
      $region61: #{mnist_cnn_forward.1} parent=5 // pred_check
        %p378 = pneg %p377
      $region62: #{mnist_cnn_forward.1} parent=5 // pred_check_branch
        %380 = sbr.rel (%p378) target = $region64
      $region63: #{mnist_cnn_forward.1} parent=5 // pred_region
        // Predicated region
        $region65: #{mnist_cnn_forward.1} parent=63 // pred_check
          %p381 = pneg %p42
        $region66: #{mnist_cnn_forward.1} parent=63 // pred_check_branch
          %383 = sbr.rel (%p381) target = $region68
        $region67: #{mnist_cnn_forward.1} parent=63 // pred_region
          %s384 = smul.u32 2, %s22
          %p385 = scmp.lt.s32.totalorder %s384, 3
          %s386 = scalar_select %p385, %s384, 3
          %s387 = smul.addr %s386, 32
          %s388 = smul.addr %s387, 8
          %s389 = scalar_lea.vmem %s0, %s388
          %s390 = smul.u32 2, %s22
        $region68: #{mnist_cnn_forward.1} parent=63 // pred_fallthru
          _
      $region64: #{mnist_cnn_forward.1} parent=5 // pred_fallthru
        _
      %p391 = scmp.le.s32.totalorder 1, %s22
      %p392 = scmp.lt.s32.totalorder %s22, 3
      %p393 = pnand %p391, %p392
      %p394 = pneg %p393
      // Predicated region
      $region69: #{mnist_cnn_forward.1} parent=5 // pred_check
        _
      $region70: #{mnist_cnn_forward.1} parent=5 // pred_check_branch
        %396 = sbr.rel (%p393) target = $region72
      $region71: #{mnist_cnn_forward.1} parent=5 // pred_region
        %s397 = ssub.s32 %s22, 1
        %s398 = smul.u32 2, %s27
        %p399 = scmp.lt.s32.totalorder %s398, 3
        %s400 = scalar_select %p399, %s398, 3
        %s401 = smul.addr %s400, 32
        %s402 = smul.addr %s401, 8
        %s403 = scalar_lea.vmem %s0, %s402
        %p404 = pneg %p48
        %p405 = pneg %p45
        %p406 = pneg %p69
        %p407 = pneg %p66
        %p408 = pneg %p90
        %p409 = pneg %p87
        %p410 = pneg %p111
        %p411 = pneg %p108
        %p412 = pneg %p132
        %p413 = pneg %p129
        %p414 = pneg %p153
        %p415 = pneg %p150
        %p416 = pneg %p174
        %p417 = pneg %p171
        %p418 = pneg %p195
        %p419 = pneg %p192
        %p420 = pneg %p216
        %p421 = pneg %p213
        %p422 = pneg %p237
        %p423 = pneg %p234
        %p424 = pneg %p258
        %p425 = pneg %p255
        %p426 = pneg %p279
        %p427 = pneg %p276
        %p428 = pneg %p300
        %p429 = pneg %p297
        %p430 = pneg %p326
        %p431 = pneg %p323
        %s432 = sand.u32 %s313, 1
        %s433 = scalar_lea.sflag [#allocation6], %s432
        %s434 = sand.u32 %s313, 1
        %s435 = smul.addr %s434, 2
        %s436 = scalar_lea.vmem [#allocation5], %s435
        %s437 = smul.u32 2, %s27
        %p438 = scmp.lt.s32.totalorder %s437, 3
        %s439 = scalar_select %p438, %s437, 3
        %s440 = smul.addr %s439, 32
        %s441 = smul.addr %s440, 8
        %s442 = scalar_lea.vmem %s0, %s441
        %s443 = smul.u32 2, %s27
        %vm444 = vcmask 523264
        %445 = vst.msk [vmem:[#allocation2] sm:$0xff] %vm444, 0.0
        %vm446 = vcmask 516096
        %447 = vst.msk [vmem:[#allocation2 + $0x8] sm:$0x1] %vm446, 0.0
        %448 = vst.msk [vmem:[#allocation2 + $0x10] sm:$0xff] %vm444, 0.0
        %449 = vst.msk [vmem:[#allocation2 + $0x18] sm:$0x1] %vm446, 0.0
        %450 = vst.msk [vmem:[#allocation2 + $0x20] sm:$0xff] %vm444, 0.0
        %451 = vst.msk [vmem:[#allocation2 + $0x28] sm:$0x1] %vm446, 0.0
        %452 = vst.msk [vmem:[#allocation2 + $0x30] sm:$0xff] %vm444, 0.0
        %453 = vst.msk [vmem:[#allocation2 + $0x38] sm:$0x1] %vm446, 0.0
        %454 = vst.msk [vmem:[#allocation2 + $0x40] sm:$0xff] %vm444, 0.0
        %455 = vst.msk [vmem:[#allocation2 + $0x48] sm:$0x1] %vm446, 0.0
        %456 = vst.msk [vmem:[#allocation2 + $0x50] sm:$0xff] %vm444, 0.0
        %457 = vst.msk [vmem:[#allocation2 + $0x58] sm:$0x1] %vm446, 0.0
        %458 = vst.msk [vmem:[#allocation2 + $0x60] sm:$0xff] %vm444, 0.0
        %459 = vst.msk [vmem:[#allocation2 + $0x68] sm:$0x1] %vm446, 0.0
        %460 = vst.msk [vmem:[#allocation2 + $0x70] sm:$0xff] %vm444, 0.0
        %461 = vst.msk [vmem:[#allocation2 + $0x78] sm:$0x1] %vm446, 0.0
        %462 = vst.msk [vmem:[#allocation2 + $0x80] sm:$0xff] %vm444, 0.0
        %463 = vst.msk [vmem:[#allocation2 + $0x88] sm:$0x1] %vm446, 0.0
        %464 = vst.msk [vmem:[#allocation2 + $0x90] sm:$0xff] %vm444, 0.0
        %465 = vst.msk [vmem:[#allocation2 + $0x98] sm:$0x1] %vm446, 0.0
        %466 = vst.msk [vmem:[#allocation2 + $0xa0] sm:$0xff] %vm444, 0.0
        %467 = vst.msk [vmem:[#allocation2 + $0xa8] sm:$0x1] %vm446, 0.0
        %468 = vst.msk [vmem:[#allocation2 + $0xb0] sm:$0xff] %vm444, 0.0
        %469 = vst.msk [vmem:[#allocation2 + $0xb8] sm:$0x1] %vm446, 0.0
        %470 = vst.msk [vmem:[#allocation2 + $0xc0] sm:$0xff] %vm444, 0.0
        %471 = vst.msk [vmem:[#allocation2 + $0xc8] sm:$0x1] %vm446, 0.0
        %472 = vst.msk [vmem:[#allocation2 + $0xd0] sm:$0xff] %vm444, 0.0
        %473 = vst.msk [vmem:[#allocation2 + $0xd8] sm:$0x1] %vm446, 0.0
        %474 = vst.msk [vmem:[#allocation2 + $0xe0] sm:$0xff] %vm444, 0.0
        %475 = vst.msk [vmem:[#allocation2 + $0xe8] sm:$0x1] %vm446, 0.0
        %476 = vst.msk [vmem:[#allocation2 + $0xf0] sm:$0xff] %vm444, 0.0
        %477 = vst.msk [vmem:[#allocation2 + $0xf8] sm:$0x1] %vm446, 0.0
        %478 = vst.msk [vmem:[#allocation2 + $0x100] sm:$0xff] %vm444, 0.0
        %479 = vst.msk [vmem:[#allocation2 + $0x108] sm:$0x1] %vm446, 0.0
        %480 = vst.msk [vmem:[#allocation2 + $0x110] sm:$0xff] %vm444, 0.0
        %481 = vst.msk [vmem:[#allocation2 + $0x118] sm:$0x1] %vm446, 0.0
        %482 = vst.msk [vmem:[#allocation2 + $0x120] sm:$0xff] %vm444, 0.0
        %483 = vst.msk [vmem:[#allocation2 + $0x128] sm:$0x1] %vm446, 0.0
        %484 = vst.msk [vmem:[#allocation2 + $0x130] sm:$0xff] %vm444, 0.0
        %485 = vst.msk [vmem:[#allocation2 + $0x138] sm:$0x1] %vm446, 0.0
        %486 = vst.msk [vmem:[#allocation2 + $0x140] sm:$0xff] %vm444, 0.0
        %487 = vst.msk [vmem:[#allocation2 + $0x148] sm:$0x1] %vm446, 0.0
        %488 = vst.msk [vmem:[#allocation2 + $0x150] sm:$0xff] %vm444, 0.0
        %489 = vst.msk [vmem:[#allocation2 + $0x158] sm:$0x1] %vm446, 0.0
        %490 = vst.msk [vmem:[#allocation2 + $0x160] sm:$0xff] %vm444, 0.0
        %491 = vst.msk [vmem:[#allocation2 + $0x168] sm:$0x1] %vm446, 0.0
        %492 = vst.msk [vmem:[#allocation2 + $0x170] sm:$0xff] %vm444, 0.0
        %493 = vst.msk [vmem:[#allocation2 + $0x178] sm:$0x1] %vm446, 0.0
        %494 = vst.msk [vmem:[#allocation2 + $0x180] sm:$0xff] %vm444, 0.0
        %495 = vst.msk [vmem:[#allocation2 + $0x188] sm:$0x1] %vm446, 0.0
        %496 = vst.msk [vmem:[#allocation2 + $0x190] sm:$0xff] %vm444, 0.0
        %497 = vst.msk [vmem:[#allocation2 + $0x198] sm:$0x1] %vm446, 0.0
        %498 = vst.msk [vmem:[#allocation2 + $0x1a0] sm:$0xff] %vm444, 0.0
        %499 = vst.msk [vmem:[#allocation2 + $0x1a8] sm:$0x1] %vm446, 0.0
        %500 = vst.msk [vmem:[#allocation2 + $0x1b0] sm:$0xff] %vm444, 0.0
        %501 = vst.msk [vmem:[#allocation2 + $0x1b8] sm:$0x1] %vm446, 0.0
        %502 = vst.msk [vmem:[#allocation2 + $0x1c0] sm:$0xff] %vm444, 0.0
        %503 = vst.msk [vmem:[#allocation2 + $0x1c8] sm:$0x1] %vm446, 0.0
        %504 = vst.msk [vmem:[#allocation2 + $0x1d0] sm:$0xff] %vm444, 0.0
        %505 = vst.msk [vmem:[#allocation2 + $0x1d8] sm:$0x1] %vm446, 0.0
        %506 = vst.msk [vmem:[#allocation2 + $0x1e0] sm:$0xff] %vm444, 0.0
        %507 = vst.msk [vmem:[#allocation2 + $0x1e8] sm:$0x1] %vm446, 0.0
        %508 = vst.msk [vmem:[#allocation2 + $0x1f0] sm:$0xff] %vm444, 0.0
        %509 = vst.msk [vmem:[#allocation2 + $0x1f8] sm:$0x1] %vm446, 0.0
        %510 = vst.msk [vmem:[#allocation2 + $0x200] sm:$0xff] %vm444, 0.0
        %511 = vst.msk [vmem:[#allocation2 + $0x208] sm:$0x1] %vm446, 0.0
        %512 = vst.msk [vmem:[#allocation2 + $0x210] sm:$0xff] %vm444, 0.0
        %513 = vst.msk [vmem:[#allocation2 + $0x218] sm:$0x1] %vm446, 0.0
        %514 = vst.msk [vmem:[#allocation2 + $0x220] sm:$0xff] %vm444, 0.0
        %515 = vst.msk [vmem:[#allocation2 + $0x228] sm:$0x1] %vm446, 0.0
        %516 = vst.msk [vmem:[#allocation2 + $0x230] sm:$0xff] %vm444, 0.0
        %517 = vst.msk [vmem:[#allocation2 + $0x238] sm:$0x1] %vm446, 0.0
        %518 = vst.msk [vmem:[#allocation2 + $0x240] sm:$0xff] %vm444, 0.0
        %519 = vst.msk [vmem:[#allocation2 + $0x248] sm:$0x1] %vm446, 0.0
        %520 = vst.msk [vmem:[#allocation2 + $0x250] sm:$0xff] %vm444, 0.0
        %521 = vst.msk [vmem:[#allocation2 + $0x258] sm:$0x1] %vm446, 0.0
        %522 = vst.msk [vmem:[#allocation2 + $0x260] sm:$0xff] %vm444, 0.0
        %523 = vst.msk [vmem:[#allocation2 + $0x268] sm:$0x1] %vm446, 0.0
        %524 = vst.msk [vmem:[#allocation2 + $0x270] sm:$0xff] %vm444, 0.0
        %525 = vst.msk [vmem:[#allocation2 + $0x278] sm:$0x1] %vm446, 0.0
        %526 = vst.msk [vmem:[#allocation2 + $0x280] sm:$0xff] %vm444, 0.0
        %527 = vst.msk [vmem:[#allocation2 + $0x288] sm:$0x1] %vm446, 0.0
        %528 = vst.msk [vmem:[#allocation2 + $0x290] sm:$0xff] %vm444, 0.0
        %529 = vst.msk [vmem:[#allocation2 + $0x298] sm:$0x1] %vm446, 0.0
        %530 = vst.msk [vmem:[#allocation2 + $0x2a0] sm:$0xff] %vm444, 0.0
        %531 = vst.msk [vmem:[#allocation2 + $0x2a8] sm:$0x1] %vm446, 0.0
        %532 = vst.msk [vmem:[#allocation2 + $0x2b0] sm:$0xff] %vm444, 0.0
        %533 = vst.msk [vmem:[#allocation2 + $0x2b8] sm:$0x1] %vm446, 0.0
        %534 = vst.msk [vmem:[#allocation2 + $0x2c0] sm:$0xff] %vm444, 0.0
        %535 = vst.msk [vmem:[#allocation2 + $0x2c8] sm:$0x1] %vm446, 0.0
        %536 = vst.msk [vmem:[#allocation2 + $0x2d0] sm:$0xff] %vm444, 0.0
        %537 = vst.msk [vmem:[#allocation2 + $0x2d8] sm:$0x1] %vm446, 0.0
        %538 = vst.msk [vmem:[#allocation2 + $0x2e0] sm:$0xff] %vm444, 0.0
        %539 = vst.msk [vmem:[#allocation2 + $0x2e8] sm:$0x1] %vm446, 0.0
        %540 = vst.msk [vmem:[#allocation2 + $0x2f0] sm:$0xff] %vm444, 0.0
        %541 = vst.msk [vmem:[#allocation2 + $0x2f8] sm:$0x1] %vm446, 0.0
        %542 = vst.msk [vmem:[#allocation2 + $0x300] sm:$0xff] %vm444, 0.0
        %543 = vst.msk [vmem:[#allocation2 + $0x308] sm:$0x1] %vm446, 0.0
        %544 = vst.msk [vmem:[#allocation2 + $0x310] sm:$0xff] %vm444, 0.0
        %545 = vst.msk [vmem:[#allocation2 + $0x318] sm:$0x1] %vm446, 0.0
        %546 = vst.msk [vmem:[#allocation2 + $0x320] sm:$0xff] %vm444, 0.0
        %547 = vst.msk [vmem:[#allocation2 + $0x328] sm:$0x1] %vm446, 0.0
        %548 = vst.msk [vmem:[#allocation2 + $0x330] sm:$0xff] %vm444, 0.0
        %549 = vst.msk [vmem:[#allocation2 + $0x338] sm:$0x1] %vm446, 0.0
        %550 = vst.msk [vmem:[#allocation2 + $0x340] sm:$0xff] %vm444, 0.0
        %551 = vst.msk [vmem:[#allocation2 + $0x348] sm:$0x1] %vm446, 0.0
        %552 = vst.msk [vmem:[#allocation2 + $0x350] sm:$0xff] %vm444, 0.0
        %553 = vst.msk [vmem:[#allocation2 + $0x358] sm:$0x1] %vm446, 0.0
        %554 = vst.msk [vmem:[#allocation2 + $0x360] sm:$0xff] %vm444, 0.0
        %555 = vst.msk [vmem:[#allocation2 + $0x368] sm:$0x1] %vm446, 0.0
        %556 = vst.msk [vmem:[#allocation2 + $0x370] sm:$0xff] %vm444, 0.0
        %557 = vst.msk [vmem:[#allocation2 + $0x378] sm:$0x1] %vm446, 0.0
        %558 = vst.msk [vmem:[#allocation2 + $0x380] sm:$0xff] %vm444, 0.0
        %559 = vst.msk [vmem:[#allocation2 + $0x388] sm:$0x1] %vm446, 0.0
        %560 = vst.msk [vmem:[#allocation2 + $0x390] sm:$0xff] %vm444, 0.0
        %561 = vst.msk [vmem:[#allocation2 + $0x398] sm:$0x1] %vm446, 0.0
        %562 = vst.msk [vmem:[#allocation2 + $0x3a0] sm:$0xff] %vm444, 0.0
        %563 = vst.msk [vmem:[#allocation2 + $0x3a8] sm:$0x1] %vm446, 0.0
        %564 = vst.msk [vmem:[#allocation2 + $0x3b0] sm:$0xff] %vm444, 0.0
        %565 = vst.msk [vmem:[#allocation2 + $0x3b8] sm:$0x1] %vm446, 0.0
        %566 = vst.msk [vmem:[#allocation2 + $0x3c0] sm:$0xff] %vm444, 0.0
        %567 = vst.msk [vmem:[#allocation2 + $0x3c8] sm:$0x1] %vm446, 0.0
        %568 = vst.msk [vmem:[#allocation2 + $0x3d0] sm:$0xff] %vm444, 0.0
        %569 = vst.msk [vmem:[#allocation2 + $0x3d8] sm:$0x1] %vm446, 0.0
        %570 = vst.msk [vmem:[#allocation2 + $0x3e0] sm:$0xff] %vm444, 0.0
        %571 = vst.msk [vmem:[#allocation2 + $0x3e8] sm:$0x1] %vm446, 0.0
        %572 = vst.msk [vmem:[#allocation2 + $0x3f0] sm:$0xff] %vm444, 0.0
        %573 = vst.msk [vmem:[#allocation2 + $0x3f8] sm:$0x1] %vm446, 0.0
        %574 = vst.msk [vmem:[#allocation2 + $0x400] sm:$0xff] %vm444, 0.0
        %575 = vst.msk [vmem:[#allocation2 + $0x408] sm:$0x1] %vm446, 0.0
        %576 = vst.msk [vmem:[#allocation2 + $0x410] sm:$0xff] %vm444, 0.0
        %577 = vst.msk [vmem:[#allocation2 + $0x418] sm:$0x1] %vm446, 0.0
        %578 = vst.msk [vmem:[#allocation2 + $0x420] sm:$0xff] %vm444, 0.0
        %579 = vst.msk [vmem:[#allocation2 + $0x428] sm:$0x1] %vm446, 0.0
        %580 = vst.msk [vmem:[#allocation2 + $0x430] sm:$0xff] %vm444, 0.0
        %581 = vst.msk [vmem:[#allocation2 + $0x438] sm:$0x1] %vm446, 0.0
        %582 = vst.msk [vmem:[#allocation2 + $0x440] sm:$0xff] %vm444, 0.0
        %583 = vst.msk [vmem:[#allocation2 + $0x448] sm:$0x1] %vm446, 0.0
        %584 = vst.msk [vmem:[#allocation2 + $0x450] sm:$0xff] %vm444, 0.0
        %585 = vst.msk [vmem:[#allocation2 + $0x458] sm:$0x1] %vm446, 0.0
        %586 = vst.msk [vmem:[#allocation2 + $0x460] sm:$0xff] %vm444, 0.0
        %587 = vst.msk [vmem:[#allocation2 + $0x468] sm:$0x1] %vm446, 0.0
        %588 = vst.msk [vmem:[#allocation2 + $0x470] sm:$0xff] %vm444, 0.0
        %589 = vst.msk [vmem:[#allocation2 + $0x478] sm:$0x1] %vm446, 0.0
        %590 = vst [vmem:[#allocation3] sm:$0xff] 0.0
        %591 = vst [vmem:[#allocation3 + $0x8] sm:$0x3] 0.0
        %592 = vst [vmem:[#allocation3 + $0x10] sm:$0xff] 0.0
        %593 = vst [vmem:[#allocation3 + $0x18] sm:$0x3] 0.0
        %594 = vst [vmem:[#allocation3 + $0x20] sm:$0xff] 0.0
        %595 = vst [vmem:[#allocation3 + $0x28] sm:$0x3] 0.0
        %596 = vst [vmem:[#allocation3 + $0x30] sm:$0xff] 0.0
        %597 = vst [vmem:[#allocation3 + $0x38] sm:$0x3] 0.0
        %598 = vst [vmem:[#allocation3 + $0x40] sm:$0xff] 0.0
        %599 = vst [vmem:[#allocation3 + $0x48] sm:$0x3] 0.0
        %600 = vst [vmem:[#allocation3 + $0x50] sm:$0xff] 0.0
        %601 = vst [vmem:[#allocation3 + $0x58] sm:$0x3] 0.0
        %602 = vst [vmem:[#allocation3 + $0x60] sm:$0xff] 0.0
        %603 = vst [vmem:[#allocation3 + $0x68] sm:$0x3] 0.0
        %604 = vst [vmem:[#allocation3 + $0x70] sm:$0xff] 0.0
        %605 = vst [vmem:[#allocation3 + $0x78] sm:$0x3] 0.0
        %606 = vst [vmem:[#allocation3 + $0x80] sm:$0xff] 0.0
        %607 = vst [vmem:[#allocation3 + $0x88] sm:$0x3] 0.0
        %608 = vst [vmem:[#allocation3 + $0x90] sm:$0xff] 0.0
        %609 = vst [vmem:[#allocation3 + $0x98] sm:$0x3] 0.0
        %610 = vst [vmem:[#allocation3 + $0xa0] sm:$0xff] 0.0
        %611 = vst [vmem:[#allocation3 + $0xa8] sm:$0x3] 0.0
        %612 = vst [vmem:[#allocation3 + $0xb0] sm:$0xff] 0.0
        %613 = vst [vmem:[#allocation3 + $0xb8] sm:$0x3] 0.0
        %614 = vst [vmem:[#allocation3 + $0xc0] sm:$0xff] 0.0
        %615 = vst [vmem:[#allocation3 + $0xc8] sm:$0x3] 0.0
        %616 = vst [vmem:[#allocation3 + $0xd0] sm:$0xff] 0.0
        %617 = vst [vmem:[#allocation3 + $0xd8] sm:$0x3] 0.0
        %618 = vst [vmem:[#allocation3 + $0xe0] sm:$0xff] 0.0
        %619 = vst [vmem:[#allocation3 + $0xe8] sm:$0x3] 0.0
        %620 = vst [vmem:[#allocation3 + $0xf0] sm:$0xff] 0.0
        %621 = vst [vmem:[#allocation3 + $0xf8] sm:$0x3] 0.0
        %622 = vst [vmem:[#allocation3 + $0x100] sm:$0xff] 0.0
        %623 = vst [vmem:[#allocation3 + $0x108] sm:$0x3] 0.0
        %624 = vst [vmem:[#allocation3 + $0x110] sm:$0xff] 0.0
        %625 = vst [vmem:[#allocation3 + $0x118] sm:$0x3] 0.0
        %626 = vst [vmem:[#allocation3 + $0x120] sm:$0xff] 0.0
        %627 = vst [vmem:[#allocation3 + $0x128] sm:$0x3] 0.0
        %628 = vst [vmem:[#allocation3 + $0x130] sm:$0xff] 0.0
        %629 = vst [vmem:[#allocation3 + $0x138] sm:$0x3] 0.0
        %630 = vst [vmem:[#allocation4] sm:$0xff] 0.0
        %631 = vst [vmem:[#allocation4 + $0x8] sm:$0x3] 0.0
        %632 = vst [vmem:[#allocation4 + $0x10] sm:$0xff] 0.0
        %633 = vst [vmem:[#allocation4 + $0x18] sm:$0x3] 0.0
        %634 = vst [vmem:[#allocation4 + $0x20] sm:$0xff] 0.0
        %635 = vst [vmem:[#allocation4 + $0x28] sm:$0x3] 0.0
        %636 = vst [vmem:[#allocation4 + $0x30] sm:$0xff] 0.0
        %637 = vst [vmem:[#allocation4 + $0x38] sm:$0x3] 0.0
        %638 = vst [vmem:[#allocation4 + $0x40] sm:$0xff] 0.0
        %639 = vst [vmem:[#allocation4 + $0x48] sm:$0x3] 0.0
        %640 = vst [vmem:[#allocation4 + $0x50] sm:$0xff] 0.0
        %641 = vst [vmem:[#allocation4 + $0x58] sm:$0x3] 0.0
        %642 = vst [vmem:[#allocation4 + $0x60] sm:$0xff] 0.0
        %643 = vst [vmem:[#allocation4 + $0x68] sm:$0x3] 0.0
        %644 = vst [vmem:[#allocation4 + $0x70] sm:$0xff] 0.0
        %645 = vst [vmem:[#allocation4 + $0x78] sm:$0x3] 0.0
        %646 = vst [vmem:[#allocation4 + $0x80] sm:$0xff] 0.0
        %647 = vst [vmem:[#allocation4 + $0x88] sm:$0x3] 0.0
        %648 = vst [vmem:[#allocation4 + $0x90] sm:$0xff] 0.0
        %649 = vst [vmem:[#allocation4 + $0x98] sm:$0x3] 0.0
        %650 = vst [vmem:[#allocation4 + $0xa0] sm:$0xff] 0.0
        %651 = vst [vmem:[#allocation4 + $0xa8] sm:$0x3] 0.0
        %652 = vst [vmem:[#allocation4 + $0xb0] sm:$0xff] 0.0
        %653 = vst [vmem:[#allocation4 + $0xb8] sm:$0x3] 0.0
        %654 = vst [vmem:[#allocation4 + $0xc0] sm:$0xff] 0.0
        %655 = vst [vmem:[#allocation4 + $0xc8] sm:$0x3] 0.0
        %656 = vst [vmem:[#allocation4 + $0xd0] sm:$0xff] 0.0
        %657 = vst [vmem:[#allocation4 + $0xd8] sm:$0x3] 0.0
        %658 = vst [vmem:[#allocation4 + $0xe0] sm:$0xff] 0.0
        %659 = vst [vmem:[#allocation4 + $0xe8] sm:$0x3] 0.0
        %660 = vst [vmem:[#allocation4 + $0xf0] sm:$0xff] 0.0
        %661 = vst [vmem:[#allocation4 + $0xf8] sm:$0x3] 0.0
        %662 = vst [vmem:[#allocation4 + $0x100] sm:$0xff] 0.0
        %663 = vst [vmem:[#allocation4 + $0x108] sm:$0x3] 0.0
        %664 = vst [vmem:[#allocation4 + $0x110] sm:$0xff] 0.0
        %665 = vst [vmem:[#allocation4 + $0x118] sm:$0x3] 0.0
        %666 = vst [vmem:[#allocation4 + $0x120] sm:$0xff] 0.0
        %667 = vst [vmem:[#allocation4 + $0x128] sm:$0x3] 0.0
        %668 = vst [vmem:[#allocation4 + $0x130] sm:$0xff] 0.0
        %669 = vst [vmem:[#allocation4 + $0x138] sm:$0x3] 0.0
        %v670 = vld [vmem:[%s9] sm:$0xff]
        %v671 = vld [vmem:[%s9 + $0x8] sm:$0xff]
        %v672 = vld [vmem:[%s9 + $0x10] sm:$0xff]
        %v673 = vld [vmem:[%s9 + $0x18] sm:$0xff]
        %v674 = vld [vmem:[%s9 + $0x20] sm:$0xff]
        %v675 = vld [vmem:[%s9 + $0x28] sm:$0xff]
        %v676 = vld [vmem:[%s9 + $0x30] sm:$0xff]
        %v677 = vld [vmem:[%s9 + $0x38] sm:$0xff]
        %v678 = vld [vmem:[%s10] sm:$0xff]
        %v679 = vld [vmem:[%s11] sm:$0xff]
        %v680 = vld [vmem:[%s11 + $0x8] sm:$0xff]
        %v681 = vld [vmem:[%s11 + $0x10] sm:$0xff]
        %v682 = vld [vmem:[%s11 + $0x18] sm:$0xff]
        %v683 = vld [vmem:[%s11 + $0x20] sm:$0xff]
        %v684 = vld [vmem:[%s11 + $0x28] sm:$0xff]
        %v685 = vld [vmem:[%s11 + $0x30] sm:$0xff]
        %v686 = vld [vmem:[%s11 + $0x38] sm:$0xff]
        %v687 = vld [vmem:[%s11 + $0x40] sm:$0xff]
        %v688 = vld [vmem:[%s11 + $0x48] sm:$0xff]
        %v689 = vld [vmem:[%s11 + $0x50] sm:$0xff]
        %v690 = vld [vmem:[%s11 + $0x58] sm:$0xff]
        %v691 = vld [vmem:[%s11 + $0x60] sm:$0xff]
        %v692 = vld [vmem:[%s11 + $0x68] sm:$0xff]
        %v693 = vld [vmem:[%s11 + $0x70] sm:$0xff]
        %v694 = vld [vmem:[%s11 + $0x78] sm:$0xff]
        %v695 = vld [vmem:[%s12] sm:$0xff]
        %v696 = vld [vmem:[%s442] sm:$0xff]
        %v697 = vld [vmem:[%s442 + $0x8] sm:$0xff]
        %v698 = vld [vmem:[%s442 + $0x10] sm:$0xff]
        %v699 = vld [vmem:[%s442 + $0x18] sm:$0xff]
        %v700 = vld [vmem:[%s442 + $0x20] sm:$0xff]
        %v701 = vld [vmem:[%s442 + $0x28] sm:$0xff]
        %v702 = vld [vmem:[%s442 + $0x30] sm:$0xff]
        %v703 = vld [vmem:[%s442 + $0x38] sm:$0xff]
        %v704 = vld [vmem:[%s442 + $0x40] sm:$0xff]
        %v705 = vld [vmem:[%s442 + $0x48] sm:$0xff]
        %v706 = vld [vmem:[%s442 + $0x50] sm:$0xff]
        %v707 = vld [vmem:[%s442 + $0x58] sm:$0xff]
        %v708 = vld [vmem:[%s442 + $0x60] sm:$0xff]
        %v709 = vld [vmem:[%s442 + $0x68] sm:$0xff]
        %v710 = vld [vmem:[%s442 + $0x70] sm:$0xff]
        %v711 = vld [vmem:[%s442 + $0x78] sm:$0xff]
        %v712 = vld [vmem:[%s442 + $0x80] sm:$0xff]
        %v713 = vld [vmem:[%s442 + $0x88] sm:$0xff]
        %v714 = vld [vmem:[%s442 + $0x90] sm:$0xff]
        %v715 = vld [vmem:[%s442 + $0x98] sm:$0xff]
        %v716 = vld [vmem:[%s442 + $0xa0] sm:$0xff]
        %v717 = vld [vmem:[%s442 + $0xa8] sm:$0xff]
        %v718 = vld [vmem:[%s442 + $0xb0] sm:$0xff]
        %v719 = vld [vmem:[%s442 + $0xb8] sm:$0xff]
        %v720 = vld [vmem:[%s442 + $0xc0] sm:$0xff]
        %v721 = vld [vmem:[%s442 + $0xc8] sm:$0xff]
        %v722 = vld [vmem:[%s442 + $0xd0] sm:$0xff]
        %v723 = vld [vmem:[%s442 + $0xd8] sm:$0xff]
        %v724 = vld [vmem:[%s442 + $0xe0] sm:$0xff]
        %v725 = vld [vmem:[%s442 + $0xe8] sm:$0xff]
        %v726 = vld [vmem:[%s442 + $0xf0] sm:$0xff]
        %v727 = vld [vmem:[%s442 + $0xf8] sm:$0xff]
        %v728 = vld [vmem:[%s442 + $0x100] sm:$0xff]
        %v729 = vld [vmem:[%s442 + $0x108] sm:$0xff]
        %v730 = vld [vmem:[%s442 + $0x110] sm:$0xff]
        %v731 = vld [vmem:[%s442 + $0x118] sm:$0xff]
        %v732 = vld [vmem:[%s442 + $0x120] sm:$0xff]
        %v733 = vld [vmem:[%s442 + $0x128] sm:$0xff]
        %v734 = vld [vmem:[%s442 + $0x130] sm:$0xff]
        %v735 = vld [vmem:[%s442 + $0x138] sm:$0xff]
        %v736 = vld [vmem:[%s442 + $0x140] sm:$0xff]
        %v737 = vld [vmem:[%s442 + $0x148] sm:$0xff]
        %v738 = vld [vmem:[%s442 + $0x150] sm:$0xff]
        %v739 = vld [vmem:[%s442 + $0x158] sm:$0xff]
        %v740 = vld [vmem:[%s442 + $0x160] sm:$0xff]
        %v741 = vld [vmem:[%s442 + $0x168] sm:$0xff]
        %v742 = vld [vmem:[%s442 + $0x170] sm:$0xff]
        %v743 = vld [vmem:[%s442 + $0x178] sm:$0xff]
        %v744 = vld [vmem:[%s442 + $0x180] sm:$0xff]
        %v745 = vld [vmem:[%s442 + $0x188] sm:$0xff]
        %v746 = vld [vmem:[%s442 + $0x190] sm:$0xff]
        %v747 = vld [vmem:[%s442 + $0x198] sm:$0xff]
        %v748 = vld [vmem:[%s442 + $0x1a0] sm:$0xff]
        %v749 = vld [vmem:[%s442 + $0x1a8] sm:$0xff]
        %v750 = vld [vmem:[%s442 + $0x1b0] sm:$0xff]
        %v751 = vld [vmem:[%s442 + $0x1b8] sm:$0xff]
        %v752 = vld [vmem:[%s442 + $0x1c0] sm:$0xff]
        %v753 = vld [vmem:[%s442 + $0x1c8] sm:$0xff]
        %v754 = vld [vmem:[%s442 + $0x1d0] sm:$0xff]
        %v755 = vld [vmem:[%s442 + $0x1d8] sm:$0xff]
        %v756 = vld [vmem:[%s442 + $0x1e0] sm:$0xff]
        %v757 = vld [vmem:[%s442 + $0x1e8] sm:$0xff]
        %v758 = vld [vmem:[%s442 + $0x1f0] sm:$0xff]
        %v759 = vld [vmem:[%s442 + $0x1f8] sm:$0xff]
        %v760 = vld [vmem:[%s1] sm:$0xff]
        %v761 = vld [vmem:[%s1 + $0x8] sm:$0xff]
        %v762 = vld [vmem:[%s1 + $0x10] sm:$0xff]
        %v763 = vld [vmem:[%s1 + $0x18] sm:$0x7]
        %v764 = vld [vmem:[%s2] sm:$0x1]
        %v765 = vlaneseq
        %v766 = vshrl.u32 %v765, 7
        %v767 = vsub.s32 0, %v766
        %v768 = vrot.slane %v764, %v767
        %vm769 = vcmask 220160
        %v771 = vsel %vm769, %v696, 0
        %v774 = vsel %vm769, %v697, 0
        %v777 = vsel %vm769, %v698, 0
        %v780 = vsel %vm769, %v699, 0
        %v783 = vsel %vm769, %v700, 0
        %v786 = vsel %vm769, %v701, 0
        %v789 = vsel %vm769, %v702, 0
        %v792 = vsel %vm769, %v703, 0
        %v795 = vsel %vm769, %v704, 0
        %v798 = vsel %vm769, %v705, 0
        %v801 = vsel %vm769, %v706, 0
        %v804 = vsel %vm769, %v707, 0
        %v807 = vsel %vm769, %v708, 0
        %v810 = vsel %vm769, %v709, 0
        %v813 = vsel %vm769, %v710, 0
        %v816 = vsel %vm769, %v711, 0
        %v819 = vsel %vm769, %v712, 0
        %v822 = vsel %vm769, %v713, 0
        %v825 = vsel %vm769, %v714, 0
        %v828 = vsel %vm769, %v715, 0
        %v831 = vsel %vm769, %v716, 0
        %v834 = vsel %vm769, %v717, 0
        %v837 = vsel %vm769, %v718, 0
        %v840 = vsel %vm769, %v719, 0
        %v843 = vsel %vm769, %v720, 0
        %v846 = vsel %vm769, %v721, 0
        %v849 = vsel %vm769, %v722, 0
        %v852 = vsel %vm769, %v723, 0
        %v855 = vsel %vm769, %v724, 0
        %v858 = vsel %vm769, %v725, 0
        %v861 = vsel %vm769, %v726, 0
        %v864 = vsel %vm769, %v727, 0
        %v867 = vsel %vm769, %v728, 0
        %v870 = vsel %vm769, %v729, 0
        %v873 = vsel %vm769, %v730, 0
        %v876 = vsel %vm769, %v731, 0
        %v879 = vsel %vm769, %v732, 0
        %v882 = vsel %vm769, %v733, 0
        %v885 = vsel %vm769, %v734, 0
        %v888 = vsel %vm769, %v735, 0
        %v891 = vsel %vm769, %v736, 0
        %v894 = vsel %vm769, %v737, 0
        %v897 = vsel %vm769, %v738, 0
        %v900 = vsel %vm769, %v739, 0
        %v903 = vsel %vm769, %v740, 0
        %v906 = vsel %vm769, %v741, 0
        %v909 = vsel %vm769, %v742, 0
        %v912 = vsel %vm769, %v743, 0
        %v915 = vsel %vm769, %v744, 0
        %v918 = vsel %vm769, %v745, 0
        %v921 = vsel %vm769, %v746, 0
        %v924 = vsel %vm769, %v747, 0
        %v927 = vsel %vm769, %v748, 0
        %v930 = vsel %vm769, %v749, 0
        %v933 = vsel %vm769, %v750, 0
        %v936 = vsel %vm769, %v751, 0
        %v939 = vsel %vm769, %v752, 0
        %v942 = vsel %vm769, %v753, 0
        %v945 = vsel %vm769, %v754, 0
        %v948 = vsel %vm769, %v755, 0
        %v951 = vsel %vm769, %v756, 0
        %v954 = vsel %vm769, %v757, 0
        %v957 = vsel %vm769, %v758, 0
        %v960 = vsel %vm769, %v759, 0
        %vm962 = vcmask 1042432
        %v964 = vsel %vm962, %v763, 0
        %966 = vmatprep.subr.mxu0 0.0
        %967 = vmatpush1.msra.mxu0 %v760
        %968 = vmatprep.subr.mxu0 0.0
        %969 = vmatpush1.msra.mxu0 %v761
        %970 = vmatprep.subr.mxu0 0.0
        %971 = vmatpush1.msra.mxu0 %v762
        %972 = vmatprep.subr.mxu0 0.0
        %973 = vmatpush1.msra.mxu0 %v964
        %974 = vmatprep.subr.mxu0 0.0
        %975 = vmatpush1.msra.mxu0 0.0
        %976 = vmatprep.subr.mxu0 0.0
        %977 = vmatpush1.msra.mxu0 0.0
        %978 = vmatprep.subr.mxu0 0.0
        %979 = vmatpush1.msra.mxu0 0.0
        %980 = vmatprep.subr.mxu0 0.0
        %981 = vmatpush1.msra.mxu0 0.0
        %982 = vmatprep.subr.mxu0 0.0
        %983 = vmatpush1.msra.mxu0 0.0
        %984 = vmatprep.subr.mxu0 0.0
        %985 = vmatpush1.msra.mxu0 0.0
        %986 = vmatprep.subr.mxu0 0.0
        %987 = vmatpush1.msra.mxu0 0.0
        %988 = vmatprep.subr.mxu0 0.0
        %989 = vmatpush1.msra.mxu0 0.0
        %990 = vmatprep.subr.mxu0 0.0
        %991 = vmatpush1.msra.mxu0 0.0
        %992 = vmatprep.subr.mxu0 0.0
        %993 = vmatpush1.msra.mxu0 0.0
        %994 = vmatprep.subr.mxu0 0.0
        %995 = vmatpush1.msra.mxu0 0.0
        %996 = vmatprep.subr.mxu0 0.0
        %997 = vmatpush1.msra.mxu0 0.0
        %998 = vmatprep.subr.mxu0 0.0
        %999 = vmatpush1.msra.mxu0 0.0
        %1000 = vmatprep.subr.mxu0 0.0
        %1001 = vmatpush1.msra.mxu0 0.0
        %1002 = vmatprep.subr.mxu0 0.0
        %1003 = vmatpush1.msra.mxu0 0.0
        %1004 = vmatprep.subr.mxu0 0.0
        %1005 = vmatpush1.msra.mxu0 0.0
        %1006 = vmatprep.subr.mxu0 0.0
        %1007 = vmatpush1.msra.mxu0 0.0
        %1008 = vmatprep.subr.mxu0 0.0
        %1009 = vmatpush1.msra.mxu0 0.0
        %1010 = vmatprep.subr.mxu0 0.0
        %1011 = vmatpush1.msra.mxu0 0.0
        %1012 = vmatprep.subr.mxu0 0.0
        %1013 = vmatpush1.msra.mxu0 0.0
        %1014 = vmatprep.subr.mxu0 0.0
        %1015 = vmatpush1.msra.mxu0 0.0
        %1016 = vmatprep.subr.mxu0 0.0
        %1017 = vmatpush1.msra.mxu0 0.0
        %1018 = vmatprep.subr.mxu0 0.0
        %1019 = vmatpush1.msra.mxu0 0.0
        %1020 = vmatprep.subr.mxu0 0.0
        %1021 = vmatpush1.msra.mxu0 0.0
        %1022 = vmatprep.subr.mxu0 0.0
        %1023 = vmatpush1.msra.mxu0 0.0
        %1024 = vmatprep.subr.mxu0 0.0
        %1025 = vmatpush1.msra.mxu0 0.0
        %1026 = vmatprep.subr.mxu0 0.0
        %1027 = vmatpush1.msra.mxu0 0.0
        %1028 = vmatprep.subr.mxu0 0.0
        %1029 = vmatpush1.msra.mxu0 0.0
        %1030 = vmatprep.mubr.f32.mxu0 0.0
        %1031 = vmatmul.mubr.f32.gmra.mrb[0].mxu0 %v771
        %v1032 = vpop.f32.mrb[0].mxu0
        %v1033 = vadd.f32 %v768, %v1032
        %v1034 = vpop.f32.mrb[0].mxu0
        %1035 = vmatprep.mubr.f32.mxu0 0.0
        %1036 = vmatmul.mubr.f32.gmra.mrb[0].mxu0 %v774
        %v1037 = vpop.f32.mrb[0].mxu0
        %v1038 = vadd.f32 %v768, %v1037
        %v1039 = vpop.f32.mrb[0].mxu0
        %1040 = vmatprep.mubr.f32.mxu0 0.0
        %1041 = vmatmul.mubr.f32.gmra.mrb[0].mxu0 %v777
        %v1042 = vpop.f32.mrb[0].mxu0
        %v1043 = vadd.f32 %v768, %v1042
        %v1044 = vpop.f32.mrb[0].mxu0
        %1045 = vmatprep.mubr.f32.mxu0 0.0
        %1046 = vmatmul.mubr.f32.gmra.mrb[0].mxu0 %v780
        %v1047 = vpop.f32.mrb[0].mxu0
        %v1048 = vadd.f32 %v768, %v1047
        %v1049 = vpop.f32.mrb[0].mxu0
        %1050 = vmatprep.mubr.f32.mxu0 0.0
        %1051 = vmatmul.mubr.f32.gmra.mrb[0].mxu0 %v783
        %v1052 = vpop.f32.mrb[0].mxu0
        %v1053 = vadd.f32 %v768, %v1052
        %v1054 = vpop.f32.mrb[0].mxu0
        %1055 = vmatprep.mubr.f32.mxu0 0.0
        %1056 = vmatmul.mubr.f32.gmra.mrb[0].mxu0 %v786
        %v1057 = vpop.f32.mrb[0].mxu0
        %v1058 = vadd.f32 %v768, %v1057
        %v1059 = vpop.f32.mrb[0].mxu0
        %1060 = vmatprep.mubr.f32.mxu0 0.0
        %1061 = vmatmul.mubr.f32.gmra.mrb[0].mxu0 %v789
        %v1062 = vpop.f32.mrb[0].mxu0
        %v1063 = vadd.f32 %v768, %v1062
        %v1064 = vpop.f32.mrb[0].mxu0
        %1065 = vmatprep.mubr.f32.mxu0 0.0
        %1066 = vmatmul.mubr.f32.gmra.mrb[0].mxu0 %v792
        %v1067 = vpop.f32.mrb[0].mxu0
        %v1068 = vadd.f32 %v768, %v1067
        %v1069 = vpop.f32.mrb[0].mxu0
        %1070 = vmatprep.mubr.f32.mxu0 0.0
        %1071 = vmatmul.mubr.f32.gmra.mrb[0].mxu0 %v795
        %v1072 = vpop.f32.mrb[0].mxu0
        %v1073 = vadd.f32 %v768, %v1072
        %v1074 = vpop.f32.mrb[0].mxu0
        %1075 = vmatprep.mubr.f32.mxu0 0.0
        %1076 = vmatmul.mubr.f32.gmra.mrb[0].mxu0 %v798
        %v1077 = vpop.f32.mrb[0].mxu0
        %v1078 = vadd.f32 %v768, %v1077
        %v1079 = vpop.f32.mrb[0].mxu0
        %1080 = vmatprep.mubr.f32.mxu0 0.0
        %1081 = vmatmul.mubr.f32.gmra.mrb[0].mxu0 %v801
        %v1082 = vpop.f32.mrb[0].mxu0
        %v1083 = vadd.f32 %v768, %v1082
        %v1084 = vpop.f32.mrb[0].mxu0
        %1085 = vmatprep.mubr.f32.mxu0 0.0
        %1086 = vmatmul.mubr.f32.gmra.mrb[0].mxu0 %v804
        %v1087 = vpop.f32.mrb[0].mxu0
        %v1088 = vadd.f32 %v768, %v1087
        %v1089 = vpop.f32.mrb[0].mxu0
        %1090 = vmatprep.mubr.f32.mxu0 0.0
        %1091 = vmatmul.mubr.f32.gmra.mrb[0].mxu0 %v807
        %v1092 = vpop.f32.mrb[0].mxu0
        %v1093 = vadd.f32 %v768, %v1092
        %v1094 = vpop.f32.mrb[0].mxu0
        %1095 = vmatprep.mubr.f32.mxu0 0.0
        %1096 = vmatmul.mubr.f32.gmra.mrb[0].mxu0 %v810
        %v1097 = vpop.f32.mrb[0].mxu0
        %v1098 = vadd.f32 %v768, %v1097
        %v1099 = vpop.f32.mrb[0].mxu0
        %1100 = vmatprep.mubr.f32.mxu0 0.0
        %1101 = vmatmul.mubr.f32.gmra.mrb[0].mxu0 %v813
        %v1102 = vpop.f32.mrb[0].mxu0
        %v1103 = vadd.f32 %v768, %v1102
        %v1104 = vpop.f32.mrb[0].mxu0
        %1105 = vmatprep.mubr.f32.mxu0 0.0
        %1106 = vmatmul.mubr.f32.gmra.mrb[0].mxu0 %v816
        %v1107 = vpop.f32.mrb[0].mxu0
        %v1108 = vadd.f32 %v768, %v1107
        %v1109 = vpop.f32.mrb[0].mxu0
        %1110 = vmatprep.mubr.f32.mxu0 0.0
        %1111 = vmatmul.mubr.f32.gmra.mrb[0].mxu0 %v819
        %v1112 = vpop.f32.mrb[0].mxu0
        %v1113 = vadd.f32 %v768, %v1112
        %v1114 = vpop.f32.mrb[0].mxu0
        %1115 = vmatprep.mubr.f32.mxu0 0.0
        %1116 = vmatmul.mubr.f32.gmra.mrb[0].mxu0 %v822
        %v1117 = vpop.f32.mrb[0].mxu0
        %v1118 = vadd.f32 %v768, %v1117
        %v1119 = vpop.f32.mrb[0].mxu0
        %1120 = vmatprep.mubr.f32.mxu0 0.0
        %1121 = vmatmul.mubr.f32.gmra.mrb[0].mxu0 %v825
        %v1122 = vpop.f32.mrb[0].mxu0
        %v1123 = vadd.f32 %v768, %v1122
        %v1124 = vpop.f32.mrb[0].mxu0
        %1125 = vmatprep.mubr.f32.mxu0 0.0
        %1126 = vmatmul.mubr.f32.gmra.mrb[0].mxu0 %v828
        %v1127 = vpop.f32.mrb[0].mxu0
        %v1128 = vadd.f32 %v768, %v1127
        %v1129 = vpop.f32.mrb[0].mxu0
        %1130 = vmatprep.mubr.f32.mxu0 0.0
        %1131 = vmatmul.mubr.f32.gmra.mrb[0].mxu0 %v831
        %v1132 = vpop.f32.mrb[0].mxu0
        %v1133 = vadd.f32 %v768, %v1132
        %v1134 = vpop.f32.mrb[0].mxu0
        %1135 = vmatprep.mubr.f32.mxu0 0.0
        %1136 = vmatmul.mubr.f32.gmra.mrb[0].mxu0 %v834
        %v1137 = vpop.f32.mrb[0].mxu0
        %v1138 = vadd.f32 %v768, %v1137
        %v1139 = vpop.f32.mrb[0].mxu0
        %1140 = vmatprep.mubr.f32.mxu0 0.0
        %1141 = vmatmul.mubr.f32.gmra.mrb[0].mxu0 %v837
        %v1142 = vpop.f32.mrb[0].mxu0
        %v1143 = vadd.f32 %v768, %v1142
        %v1144 = vpop.f32.mrb[0].mxu0
        %1145 = vmatprep.mubr.f32.mxu0 0.0
        %1146 = vmatmul.mubr.f32.gmra.mrb[0].mxu0 %v840
        %v1147 = vpop.f32.mrb[0].mxu0
        %v1148 = vadd.f32 %v768, %v1147
        %v1149 = vpop.f32.mrb[0].mxu0
        %1150 = vmatprep.mubr.f32.mxu0 0.0
        %1151 = vmatmul.mubr.f32.gmra.mrb[0].mxu0 %v843
        %v1152 = vpop.f32.mrb[0].mxu0
        %v1153 = vadd.f32 %v768, %v1152
        %v1154 = vpop.f32.mrb[0].mxu0
        %1155 = vmatprep.mubr.f32.mxu0 0.0
        %1156 = vmatmul.mubr.f32.gmra.mrb[0].mxu0 %v846
        %v1157 = vpop.f32.mrb[0].mxu0
        %v1158 = vadd.f32 %v768, %v1157
        %v1159 = vpop.f32.mrb[0].mxu0
        %1160 = vmatprep.mubr.f32.mxu0 0.0
        %1161 = vmatmul.mubr.f32.gmra.mrb[0].mxu0 %v849
        %v1162 = vpop.f32.mrb[0].mxu0
        %v1163 = vadd.f32 %v768, %v1162
        %v1164 = vpop.f32.mrb[0].mxu0
        %1165 = vmatprep.mubr.f32.mxu0 0.0
        %1166 = vmatmul.mubr.f32.gmra.mrb[0].mxu0 %v852
        %v1167 = vpop.f32.mrb[0].mxu0
        %v1168 = vadd.f32 %v768, %v1167
        %v1169 = vpop.f32.mrb[0].mxu0
        %1170 = vmatprep.mubr.f32.mxu0 0.0
        %1171 = vmatmul.mubr.f32.gmra.mrb[0].mxu0 %v855
        %v1172 = vpop.f32.mrb[0].mxu0
        %v1173 = vadd.f32 %v768, %v1172
        %v1174 = vpop.f32.mrb[0].mxu0
        %1175 = vmatprep.mubr.f32.mxu0 0.0
        %1176 = vmatmul.mubr.f32.gmra.mrb[0].mxu0 %v858
        %v1177 = vpop.f32.mrb[0].mxu0
        %v1178 = vadd.f32 %v768, %v1177
        %v1179 = vpop.f32.mrb[0].mxu0
        %1180 = vmatprep.mubr.f32.mxu0 0.0
        %1181 = vmatmul.mubr.f32.gmra.mrb[0].mxu0 %v861
        %v1182 = vpop.f32.mrb[0].mxu0
        %v1183 = vadd.f32 %v768, %v1182
        %v1184 = vpop.f32.mrb[0].mxu0
        %1185 = vmatprep.mubr.f32.mxu0 0.0
        %1186 = vmatmul.mubr.f32.gmra.mrb[0].mxu0 %v864
        %v1187 = vpop.f32.mrb[0].mxu0
        %v1188 = vadd.f32 %v768, %v1187
        %v1189 = vpop.f32.mrb[0].mxu0
        %1190 = vmatprep.mubr.f32.mxu0 0.0
        %1191 = vmatmul.mubr.f32.gmra.mrb[0].mxu0 %v867
        %v1192 = vpop.f32.mrb[0].mxu0
        %v1193 = vadd.f32 %v768, %v1192
        %v1194 = vpop.f32.mrb[0].mxu0
        %1195 = vmatprep.mubr.f32.mxu0 0.0
        %1196 = vmatmul.mubr.f32.gmra.mrb[0].mxu0 %v870
        %v1197 = vpop.f32.mrb[0].mxu0
        %v1198 = vadd.f32 %v768, %v1197
        %v1199 = vpop.f32.mrb[0].mxu0
        %1200 = vmatprep.mubr.f32.mxu0 0.0
        %1201 = vmatmul.mubr.f32.gmra.mrb[0].mxu0 %v873
        %v1202 = vpop.f32.mrb[0].mxu0
        %v1203 = vadd.f32 %v768, %v1202
        %v1204 = vpop.f32.mrb[0].mxu0
        %1205 = vmatprep.mubr.f32.mxu0 0.0
        %1206 = vmatmul.mubr.f32.gmra.mrb[0].mxu0 %v876
        %v1207 = vpop.f32.mrb[0].mxu0
        %v1208 = vadd.f32 %v768, %v1207
        %v1209 = vpop.f32.mrb[0].mxu0
        %1210 = vmatprep.mubr.f32.mxu0 0.0
        %1211 = vmatmul.mubr.f32.gmra.mrb[0].mxu0 %v879
        %v1212 = vpop.f32.mrb[0].mxu0
        %v1213 = vadd.f32 %v768, %v1212
        %v1214 = vpop.f32.mrb[0].mxu0
        %1215 = vmatprep.mubr.f32.mxu0 0.0
        %1216 = vmatmul.mubr.f32.gmra.mrb[0].mxu0 %v882
        %v1217 = vpop.f32.mrb[0].mxu0
        %v1218 = vadd.f32 %v768, %v1217
        %v1219 = vpop.f32.mrb[0].mxu0
        %1220 = vmatprep.mubr.f32.mxu0 0.0
        %1221 = vmatmul.mubr.f32.gmra.mrb[0].mxu0 %v885
        %v1222 = vpop.f32.mrb[0].mxu0
        %v1223 = vadd.f32 %v768, %v1222
        %v1224 = vpop.f32.mrb[0].mxu0
        %1225 = vmatprep.mubr.f32.mxu0 0.0
        %1226 = vmatmul.mubr.f32.gmra.mrb[0].mxu0 %v888
        %v1227 = vpop.f32.mrb[0].mxu0
        %v1228 = vadd.f32 %v768, %v1227
        %v1229 = vpop.f32.mrb[0].mxu0
        %1230 = vmatprep.mubr.f32.mxu0 0.0
        %1231 = vmatmul.mubr.f32.gmra.mrb[0].mxu0 %v891
        %v1232 = vpop.f32.mrb[0].mxu0
        %v1233 = vadd.f32 %v768, %v1232
        %v1234 = vpop.f32.mrb[0].mxu0
        %1235 = vmatprep.mubr.f32.mxu0 0.0
        %1236 = vmatmul.mubr.f32.gmra.mrb[0].mxu0 %v894
        %v1237 = vpop.f32.mrb[0].mxu0
        %v1238 = vadd.f32 %v768, %v1237
        %v1239 = vpop.f32.mrb[0].mxu0
        %1240 = vmatprep.mubr.f32.mxu0 0.0
        %1241 = vmatmul.mubr.f32.gmra.mrb[0].mxu0 %v897
        %v1242 = vpop.f32.mrb[0].mxu0
        %v1243 = vadd.f32 %v768, %v1242
        %v1244 = vpop.f32.mrb[0].mxu0
        %1245 = vmatprep.mubr.f32.mxu0 0.0
        %1246 = vmatmul.mubr.f32.gmra.mrb[0].mxu0 %v900
        %v1247 = vpop.f32.mrb[0].mxu0
        %v1248 = vadd.f32 %v768, %v1247
        %v1249 = vpop.f32.mrb[0].mxu0
        %1250 = vmatprep.mubr.f32.mxu0 0.0
        %1251 = vmatmul.mubr.f32.gmra.mrb[0].mxu0 %v903
        %v1252 = vpop.f32.mrb[0].mxu0
        %v1253 = vadd.f32 %v768, %v1252
        %v1254 = vpop.f32.mrb[0].mxu0
        %1255 = vmatprep.mubr.f32.mxu0 0.0
        %1256 = vmatmul.mubr.f32.gmra.mrb[0].mxu0 %v906
        %v1257 = vpop.f32.mrb[0].mxu0
        %v1258 = vadd.f32 %v768, %v1257
        %v1259 = vpop.f32.mrb[0].mxu0
        %1260 = vmatprep.mubr.f32.mxu0 0.0
        %1261 = vmatmul.mubr.f32.gmra.mrb[0].mxu0 %v909
        %v1262 = vpop.f32.mrb[0].mxu0
        %v1263 = vadd.f32 %v768, %v1262
        %v1264 = vpop.f32.mrb[0].mxu0
        %1265 = vmatprep.mubr.f32.mxu0 0.0
        %1266 = vmatmul.mubr.f32.gmra.mrb[0].mxu0 %v912
        %v1267 = vpop.f32.mrb[0].mxu0
        %v1268 = vadd.f32 %v768, %v1267
        %v1269 = vpop.f32.mrb[0].mxu0
        %1270 = vmatprep.mubr.f32.mxu0 0.0
        %1271 = vmatmul.mubr.f32.gmra.mrb[0].mxu0 %v915
        %v1272 = vpop.f32.mrb[0].mxu0
        %v1273 = vadd.f32 %v768, %v1272
        %v1274 = vpop.f32.mrb[0].mxu0
        %1275 = vmatprep.mubr.f32.mxu0 0.0
        %1276 = vmatmul.mubr.f32.gmra.mrb[0].mxu0 %v918
        %v1277 = vpop.f32.mrb[0].mxu0
        %v1278 = vadd.f32 %v768, %v1277
        %v1279 = vpop.f32.mrb[0].mxu0
        %1280 = vmatprep.mubr.f32.mxu0 0.0
        %1281 = vmatmul.mubr.f32.gmra.mrb[0].mxu0 %v921
        %v1282 = vpop.f32.mrb[0].mxu0
        %v1283 = vadd.f32 %v768, %v1282
        %v1284 = vpop.f32.mrb[0].mxu0
        %1285 = vmatprep.mubr.f32.mxu0 0.0
        %1286 = vmatmul.mubr.f32.gmra.mrb[0].mxu0 %v924
        %v1287 = vpop.f32.mrb[0].mxu0
        %v1288 = vadd.f32 %v768, %v1287
        %v1289 = vpop.f32.mrb[0].mxu0
        %1290 = vmatprep.mubr.f32.mxu0 0.0
        %1291 = vmatmul.mubr.f32.gmra.mrb[0].mxu0 %v927
        %v1292 = vpop.f32.mrb[0].mxu0
        %v1293 = vadd.f32 %v768, %v1292
        %v1294 = vpop.f32.mrb[0].mxu0
        %1295 = vmatprep.mubr.f32.mxu0 0.0
        %1296 = vmatmul.mubr.f32.gmra.mrb[0].mxu0 %v930
        %v1297 = vpop.f32.mrb[0].mxu0
        %v1298 = vadd.f32 %v768, %v1297
        %v1299 = vpop.f32.mrb[0].mxu0
        %1300 = vmatprep.mubr.f32.mxu0 0.0
        %1301 = vmatmul.mubr.f32.gmra.mrb[0].mxu0 %v933
        %v1302 = vpop.f32.mrb[0].mxu0
        %v1303 = vadd.f32 %v768, %v1302
        %v1304 = vpop.f32.mrb[0].mxu0
        %1305 = vmatprep.mubr.f32.mxu0 0.0
        %1306 = vmatmul.mubr.f32.gmra.mrb[0].mxu0 %v936
        %v1307 = vpop.f32.mrb[0].mxu0
        %v1308 = vadd.f32 %v768, %v1307
        %v1309 = vpop.f32.mrb[0].mxu0
        %1310 = vmatprep.mubr.f32.mxu0 0.0
        %1311 = vmatmul.mubr.f32.gmra.mrb[0].mxu0 %v939
        %v1312 = vpop.f32.mrb[0].mxu0
        %v1313 = vadd.f32 %v768, %v1312
        %v1314 = vpop.f32.mrb[0].mxu0
        %1315 = vmatprep.mubr.f32.mxu0 0.0
        %1316 = vmatmul.mubr.f32.gmra.mrb[0].mxu0 %v942
        %v1317 = vpop.f32.mrb[0].mxu0
        %v1318 = vadd.f32 %v768, %v1317
        %v1319 = vpop.f32.mrb[0].mxu0
        %1320 = vmatprep.mubr.f32.mxu0 0.0
        %1321 = vmatmul.mubr.f32.gmra.mrb[0].mxu0 %v945
        %v1322 = vpop.f32.mrb[0].mxu0
        %v1323 = vadd.f32 %v768, %v1322
        %v1324 = vpop.f32.mrb[0].mxu0
        %1325 = vmatprep.mubr.f32.mxu0 0.0
        %1326 = vmatmul.mubr.f32.gmra.mrb[0].mxu0 %v948
        %v1327 = vpop.f32.mrb[0].mxu0
        %v1328 = vadd.f32 %v768, %v1327
        %v1329 = vpop.f32.mrb[0].mxu0
        %1330 = vmatprep.mubr.f32.mxu0 0.0
        %1331 = vmatmul.mubr.f32.gmra.mrb[0].mxu0 %v951
        %v1332 = vpop.f32.mrb[0].mxu0
        %v1333 = vadd.f32 %v768, %v1332
        %v1334 = vpop.f32.mrb[0].mxu0
        %1335 = vmatprep.mubr.f32.mxu0 0.0
        %1336 = vmatmul.mubr.f32.gmra.mrb[0].mxu0 %v954
        %v1337 = vpop.f32.mrb[0].mxu0
        %v1338 = vadd.f32 %v768, %v1337
        %v1339 = vpop.f32.mrb[0].mxu0
        %1340 = vmatprep.mubr.f32.mxu0 0.0
        %1341 = vmatmul.mubr.f32.gmra.mrb[0].mxu0 %v957
        %v1342 = vpop.f32.mrb[0].mxu0
        %v1343 = vadd.f32 %v768, %v1342
        %v1344 = vpop.f32.mrb[0].mxu0
        %1345 = vmatprep.mubr.f32.mxu0 0.0
        %1346 = vmatmul.mubr.f32.gmra.mrb[0].mxu0 %v960
        %v1347 = vpop.f32.mrb[0].mxu0
        %v1348 = vadd.f32 %v768, %v1347
        %v1349 = vpop.f32.mrb[0].mxu0
        %1350 = vdwg.mxu0
        %v1351 = vmax.f32 %v1033, 0.0
        %v1352 = vmax.f32 %v1038, 0.0
        %v1353 = vmax.f32 %v1043, 0.0
        %v1354 = vmax.f32 %v1048, 0.0
        %v1355 = vmax.f32 %v1053, 0.0
        %v1356 = vmax.f32 %v1058, 0.0
        %v1357 = vmax.f32 %v1063, 0.0
        %v1358 = vmax.f32 %v1068, 0.0
        %v1359 = vmax.f32 %v1073, 0.0
        %v1360 = vmax.f32 %v1078, 0.0
        %v1361 = vmax.f32 %v1083, 0.0
        %v1362 = vmax.f32 %v1088, 0.0
        %v1363 = vmax.f32 %v1093, 0.0
        %v1364 = vmax.f32 %v1098, 0.0
        %v1365 = vmax.f32 %v1103, 0.0
        %v1366 = vmax.f32 %v1108, 0.0
        %v1367 = vmax.f32 %v1113, 0.0
        %v1368 = vmax.f32 %v1118, 0.0
        %v1369 = vmax.f32 %v1123, 0.0
        %v1370 = vmax.f32 %v1128, 0.0
        %v1371 = vmax.f32 %v1133, 0.0
        %v1372 = vmax.f32 %v1138, 0.0
        %v1373 = vmax.f32 %v1143, 0.0
        %v1374 = vmax.f32 %v1148, 0.0
        %v1375 = vmax.f32 %v1153, 0.0
        %v1376 = vmax.f32 %v1158, 0.0
        %v1377 = vmax.f32 %v1163, 0.0
        %v1378 = vmax.f32 %v1168, 0.0
        %v1379 = vmax.f32 %v1173, 0.0
        %v1380 = vmax.f32 %v1178, 0.0
        %v1381 = vmax.f32 %v1183, 0.0
        %v1382 = vmax.f32 %v1188, 0.0
        %v1383 = vmax.f32 %v1193, 0.0
        %v1384 = vmax.f32 %v1198, 0.0
        %v1385 = vmax.f32 %v1203, 0.0
        %v1386 = vmax.f32 %v1208, 0.0
        %v1387 = vmax.f32 %v1213, 0.0
        %v1388 = vmax.f32 %v1218, 0.0
        %v1389 = vmax.f32 %v1223, 0.0
        %v1390 = vmax.f32 %v1228, 0.0
        %v1391 = vmax.f32 %v1233, 0.0
        %v1392 = vmax.f32 %v1238, 0.0
        %v1393 = vmax.f32 %v1243, 0.0
        %v1394 = vmax.f32 %v1248, 0.0
        %v1395 = vmax.f32 %v1253, 0.0
        %v1396 = vmax.f32 %v1258, 0.0
        %v1397 = vmax.f32 %v1263, 0.0
        %v1398 = vmax.f32 %v1268, 0.0
        %v1399 = vmax.f32 %v1273, 0.0
        %v1400 = vmax.f32 %v1278, 0.0
        %v1401 = vmax.f32 %v1283, 0.0
        %v1402 = vmax.f32 %v1288, 0.0
        %v1403 = vmax.f32 %v1293, 0.0
        %v1404 = vmax.f32 %v1298, 0.0
        %v1405 = vmax.f32 %v1303, 0.0
        %v1406 = vmax.f32 %v1308, 0.0
        %v1407 = vmax.f32 %v1313, 0.0
        %v1408 = vmax.f32 %v1318, 0.0
        %v1409 = vmax.f32 %v1323, 0.0
        %v1410 = vmax.f32 %v1328, 0.0
        %v1411 = vmax.f32 %v1333, 0.0
        %v1412 = vmax.f32 %v1338, 0.0
        %v1413 = vmax.f32 %v1343, 0.0
        %v1414 = vmax.f32 %v1348, 0.0
        %v1415 = vld [vmem:[%s2 + $0x1] sm:$0x1]
        %v1416 = vld [vmem:[%s2 + $0x2] sm:$0x1]
        %v1417 = vsel %vm444, %v1351, 0.0
        %v1418 = vsel %vm444, %v1352, 0.0
        %v1419 = vadd.f32 %v1417, %v1418
        %v1420 = vsel %vm444, %v1353, 0.0
        %v1421 = vadd.f32 %v1419, %v1420
        %v1422 = vsel %vm444, %v1354, 0.0
        %v1423 = vadd.f32 %v1421, %v1422
        %v1424 = vsel %vm444, %v1355, 0.0
        %v1425 = vadd.f32 %v1423, %v1424
        %v1426 = vsel %vm444, %v1356, 0.0
        %v1427 = vadd.f32 %v1425, %v1426
        %v1428 = vsel %vm444, %v1357, 0.0
        %v1429 = vadd.f32 %v1427, %v1428
        %v1430 = vsel %vm444, %v1358, 0.0
        %v1431 = vadd.f32 %v1429, %v1430
        %v1432 = vsel %vm444, %v1359, 0.0
        %v1433 = vadd.f32 %v1431, %v1432
        %v1434 = vsel %vm444, %v1360, 0.0
        %v1435 = vadd.f32 %v1433, %v1434
        %v1436 = vsel %vm444, %v1361, 0.0
        %v1437 = vadd.f32 %v1435, %v1436
        %v1438 = vsel %vm444, %v1362, 0.0
        %v1439 = vadd.f32 %v1437, %v1438
        %v1440 = vsel %vm444, %v1363, 0.0
        %v1441 = vadd.f32 %v1439, %v1440
        %v1442 = vsel %vm444, %v1364, 0.0
        %v1443 = vadd.f32 %v1441, %v1442
        %v1444 = vsel %vm444, %v1365, 0.0
        %v1445 = vadd.f32 %v1443, %v1444
        %v1446 = vsel %vm444, %v1366, 0.0
        %v1447 = vadd.f32 %v1445, %v1446
        %v1448 = vsel %vm444, %v1367, 0.0
        %v1449 = vadd.f32 %v1447, %v1448
        %v1450 = vsel %vm444, %v1368, 0.0
        %v1451 = vadd.f32 %v1449, %v1450
        %v1452 = vsel %vm444, %v1369, 0.0
        %v1453 = vadd.f32 %v1451, %v1452
        %v1454 = vsel %vm444, %v1370, 0.0
        %v1455 = vadd.f32 %v1453, %v1454
        %v1456 = vsel %vm444, %v1371, 0.0
        %v1457 = vadd.f32 %v1455, %v1456
        %v1458 = vsel %vm444, %v1372, 0.0
        %v1459 = vadd.f32 %v1457, %v1458
        %v1460 = vsel %vm444, %v1373, 0.0
        %v1461 = vadd.f32 %v1459, %v1460
        %v1462 = vsel %vm444, %v1374, 0.0
        %v1463 = vadd.f32 %v1461, %v1462
        %v1464 = vsel %vm444, %v1375, 0.0
        %v1465 = vadd.f32 %v1463, %v1464
        %v1466 = vsel %vm444, %v1376, 0.0
        %v1467 = vadd.f32 %v1465, %v1466
        %v1468 = vsel %vm444, %v1377, 0.0
        %v1469 = vadd.f32 %v1467, %v1468
        %v1470 = vsel %vm444, %v1378, 0.0
        %v1471 = vadd.f32 %v1469, %v1470
        %v1472 = vsel %vm444, %v1379, 0.0
        %v1473 = vadd.f32 %v1471, %v1472
        %v1474 = vsel %vm444, %v1380, 0.0
        %v1475 = vadd.f32 %v1473, %v1474
        %v1476 = vsel %vm444, %v1381, 0.0
        %v1477 = vadd.f32 %v1475, %v1476
        %v1478 = vsel %vm444, %v1382, 0.0
        %v1479 = vadd.f32 %v1477, %v1478
        %v1480 = vrot.slane %v1479, 4
        %v1481 = vadd.f32 %v1479, %v1480
        %v1482 = vrot.slane %v1481, 2
        %v1483 = vadd.f32 %v1481, %v1482
        %v1484 = vrot.slane %v1483, 1
        %v1485 = vadd.f32 %v1483, %v1484
        %v1486 = vsel %vm444, %v1383, 0.0
        %v1487 = vsel %vm444, %v1384, 0.0
        %v1488 = vadd.f32 %v1486, %v1487
        %v1489 = vsel %vm444, %v1385, 0.0
        %v1490 = vadd.f32 %v1488, %v1489
        %v1491 = vsel %vm444, %v1386, 0.0
        %v1492 = vadd.f32 %v1490, %v1491
        %v1493 = vsel %vm444, %v1387, 0.0
        %v1494 = vadd.f32 %v1492, %v1493
        %v1495 = vsel %vm444, %v1388, 0.0
        %v1496 = vadd.f32 %v1494, %v1495
        %v1497 = vsel %vm444, %v1389, 0.0
        %v1498 = vadd.f32 %v1496, %v1497
        %v1499 = vsel %vm444, %v1390, 0.0
        %v1500 = vadd.f32 %v1498, %v1499
        %v1501 = vsel %vm444, %v1391, 0.0
        %v1502 = vadd.f32 %v1500, %v1501
        %v1503 = vsel %vm444, %v1392, 0.0
        %v1504 = vadd.f32 %v1502, %v1503
        %v1505 = vsel %vm444, %v1393, 0.0
        %v1506 = vadd.f32 %v1504, %v1505
        %v1507 = vsel %vm444, %v1394, 0.0
        %v1508 = vadd.f32 %v1506, %v1507
        %v1509 = vsel %vm444, %v1395, 0.0
        %v1510 = vadd.f32 %v1508, %v1509
        %v1511 = vsel %vm444, %v1396, 0.0
        %v1512 = vadd.f32 %v1510, %v1511
        %v1513 = vsel %vm444, %v1397, 0.0
        %v1514 = vadd.f32 %v1512, %v1513
        %v1515 = vsel %vm444, %v1398, 0.0
        %v1516 = vadd.f32 %v1514, %v1515
        %v1517 = vsel %vm444, %v1399, 0.0
        %v1518 = vadd.f32 %v1516, %v1517
        %v1519 = vsel %vm444, %v1400, 0.0
        %v1520 = vadd.f32 %v1518, %v1519
        %v1521 = vsel %vm444, %v1401, 0.0
        %v1522 = vadd.f32 %v1520, %v1521
        %v1523 = vsel %vm444, %v1402, 0.0
        %v1524 = vadd.f32 %v1522, %v1523
        %v1525 = vsel %vm444, %v1403, 0.0
        %v1526 = vadd.f32 %v1524, %v1525
        %v1527 = vsel %vm444, %v1404, 0.0
        %v1528 = vadd.f32 %v1526, %v1527
        %v1529 = vsel %vm444, %v1405, 0.0
        %v1530 = vadd.f32 %v1528, %v1529
        %v1531 = vsel %vm444, %v1406, 0.0
        %v1532 = vadd.f32 %v1530, %v1531
        %v1533 = vsel %vm444, %v1407, 0.0
        %v1534 = vadd.f32 %v1532, %v1533
        %v1535 = vsel %vm444, %v1408, 0.0
        %v1536 = vadd.f32 %v1534, %v1535
        %v1537 = vsel %vm444, %v1409, 0.0
        %v1538 = vadd.f32 %v1536, %v1537
        %v1539 = vsel %vm444, %v1410, 0.0
        %v1540 = vadd.f32 %v1538, %v1539
        %v1541 = vsel %vm444, %v1411, 0.0
        %v1542 = vadd.f32 %v1540, %v1541
        %v1543 = vsel %vm444, %v1412, 0.0
        %v1544 = vadd.f32 %v1542, %v1543
        %v1545 = vsel %vm444, %v1413, 0.0
        %v1546 = vadd.f32 %v1544, %v1545
        %v1547 = vsel %vm444, %v1414, 0.0
        %v1548 = vadd.f32 %v1546, %v1547
        %v1549 = vrot.slane %v1548, 4
        %v1550 = vadd.f32 %v1548, %v1549
        %v1551 = vrot.slane %v1550, 2
        %v1552 = vadd.f32 %v1550, %v1551
        %v1553 = vrot.slane %v1552, 1
        %v1554 = vadd.f32 %v1552, %v1553
        %v1555 = vmul.f32 %v1351, %v1351
        %v1556 = vmul.f32 %v1352, %v1352
        %v1557 = vmul.f32 %v1353, %v1353
        %v1558 = vmul.f32 %v1354, %v1354
        %v1559 = vmul.f32 %v1355, %v1355
        %v1560 = vmul.f32 %v1356, %v1356
        %v1561 = vmul.f32 %v1357, %v1357
        %v1562 = vmul.f32 %v1358, %v1358
        %v1563 = vmul.f32 %v1359, %v1359
        %v1564 = vmul.f32 %v1360, %v1360
        %v1565 = vmul.f32 %v1361, %v1361
        %v1566 = vmul.f32 %v1362, %v1362
        %v1567 = vmul.f32 %v1363, %v1363
        %v1568 = vmul.f32 %v1364, %v1364
        %v1569 = vmul.f32 %v1365, %v1365
        %v1570 = vmul.f32 %v1366, %v1366
        %v1571 = vmul.f32 %v1367, %v1367
        %v1572 = vmul.f32 %v1368, %v1368
        %v1573 = vmul.f32 %v1369, %v1369
        %v1574 = vmul.f32 %v1370, %v1370
        %v1575 = vmul.f32 %v1371, %v1371
        %v1576 = vmul.f32 %v1372, %v1372
        %v1577 = vmul.f32 %v1373, %v1373
        %v1578 = vmul.f32 %v1374, %v1374
        %v1579 = vmul.f32 %v1375, %v1375
        %v1580 = vmul.f32 %v1376, %v1376
        %v1581 = vmul.f32 %v1377, %v1377
        %v1582 = vmul.f32 %v1378, %v1378
        %v1583 = vmul.f32 %v1379, %v1379
        %v1584 = vmul.f32 %v1380, %v1380
        %v1585 = vmul.f32 %v1381, %v1381
        %v1586 = vmul.f32 %v1382, %v1382
        %v1587 = vmul.f32 %v1383, %v1383
        %v1588 = vmul.f32 %v1384, %v1384
        %v1589 = vmul.f32 %v1385, %v1385
        %v1590 = vmul.f32 %v1386, %v1386
        %v1591 = vmul.f32 %v1387, %v1387
        %v1592 = vmul.f32 %v1388, %v1388
        %v1593 = vmul.f32 %v1389, %v1389
        %v1594 = vmul.f32 %v1390, %v1390
        %v1595 = vmul.f32 %v1391, %v1391
        %v1596 = vmul.f32 %v1392, %v1392
        %v1597 = vmul.f32 %v1393, %v1393
        %v1598 = vmul.f32 %v1394, %v1394
        %v1599 = vmul.f32 %v1395, %v1395
        %v1600 = vmul.f32 %v1396, %v1396
        %v1601 = vmul.f32 %v1397, %v1397
        %v1602 = vmul.f32 %v1398, %v1398
        %v1603 = vmul.f32 %v1399, %v1399
        %v1604 = vmul.f32 %v1400, %v1400
        %v1605 = vmul.f32 %v1401, %v1401
        %v1606 = vmul.f32 %v1402, %v1402
        %v1607 = vmul.f32 %v1403, %v1403
        %v1608 = vmul.f32 %v1404, %v1404
        %v1609 = vmul.f32 %v1405, %v1405
        %v1610 = vmul.f32 %v1406, %v1406
        %v1611 = vmul.f32 %v1407, %v1407
        %v1612 = vmul.f32 %v1408, %v1408
        %v1613 = vmul.f32 %v1409, %v1409
        %v1614 = vmul.f32 %v1410, %v1410
        %v1615 = vmul.f32 %v1411, %v1411
        %v1616 = vmul.f32 %v1412, %v1412
        %v1617 = vmul.f32 %v1413, %v1413
        %v1618 = vmul.f32 %v1414, %v1414
        %v1619 = vsel %vm444, %v1555, 0.0
        %v1620 = vsel %vm444, %v1556, 0.0
        %v1621 = vadd.f32 %v1619, %v1620
        %v1622 = vsel %vm444, %v1557, 0.0
        %v1623 = vadd.f32 %v1621, %v1622
        %v1624 = vsel %vm444, %v1558, 0.0
        %v1625 = vadd.f32 %v1623, %v1624
        %v1626 = vsel %vm444, %v1559, 0.0
        %v1627 = vadd.f32 %v1625, %v1626
        %v1628 = vsel %vm444, %v1560, 0.0
        %v1629 = vadd.f32 %v1627, %v1628
        %v1630 = vsel %vm444, %v1561, 0.0
        %v1631 = vadd.f32 %v1629, %v1630
        %v1632 = vsel %vm444, %v1562, 0.0
        %v1633 = vadd.f32 %v1631, %v1632
        %v1634 = vsel %vm444, %v1563, 0.0
        %v1635 = vadd.f32 %v1633, %v1634
        %v1636 = vsel %vm444, %v1564, 0.0
        %v1637 = vadd.f32 %v1635, %v1636
        %v1638 = vsel %vm444, %v1565, 0.0
        %v1639 = vadd.f32 %v1637, %v1638
        %v1640 = vsel %vm444, %v1566, 0.0
        %v1641 = vadd.f32 %v1639, %v1640
        %v1642 = vsel %vm444, %v1567, 0.0
        %v1643 = vadd.f32 %v1641, %v1642
        %v1644 = vsel %vm444, %v1568, 0.0
        %v1645 = vadd.f32 %v1643, %v1644
        %v1646 = vsel %vm444, %v1569, 0.0
        %v1647 = vadd.f32 %v1645, %v1646
        %v1648 = vsel %vm444, %v1570, 0.0
        %v1649 = vadd.f32 %v1647, %v1648
        %v1650 = vsel %vm444, %v1571, 0.0
        %v1651 = vadd.f32 %v1649, %v1650
        %v1652 = vsel %vm444, %v1572, 0.0
        %v1653 = vadd.f32 %v1651, %v1652
        %v1654 = vsel %vm444, %v1573, 0.0
        %v1655 = vadd.f32 %v1653, %v1654
        %v1656 = vsel %vm444, %v1574, 0.0
        %v1657 = vadd.f32 %v1655, %v1656
        %v1658 = vsel %vm444, %v1575, 0.0
        %v1659 = vadd.f32 %v1657, %v1658
        %v1660 = vsel %vm444, %v1576, 0.0
        %v1661 = vadd.f32 %v1659, %v1660
        %v1662 = vsel %vm444, %v1577, 0.0
        %v1663 = vadd.f32 %v1661, %v1662
        %v1664 = vsel %vm444, %v1578, 0.0
        %v1665 = vadd.f32 %v1663, %v1664
        %v1666 = vsel %vm444, %v1579, 0.0
        %v1667 = vadd.f32 %v1665, %v1666
        %v1668 = vsel %vm444, %v1580, 0.0
        %v1669 = vadd.f32 %v1667, %v1668
        %v1670 = vsel %vm444, %v1581, 0.0
        %v1671 = vadd.f32 %v1669, %v1670
        %v1672 = vsel %vm444, %v1582, 0.0
        %v1673 = vadd.f32 %v1671, %v1672
        %v1674 = vsel %vm444, %v1583, 0.0
        %v1675 = vadd.f32 %v1673, %v1674
        %v1676 = vsel %vm444, %v1584, 0.0
        %v1677 = vadd.f32 %v1675, %v1676
        %v1678 = vsel %vm444, %v1585, 0.0
        %v1679 = vadd.f32 %v1677, %v1678
        %v1680 = vsel %vm444, %v1586, 0.0
        %v1681 = vadd.f32 %v1679, %v1680
        %v1682 = vrot.slane %v1681, 4
        %v1683 = vadd.f32 %v1681, %v1682
        %v1684 = vrot.slane %v1683, 2
        %v1685 = vadd.f32 %v1683, %v1684
        %v1686 = vrot.slane %v1685, 1
        %v1687 = vadd.f32 %v1685, %v1686
        %v1688 = vsel %vm444, %v1587, 0.0
        %v1689 = vsel %vm444, %v1588, 0.0
        %v1690 = vadd.f32 %v1688, %v1689
        %v1691 = vsel %vm444, %v1589, 0.0
        %v1692 = vadd.f32 %v1690, %v1691
        %v1693 = vsel %vm444, %v1590, 0.0
        %v1694 = vadd.f32 %v1692, %v1693
        %v1695 = vsel %vm444, %v1591, 0.0
        %v1696 = vadd.f32 %v1694, %v1695
        %v1697 = vsel %vm444, %v1592, 0.0
        %v1698 = vadd.f32 %v1696, %v1697
        %v1699 = vsel %vm444, %v1593, 0.0
        %v1700 = vadd.f32 %v1698, %v1699
        %v1701 = vsel %vm444, %v1594, 0.0
        %v1702 = vadd.f32 %v1700, %v1701
        %v1703 = vsel %vm444, %v1595, 0.0
        %v1704 = vadd.f32 %v1702, %v1703
        %v1705 = vsel %vm444, %v1596, 0.0
        %v1706 = vadd.f32 %v1704, %v1705
        %v1707 = vsel %vm444, %v1597, 0.0
        %v1708 = vadd.f32 %v1706, %v1707
        %v1709 = vsel %vm444, %v1598, 0.0
        %v1710 = vadd.f32 %v1708, %v1709
        %v1711 = vsel %vm444, %v1599, 0.0
        %v1712 = vadd.f32 %v1710, %v1711
        %v1713 = vsel %vm444, %v1600, 0.0
        %v1714 = vadd.f32 %v1712, %v1713
        %v1715 = vsel %vm444, %v1601, 0.0
        %v1716 = vadd.f32 %v1714, %v1715
        %v1717 = vsel %vm444, %v1602, 0.0
        %v1718 = vadd.f32 %v1716, %v1717
        %v1719 = vsel %vm444, %v1603, 0.0
        %v1720 = vadd.f32 %v1718, %v1719
        %v1721 = vsel %vm444, %v1604, 0.0
        %v1722 = vadd.f32 %v1720, %v1721
        %v1723 = vsel %vm444, %v1605, 0.0
        %v1724 = vadd.f32 %v1722, %v1723
        %v1725 = vsel %vm444, %v1606, 0.0
        %v1726 = vadd.f32 %v1724, %v1725
        %v1727 = vsel %vm444, %v1607, 0.0
        %v1728 = vadd.f32 %v1726, %v1727
        %v1729 = vsel %vm444, %v1608, 0.0
        %v1730 = vadd.f32 %v1728, %v1729
        %v1731 = vsel %vm444, %v1609, 0.0
        %v1732 = vadd.f32 %v1730, %v1731
        %v1733 = vsel %vm444, %v1610, 0.0
        %v1734 = vadd.f32 %v1732, %v1733
        %v1735 = vsel %vm444, %v1611, 0.0
        %v1736 = vadd.f32 %v1734, %v1735
        %v1737 = vsel %vm444, %v1612, 0.0
        %v1738 = vadd.f32 %v1736, %v1737
        %v1739 = vsel %vm444, %v1613, 0.0
        %v1740 = vadd.f32 %v1738, %v1739
        %v1741 = vsel %vm444, %v1614, 0.0
        %v1742 = vadd.f32 %v1740, %v1741
        %v1743 = vsel %vm444, %v1615, 0.0
        %v1744 = vadd.f32 %v1742, %v1743
        %v1745 = vsel %vm444, %v1616, 0.0
        %v1746 = vadd.f32 %v1744, %v1745
        %v1747 = vsel %vm444, %v1617, 0.0
        %v1748 = vadd.f32 %v1746, %v1747
        %v1749 = vsel %vm444, %v1618, 0.0
        %v1750 = vadd.f32 %v1748, %v1749
        %v1751 = vrot.slane %v1750, 4
        %v1752 = vadd.f32 %v1750, %v1751
        %v1753 = vrot.slane %v1752, 2
        %v1754 = vadd.f32 %v1752, %v1753
        %v1755 = vrot.slane %v1754, 1
        %v1756 = vadd.f32 %v1754, %v1755
        %vm1759 = vcmask 1041409
        %v1760 = vsel %vm1759, %v1554, %v1485
        %v1761 = vsel %vm444, %v1760, 0
        %1763 = vmatprep.subr.mxu0 0.0
        %1764 = vmatpush1.msra.mxu0 %v670
        %1765 = vmatprep.subr.mxu0 0.0
        %1766 = vmatpush1.msra.mxu0 %v671
        %1767 = vmatprep.subr.mxu0 0.0
        %1768 = vmatpush1.msra.mxu0 %v672
        %1769 = vmatprep.subr.mxu0 0.0
        %1770 = vmatpush1.msra.mxu0 %v673
        %1771 = vmatprep.subr.mxu0 0.0
        %1772 = vmatpush1.msra.mxu0 %v674
        %1773 = vmatprep.subr.mxu0 0.0
        %1774 = vmatpush1.msra.mxu0 %v675
        %1775 = vmatprep.subr.mxu0 0.0
        %1776 = vmatpush1.msra.mxu0 %v676
        %1777 = vmatprep.subr.mxu0 0.0
        %1778 = vmatpush1.msra.mxu0 %v677
        %1779 = vmatprep.subr.mxu0 0.0
        %1780 = vmatpush1.msra.mxu0 0.0
        %1781 = vmatprep.subr.mxu0 0.0
        %1782 = vmatpush1.msra.mxu0 0.0
        %1783 = vmatprep.subr.mxu0 0.0
        %1784 = vmatpush1.msra.mxu0 0.0
        %1785 = vmatprep.subr.mxu0 0.0
        %1786 = vmatpush1.msra.mxu0 0.0
        %1787 = vmatprep.subr.mxu0 0.0
        %1788 = vmatpush1.msra.mxu0 0.0
        %1789 = vmatprep.subr.mxu0 0.0
        %1790 = vmatpush1.msra.mxu0 0.0
        %1791 = vmatprep.subr.mxu0 0.0
        %1792 = vmatpush1.msra.mxu0 0.0
        %1793 = vmatprep.subr.mxu0 0.0
        %1794 = vmatpush1.msra.mxu0 0.0
        %1795 = vmatprep.subr.mxu0 0.0
        %1796 = vmatpush1.msra.mxu0 0.0
        %1797 = vmatprep.subr.mxu0 0.0
        %1798 = vmatpush1.msra.mxu0 0.0
        %1799 = vmatprep.subr.mxu0 0.0
        %1800 = vmatpush1.msra.mxu0 0.0
        %1801 = vmatprep.subr.mxu0 0.0
        %1802 = vmatpush1.msra.mxu0 0.0
        %1803 = vmatprep.subr.mxu0 0.0
        %1804 = vmatpush1.msra.mxu0 0.0
        %1805 = vmatprep.subr.mxu0 0.0
        %1806 = vmatpush1.msra.mxu0 0.0
        %1807 = vmatprep.subr.mxu0 0.0
        %1808 = vmatpush1.msra.mxu0 0.0
        %1809 = vmatprep.subr.mxu0 0.0
        %1810 = vmatpush1.msra.mxu0 0.0
        %1811 = vmatprep.subr.mxu0 0.0
        %1812 = vmatpush1.msra.mxu0 0.0
        %1813 = vmatprep.subr.mxu0 0.0
        %1814 = vmatpush1.msra.mxu0 0.0
        %1815 = vmatprep.subr.mxu0 0.0
        %1816 = vmatpush1.msra.mxu0 0.0
        %1817 = vmatprep.subr.mxu0 0.0
        %1818 = vmatpush1.msra.mxu0 0.0
        %1819 = vmatprep.subr.mxu0 0.0
        %1820 = vmatpush1.msra.mxu0 0.0
        %1821 = vmatprep.subr.mxu0 0.0
        %1822 = vmatpush1.msra.mxu0 0.0
        %1823 = vmatprep.subr.mxu0 0.0
        %1824 = vmatpush1.msra.mxu0 0.0
        %1825 = vmatprep.subr.mxu0 0.0
        %1826 = vmatpush1.msra.mxu0 0.0
        %1827 = vmatprep.mubr.f32.mxu0 0.0
        %1828 = vmatmul.mubr.f32.gmra.mrb[0].mxu0 %v1761
        %v1829 = vpop.f32.mrb[0].mxu0
        %v1830 = vadd.f32 0.0, %v1829
        %v1831 = vpop.f32.mrb[0].mxu0
        %1832 = vdwg.mxu0
        %v1833 = vrcp.pop 2048.0
        %v1834 = vmul.f32 %v1830, %v1833
        %v1837 = vsel %vm1759, %v1756, %v1687
        %v1838 = vsel %vm444, %v1837, 0
        %1840 = vmatprep.subr.mxu0 0.0
        %1841 = vmatpush1.msra.mxu0 %v670
        %1842 = vmatprep.subr.mxu0 0.0
        %1843 = vmatpush1.msra.mxu0 %v671
        %1844 = vmatprep.subr.mxu0 0.0
        %1845 = vmatpush1.msra.mxu0 %v672
        %1846 = vmatprep.subr.mxu0 0.0
        %1847 = vmatpush1.msra.mxu0 %v673
        %1848 = vmatprep.subr.mxu0 0.0
        %1849 = vmatpush1.msra.mxu0 %v674
        %1850 = vmatprep.subr.mxu0 0.0
        %1851 = vmatpush1.msra.mxu0 %v675
        %1852 = vmatprep.subr.mxu0 0.0
        %1853 = vmatpush1.msra.mxu0 %v676
        %1854 = vmatprep.subr.mxu0 0.0
        %1855 = vmatpush1.msra.mxu0 %v677
        %1856 = vmatprep.subr.mxu0 0.0
        %1857 = vmatpush1.msra.mxu0 0.0
        %1858 = vmatprep.subr.mxu0 0.0
        %1859 = vmatpush1.msra.mxu0 0.0
        %1860 = vmatprep.subr.mxu0 0.0
        %1861 = vmatpush1.msra.mxu0 0.0
        %1862 = vmatprep.subr.mxu0 0.0
        %1863 = vmatpush1.msra.mxu0 0.0
        %1864 = vmatprep.subr.mxu0 0.0
        %1865 = vmatpush1.msra.mxu0 0.0
        %1866 = vmatprep.subr.mxu0 0.0
        %1867 = vmatpush1.msra.mxu0 0.0
        %1868 = vmatprep.subr.mxu0 0.0
        %1869 = vmatpush1.msra.mxu0 0.0
        %1870 = vmatprep.subr.mxu0 0.0
        %1871 = vmatpush1.msra.mxu0 0.0
        %1872 = vmatprep.subr.mxu0 0.0
        %1873 = vmatpush1.msra.mxu0 0.0
        %1874 = vmatprep.subr.mxu0 0.0
        %1875 = vmatpush1.msra.mxu0 0.0
        %1876 = vmatprep.subr.mxu0 0.0
        %1877 = vmatpush1.msra.mxu0 0.0
        %1878 = vmatprep.subr.mxu0 0.0
        %1879 = vmatpush1.msra.mxu0 0.0
        %1880 = vmatprep.subr.mxu0 0.0
        %1881 = vmatpush1.msra.mxu0 0.0
        %1882 = vmatprep.subr.mxu0 0.0
        %1883 = vmatpush1.msra.mxu0 0.0
        %1884 = vmatprep.subr.mxu0 0.0
        %1885 = vmatpush1.msra.mxu0 0.0
        %1886 = vmatprep.subr.mxu0 0.0
        %1887 = vmatpush1.msra.mxu0 0.0
        %1888 = vmatprep.subr.mxu0 0.0
        %1889 = vmatpush1.msra.mxu0 0.0
        %1890 = vmatprep.subr.mxu0 0.0
        %1891 = vmatpush1.msra.mxu0 0.0
        %1892 = vmatprep.subr.mxu0 0.0
        %1893 = vmatpush1.msra.mxu0 0.0
        %1894 = vmatprep.subr.mxu0 0.0
        %1895 = vmatpush1.msra.mxu0 0.0
        %1896 = vmatprep.subr.mxu0 0.0
        %1897 = vmatpush1.msra.mxu0 0.0
        %1898 = vmatprep.subr.mxu0 0.0
        %1899 = vmatpush1.msra.mxu0 0.0
        %1900 = vmatprep.subr.mxu0 0.0
        %1901 = vmatpush1.msra.mxu0 0.0
        %1902 = vmatprep.subr.mxu0 0.0
        %1903 = vmatpush1.msra.mxu0 0.0
        %1904 = vmatprep.mubr.f32.mxu0 0.0
        %1905 = vmatmul.mubr.f32.gmra.mrb[0].mxu0 %v1838
        %v1906 = vpop.f32.mrb[0].mxu0
        %v1907 = vadd.f32 0.0, %v1906
        %v1908 = vpop.f32.mrb[0].mxu0
        %1909 = vdwg.mxu0
        %v1910 = vmul.f32 %v1907, %v1833
        %v1911 = vmul.f32 %v1834, %v1834
        %v1912 = vsub.f32 %v1910, %v1911
        %v1913 = vadd.f32 %v1912, 1e-05
        %v1914 = vrsqrt.pop %v1913
        %vm1915 = vcmask 64512
        %v1917 = vsel %vm1915, %v1834, 0
        %1919 = vmatprep.subr.mxu0 0.0
        %1920 = vmatpush1.msra.mxu0 %v678
        %1921 = vmatprep.subr.mxu0 0.0
        %1922 = vmatpush1.msra.mxu0 0.0
        %1923 = vmatprep.subr.mxu0 0.0
        %1924 = vmatpush1.msra.mxu0 0.0
        %1925 = vmatprep.subr.mxu0 0.0
        %1926 = vmatpush1.msra.mxu0 0.0
        %1927 = vmatprep.subr.mxu0 0.0
        %1928 = vmatpush1.msra.mxu0 0.0
        %1929 = vmatprep.subr.mxu0 0.0
        %1930 = vmatpush1.msra.mxu0 0.0
        %1931 = vmatprep.subr.mxu0 0.0
        %1932 = vmatpush1.msra.mxu0 0.0
        %1933 = vmatprep.subr.mxu0 0.0
        %1934 = vmatpush1.msra.mxu0 0.0
        %1935 = vmatprep.subr.mxu0 0.0
        %1936 = vmatpush1.msra.mxu0 0.0
        %1937 = vmatprep.subr.mxu0 0.0
        %1938 = vmatpush1.msra.mxu0 0.0
        %1939 = vmatprep.subr.mxu0 0.0
        %1940 = vmatpush1.msra.mxu0 0.0
        %1941 = vmatprep.subr.mxu0 0.0
        %1942 = vmatpush1.msra.mxu0 0.0
        %1943 = vmatprep.subr.mxu0 0.0
        %1944 = vmatpush1.msra.mxu0 0.0
        %1945 = vmatprep.subr.mxu0 0.0
        %1946 = vmatpush1.msra.mxu0 0.0
        %1947 = vmatprep.subr.mxu0 0.0
        %1948 = vmatpush1.msra.mxu0 0.0
        %1949 = vmatprep.subr.mxu0 0.0
        %1950 = vmatpush1.msra.mxu0 0.0
        %1951 = vmatprep.subr.mxu0 0.0
        %1952 = vmatpush1.msra.mxu0 0.0
        %1953 = vmatprep.subr.mxu0 0.0
        %1954 = vmatpush1.msra.mxu0 0.0
        %1955 = vmatprep.subr.mxu0 0.0
        %1956 = vmatpush1.msra.mxu0 0.0
        %1957 = vmatprep.subr.mxu0 0.0
        %1958 = vmatpush1.msra.mxu0 0.0
        %1959 = vmatprep.subr.mxu0 0.0
        %1960 = vmatpush1.msra.mxu0 0.0
        %1961 = vmatprep.subr.mxu0 0.0
        %1962 = vmatpush1.msra.mxu0 0.0
        %1963 = vmatprep.subr.mxu0 0.0
        %1964 = vmatpush1.msra.mxu0 0.0
        %1965 = vmatprep.subr.mxu0 0.0
        %1966 = vmatpush1.msra.mxu0 0.0
        %1967 = vmatprep.subr.mxu0 0.0
        %1968 = vmatpush1.msra.mxu0 0.0
        %1969 = vmatprep.subr.mxu0 0.0
        %1970 = vmatpush1.msra.mxu0 0.0
        %1971 = vmatprep.subr.mxu0 0.0
        %1972 = vmatpush1.msra.mxu0 0.0
        %1973 = vmatprep.subr.mxu0 0.0
        %1974 = vmatpush1.msra.mxu0 0.0
        %1975 = vmatprep.subr.mxu0 0.0
        %1976 = vmatpush1.msra.mxu0 0.0
        %1977 = vmatprep.subr.mxu0 0.0
        %1978 = vmatpush1.msra.mxu0 0.0
        %1979 = vmatprep.subr.mxu0 0.0
        %1980 = vmatpush1.msra.mxu0 0.0
        %1981 = vmatprep.subr.mxu0 0.0
        %1982 = vmatpush1.msra.mxu0 0.0
        %1983 = vmatprep.mubr.f32.mxu0 0.0
        %1984 = vmatmul.mubr.f32.gmra.mrb[0].mxu0 %v1917
        %v1985 = vpop.f32.mrb[0].mxu0
        %v1986 = vadd.f32 0.0, %v1985
        %v1987 = vpop.f32.mrb[0].mxu0
        %1988 = vdwg.mxu0
        %v1990 = vsel %vm1915, %v1914, 0
        %1992 = vmatprep.subr.mxu0 0.0
        %1993 = vmatpush1.msra.mxu0 %v678
        %1994 = vmatprep.subr.mxu0 0.0
        %1995 = vmatpush1.msra.mxu0 0.0
        %1996 = vmatprep.subr.mxu0 0.0
        %1997 = vmatpush1.msra.mxu0 0.0
        %1998 = vmatprep.subr.mxu0 0.0
        %1999 = vmatpush1.msra.mxu0 0.0
        %2000 = vmatprep.subr.mxu0 0.0
        %2001 = vmatpush1.msra.mxu0 0.0
        %2002 = vmatprep.subr.mxu0 0.0
        %2003 = vmatpush1.msra.mxu0 0.0
        %2004 = vmatprep.subr.mxu0 0.0
        %2005 = vmatpush1.msra.mxu0 0.0
        %2006 = vmatprep.subr.mxu0 0.0
        %2007 = vmatpush1.msra.mxu0 0.0
        %2008 = vmatprep.subr.mxu0 0.0
        %2009 = vmatpush1.msra.mxu0 0.0
        %2010 = vmatprep.subr.mxu0 0.0
        %2011 = vmatpush1.msra.mxu0 0.0
        %2012 = vmatprep.subr.mxu0 0.0
        %2013 = vmatpush1.msra.mxu0 0.0
        %2014 = vmatprep.subr.mxu0 0.0
        %2015 = vmatpush1.msra.mxu0 0.0
        %2016 = vmatprep.subr.mxu0 0.0
        %2017 = vmatpush1.msra.mxu0 0.0
        %2018 = vmatprep.subr.mxu0 0.0
        %2019 = vmatpush1.msra.mxu0 0.0
        %2020 = vmatprep.subr.mxu0 0.0
        %2021 = vmatpush1.msra.mxu0 0.0
        %2022 = vmatprep.subr.mxu0 0.0
        %2023 = vmatpush1.msra.mxu0 0.0
        %2024 = vmatprep.subr.mxu0 0.0
        %2025 = vmatpush1.msra.mxu0 0.0
        %2026 = vmatprep.subr.mxu0 0.0
        %2027 = vmatpush1.msra.mxu0 0.0
        %2028 = vmatprep.subr.mxu0 0.0
        %2029 = vmatpush1.msra.mxu0 0.0
        %2030 = vmatprep.subr.mxu0 0.0
        %2031 = vmatpush1.msra.mxu0 0.0
        %2032 = vmatprep.subr.mxu0 0.0
        %2033 = vmatpush1.msra.mxu0 0.0
        %2034 = vmatprep.subr.mxu0 0.0
        %2035 = vmatpush1.msra.mxu0 0.0
        %2036 = vmatprep.subr.mxu0 0.0
        %2037 = vmatpush1.msra.mxu0 0.0
        %2038 = vmatprep.subr.mxu0 0.0
        %2039 = vmatpush1.msra.mxu0 0.0
        %2040 = vmatprep.subr.mxu0 0.0
        %2041 = vmatpush1.msra.mxu0 0.0
        %2042 = vmatprep.subr.mxu0 0.0
        %2043 = vmatpush1.msra.mxu0 0.0
        %2044 = vmatprep.subr.mxu0 0.0
        %2045 = vmatpush1.msra.mxu0 0.0
        %2046 = vmatprep.subr.mxu0 0.0
        %2047 = vmatpush1.msra.mxu0 0.0
        %2048 = vmatprep.subr.mxu0 0.0
        %2049 = vmatpush1.msra.mxu0 0.0
        %2050 = vmatprep.subr.mxu0 0.0
        %2051 = vmatpush1.msra.mxu0 0.0
        %2052 = vmatprep.subr.mxu0 0.0
        %2053 = vmatpush1.msra.mxu0 0.0
        %2054 = vmatprep.subr.mxu0 0.0
        %2055 = vmatpush1.msra.mxu0 0.0
        %2056 = vmatprep.mubr.f32.mxu0 0.0
        %2057 = vmatmul.mubr.f32.gmra.mrb[0].mxu0 %v1990
        %v2058 = vpop.f32.mrb[0].mxu0
        %v2059 = vadd.f32 0.0, %v2058
        %v2060 = vpop.f32.mrb[0].mxu0
        %2061 = vdwg.mxu0
        %v2064 = vunpack.c.l.s4 1966171168
        %v2065 = vunpack.c.0.s8 %v2064
        %v2066 = vlaneseq
        %v2067 = vshrl.u32 %v2066, 7
        %v2068 = vsub.s32 %v2065, %v2067
        %v2069 = vrot.slane %v1986, %v2068
        %v2070 = vcombine.high %v2069, %v2069
        %v2072 = vunpack.c.l.s4 1966171168
        %v2073 = vunpack.c.0.s8 %v2072
        %v2074 = vlaneseq
        %v2075 = vshrl.u32 %v2074, 7
        %v2076 = vsub.s32 %v2073, %v2075
        %v2077 = vrot.slane %v2069, %v2076
        %v2079 = vunpack.c.l.s4 1966171168
        %v2080 = vunpack.c.0.s8 %v2079
        %v2081 = vlaneseq
        %v2082 = vshrl.u32 %v2081, 7
        %v2083 = vsub.s32 %v2080, %v2082
        %v2084 = vrot.slane %v2070, %v2083
        %v2085 = vlaneseq
        %v2086 = vshrl.u32 %v2085, 7
        %v2087 = vsub.s32 0, %v2086
        %v2088 = vrot.slane %v2077, %v2087
        %v2089 = vlaneseq
        %v2090 = vshrl.u32 %v2089, 7
        %v2091 = vsub.s32 0, %v2090
        %v2092 = vrot.slane %v2084, %v2091
        %v2095 = vsub.f32 %v1351, %v2088
        %v2096 = vsub.f32 %v1352, %v2088
        %v2097 = vsub.f32 %v1353, %v2088
        %v2098 = vsub.f32 %v1354, %v2088
        %v2099 = vsub.f32 %v1355, %v2088
        %v2100 = vsub.f32 %v1356, %v2088
        %v2101 = vsub.f32 %v1357, %v2088
        %v2102 = vsub.f32 %v1358, %v2088
        %v2103 = vsub.f32 %v1359, %v2088
        %v2104 = vsub.f32 %v1360, %v2088
        %v2105 = vsub.f32 %v1361, %v2088
        %v2106 = vsub.f32 %v1362, %v2088
        %v2107 = vsub.f32 %v1363, %v2088
        %v2108 = vsub.f32 %v1364, %v2088
        %v2109 = vsub.f32 %v1365, %v2088
        %v2110 = vsub.f32 %v1366, %v2088
        %v2111 = vsub.f32 %v1367, %v2088
        %v2112 = vsub.f32 %v1368, %v2088
        %v2113 = vsub.f32 %v1369, %v2088
        %v2114 = vsub.f32 %v1370, %v2088
        %v2115 = vsub.f32 %v1371, %v2088
        %v2116 = vsub.f32 %v1372, %v2088
        %v2117 = vsub.f32 %v1373, %v2088
        %v2118 = vsub.f32 %v1374, %v2088
        %v2119 = vsub.f32 %v1375, %v2088
        %v2120 = vsub.f32 %v1376, %v2088
        %v2121 = vsub.f32 %v1377, %v2088
        %v2122 = vsub.f32 %v1378, %v2088
        %v2123 = vsub.f32 %v1379, %v2088
        %v2124 = vsub.f32 %v1380, %v2088
        %v2125 = vsub.f32 %v1381, %v2088
        %v2126 = vsub.f32 %v1382, %v2088
        %v2127 = vsub.f32 %v1383, %v2092
        %v2128 = vsub.f32 %v1384, %v2092
        %v2129 = vsub.f32 %v1385, %v2092
        %v2130 = vsub.f32 %v1386, %v2092
        %v2131 = vsub.f32 %v1387, %v2092
        %v2132 = vsub.f32 %v1388, %v2092
        %v2133 = vsub.f32 %v1389, %v2092
        %v2134 = vsub.f32 %v1390, %v2092
        %v2135 = vsub.f32 %v1391, %v2092
        %v2136 = vsub.f32 %v1392, %v2092
        %v2137 = vsub.f32 %v1393, %v2092
        %v2138 = vsub.f32 %v1394, %v2092
        %v2139 = vsub.f32 %v1395, %v2092
        %v2140 = vsub.f32 %v1396, %v2092
        %v2141 = vsub.f32 %v1397, %v2092
        %v2142 = vsub.f32 %v1398, %v2092
        %v2143 = vsub.f32 %v1399, %v2092
        %v2144 = vsub.f32 %v1400, %v2092
        %v2145 = vsub.f32 %v1401, %v2092
        %v2146 = vsub.f32 %v1402, %v2092
        %v2147 = vsub.f32 %v1403, %v2092
        %v2148 = vsub.f32 %v1404, %v2092
        %v2149 = vsub.f32 %v1405, %v2092
        %v2150 = vsub.f32 %v1406, %v2092
        %v2151 = vsub.f32 %v1407, %v2092
        %v2152 = vsub.f32 %v1408, %v2092
        %v2153 = vsub.f32 %v1409, %v2092
        %v2154 = vsub.f32 %v1410, %v2092
        %v2155 = vsub.f32 %v1411, %v2092
        %v2156 = vsub.f32 %v1412, %v2092
        %v2157 = vsub.f32 %v1413, %v2092
        %v2158 = vsub.f32 %v1414, %v2092
        %v2161 = vunpack.c.l.s4 1966171168
        %v2162 = vunpack.c.0.s8 %v2161
        %v2163 = vlaneseq
        %v2164 = vshrl.u32 %v2163, 7
        %v2165 = vsub.s32 %v2162, %v2164
        %v2166 = vrot.slane %v2059, %v2165
        %v2167 = vcombine.high %v2166, %v2166
        %v2169 = vunpack.c.l.s4 1966171168
        %v2170 = vunpack.c.0.s8 %v2169
        %v2171 = vlaneseq
        %v2172 = vshrl.u32 %v2171, 7
        %v2173 = vsub.s32 %v2170, %v2172
        %v2174 = vrot.slane %v2166, %v2173
        %v2176 = vunpack.c.l.s4 1966171168
        %v2177 = vunpack.c.0.s8 %v2176
        %v2178 = vlaneseq
        %v2179 = vshrl.u32 %v2178, 7
        %v2180 = vsub.s32 %v2177, %v2179
        %v2181 = vrot.slane %v2167, %v2180
        %v2182 = vlaneseq
        %v2183 = vshrl.u32 %v2182, 7
        %v2184 = vsub.s32 0, %v2183
        %v2185 = vrot.slane %v2174, %v2184
        %v2186 = vlaneseq
        %v2187 = vshrl.u32 %v2186, 7
        %v2188 = vsub.s32 0, %v2187
        %v2189 = vrot.slane %v2181, %v2188
        %v2192 = vmul.f32 %v2095, %v2185
        %v2193 = vmul.f32 %v2096, %v2185
        %v2194 = vmul.f32 %v2097, %v2185
        %v2195 = vmul.f32 %v2098, %v2185
        %v2196 = vmul.f32 %v2099, %v2185
        %v2197 = vmul.f32 %v2100, %v2185
        %v2198 = vmul.f32 %v2101, %v2185
        %v2199 = vmul.f32 %v2102, %v2185
        %v2200 = vmul.f32 %v2103, %v2185
        %v2201 = vmul.f32 %v2104, %v2185
        %v2202 = vmul.f32 %v2105, %v2185
        %v2203 = vmul.f32 %v2106, %v2185
        %v2204 = vmul.f32 %v2107, %v2185
        %v2205 = vmul.f32 %v2108, %v2185
        %v2206 = vmul.f32 %v2109, %v2185
        %v2207 = vmul.f32 %v2110, %v2185
        %v2208 = vmul.f32 %v2111, %v2185
        %v2209 = vmul.f32 %v2112, %v2185
        %v2210 = vmul.f32 %v2113, %v2185
        %v2211 = vmul.f32 %v2114, %v2185
        %v2212 = vmul.f32 %v2115, %v2185
        %v2213 = vmul.f32 %v2116, %v2185
        %v2214 = vmul.f32 %v2117, %v2185
        %v2215 = vmul.f32 %v2118, %v2185
        %v2216 = vmul.f32 %v2119, %v2185
        %v2217 = vmul.f32 %v2120, %v2185
        %v2218 = vmul.f32 %v2121, %v2185
        %v2219 = vmul.f32 %v2122, %v2185
        %v2220 = vmul.f32 %v2123, %v2185
        %v2221 = vmul.f32 %v2124, %v2185
        %v2222 = vmul.f32 %v2125, %v2185
        %v2223 = vmul.f32 %v2126, %v2185
        %v2224 = vmul.f32 %v2127, %v2189
        %v2225 = vmul.f32 %v2128, %v2189
        %v2226 = vmul.f32 %v2129, %v2189
        %v2227 = vmul.f32 %v2130, %v2189
        %v2228 = vmul.f32 %v2131, %v2189
        %v2229 = vmul.f32 %v2132, %v2189
        %v2230 = vmul.f32 %v2133, %v2189
        %v2231 = vmul.f32 %v2134, %v2189
        %v2232 = vmul.f32 %v2135, %v2189
        %v2233 = vmul.f32 %v2136, %v2189
        %v2234 = vmul.f32 %v2137, %v2189
        %v2235 = vmul.f32 %v2138, %v2189
        %v2236 = vmul.f32 %v2139, %v2189
        %v2237 = vmul.f32 %v2140, %v2189
        %v2238 = vmul.f32 %v2141, %v2189
        %v2239 = vmul.f32 %v2142, %v2189
        %v2240 = vmul.f32 %v2143, %v2189
        %v2241 = vmul.f32 %v2144, %v2189
        %v2242 = vmul.f32 %v2145, %v2189
        %v2243 = vmul.f32 %v2146, %v2189
        %v2244 = vmul.f32 %v2147, %v2189
        %v2245 = vmul.f32 %v2148, %v2189
        %v2246 = vmul.f32 %v2149, %v2189
        %v2247 = vmul.f32 %v2150, %v2189
        %v2248 = vmul.f32 %v2151, %v2189
        %v2249 = vmul.f32 %v2152, %v2189
        %v2250 = vmul.f32 %v2153, %v2189
        %v2251 = vmul.f32 %v2154, %v2189
        %v2252 = vmul.f32 %v2155, %v2189
        %v2253 = vmul.f32 %v2156, %v2189
        %v2254 = vmul.f32 %v2157, %v2189
        %v2255 = vmul.f32 %v2158, %v2189
        %v2256 = vlaneseq
        %v2257 = vshrl.u32 %v2256, 7
        %v2258 = vsub.s32 0, %v2257
        %v2259 = vrot.slane %v1415, %v2258
        %v2260 = vmul.f32 %v2192, %v2259
        %v2261 = vmul.f32 %v2193, %v2259
        %v2262 = vmul.f32 %v2194, %v2259
        %v2263 = vmul.f32 %v2195, %v2259
        %v2264 = vmul.f32 %v2196, %v2259
        %v2265 = vmul.f32 %v2197, %v2259
        %v2266 = vmul.f32 %v2198, %v2259
        %v2267 = vmul.f32 %v2199, %v2259
        %v2268 = vmul.f32 %v2200, %v2259
        %v2269 = vmul.f32 %v2201, %v2259
        %v2270 = vmul.f32 %v2202, %v2259
        %v2271 = vmul.f32 %v2203, %v2259
        %v2272 = vmul.f32 %v2204, %v2259
        %v2273 = vmul.f32 %v2205, %v2259
        %v2274 = vmul.f32 %v2206, %v2259
        %v2275 = vmul.f32 %v2207, %v2259
        %v2276 = vmul.f32 %v2208, %v2259
        %v2277 = vmul.f32 %v2209, %v2259
        %v2278 = vmul.f32 %v2210, %v2259
        %v2279 = vmul.f32 %v2211, %v2259
        %v2280 = vmul.f32 %v2212, %v2259
        %v2281 = vmul.f32 %v2213, %v2259
        %v2282 = vmul.f32 %v2214, %v2259
        %v2283 = vmul.f32 %v2215, %v2259
        %v2284 = vmul.f32 %v2216, %v2259
        %v2285 = vmul.f32 %v2217, %v2259
        %v2286 = vmul.f32 %v2218, %v2259
        %v2287 = vmul.f32 %v2219, %v2259
        %v2288 = vmul.f32 %v2220, %v2259
        %v2289 = vmul.f32 %v2221, %v2259
        %v2290 = vmul.f32 %v2222, %v2259
        %v2291 = vmul.f32 %v2223, %v2259
        %v2292 = vmul.f32 %v2224, %v2259
        %v2293 = vmul.f32 %v2225, %v2259
        %v2294 = vmul.f32 %v2226, %v2259
        %v2295 = vmul.f32 %v2227, %v2259
        %v2296 = vmul.f32 %v2228, %v2259
        %v2297 = vmul.f32 %v2229, %v2259
        %v2298 = vmul.f32 %v2230, %v2259
        %v2299 = vmul.f32 %v2231, %v2259
        %v2300 = vmul.f32 %v2232, %v2259
        %v2301 = vmul.f32 %v2233, %v2259
        %v2302 = vmul.f32 %v2234, %v2259
        %v2303 = vmul.f32 %v2235, %v2259
        %v2304 = vmul.f32 %v2236, %v2259
        %v2305 = vmul.f32 %v2237, %v2259
        %v2306 = vmul.f32 %v2238, %v2259
        %v2307 = vmul.f32 %v2239, %v2259
        %v2308 = vmul.f32 %v2240, %v2259
        %v2309 = vmul.f32 %v2241, %v2259
        %v2310 = vmul.f32 %v2242, %v2259
        %v2311 = vmul.f32 %v2243, %v2259
        %v2312 = vmul.f32 %v2244, %v2259
        %v2313 = vmul.f32 %v2245, %v2259
        %v2314 = vmul.f32 %v2246, %v2259
        %v2315 = vmul.f32 %v2247, %v2259
        %v2316 = vmul.f32 %v2248, %v2259
        %v2317 = vmul.f32 %v2249, %v2259
        %v2318 = vmul.f32 %v2250, %v2259
        %v2319 = vmul.f32 %v2251, %v2259
        %v2320 = vmul.f32 %v2252, %v2259
        %v2321 = vmul.f32 %v2253, %v2259
        %v2322 = vmul.f32 %v2254, %v2259
        %v2323 = vmul.f32 %v2255, %v2259
        %v2324 = vlaneseq
        %v2325 = vshrl.u32 %v2324, 7
        %v2326 = vsub.s32 0, %v2325
        %v2327 = vrot.slane %v1416, %v2326
        %v2328 = vadd.f32 %v2260, %v2327
        %v2329 = vadd.f32 %v2261, %v2327
        %v2330 = vadd.f32 %v2262, %v2327
        %v2331 = vadd.f32 %v2263, %v2327
        %v2332 = vadd.f32 %v2264, %v2327
        %v2333 = vadd.f32 %v2265, %v2327
        %v2334 = vadd.f32 %v2266, %v2327
        %v2335 = vadd.f32 %v2267, %v2327
        %v2336 = vadd.f32 %v2268, %v2327
        %v2337 = vadd.f32 %v2269, %v2327
        %v2338 = vadd.f32 %v2270, %v2327
        %v2339 = vadd.f32 %v2271, %v2327
        %v2340 = vadd.f32 %v2272, %v2327
        %v2341 = vadd.f32 %v2273, %v2327
        %v2342 = vadd.f32 %v2274, %v2327
        %v2343 = vadd.f32 %v2275, %v2327
        %v2344 = vadd.f32 %v2276, %v2327
        %v2345 = vadd.f32 %v2277, %v2327
        %v2346 = vadd.f32 %v2278, %v2327
        %v2347 = vadd.f32 %v2279, %v2327
        %v2348 = vadd.f32 %v2280, %v2327
        %v2349 = vadd.f32 %v2281, %v2327
        %v2350 = vadd.f32 %v2282, %v2327
        %v2351 = vadd.f32 %v2283, %v2327
        %v2352 = vadd.f32 %v2284, %v2327
        %v2353 = vadd.f32 %v2285, %v2327
        %v2354 = vadd.f32 %v2286, %v2327
        %v2355 = vadd.f32 %v2287, %v2327
        %v2356 = vadd.f32 %v2288, %v2327
        %v2357 = vadd.f32 %v2289, %v2327
        %v2358 = vadd.f32 %v2290, %v2327
        %v2359 = vadd.f32 %v2291, %v2327
        %v2360 = vadd.f32 %v2292, %v2327
        %v2361 = vadd.f32 %v2293, %v2327
        %v2362 = vadd.f32 %v2294, %v2327
        %v2363 = vadd.f32 %v2295, %v2327
        %v2364 = vadd.f32 %v2296, %v2327
        %v2365 = vadd.f32 %v2297, %v2327
        %v2366 = vadd.f32 %v2298, %v2327
        %v2367 = vadd.f32 %v2299, %v2327
        %v2368 = vadd.f32 %v2300, %v2327
        %v2369 = vadd.f32 %v2301, %v2327
        %v2370 = vadd.f32 %v2302, %v2327
        %v2371 = vadd.f32 %v2303, %v2327
        %v2372 = vadd.f32 %v2304, %v2327
        %v2373 = vadd.f32 %v2305, %v2327
        %v2374 = vadd.f32 %v2306, %v2327
        %v2375 = vadd.f32 %v2307, %v2327
        %v2376 = vadd.f32 %v2308, %v2327
        %v2377 = vadd.f32 %v2309, %v2327
        %v2378 = vadd.f32 %v2310, %v2327
        %v2379 = vadd.f32 %v2311, %v2327
        %v2380 = vadd.f32 %v2312, %v2327
        %v2381 = vadd.f32 %v2313, %v2327
        %v2382 = vadd.f32 %v2314, %v2327
        %v2383 = vadd.f32 %v2315, %v2327
        %v2384 = vadd.f32 %v2316, %v2327
        %v2385 = vadd.f32 %v2317, %v2327
        %v2386 = vadd.f32 %v2318, %v2327
        %v2387 = vadd.f32 %v2319, %v2327
        %v2388 = vadd.f32 %v2320, %v2327
        %v2389 = vadd.f32 %v2321, %v2327
        %v2390 = vadd.f32 %v2322, %v2327
        %v2391 = vadd.f32 %v2323, %v2327
        %s2392 = scalar_lea.vmem [#allocation2], 16
        %2393 = vst.msk [vmem:[%s2392 + $0x1] sm:$0xff] %vm444, %v2328
        %2394 = vst.msk [vmem:[%s2392 + $0x11] sm:$0xff] %vm444, %v2329
        %2395 = vst.msk [vmem:[%s2392 + $0x21] sm:$0xff] %vm444, %v2330
        %2396 = vst.msk [vmem:[%s2392 + $0x31] sm:$0xff] %vm444, %v2331
        %2397 = vst.msk [vmem:[%s2392 + $0x41] sm:$0xff] %vm444, %v2332
        %2398 = vst.msk [vmem:[%s2392 + $0x51] sm:$0xff] %vm444, %v2333
        %2399 = vst.msk [vmem:[%s2392 + $0x61] sm:$0xff] %vm444, %v2334
        %2400 = vst.msk [vmem:[%s2392 + $0x71] sm:$0xff] %vm444, %v2335
        %s2401 = scalar_lea.vmem [#allocation2], 160
        %2402 = vst.msk [vmem:[%s2401] sm:$0xff] %vm444, %v2336
        %2403 = vst.msk [vmem:[%s2401 + $0x10] sm:$0xff] %vm444, %v2337
        %2404 = vst.msk [vmem:[%s2401 + $0x20] sm:$0xff] %vm444, %v2338
        %2405 = vst.msk [vmem:[%s2401 + $0x30] sm:$0xff] %vm444, %v2339
        %2406 = vst.msk [vmem:[%s2401 + $0x40] sm:$0xff] %vm444, %v2340
        %2407 = vst.msk [vmem:[%s2401 + $0x50] sm:$0xff] %vm444, %v2341
        %2408 = vst.msk [vmem:[%s2401 + $0x60] sm:$0xff] %vm444, %v2342
        %2409 = vst.msk [vmem:[%s2401 + $0x70] sm:$0xff] %vm444, %v2343
        %s2410 = scalar_lea.vmem [#allocation2], 288
        %2411 = vst.msk [vmem:[%s2410 + $0x1] sm:$0xff] %vm444, %v2344
        %2412 = vst.msk [vmem:[%s2410 + $0x11] sm:$0xff] %vm444, %v2345
        %2413 = vst.msk [vmem:[%s2410 + $0x21] sm:$0xff] %vm444, %v2346
        %2414 = vst.msk [vmem:[%s2410 + $0x31] sm:$0xff] %vm444, %v2347
        %2415 = vst.msk [vmem:[%s2410 + $0x41] sm:$0xff] %vm444, %v2348
        %2416 = vst.msk [vmem:[%s2410 + $0x51] sm:$0xff] %vm444, %v2349
        %2417 = vst.msk [vmem:[%s2410 + $0x61] sm:$0xff] %vm444, %v2350
        %2418 = vst.msk [vmem:[%s2410 + $0x71] sm:$0xff] %vm444, %v2351
        %s2419 = scalar_lea.vmem [#allocation2], 432
        %2420 = vst.msk [vmem:[%s2419] sm:$0xff] %vm444, %v2352
        %2421 = vst.msk [vmem:[%s2419 + $0x10] sm:$0xff] %vm444, %v2353
        %2422 = vst.msk [vmem:[%s2419 + $0x20] sm:$0xff] %vm444, %v2354
        %2423 = vst.msk [vmem:[%s2419 + $0x30] sm:$0xff] %vm444, %v2355
        %2424 = vst.msk [vmem:[%s2419 + $0x40] sm:$0xff] %vm444, %v2356
        %2425 = vst.msk [vmem:[%s2419 + $0x50] sm:$0xff] %vm444, %v2357
        %2426 = vst.msk [vmem:[%s2419 + $0x60] sm:$0xff] %vm444, %v2358
        %2427 = vst.msk [vmem:[%s2419 + $0x70] sm:$0xff] %vm444, %v2359
        %s2428 = scalar_lea.vmem [#allocation2], 592
        %2429 = vst.msk [vmem:[%s2428 + $0x1] sm:$0xff] %vm444, %v2360
        %2430 = vst.msk [vmem:[%s2428 + $0x11] sm:$0xff] %vm444, %v2361
        %2431 = vst.msk [vmem:[%s2428 + $0x21] sm:$0xff] %vm444, %v2362
        %2432 = vst.msk [vmem:[%s2428 + $0x31] sm:$0xff] %vm444, %v2363
        %2433 = vst.msk [vmem:[%s2428 + $0x41] sm:$0xff] %vm444, %v2364
        %2434 = vst.msk [vmem:[%s2428 + $0x51] sm:$0xff] %vm444, %v2365
        %2435 = vst.msk [vmem:[%s2428 + $0x61] sm:$0xff] %vm444, %v2366
        %2436 = vst.msk [vmem:[%s2428 + $0x71] sm:$0xff] %vm444, %v2367
        %s2437 = scalar_lea.vmem [#allocation2], 736
        %2438 = vst.msk [vmem:[%s2437] sm:$0xff] %vm444, %v2368
        %2439 = vst.msk [vmem:[%s2437 + $0x10] sm:$0xff] %vm444, %v2369
        %2440 = vst.msk [vmem:[%s2437 + $0x20] sm:$0xff] %vm444, %v2370
        %2441 = vst.msk [vmem:[%s2437 + $0x30] sm:$0xff] %vm444, %v2371
        %2442 = vst.msk [vmem:[%s2437 + $0x40] sm:$0xff] %vm444, %v2372
        %2443 = vst.msk [vmem:[%s2437 + $0x50] sm:$0xff] %vm444, %v2373
        %2444 = vst.msk [vmem:[%s2437 + $0x60] sm:$0xff] %vm444, %v2374
        %2445 = vst.msk [vmem:[%s2437 + $0x70] sm:$0xff] %vm444, %v2375
        %s2446 = scalar_lea.vmem [#allocation2], 864
        %2447 = vst.msk [vmem:[%s2446 + $0x1] sm:$0xff] %vm444, %v2376
        %2448 = vst.msk [vmem:[%s2446 + $0x11] sm:$0xff] %vm444, %v2377
        %2449 = vst.msk [vmem:[%s2446 + $0x21] sm:$0xff] %vm444, %v2378
        %2450 = vst.msk [vmem:[%s2446 + $0x31] sm:$0xff] %vm444, %v2379
        %2451 = vst.msk [vmem:[%s2446 + $0x41] sm:$0xff] %vm444, %v2380
        %2452 = vst.msk [vmem:[%s2446 + $0x51] sm:$0xff] %vm444, %v2381
        %2453 = vst.msk [vmem:[%s2446 + $0x61] sm:$0xff] %vm444, %v2382
        %2454 = vst.msk [vmem:[%s2446 + $0x71] sm:$0xff] %vm444, %v2383
        %s2455 = scalar_lea.vmem [#allocation2], 1008
        %2456 = vst.msk [vmem:[%s2455] sm:$0xff] %vm444, %v2384
        %2457 = vst.msk [vmem:[%s2455 + $0x10] sm:$0xff] %vm444, %v2385
        %2458 = vst.msk [vmem:[%s2455 + $0x20] sm:$0xff] %vm444, %v2386
        %2459 = vst.msk [vmem:[%s2455 + $0x30] sm:$0xff] %vm444, %v2387
        %2460 = vst.msk [vmem:[%s2455 + $0x40] sm:$0xff] %vm444, %v2388
        %2461 = vst.msk [vmem:[%s2455 + $0x50] sm:$0xff] %vm444, %v2389
        %2462 = vst.msk [vmem:[%s2455 + $0x60] sm:$0xff] %vm444, %v2390
        %2463 = vst.msk [vmem:[%s2455 + $0x70] sm:$0xff] %vm444, %v2391
        %v2464 = vld [vmem:[#allocation2] sm:$0xff]
        %v2465 = vld [vmem:[#allocation2 + $0x10] sm:$0xff]
        %v2466 = vld [vmem:[#allocation2 + $0x20] sm:$0xff]
        %v2467 = vld [vmem:[#allocation2 + $0x30] sm:$0xff]
        %v2468 = vld [vmem:[#allocation2 + $0x40] sm:$0xff]
        %v2469 = vld [vmem:[#allocation2 + $0x50] sm:$0xff]
        %v2470 = vld [vmem:[#allocation2 + $0x60] sm:$0xff]
        %v2471 = vld [vmem:[#allocation2 + $0x70] sm:$0xff]
        %s2472 = scalar_lea.vmem [#allocation2], 576
        %v2473 = vld [vmem:[%s2472] sm:$0xff]
        %v2474 = vld [vmem:[%s2472 + $0x10] sm:$0xff]
        %v2475 = vld [vmem:[%s2472 + $0x20] sm:$0xff]
        %v2476 = vld [vmem:[%s2472 + $0x30] sm:$0xff]
        %v2477 = vld [vmem:[%s2472 + $0x40] sm:$0xff]
        %v2478 = vld [vmem:[%s2472 + $0x50] sm:$0xff]
        %v2479 = vld [vmem:[%s2472 + $0x60] sm:$0xff]
        %v2480 = vld [vmem:[%s2472 + $0x70] sm:$0xff]
        %s2481 = scalar_lea.vmem [#allocation2], 144
        %v2482 = vld [vmem:[%s2481] sm:$0xff]
        %v2483 = vld [vmem:[%s2481 + $0x10] sm:$0xff]
        %v2484 = vld [vmem:[%s2481 + $0x20] sm:$0xff]
        %v2485 = vld [vmem:[%s2481 + $0x30] sm:$0xff]
        %v2486 = vld [vmem:[%s2481 + $0x40] sm:$0xff]
        %v2487 = vld [vmem:[%s2481 + $0x50] sm:$0xff]
        %v2488 = vld [vmem:[%s2481 + $0x60] sm:$0xff]
        %v2489 = vld [vmem:[%s2481 + $0x70] sm:$0xff]
        %s2490 = scalar_lea.vmem [#allocation2], 720
        %v2491 = vld [vmem:[%s2490] sm:$0xff]
        %v2492 = vld [vmem:[%s2490 + $0x10] sm:$0xff]
        %v2493 = vld [vmem:[%s2490 + $0x20] sm:$0xff]
        %v2494 = vld [vmem:[%s2490 + $0x30] sm:$0xff]
        %v2495 = vld [vmem:[%s2490 + $0x40] sm:$0xff]
        %v2496 = vld [vmem:[%s2490 + $0x50] sm:$0xff]
        %v2497 = vld [vmem:[%s2490 + $0x60] sm:$0xff]
        %v2498 = vld [vmem:[%s2490 + $0x70] sm:$0xff]
        %v2499 = vld [vmem:[#allocation2 + $0x1] sm:$0xff]
        %v2500 = vld [vmem:[#allocation2 + $0x11] sm:$0xff]
        %v2501 = vld [vmem:[#allocation2 + $0x21] sm:$0xff]
        %v2502 = vld [vmem:[#allocation2 + $0x31] sm:$0xff]
        %v2503 = vld [vmem:[#allocation2 + $0x41] sm:$0xff]
        %v2504 = vld [vmem:[#allocation2 + $0x51] sm:$0xff]
        %v2505 = vld [vmem:[#allocation2 + $0x61] sm:$0xff]
        %v2506 = vld [vmem:[#allocation2 + $0x71] sm:$0xff]
        %v2507 = vld [vmem:[%s2472 + $0x1] sm:$0xff]
        %v2508 = vld [vmem:[%s2472 + $0x11] sm:$0xff]
        %v2509 = vld [vmem:[%s2472 + $0x21] sm:$0xff]
        %v2510 = vld [vmem:[%s2472 + $0x31] sm:$0xff]
        %v2511 = vld [vmem:[%s2472 + $0x41] sm:$0xff]
        %v2512 = vld [vmem:[%s2472 + $0x51] sm:$0xff]
        %v2513 = vld [vmem:[%s2472 + $0x61] sm:$0xff]
        %v2514 = vld [vmem:[%s2472 + $0x71] sm:$0xff]
        %v2515 = vld [vmem:[%s2410] sm:$0xff]
        %v2516 = vld [vmem:[%s2410 + $0x10] sm:$0xff]
        %v2517 = vld [vmem:[%s2410 + $0x20] sm:$0xff]
        %v2518 = vld [vmem:[%s2410 + $0x30] sm:$0xff]
        %v2519 = vld [vmem:[%s2410 + $0x40] sm:$0xff]
        %v2520 = vld [vmem:[%s2410 + $0x50] sm:$0xff]
        %v2521 = vld [vmem:[%s2410 + $0x60] sm:$0xff]
        %v2522 = vld [vmem:[%s2410 + $0x70] sm:$0xff]
        %v2523 = vld [vmem:[%s2446] sm:$0xff]
        %v2524 = vld [vmem:[%s2446 + $0x10] sm:$0xff]
        %v2525 = vld [vmem:[%s2446 + $0x20] sm:$0xff]
        %v2526 = vld [vmem:[%s2446 + $0x30] sm:$0xff]
        %v2527 = vld [vmem:[%s2446 + $0x40] sm:$0xff]
        %v2528 = vld [vmem:[%s2446 + $0x50] sm:$0xff]
        %v2529 = vld [vmem:[%s2446 + $0x60] sm:$0xff]
        %v2530 = vld [vmem:[%s2446 + $0x70] sm:$0xff]
        %v2531 = vld [vmem:[%s2419] sm:$0xff]
        %v2532 = vld [vmem:[%s2419 + $0x10] sm:$0xff]
        %v2533 = vld [vmem:[%s2419 + $0x20] sm:$0xff]
        %v2534 = vld [vmem:[%s2419 + $0x30] sm:$0xff]
        %v2535 = vld [vmem:[%s2419 + $0x40] sm:$0xff]
        %v2536 = vld [vmem:[%s2419 + $0x50] sm:$0xff]
        %v2537 = vld [vmem:[%s2419 + $0x60] sm:$0xff]
        %v2538 = vld [vmem:[%s2419 + $0x70] sm:$0xff]
        %v2539 = vld [vmem:[%s2455] sm:$0xff]
        %v2540 = vld [vmem:[%s2455 + $0x10] sm:$0xff]
        %v2541 = vld [vmem:[%s2455 + $0x20] sm:$0xff]
        %v2542 = vld [vmem:[%s2455 + $0x30] sm:$0xff]
        %v2543 = vld [vmem:[%s2455 + $0x40] sm:$0xff]
        %v2544 = vld [vmem:[%s2455 + $0x50] sm:$0xff]
        %v2545 = vld [vmem:[%s2455 + $0x60] sm:$0xff]
        %v2546 = vld [vmem:[%s2455 + $0x70] sm:$0xff]
        %v2547 = vld [vmem:[%s2410 + $0x1] sm:$0xff]
        %v2548 = vld [vmem:[%s2410 + $0x11] sm:$0xff]
        %v2549 = vld [vmem:[%s2410 + $0x21] sm:$0xff]
        %v2550 = vld [vmem:[%s2410 + $0x31] sm:$0xff]
        %v2551 = vld [vmem:[%s2410 + $0x41] sm:$0xff]
        %v2552 = vld [vmem:[%s2410 + $0x51] sm:$0xff]
        %v2553 = vld [vmem:[%s2410 + $0x61] sm:$0xff]
        %v2554 = vld [vmem:[%s2410 + $0x71] sm:$0xff]
        %v2555 = vld [vmem:[%s2446 + $0x1] sm:$0xff]
        %v2556 = vld [vmem:[%s2446 + $0x11] sm:$0xff]
        %v2557 = vld [vmem:[%s2446 + $0x21] sm:$0xff]
        %v2558 = vld [vmem:[%s2446 + $0x31] sm:$0xff]
        %v2559 = vld [vmem:[%s2446 + $0x41] sm:$0xff]
        %v2560 = vld [vmem:[%s2446 + $0x51] sm:$0xff]
        %v2561 = vld [vmem:[%s2446 + $0x61] sm:$0xff]
        %v2562 = vld [vmem:[%s2446 + $0x71] sm:$0xff]
        %v2563 = vld [vmem:[%s2392] sm:$0xff]
        %v2564 = vld [vmem:[%s2392 + $0x10] sm:$0xff]
        %v2565 = vld [vmem:[%s2392 + $0x20] sm:$0xff]
        %v2566 = vld [vmem:[%s2392 + $0x30] sm:$0xff]
        %v2567 = vld [vmem:[%s2392 + $0x40] sm:$0xff]
        %v2568 = vld [vmem:[%s2392 + $0x50] sm:$0xff]
        %v2569 = vld [vmem:[%s2392 + $0x60] sm:$0xff]
        %v2570 = vld [vmem:[%s2392 + $0x70] sm:$0xff]
        %v2571 = vld [vmem:[%s2428] sm:$0xff]
        %v2572 = vld [vmem:[%s2428 + $0x10] sm:$0xff]
        %v2573 = vld [vmem:[%s2428 + $0x20] sm:$0xff]
        %v2574 = vld [vmem:[%s2428 + $0x30] sm:$0xff]
        %v2575 = vld [vmem:[%s2428 + $0x40] sm:$0xff]
        %v2576 = vld [vmem:[%s2428 + $0x50] sm:$0xff]
        %v2577 = vld [vmem:[%s2428 + $0x60] sm:$0xff]
        %v2578 = vld [vmem:[%s2428 + $0x70] sm:$0xff]
        %v2579 = vld [vmem:[%s2401] sm:$0xff]
        %v2580 = vld [vmem:[%s2401 + $0x10] sm:$0xff]
        %v2581 = vld [vmem:[%s2401 + $0x20] sm:$0xff]
        %v2582 = vld [vmem:[%s2401 + $0x30] sm:$0xff]
        %v2583 = vld [vmem:[%s2401 + $0x40] sm:$0xff]
        %v2584 = vld [vmem:[%s2401 + $0x50] sm:$0xff]
        %v2585 = vld [vmem:[%s2401 + $0x60] sm:$0xff]
        %v2586 = vld [vmem:[%s2401 + $0x70] sm:$0xff]
        %v2587 = vld [vmem:[%s2437] sm:$0xff]
        %v2588 = vld [vmem:[%s2437 + $0x10] sm:$0xff]
        %v2589 = vld [vmem:[%s2437 + $0x20] sm:$0xff]
        %v2590 = vld [vmem:[%s2437 + $0x30] sm:$0xff]
        %v2591 = vld [vmem:[%s2437 + $0x40] sm:$0xff]
        %v2592 = vld [vmem:[%s2437 + $0x50] sm:$0xff]
        %v2593 = vld [vmem:[%s2437 + $0x60] sm:$0xff]
        %v2594 = vld [vmem:[%s2437 + $0x70] sm:$0xff]
        %v2595 = vld [vmem:[%s2392 + $0x1] sm:$0xff]
        %v2596 = vld [vmem:[%s2392 + $0x11] sm:$0xff]
        %v2597 = vld [vmem:[%s2392 + $0x21] sm:$0xff]
        %v2598 = vld [vmem:[%s2392 + $0x31] sm:$0xff]
        %v2599 = vld [vmem:[%s2392 + $0x41] sm:$0xff]
        %v2600 = vld [vmem:[%s2392 + $0x51] sm:$0xff]
        %v2601 = vld [vmem:[%s2392 + $0x61] sm:$0xff]
        %v2602 = vld [vmem:[%s2392 + $0x71] sm:$0xff]
        %v2603 = vld [vmem:[%s2428 + $0x1] sm:$0xff]
        %v2604 = vld [vmem:[%s2428 + $0x11] sm:$0xff]
        %v2605 = vld [vmem:[%s2428 + $0x21] sm:$0xff]
        %v2606 = vld [vmem:[%s2428 + $0x31] sm:$0xff]
        %v2607 = vld [vmem:[%s2428 + $0x41] sm:$0xff]
        %v2608 = vld [vmem:[%s2428 + $0x51] sm:$0xff]
        %v2609 = vld [vmem:[%s2428 + $0x61] sm:$0xff]
        %v2610 = vld [vmem:[%s2428 + $0x71] sm:$0xff]
        %2627 = vrot.lane.b32.xlu0 %v2482, 64
        %v2628 = vpop.permute.xlu0 %2627
        %2629 = vrot.lane.b32.xlu0 %v2483, 64
        %v2630 = vpop.permute.xlu0 %2629
        %2631 = vrot.lane.b32.xlu0 %v2484, 64
        %v2632 = vpop.permute.xlu0 %2631
        %2633 = vrot.lane.b32.xlu0 %v2485, 64
        %v2634 = vpop.permute.xlu0 %2633
        %2635 = vrot.lane.b32.xlu0 %v2486, 64
        %v2636 = vpop.permute.xlu0 %2635
        %2637 = vrot.lane.b32.xlu0 %v2487, 64
        %v2638 = vpop.permute.xlu0 %2637
        %2639 = vrot.lane.b32.xlu0 %v2488, 64
        %v2640 = vpop.permute.xlu0 %2639
        %2641 = vrot.lane.b32.xlu0 %v2489, 64
        %v2642 = vpop.permute.xlu0 %2641
        %2643 = vrot.lane.b32.xlu0 %v2491, 64
        %v2644 = vpop.permute.xlu0 %2643
        %2645 = vrot.lane.b32.xlu0 %v2492, 64
        %v2646 = vpop.permute.xlu0 %2645
        %2647 = vrot.lane.b32.xlu0 %v2493, 64
        %v2648 = vpop.permute.xlu0 %2647
        %2649 = vrot.lane.b32.xlu0 %v2494, 64
        %v2650 = vpop.permute.xlu0 %2649
        %2651 = vrot.lane.b32.xlu0 %v2495, 64
        %v2652 = vpop.permute.xlu0 %2651
        %2653 = vrot.lane.b32.xlu0 %v2496, 64
        %v2654 = vpop.permute.xlu0 %2653
        %2655 = vrot.lane.b32.xlu0 %v2497, 64
        %v2656 = vpop.permute.xlu0 %2655
        %2657 = vrot.lane.b32.xlu0 %v2498, 64
        %v2658 = vpop.permute.xlu0 %2657
        %2691 = vrot.lane.b32.xlu0 %v2515, 64
        %v2692 = vpop.permute.xlu0 %2691
        %2693 = vrot.lane.b32.xlu0 %v2516, 64
        %v2694 = vpop.permute.xlu0 %2693
        %2695 = vrot.lane.b32.xlu0 %v2517, 64
        %v2696 = vpop.permute.xlu0 %2695
        %2697 = vrot.lane.b32.xlu0 %v2518, 64
        %v2698 = vpop.permute.xlu0 %2697
        %2699 = vrot.lane.b32.xlu0 %v2519, 64
        %v2700 = vpop.permute.xlu0 %2699
        %2701 = vrot.lane.b32.xlu0 %v2520, 64
        %v2702 = vpop.permute.xlu0 %2701
        %2703 = vrot.lane.b32.xlu0 %v2521, 64
        %v2704 = vpop.permute.xlu0 %2703
        %2705 = vrot.lane.b32.xlu0 %v2522, 64
        %v2706 = vpop.permute.xlu0 %2705
        %2707 = vrot.lane.b32.xlu0 %v2523, 64
        %v2708 = vpop.permute.xlu0 %2707
        %2709 = vrot.lane.b32.xlu0 %v2524, 64
        %v2710 = vpop.permute.xlu0 %2709
        %2711 = vrot.lane.b32.xlu0 %v2525, 64
        %v2712 = vpop.permute.xlu0 %2711
        %2713 = vrot.lane.b32.xlu0 %v2526, 64
        %v2714 = vpop.permute.xlu0 %2713
        %2715 = vrot.lane.b32.xlu0 %v2527, 64
        %v2716 = vpop.permute.xlu0 %2715
        %2717 = vrot.lane.b32.xlu0 %v2528, 64
        %v2718 = vpop.permute.xlu0 %2717
        %2719 = vrot.lane.b32.xlu0 %v2529, 64
        %v2720 = vpop.permute.xlu0 %2719
        %2721 = vrot.lane.b32.xlu0 %v2530, 64
        %v2722 = vpop.permute.xlu0 %2721
        %2755 = vrot.lane.b32.xlu0 %v2547, 64
        %v2756 = vpop.permute.xlu0 %2755
        %2757 = vrot.lane.b32.xlu0 %v2548, 64
        %v2758 = vpop.permute.xlu0 %2757
        %2759 = vrot.lane.b32.xlu0 %v2549, 64
        %v2760 = vpop.permute.xlu0 %2759
        %2761 = vrot.lane.b32.xlu0 %v2550, 64
        %v2762 = vpop.permute.xlu0 %2761
        %2763 = vrot.lane.b32.xlu0 %v2551, 64
        %v2764 = vpop.permute.xlu0 %2763
        %2765 = vrot.lane.b32.xlu0 %v2552, 64
        %v2766 = vpop.permute.xlu0 %2765
        %2767 = vrot.lane.b32.xlu0 %v2553, 64
        %v2768 = vpop.permute.xlu0 %2767
        %2769 = vrot.lane.b32.xlu0 %v2554, 64
        %v2770 = vpop.permute.xlu0 %2769
        %2771 = vrot.lane.b32.xlu0 %v2555, 64
        %v2772 = vpop.permute.xlu0 %2771
        %2773 = vrot.lane.b32.xlu0 %v2556, 64
        %v2774 = vpop.permute.xlu0 %2773
        %2775 = vrot.lane.b32.xlu0 %v2557, 64
        %v2776 = vpop.permute.xlu0 %2775
        %2777 = vrot.lane.b32.xlu0 %v2558, 64
        %v2778 = vpop.permute.xlu0 %2777
        %2779 = vrot.lane.b32.xlu0 %v2559, 64
        %v2780 = vpop.permute.xlu0 %2779
        %2781 = vrot.lane.b32.xlu0 %v2560, 64
        %v2782 = vpop.permute.xlu0 %2781
        %2783 = vrot.lane.b32.xlu0 %v2561, 64
        %v2784 = vpop.permute.xlu0 %2783
        %2785 = vrot.lane.b32.xlu0 %v2562, 64
        %v2786 = vpop.permute.xlu0 %2785
        %2819 = vrot.lane.b32.xlu0 %v2579, 64
        %v2820 = vpop.permute.xlu0 %2819
        %2821 = vrot.lane.b32.xlu0 %v2580, 64
        %v2822 = vpop.permute.xlu0 %2821
        %2823 = vrot.lane.b32.xlu0 %v2581, 64
        %v2824 = vpop.permute.xlu0 %2823
        %2825 = vrot.lane.b32.xlu0 %v2582, 64
        %v2826 = vpop.permute.xlu0 %2825
        %2827 = vrot.lane.b32.xlu0 %v2583, 64
        %v2828 = vpop.permute.xlu0 %2827
        %2829 = vrot.lane.b32.xlu0 %v2584, 64
        %v2830 = vpop.permute.xlu0 %2829
        %2831 = vrot.lane.b32.xlu0 %v2585, 64
        %v2832 = vpop.permute.xlu0 %2831
        %2833 = vrot.lane.b32.xlu0 %v2586, 64
        %v2834 = vpop.permute.xlu0 %2833
        %2835 = vrot.lane.b32.xlu0 %v2587, 64
        %v2836 = vpop.permute.xlu0 %2835
        %2837 = vrot.lane.b32.xlu0 %v2588, 64
        %v2838 = vpop.permute.xlu0 %2837
        %2839 = vrot.lane.b32.xlu0 %v2589, 64
        %v2840 = vpop.permute.xlu0 %2839
        %2841 = vrot.lane.b32.xlu0 %v2590, 64
        %v2842 = vpop.permute.xlu0 %2841
        %2843 = vrot.lane.b32.xlu0 %v2591, 64
        %v2844 = vpop.permute.xlu0 %2843
        %2845 = vrot.lane.b32.xlu0 %v2592, 64
        %v2846 = vpop.permute.xlu0 %2845
        %2847 = vrot.lane.b32.xlu0 %v2593, 64
        %v2848 = vpop.permute.xlu0 %2847
        %2849 = vrot.lane.b32.xlu0 %v2594, 64
        %v2850 = vpop.permute.xlu0 %2849
        %v2867 = vsel %vm444, %v2464, %v2628
        %v2868 = vsel %vm444, %v2465, %v2630
        %v2869 = vsel %vm444, %v2466, %v2632
        %v2870 = vsel %vm444, %v2467, %v2634
        %v2871 = vsel %vm444, %v2468, %v2636
        %v2872 = vsel %vm444, %v2469, %v2638
        %v2873 = vsel %vm444, %v2470, %v2640
        %v2874 = vsel %vm444, %v2471, %v2642
        %v2875 = vsel %vm444, %v2473, %v2644
        %v2876 = vsel %vm444, %v2474, %v2646
        %v2877 = vsel %vm444, %v2475, %v2648
        %v2878 = vsel %vm444, %v2476, %v2650
        %v2879 = vsel %vm444, %v2477, %v2652
        %v2880 = vsel %vm444, %v2478, %v2654
        %v2881 = vsel %vm444, %v2479, %v2656
        %v2882 = vsel %vm444, %v2480, %v2658
        %v2883 = vsel %vm444, %v2499, %v2692
        %v2884 = vsel %vm444, %v2500, %v2694
        %v2885 = vsel %vm444, %v2501, %v2696
        %v2886 = vsel %vm444, %v2502, %v2698
        %v2887 = vsel %vm444, %v2503, %v2700
        %v2888 = vsel %vm444, %v2504, %v2702
        %v2889 = vsel %vm444, %v2505, %v2704
        %v2890 = vsel %vm444, %v2506, %v2706
        %v2891 = vsel %vm444, %v2507, %v2708
        %v2892 = vsel %vm444, %v2508, %v2710
        %v2893 = vsel %vm444, %v2509, %v2712
        %v2894 = vsel %vm444, %v2510, %v2714
        %v2895 = vsel %vm444, %v2511, %v2716
        %v2896 = vsel %vm444, %v2512, %v2718
        %v2897 = vsel %vm444, %v2513, %v2720
        %v2898 = vsel %vm444, %v2514, %v2722
        %v2899 = vsel %vm444, %v2531, %v2756
        %v2900 = vsel %vm444, %v2532, %v2758
        %v2901 = vsel %vm444, %v2533, %v2760
        %v2902 = vsel %vm444, %v2534, %v2762
        %v2903 = vsel %vm444, %v2535, %v2764
        %v2904 = vsel %vm444, %v2536, %v2766
        %v2905 = vsel %vm444, %v2537, %v2768
        %v2906 = vsel %vm444, %v2538, %v2770
        %v2907 = vsel %vm444, %v2539, %v2772
        %v2908 = vsel %vm444, %v2540, %v2774
        %v2909 = vsel %vm444, %v2541, %v2776
        %v2910 = vsel %vm444, %v2542, %v2778
        %v2911 = vsel %vm444, %v2543, %v2780
        %v2912 = vsel %vm444, %v2544, %v2782
        %v2913 = vsel %vm444, %v2545, %v2784
        %v2914 = vsel %vm444, %v2546, %v2786
        %v2915 = vsel %vm444, %v2563, %v2820
        %v2916 = vsel %vm444, %v2564, %v2822
        %v2917 = vsel %vm444, %v2565, %v2824
        %v2918 = vsel %vm444, %v2566, %v2826
        %v2919 = vsel %vm444, %v2567, %v2828
        %v2920 = vsel %vm444, %v2568, %v2830
        %v2921 = vsel %vm444, %v2569, %v2832
        %v2922 = vsel %vm444, %v2570, %v2834
        %v2923 = vsel %vm444, %v2571, %v2836
        %v2924 = vsel %vm444, %v2572, %v2838
        %v2925 = vsel %vm444, %v2573, %v2840
        %v2926 = vsel %vm444, %v2574, %v2842
        %v2927 = vsel %vm444, %v2575, %v2844
        %v2928 = vsel %vm444, %v2576, %v2846
        %v2929 = vsel %vm444, %v2577, %v2848
        %v2930 = vsel %vm444, %v2578, %v2850
        %v2931 = vld [vmem:[%s3] sm:$0xff]
        %v2932 = vld [vmem:[%s3 + $0x8] sm:$0xff]
        %v2933 = vld [vmem:[%s3 + $0x10] sm:$0xff]
        %v2934 = vld [vmem:[%s3 + $0x18] sm:$0xff]
        %v2935 = vld [vmem:[%s3 + $0x20] sm:$0xff]
        %v2936 = vld [vmem:[%s3 + $0x28] sm:$0xff]
        %v2937 = vld [vmem:[%s3 + $0x30] sm:$0xff]
        %v2938 = vld [vmem:[%s3 + $0x38] sm:$0xff]
        %v2939 = vld [vmem:[%s3 + $0x40] sm:$0xff]
        %v2940 = vld [vmem:[%s3 + $0x48] sm:$0xff]
        %v2941 = vld [vmem:[%s3 + $0x50] sm:$0xff]
        %v2942 = vld [vmem:[%s3 + $0x58] sm:$0xff]
        %v2943 = vld [vmem:[%s3 + $0x60] sm:$0xff]
        %v2944 = vld [vmem:[%s3 + $0x68] sm:$0xff]
        %v2945 = vld [vmem:[%s3 + $0x70] sm:$0xff]
        %v2946 = vld [vmem:[%s3 + $0x78] sm:$0xff]
        %v2947 = vld [vmem:[%s3 + $0x80] sm:$0xff]
        %v2948 = vld [vmem:[%s3 + $0x88] sm:$0xff]
        %v2949 = vld [vmem:[%s3 + $0x90] sm:$0xff]
        %v2950 = vld [vmem:[%s3 + $0x98] sm:$0xff]
        %v2951 = vld [vmem:[%s3 + $0xa0] sm:$0xff]
        %v2952 = vld [vmem:[%s3 + $0xa8] sm:$0xff]
        %v2953 = vld [vmem:[%s3 + $0xb0] sm:$0xff]
        %v2954 = vld [vmem:[%s3 + $0xb8] sm:$0xff]
        %v2955 = vld [vmem:[%s3 + $0xc0] sm:$0xff]
        %v2956 = vld [vmem:[%s3 + $0xc8] sm:$0xff]
        %v2957 = vld [vmem:[%s3 + $0xd0] sm:$0xff]
        %v2958 = vld [vmem:[%s3 + $0xd8] sm:$0xff]
        %v2959 = vld [vmem:[%s3 + $0xe0] sm:$0xff]
        %v2960 = vld [vmem:[%s3 + $0xe8] sm:$0xff]
        %v2961 = vld [vmem:[%s3 + $0xf0] sm:$0xff]
        %v2962 = vld [vmem:[%s3 + $0xf8] sm:$0xff]
        %v2963 = vld [vmem:[%s3 + $0x100] sm:$0xff]
        %v2964 = vld [vmem:[%s3 + $0x108] sm:$0xff]
        %v2965 = vld [vmem:[%s3 + $0x110] sm:$0xff]
        %v2966 = vld [vmem:[%s3 + $0x118] sm:$0xff]
        %v2967 = vld [vmem:[%s3 + $0x120] sm:$0xff]
        %v2968 = vld [vmem:[%s3 + $0x128] sm:$0xff]
        %v2969 = vld [vmem:[%s3 + $0x130] sm:$0xff]
        %v2970 = vld [vmem:[%s3 + $0x138] sm:$0xff]
        %v2971 = vld [vmem:[%s3 + $0x140] sm:$0xff]
        %v2972 = vld [vmem:[%s3 + $0x148] sm:$0xff]
        %v2973 = vld [vmem:[%s3 + $0x150] sm:$0xff]
        %v2974 = vld [vmem:[%s3 + $0x158] sm:$0xff]
        %v2975 = vld [vmem:[%s3 + $0x160] sm:$0xff]
        %v2976 = vld [vmem:[%s3 + $0x168] sm:$0xff]
        %v2977 = vld [vmem:[%s3 + $0x170] sm:$0xff]
        %v2978 = vld [vmem:[%s3 + $0x178] sm:$0xff]
        %v2979 = vld [vmem:[%s3 + $0x180] sm:$0xff]
        %v2980 = vld [vmem:[%s3 + $0x188] sm:$0xff]
        %v2981 = vld [vmem:[%s3 + $0x190] sm:$0xff]
        %v2982 = vld [vmem:[%s3 + $0x198] sm:$0xff]
        %v2983 = vld [vmem:[%s3 + $0x1a0] sm:$0xff]
        %v2984 = vld [vmem:[%s3 + $0x1a8] sm:$0xff]
        %v2985 = vld [vmem:[%s3 + $0x1b0] sm:$0xff]
        %v2986 = vld [vmem:[%s3 + $0x1b8] sm:$0xff]
        %v2987 = vld [vmem:[%s3 + $0x1c0] sm:$0xff]
        %v2988 = vld [vmem:[%s3 + $0x1c8] sm:$0xff]
        %v2989 = vld [vmem:[%s3 + $0x1d0] sm:$0xff]
        %v2990 = vld [vmem:[%s3 + $0x1d8] sm:$0xff]
        %v2991 = vld [vmem:[%s3 + $0x1e0] sm:$0xff]
        %v2992 = vld [vmem:[%s3 + $0x1e8] sm:$0xff]
        %v2993 = vld [vmem:[%s3 + $0x1f0] sm:$0xff]
        %v2994 = vld [vmem:[%s3 + $0x1f8] sm:$0xff]
        %v2995 = vld [vmem:[%s3 + $0x200] sm:$0xff]
        %v2996 = vld [vmem:[%s3 + $0x208] sm:$0xff]
        %v2997 = vld [vmem:[%s3 + $0x210] sm:$0xff]
        %v2998 = vld [vmem:[%s3 + $0x218] sm:$0xff]
        %v2999 = vld [vmem:[%s3 + $0x220] sm:$0xff]
        %v3000 = vld [vmem:[%s3 + $0x228] sm:$0xff]
        %v3001 = vld [vmem:[%s3 + $0x230] sm:$0xff]
        %v3002 = vld [vmem:[%s3 + $0x238] sm:$0xff]
        %v3003 = vld [vmem:[%s4] sm:$0x1]
        %v3004 = vlaneseq
        %v3005 = vshrl.u32 %v3004, 7
        %v3006 = vsub.s32 0, %v3005
        %v3007 = vrot.slane %v3003, %v3006
        %v3009 = vsel %vm444, %v2595, 0
        %v3012 = vsel %vm444, %v2596, 0
        %v3015 = vsel %vm444, %v2597, 0
        %v3018 = vsel %vm444, %v2598, 0
        %v3021 = vsel %vm444, %v2599, 0
        %v3024 = vsel %vm444, %v2600, 0
        %v3027 = vsel %vm444, %v2601, 0
        %v3030 = vsel %vm444, %v2602, 0
        %v3033 = vsel %vm444, %v2603, 0
        %v3036 = vsel %vm444, %v2604, 0
        %v3039 = vsel %vm444, %v2605, 0
        %v3042 = vsel %vm444, %v2606, 0
        %v3045 = vsel %vm444, %v2607, 0
        %v3048 = vsel %vm444, %v2608, 0
        %v3051 = vsel %vm444, %v2609, 0
        %v3054 = vsel %vm444, %v2610, 0
        %3056 = vmatprep.subr.mxu0 0.0
        %3057 = vmatpush1.msra.mxu0 %v2931
        %3058 = vmatprep.subr.mxu0 0.0
        %3059 = vmatpush1.msra.mxu0 %v2932
        %3060 = vmatprep.subr.mxu0 0.0
        %3061 = vmatpush1.msra.mxu0 %v2933
        %3062 = vmatprep.subr.mxu0 0.0
        %3063 = vmatpush1.msra.mxu0 %v2934
        %3064 = vmatprep.subr.mxu0 0.0
        %3065 = vmatpush1.msra.mxu0 %v2935
        %3066 = vmatprep.subr.mxu0 0.0
        %3067 = vmatpush1.msra.mxu0 %v2936
        %3068 = vmatprep.subr.mxu0 0.0
        %3069 = vmatpush1.msra.mxu0 %v2937
        %3070 = vmatprep.subr.mxu0 0.0
        %3071 = vmatpush1.msra.mxu0 %v2938
        %3072 = vmatprep.subr.mxu0 0.0
        %3073 = vmatpush1.msra.mxu0 %v2939
        %3074 = vmatprep.subr.mxu0 0.0
        %3075 = vmatpush1.msra.mxu0 %v2940
        %3076 = vmatprep.subr.mxu0 0.0
        %3077 = vmatpush1.msra.mxu0 %v2941
        %3078 = vmatprep.subr.mxu0 0.0
        %3079 = vmatpush1.msra.mxu0 %v2942
        %3080 = vmatprep.subr.mxu0 0.0
        %3081 = vmatpush1.msra.mxu0 %v2943
        %3082 = vmatprep.subr.mxu0 0.0
        %3083 = vmatpush1.msra.mxu0 %v2944
        %3084 = vmatprep.subr.mxu0 0.0
        %3085 = vmatpush1.msra.mxu0 %v2945
        %3086 = vmatprep.subr.mxu0 0.0
        %3087 = vmatpush1.msra.mxu0 %v2946
        %3088 = vmatprep.subr.mxu0 0.0
        %3089 = vmatpush1.msra.mxu0 %v2947
        %3090 = vmatprep.subr.mxu0 0.0
        %3091 = vmatpush1.msra.mxu0 %v2948
        %3092 = vmatprep.subr.mxu0 0.0
        %3093 = vmatpush1.msra.mxu0 %v2949
        %3094 = vmatprep.subr.mxu0 0.0
        %3095 = vmatpush1.msra.mxu0 %v2950
        %3096 = vmatprep.subr.mxu0 0.0
        %3097 = vmatpush1.msra.mxu0 %v2951
        %3098 = vmatprep.subr.mxu0 0.0
        %3099 = vmatpush1.msra.mxu0 %v2952
        %3100 = vmatprep.subr.mxu0 0.0
        %3101 = vmatpush1.msra.mxu0 %v2953
        %3102 = vmatprep.subr.mxu0 0.0
        %3103 = vmatpush1.msra.mxu0 %v2954
        %3104 = vmatprep.subr.mxu0 0.0
        %3105 = vmatpush1.msra.mxu0 %v2955
        %3106 = vmatprep.subr.mxu0 0.0
        %3107 = vmatpush1.msra.mxu0 %v2956
        %3108 = vmatprep.subr.mxu0 0.0
        %3109 = vmatpush1.msra.mxu0 %v2957
        %3110 = vmatprep.subr.mxu0 0.0
        %3111 = vmatpush1.msra.mxu0 %v2958
        %3112 = vmatprep.subr.mxu0 0.0
        %3113 = vmatpush1.msra.mxu0 %v2959
        %3114 = vmatprep.subr.mxu0 0.0
        %3115 = vmatpush1.msra.mxu0 %v2960
        %3116 = vmatprep.subr.mxu0 0.0
        %3117 = vmatpush1.msra.mxu0 %v2961
        %3118 = vmatprep.subr.mxu0 0.0
        %3119 = vmatpush1.msra.mxu0 %v2962
        %3120 = vmatprep.mubr.f32.mxu0 %v2883
        %3121 = vmatmul.mubr.f32.gmra.mrb[0].mxu0 %v2867
        %v3122 = vpop.f32.mrb[0].mxu0
        %v3123 = vadd.f32 %v3007, %v3122
        %v3124 = vpop.f32.mrb[0].mxu0
        %3125 = vmatprep.mubr.f32.mxu0 %v2884
        %3126 = vmatmul.mubr.f32.gmra.mrb[0].mxu0 %v2868
        %v3127 = vpop.f32.mrb[0].mxu0
        %v3128 = vadd.f32 %v3007, %v3127
        %v3129 = vpop.f32.mrb[0].mxu0
        %3130 = vmatprep.mubr.f32.mxu0 %v2885
        %3131 = vmatmul.mubr.f32.gmra.mrb[0].mxu0 %v2869
        %v3132 = vpop.f32.mrb[0].mxu0
        %v3133 = vadd.f32 %v3007, %v3132
        %v3134 = vpop.f32.mrb[0].mxu0
        %3135 = vmatprep.mubr.f32.mxu0 %v2886
        %3136 = vmatmul.mubr.f32.gmra.mrb[0].mxu0 %v2870
        %v3137 = vpop.f32.mrb[0].mxu0
        %v3138 = vadd.f32 %v3007, %v3137
        %v3139 = vpop.f32.mrb[0].mxu0
        %3140 = vmatprep.mubr.f32.mxu0 %v2887
        %3141 = vmatmul.mubr.f32.gmra.mrb[0].mxu0 %v2871
        %v3142 = vpop.f32.mrb[0].mxu0
        %v3143 = vadd.f32 %v3007, %v3142
        %v3144 = vpop.f32.mrb[0].mxu0
        %3145 = vmatprep.mubr.f32.mxu0 %v2888
        %3146 = vmatmul.mubr.f32.gmra.mrb[0].mxu0 %v2872
        %v3147 = vpop.f32.mrb[0].mxu0
        %v3148 = vadd.f32 %v3007, %v3147
        %v3149 = vpop.f32.mrb[0].mxu0
        %3150 = vmatprep.mubr.f32.mxu0 %v2889
        %3151 = vmatmul.mubr.f32.gmra.mrb[0].mxu0 %v2873
        %v3152 = vpop.f32.mrb[0].mxu0
        %v3153 = vadd.f32 %v3007, %v3152
        %v3154 = vpop.f32.mrb[0].mxu0
        %3155 = vmatprep.mubr.f32.mxu0 %v2890
        %3156 = vmatmul.mubr.f32.gmra.mrb[0].mxu0 %v2874
        %v3157 = vpop.f32.mrb[0].mxu0
        %v3158 = vadd.f32 %v3007, %v3157
        %v3159 = vpop.f32.mrb[0].mxu0
        %3160 = vmatprep.mubr.f32.mxu0 %v2891
        %3161 = vmatmul.mubr.f32.gmra.mrb[0].mxu0 %v2875
        %v3162 = vpop.f32.mrb[0].mxu0
        %v3163 = vadd.f32 %v3007, %v3162
        %v3164 = vpop.f32.mrb[0].mxu0
        %3165 = vmatprep.mubr.f32.mxu0 %v2892
        %3166 = vmatmul.mubr.f32.gmra.mrb[0].mxu0 %v2876
        %v3167 = vpop.f32.mrb[0].mxu0
        %v3168 = vadd.f32 %v3007, %v3167
        %v3169 = vpop.f32.mrb[0].mxu0
        %3170 = vmatprep.mubr.f32.mxu0 %v2893
        %3171 = vmatmul.mubr.f32.gmra.mrb[0].mxu0 %v2877
        %v3172 = vpop.f32.mrb[0].mxu0
        %v3173 = vadd.f32 %v3007, %v3172
        %v3174 = vpop.f32.mrb[0].mxu0
        %3175 = vmatprep.mubr.f32.mxu0 %v2894
        %3176 = vmatmul.mubr.f32.gmra.mrb[0].mxu0 %v2878
        %v3177 = vpop.f32.mrb[0].mxu0
        %v3178 = vadd.f32 %v3007, %v3177
        %v3179 = vpop.f32.mrb[0].mxu0
        %3180 = vmatprep.mubr.f32.mxu0 %v2895
        %3181 = vmatmul.mubr.f32.gmra.mrb[0].mxu0 %v2879
        %v3182 = vpop.f32.mrb[0].mxu0
        %v3183 = vadd.f32 %v3007, %v3182
        %v3184 = vpop.f32.mrb[0].mxu0
        %3185 = vmatprep.mubr.f32.mxu0 %v2896
        %3186 = vmatmul.mubr.f32.gmra.mrb[0].mxu0 %v2880
        %v3187 = vpop.f32.mrb[0].mxu0
        %v3188 = vadd.f32 %v3007, %v3187
        %v3189 = vpop.f32.mrb[0].mxu0
        %3190 = vmatprep.mubr.f32.mxu0 %v2897
        %3191 = vmatmul.mubr.f32.gmra.mrb[0].mxu0 %v2881
        %v3192 = vpop.f32.mrb[0].mxu0
        %v3193 = vadd.f32 %v3007, %v3192
        %v3194 = vpop.f32.mrb[0].mxu0
        %3195 = vmatprep.mubr.f32.mxu0 %v2898
        %3196 = vmatmul.mubr.f32.gmra.mrb[0].mxu0 %v2882
        %v3197 = vpop.f32.mrb[0].mxu0
        %v3198 = vadd.f32 %v3007, %v3197
        %v3199 = vpop.f32.mrb[0].mxu0
        %3200 = vdwg.mxu0
        %3201 = vmatprep.subr.mxu0 0.0
        %3202 = vmatpush1.msra.mxu0 %v2963
        %3203 = vmatprep.subr.mxu0 0.0
        %3204 = vmatpush1.msra.mxu0 %v2964
        %3205 = vmatprep.subr.mxu0 0.0
        %3206 = vmatpush1.msra.mxu0 %v2965
        %3207 = vmatprep.subr.mxu0 0.0
        %3208 = vmatpush1.msra.mxu0 %v2966
        %3209 = vmatprep.subr.mxu0 0.0
        %3210 = vmatpush1.msra.mxu0 %v2967
        %3211 = vmatprep.subr.mxu0 0.0
        %3212 = vmatpush1.msra.mxu0 %v2968
        %3213 = vmatprep.subr.mxu0 0.0
        %3214 = vmatpush1.msra.mxu0 %v2969
        %3215 = vmatprep.subr.mxu0 0.0
        %3216 = vmatpush1.msra.mxu0 %v2970
        %3217 = vmatprep.subr.mxu0 0.0
        %3218 = vmatpush1.msra.mxu0 %v2971
        %3219 = vmatprep.subr.mxu0 0.0
        %3220 = vmatpush1.msra.mxu0 %v2972
        %3221 = vmatprep.subr.mxu0 0.0
        %3222 = vmatpush1.msra.mxu0 %v2973
        %3223 = vmatprep.subr.mxu0 0.0
        %3224 = vmatpush1.msra.mxu0 %v2974
        %3225 = vmatprep.subr.mxu0 0.0
        %3226 = vmatpush1.msra.mxu0 %v2975
        %3227 = vmatprep.subr.mxu0 0.0
        %3228 = vmatpush1.msra.mxu0 %v2976
        %3229 = vmatprep.subr.mxu0 0.0
        %3230 = vmatpush1.msra.mxu0 %v2977
        %3231 = vmatprep.subr.mxu0 0.0
        %3232 = vmatpush1.msra.mxu0 %v2978
        %3233 = vmatprep.subr.mxu0 0.0
        %3234 = vmatpush1.msra.mxu0 %v2979
        %3235 = vmatprep.subr.mxu0 0.0
        %3236 = vmatpush1.msra.mxu0 %v2980
        %3237 = vmatprep.subr.mxu0 0.0
        %3238 = vmatpush1.msra.mxu0 %v2981
        %3239 = vmatprep.subr.mxu0 0.0
        %3240 = vmatpush1.msra.mxu0 %v2982
        %3241 = vmatprep.subr.mxu0 0.0
        %3242 = vmatpush1.msra.mxu0 %v2983
        %3243 = vmatprep.subr.mxu0 0.0
        %3244 = vmatpush1.msra.mxu0 %v2984
        %3245 = vmatprep.subr.mxu0 0.0
        %3246 = vmatpush1.msra.mxu0 %v2985
        %3247 = vmatprep.subr.mxu0 0.0
        %3248 = vmatpush1.msra.mxu0 %v2986
        %3249 = vmatprep.subr.mxu0 0.0
        %3250 = vmatpush1.msra.mxu0 %v2987
        %3251 = vmatprep.subr.mxu0 0.0
        %3252 = vmatpush1.msra.mxu0 %v2988
        %3253 = vmatprep.subr.mxu0 0.0
        %3254 = vmatpush1.msra.mxu0 %v2989
        %3255 = vmatprep.subr.mxu0 0.0
        %3256 = vmatpush1.msra.mxu0 %v2990
        %3257 = vmatprep.subr.mxu0 0.0
        %3258 = vmatpush1.msra.mxu0 %v2991
        %3259 = vmatprep.subr.mxu0 0.0
        %3260 = vmatpush1.msra.mxu0 %v2992
        %3261 = vmatprep.subr.mxu0 0.0
        %3262 = vmatpush1.msra.mxu0 %v2993
        %3263 = vmatprep.subr.mxu0 0.0
        %3264 = vmatpush1.msra.mxu0 %v2994
        %3265 = vmatprep.mubr.f32.mxu0 %v2915
        %3266 = vmatmul.mubr.f32.gmra.mrb[0].mxu0 %v2899
        %v3267 = vpop.f32.mrb[0].mxu0
        %v3268 = vadd.f32 %v3123, %v3267
        %v3269 = vpop.f32.mrb[0].mxu0
        %3270 = vmatprep.mubr.f32.mxu0 %v2916
        %3271 = vmatmul.mubr.f32.gmra.mrb[0].mxu0 %v2900
        %v3272 = vpop.f32.mrb[0].mxu0
        %v3273 = vadd.f32 %v3128, %v3272
        %v3274 = vpop.f32.mrb[0].mxu0
        %3275 = vmatprep.mubr.f32.mxu0 %v2917
        %3276 = vmatmul.mubr.f32.gmra.mrb[0].mxu0 %v2901
        %v3277 = vpop.f32.mrb[0].mxu0
        %v3278 = vadd.f32 %v3133, %v3277
        %v3279 = vpop.f32.mrb[0].mxu0
        %3280 = vmatprep.mubr.f32.mxu0 %v2918
        %3281 = vmatmul.mubr.f32.gmra.mrb[0].mxu0 %v2902
        %v3282 = vpop.f32.mrb[0].mxu0
        %v3283 = vadd.f32 %v3138, %v3282
        %v3284 = vpop.f32.mrb[0].mxu0
        %3285 = vmatprep.mubr.f32.mxu0 %v2919
        %3286 = vmatmul.mubr.f32.gmra.mrb[0].mxu0 %v2903
        %v3287 = vpop.f32.mrb[0].mxu0
        %v3288 = vadd.f32 %v3143, %v3287
        %v3289 = vpop.f32.mrb[0].mxu0
        %3290 = vmatprep.mubr.f32.mxu0 %v2920
        %3291 = vmatmul.mubr.f32.gmra.mrb[0].mxu0 %v2904
        %v3292 = vpop.f32.mrb[0].mxu0
        %v3293 = vadd.f32 %v3148, %v3292
        %v3294 = vpop.f32.mrb[0].mxu0
        %3295 = vmatprep.mubr.f32.mxu0 %v2921
        %3296 = vmatmul.mubr.f32.gmra.mrb[0].mxu0 %v2905
        %v3297 = vpop.f32.mrb[0].mxu0
        %v3298 = vadd.f32 %v3153, %v3297
        %v3299 = vpop.f32.mrb[0].mxu0
        %3300 = vmatprep.mubr.f32.mxu0 %v2922
        %3301 = vmatmul.mubr.f32.gmra.mrb[0].mxu0 %v2906
        %v3302 = vpop.f32.mrb[0].mxu0
        %v3303 = vadd.f32 %v3158, %v3302
        %v3304 = vpop.f32.mrb[0].mxu0
        %3305 = vmatprep.mubr.f32.mxu0 %v2923
        %3306 = vmatmul.mubr.f32.gmra.mrb[0].mxu0 %v2907
        %v3307 = vpop.f32.mrb[0].mxu0
        %v3308 = vadd.f32 %v3163, %v3307
        %v3309 = vpop.f32.mrb[0].mxu0
        %3310 = vmatprep.mubr.f32.mxu0 %v2924
        %3311 = vmatmul.mubr.f32.gmra.mrb[0].mxu0 %v2908
        %v3312 = vpop.f32.mrb[0].mxu0
        %v3313 = vadd.f32 %v3168, %v3312
        %v3314 = vpop.f32.mrb[0].mxu0
        %3315 = vmatprep.mubr.f32.mxu0 %v2925
        %3316 = vmatmul.mubr.f32.gmra.mrb[0].mxu0 %v2909
        %v3317 = vpop.f32.mrb[0].mxu0
        %v3318 = vadd.f32 %v3173, %v3317
        %v3319 = vpop.f32.mrb[0].mxu0
        %3320 = vmatprep.mubr.f32.mxu0 %v2926
        %3321 = vmatmul.mubr.f32.gmra.mrb[0].mxu0 %v2910
        %v3322 = vpop.f32.mrb[0].mxu0
        %v3323 = vadd.f32 %v3178, %v3322
        %v3324 = vpop.f32.mrb[0].mxu0
        %3325 = vmatprep.mubr.f32.mxu0 %v2927
        %3326 = vmatmul.mubr.f32.gmra.mrb[0].mxu0 %v2911
        %v3327 = vpop.f32.mrb[0].mxu0
        %v3328 = vadd.f32 %v3183, %v3327
        %v3329 = vpop.f32.mrb[0].mxu0
        %3330 = vmatprep.mubr.f32.mxu0 %v2928
        %3331 = vmatmul.mubr.f32.gmra.mrb[0].mxu0 %v2912
        %v3332 = vpop.f32.mrb[0].mxu0
        %v3333 = vadd.f32 %v3188, %v3332
        %v3334 = vpop.f32.mrb[0].mxu0
        %3335 = vmatprep.mubr.f32.mxu0 %v2929
        %3336 = vmatmul.mubr.f32.gmra.mrb[0].mxu0 %v2913
        %v3337 = vpop.f32.mrb[0].mxu0
        %v3338 = vadd.f32 %v3193, %v3337
        %v3339 = vpop.f32.mrb[0].mxu0
        %3340 = vmatprep.mubr.f32.mxu0 %v2930
        %3341 = vmatmul.mubr.f32.gmra.mrb[0].mxu0 %v2914
        %v3342 = vpop.f32.mrb[0].mxu0
        %v3343 = vadd.f32 %v3198, %v3342
        %v3344 = vpop.f32.mrb[0].mxu0
        %3345 = vdwg.mxu0
        %3346 = vmatprep.subr.mxu0 0.0
        %3347 = vmatpush1.msra.mxu0 %v2995
        %3348 = vmatprep.subr.mxu0 0.0
        %3349 = vmatpush1.msra.mxu0 %v2996
        %3350 = vmatprep.subr.mxu0 0.0
        %3351 = vmatpush1.msra.mxu0 %v2997
        %3352 = vmatprep.subr.mxu0 0.0
        %3353 = vmatpush1.msra.mxu0 %v2998
        %3354 = vmatprep.subr.mxu0 0.0
        %3355 = vmatpush1.msra.mxu0 %v2999
        %3356 = vmatprep.subr.mxu0 0.0
        %3357 = vmatpush1.msra.mxu0 %v3000
        %3358 = vmatprep.subr.mxu0 0.0
        %3359 = vmatpush1.msra.mxu0 %v3001
        %3360 = vmatprep.subr.mxu0 0.0
        %3361 = vmatpush1.msra.mxu0 %v3002
        %3362 = vmatprep.subr.mxu0 0.0
        %3363 = vmatpush1.msra.mxu0 0.0
        %3364 = vmatprep.subr.mxu0 0.0
        %3365 = vmatpush1.msra.mxu0 0.0
        %3366 = vmatprep.subr.mxu0 0.0
        %3367 = vmatpush1.msra.mxu0 0.0
        %3368 = vmatprep.subr.mxu0 0.0
        %3369 = vmatpush1.msra.mxu0 0.0
        %3370 = vmatprep.subr.mxu0 0.0
        %3371 = vmatpush1.msra.mxu0 0.0
        %3372 = vmatprep.subr.mxu0 0.0
        %3373 = vmatpush1.msra.mxu0 0.0
        %3374 = vmatprep.subr.mxu0 0.0
        %3375 = vmatpush1.msra.mxu0 0.0
        %3376 = vmatprep.subr.mxu0 0.0
        %3377 = vmatpush1.msra.mxu0 0.0
        %3378 = vmatprep.subr.mxu0 0.0
        %3379 = vmatpush1.msra.mxu0 0.0
        %3380 = vmatprep.subr.mxu0 0.0
        %3381 = vmatpush1.msra.mxu0 0.0
        %3382 = vmatprep.subr.mxu0 0.0
        %3383 = vmatpush1.msra.mxu0 0.0
        %3384 = vmatprep.subr.mxu0 0.0
        %3385 = vmatpush1.msra.mxu0 0.0
        %3386 = vmatprep.subr.mxu0 0.0
        %3387 = vmatpush1.msra.mxu0 0.0
        %3388 = vmatprep.subr.mxu0 0.0
        %3389 = vmatpush1.msra.mxu0 0.0
        %3390 = vmatprep.subr.mxu0 0.0
        %3391 = vmatpush1.msra.mxu0 0.0
        %3392 = vmatprep.subr.mxu0 0.0
        %3393 = vmatpush1.msra.mxu0 0.0
        %3394 = vmatprep.subr.mxu0 0.0
        %3395 = vmatpush1.msra.mxu0 0.0
        %3396 = vmatprep.subr.mxu0 0.0
        %3397 = vmatpush1.msra.mxu0 0.0
        %3398 = vmatprep.subr.mxu0 0.0
        %3399 = vmatpush1.msra.mxu0 0.0
        %3400 = vmatprep.subr.mxu0 0.0
        %3401 = vmatpush1.msra.mxu0 0.0
        %3402 = vmatprep.subr.mxu0 0.0
        %3403 = vmatpush1.msra.mxu0 0.0
        %3404 = vmatprep.subr.mxu0 0.0
        %3405 = vmatpush1.msra.mxu0 0.0
        %3406 = vmatprep.subr.mxu0 0.0
        %3407 = vmatpush1.msra.mxu0 0.0
        %3408 = vmatprep.subr.mxu0 0.0
        %3409 = vmatpush1.msra.mxu0 0.0
        %3410 = vmatprep.mubr.f32.mxu0 0.0
        %3411 = vmatmul.mubr.f32.gmra.mrb[0].mxu0 %v3009
        %v3412 = vpop.f32.mrb[0].mxu0
        %v3413 = vadd.f32 %v3268, %v3412
        %v3414 = vpop.f32.mrb[0].mxu0
        %3415 = vmatprep.mubr.f32.mxu0 0.0
        %3416 = vmatmul.mubr.f32.gmra.mrb[0].mxu0 %v3012
        %v3417 = vpop.f32.mrb[0].mxu0
        %v3418 = vadd.f32 %v3273, %v3417
        %v3419 = vpop.f32.mrb[0].mxu0
        %3420 = vmatprep.mubr.f32.mxu0 0.0
        %3421 = vmatmul.mubr.f32.gmra.mrb[0].mxu0 %v3015
        %v3422 = vpop.f32.mrb[0].mxu0
        %v3423 = vadd.f32 %v3278, %v3422
        %v3424 = vpop.f32.mrb[0].mxu0
        %3425 = vmatprep.mubr.f32.mxu0 0.0
        %3426 = vmatmul.mubr.f32.gmra.mrb[0].mxu0 %v3018
        %v3427 = vpop.f32.mrb[0].mxu0
        %v3428 = vadd.f32 %v3283, %v3427
        %v3429 = vpop.f32.mrb[0].mxu0
        %3430 = vmatprep.mubr.f32.mxu0 0.0
        %3431 = vmatmul.mubr.f32.gmra.mrb[0].mxu0 %v3021
        %v3432 = vpop.f32.mrb[0].mxu0
        %v3433 = vadd.f32 %v3288, %v3432
        %v3434 = vpop.f32.mrb[0].mxu0
        %3435 = vmatprep.mubr.f32.mxu0 0.0
        %3436 = vmatmul.mubr.f32.gmra.mrb[0].mxu0 %v3024
        %v3437 = vpop.f32.mrb[0].mxu0
        %v3438 = vadd.f32 %v3293, %v3437
        %v3439 = vpop.f32.mrb[0].mxu0
        %3440 = vmatprep.mubr.f32.mxu0 0.0
        %3441 = vmatmul.mubr.f32.gmra.mrb[0].mxu0 %v3027
        %v3442 = vpop.f32.mrb[0].mxu0
        %v3443 = vadd.f32 %v3298, %v3442
        %v3444 = vpop.f32.mrb[0].mxu0
        %3445 = vmatprep.mubr.f32.mxu0 0.0
        %3446 = vmatmul.mubr.f32.gmra.mrb[0].mxu0 %v3030
        %v3447 = vpop.f32.mrb[0].mxu0
        %v3448 = vadd.f32 %v3303, %v3447
        %v3449 = vpop.f32.mrb[0].mxu0
        %3450 = vmatprep.mubr.f32.mxu0 0.0
        %3451 = vmatmul.mubr.f32.gmra.mrb[0].mxu0 %v3033
        %v3452 = vpop.f32.mrb[0].mxu0
        %v3453 = vadd.f32 %v3308, %v3452
        %v3454 = vpop.f32.mrb[0].mxu0
        %3455 = vmatprep.mubr.f32.mxu0 0.0
        %3456 = vmatmul.mubr.f32.gmra.mrb[0].mxu0 %v3036
        %v3457 = vpop.f32.mrb[0].mxu0
        %v3458 = vadd.f32 %v3313, %v3457
        %v3459 = vpop.f32.mrb[0].mxu0
        %3460 = vmatprep.mubr.f32.mxu0 0.0
        %3461 = vmatmul.mubr.f32.gmra.mrb[0].mxu0 %v3039
        %v3462 = vpop.f32.mrb[0].mxu0
        %v3463 = vadd.f32 %v3318, %v3462
        %v3464 = vpop.f32.mrb[0].mxu0
        %3465 = vmatprep.mubr.f32.mxu0 0.0
        %3466 = vmatmul.mubr.f32.gmra.mrb[0].mxu0 %v3042
        %v3467 = vpop.f32.mrb[0].mxu0
        %v3468 = vadd.f32 %v3323, %v3467
        %v3469 = vpop.f32.mrb[0].mxu0
        %3470 = vmatprep.mubr.f32.mxu0 0.0
        %3471 = vmatmul.mubr.f32.gmra.mrb[0].mxu0 %v3045
        %v3472 = vpop.f32.mrb[0].mxu0
        %v3473 = vadd.f32 %v3328, %v3472
        %v3474 = vpop.f32.mrb[0].mxu0
        %3475 = vmatprep.mubr.f32.mxu0 0.0
        %3476 = vmatmul.mubr.f32.gmra.mrb[0].mxu0 %v3048
        %v3477 = vpop.f32.mrb[0].mxu0
        %v3478 = vadd.f32 %v3333, %v3477
        %v3479 = vpop.f32.mrb[0].mxu0
        %3480 = vmatprep.mubr.f32.mxu0 0.0
        %3481 = vmatmul.mubr.f32.gmra.mrb[0].mxu0 %v3051
        %v3482 = vpop.f32.mrb[0].mxu0
        %v3483 = vadd.f32 %v3338, %v3482
        %v3484 = vpop.f32.mrb[0].mxu0
        %3485 = vmatprep.mubr.f32.mxu0 0.0
        %3486 = vmatmul.mubr.f32.gmra.mrb[0].mxu0 %v3054
        %v3487 = vpop.f32.mrb[0].mxu0
        %v3488 = vadd.f32 %v3343, %v3487
        %v3489 = vpop.f32.mrb[0].mxu0
        %3490 = vdwg.mxu0
        %v3491 = vmax.f32 %v3413, 0.0
        %v3492 = vmax.f32 %v3418, 0.0
        %v3493 = vmax.f32 %v3423, 0.0
        %v3494 = vmax.f32 %v3428, 0.0
        %v3495 = vmax.f32 %v3433, 0.0
        %v3496 = vmax.f32 %v3438, 0.0
        %v3497 = vmax.f32 %v3443, 0.0
        %v3498 = vmax.f32 %v3448, 0.0
        %v3499 = vmax.f32 %v3453, 0.0
        %v3500 = vmax.f32 %v3458, 0.0
        %v3501 = vmax.f32 %v3463, 0.0
        %v3502 = vmax.f32 %v3468, 0.0
        %v3503 = vmax.f32 %v3473, 0.0
        %v3504 = vmax.f32 %v3478, 0.0
        %v3505 = vmax.f32 %v3483, 0.0
        %v3506 = vmax.f32 %v3488, 0.0
        %v3507 = vld [vmem:[%s4 + $0x1] sm:$0x1]
        %v3508 = vld [vmem:[%s4 + $0x2] sm:$0x1]
        %v3509 = vadd.f32 %v3491, %v3492
        %v3510 = vadd.f32 %v3509, %v3493
        %v3511 = vadd.f32 %v3510, %v3494
        %v3512 = vadd.f32 %v3511, %v3495
        %v3513 = vadd.f32 %v3512, %v3496
        %v3514 = vadd.f32 %v3513, %v3497
        %v3515 = vadd.f32 %v3514, %v3498
        %v3516 = vrot.slane %v3515, 4
        %v3517 = vadd.f32 %v3515, %v3516
        %v3518 = vrot.slane %v3517, 2
        %v3519 = vadd.f32 %v3517, %v3518
        %v3520 = vrot.slane %v3519, 1
        %v3521 = vadd.f32 %v3519, %v3520
        %v3522 = vadd.f32 %v3499, %v3500
        %v3523 = vadd.f32 %v3522, %v3501
        %v3524 = vadd.f32 %v3523, %v3502
        %v3525 = vadd.f32 %v3524, %v3503
        %v3526 = vadd.f32 %v3525, %v3504
        %v3527 = vadd.f32 %v3526, %v3505
        %v3528 = vadd.f32 %v3527, %v3506
        %v3529 = vrot.slane %v3528, 4
        %v3530 = vadd.f32 %v3528, %v3529
        %v3531 = vrot.slane %v3530, 2
        %v3532 = vadd.f32 %v3530, %v3531
        %v3533 = vrot.slane %v3532, 1
        %v3534 = vadd.f32 %v3532, %v3533
        %v3535 = vmul.f32 %v3491, %v3491
        %v3536 = vmul.f32 %v3492, %v3492
        %v3537 = vmul.f32 %v3493, %v3493
        %v3538 = vmul.f32 %v3494, %v3494
        %v3539 = vmul.f32 %v3495, %v3495
        %v3540 = vmul.f32 %v3496, %v3496
        %v3541 = vmul.f32 %v3497, %v3497
        %v3542 = vmul.f32 %v3498, %v3498
        %v3543 = vmul.f32 %v3499, %v3499
        %v3544 = vmul.f32 %v3500, %v3500
        %v3545 = vmul.f32 %v3501, %v3501
        %v3546 = vmul.f32 %v3502, %v3502
        %v3547 = vmul.f32 %v3503, %v3503
        %v3548 = vmul.f32 %v3504, %v3504
        %v3549 = vmul.f32 %v3505, %v3505
        %v3550 = vmul.f32 %v3506, %v3506
        %v3551 = vadd.f32 %v3535, %v3536
        %v3552 = vadd.f32 %v3551, %v3537
        %v3553 = vadd.f32 %v3552, %v3538
        %v3554 = vadd.f32 %v3553, %v3539
        %v3555 = vadd.f32 %v3554, %v3540
        %v3556 = vadd.f32 %v3555, %v3541
        %v3557 = vadd.f32 %v3556, %v3542
        %v3558 = vrot.slane %v3557, 4
        %v3559 = vadd.f32 %v3557, %v3558
        %v3560 = vrot.slane %v3559, 2
        %v3561 = vadd.f32 %v3559, %v3560
        %v3562 = vrot.slane %v3561, 1
        %v3563 = vadd.f32 %v3561, %v3562
        %v3564 = vadd.f32 %v3543, %v3544
        %v3565 = vadd.f32 %v3564, %v3545
        %v3566 = vadd.f32 %v3565, %v3546
        %v3567 = vadd.f32 %v3566, %v3547
        %v3568 = vadd.f32 %v3567, %v3548
        %v3569 = vadd.f32 %v3568, %v3549
        %v3570 = vadd.f32 %v3569, %v3550
        %v3571 = vrot.slane %v3570, 4
        %v3572 = vadd.f32 %v3570, %v3571
        %v3573 = vrot.slane %v3572, 2
        %v3574 = vadd.f32 %v3572, %v3573
        %v3575 = vrot.slane %v3574, 1
        %v3576 = vadd.f32 %v3574, %v3575
        %v3579 = vsel %vm1759, %v3534, %v3521
        %3581 = vmatprep.subr.mxu0 0.0
        %3582 = vmatpush1.msra.mxu0 %v679
        %3583 = vmatprep.subr.mxu0 0.0
        %3584 = vmatpush1.msra.mxu0 %v680
        %3585 = vmatprep.subr.mxu0 0.0
        %3586 = vmatpush1.msra.mxu0 %v681
        %3587 = vmatprep.subr.mxu0 0.0
        %3588 = vmatpush1.msra.mxu0 %v682
        %3589 = vmatprep.subr.mxu0 0.0
        %3590 = vmatpush1.msra.mxu0 %v683
        %3591 = vmatprep.subr.mxu0 0.0
        %3592 = vmatpush1.msra.mxu0 %v684
        %3593 = vmatprep.subr.mxu0 0.0
        %3594 = vmatpush1.msra.mxu0 %v685
        %3595 = vmatprep.subr.mxu0 0.0
        %3596 = vmatpush1.msra.mxu0 %v686
        %3597 = vmatprep.subr.mxu0 0.0
        %3598 = vmatpush1.msra.mxu0 %v687
        %3599 = vmatprep.subr.mxu0 0.0
        %3600 = vmatpush1.msra.mxu0 %v688
        %3601 = vmatprep.subr.mxu0 0.0
        %3602 = vmatpush1.msra.mxu0 %v689
        %3603 = vmatprep.subr.mxu0 0.0
        %3604 = vmatpush1.msra.mxu0 %v690
        %3605 = vmatprep.subr.mxu0 0.0
        %3606 = vmatpush1.msra.mxu0 %v691
        %3607 = vmatprep.subr.mxu0 0.0
        %3608 = vmatpush1.msra.mxu0 %v692
        %3609 = vmatprep.subr.mxu0 0.0
        %3610 = vmatpush1.msra.mxu0 %v693
        %3611 = vmatprep.subr.mxu0 0.0
        %3612 = vmatpush1.msra.mxu0 %v694
        %3613 = vmatprep.subr.mxu0 0.0
        %3614 = vmatpush1.msra.mxu0 0.0
        %3615 = vmatprep.subr.mxu0 0.0
        %3616 = vmatpush1.msra.mxu0 0.0
        %3617 = vmatprep.subr.mxu0 0.0
        %3618 = vmatpush1.msra.mxu0 0.0
        %3619 = vmatprep.subr.mxu0 0.0
        %3620 = vmatpush1.msra.mxu0 0.0
        %3621 = vmatprep.subr.mxu0 0.0
        %3622 = vmatpush1.msra.mxu0 0.0
        %3623 = vmatprep.subr.mxu0 0.0
        %3624 = vmatpush1.msra.mxu0 0.0
        %3625 = vmatprep.subr.mxu0 0.0
        %3626 = vmatpush1.msra.mxu0 0.0
        %3627 = vmatprep.subr.mxu0 0.0
        %3628 = vmatpush1.msra.mxu0 0.0
        %3629 = vmatprep.subr.mxu0 0.0
        %3630 = vmatpush1.msra.mxu0 0.0
        %3631 = vmatprep.subr.mxu0 0.0
        %3632 = vmatpush1.msra.mxu0 0.0
        %3633 = vmatprep.subr.mxu0 0.0
        %3634 = vmatpush1.msra.mxu0 0.0
        %3635 = vmatprep.subr.mxu0 0.0
        %3636 = vmatpush1.msra.mxu0 0.0
        %3637 = vmatprep.subr.mxu0 0.0
        %3638 = vmatpush1.msra.mxu0 0.0
        %3639 = vmatprep.subr.mxu0 0.0
        %3640 = vmatpush1.msra.mxu0 0.0
        %3641 = vmatprep.subr.mxu0 0.0
        %3642 = vmatpush1.msra.mxu0 0.0
        %3643 = vmatprep.subr.mxu0 0.0
        %3644 = vmatpush1.msra.mxu0 0.0
        %3645 = vmatprep.mubr.f32.mxu0 0.0
        %3646 = vmatmul.mubr.f32.gmra.mrb[0].mxu0 %v3579
        %v3647 = vpop.f32.mrb[0].mxu0
        %v3648 = vadd.f32 0.0, %v3647
        %v3649 = vpop.f32.mrb[0].mxu0
        %3650 = vdwg.mxu0
        %v3651 = vrcp.pop 1024.0
        %v3652 = vmul.f32 %v3648, %v3651
        %v3655 = vsel %vm1759, %v3576, %v3563
        %3657 = vmatprep.subr.mxu0 0.0
        %3658 = vmatpush1.msra.mxu0 %v679
        %3659 = vmatprep.subr.mxu0 0.0
        %3660 = vmatpush1.msra.mxu0 %v680
        %3661 = vmatprep.subr.mxu0 0.0
        %3662 = vmatpush1.msra.mxu0 %v681
        %3663 = vmatprep.subr.mxu0 0.0
        %3664 = vmatpush1.msra.mxu0 %v682
        %3665 = vmatprep.subr.mxu0 0.0
        %3666 = vmatpush1.msra.mxu0 %v683
        %3667 = vmatprep.subr.mxu0 0.0
        %3668 = vmatpush1.msra.mxu0 %v684
        %3669 = vmatprep.subr.mxu0 0.0
        %3670 = vmatpush1.msra.mxu0 %v685
        %3671 = vmatprep.subr.mxu0 0.0
        %3672 = vmatpush1.msra.mxu0 %v686
        %3673 = vmatprep.subr.mxu0 0.0
        %3674 = vmatpush1.msra.mxu0 %v687
        %3675 = vmatprep.subr.mxu0 0.0
        %3676 = vmatpush1.msra.mxu0 %v688
        %3677 = vmatprep.subr.mxu0 0.0
        %3678 = vmatpush1.msra.mxu0 %v689
        %3679 = vmatprep.subr.mxu0 0.0
        %3680 = vmatpush1.msra.mxu0 %v690
        %3681 = vmatprep.subr.mxu0 0.0
        %3682 = vmatpush1.msra.mxu0 %v691
        %3683 = vmatprep.subr.mxu0 0.0
        %3684 = vmatpush1.msra.mxu0 %v692
        %3685 = vmatprep.subr.mxu0 0.0
        %3686 = vmatpush1.msra.mxu0 %v693
        %3687 = vmatprep.subr.mxu0 0.0
        %3688 = vmatpush1.msra.mxu0 %v694
        %3689 = vmatprep.subr.mxu0 0.0
        %3690 = vmatpush1.msra.mxu0 0.0
        %3691 = vmatprep.subr.mxu0 0.0
        %3692 = vmatpush1.msra.mxu0 0.0
        %3693 = vmatprep.subr.mxu0 0.0
        %3694 = vmatpush1.msra.mxu0 0.0
        %3695 = vmatprep.subr.mxu0 0.0
        %3696 = vmatpush1.msra.mxu0 0.0
        %3697 = vmatprep.subr.mxu0 0.0
        %3698 = vmatpush1.msra.mxu0 0.0
        %3699 = vmatprep.subr.mxu0 0.0
        %3700 = vmatpush1.msra.mxu0 0.0
        %3701 = vmatprep.subr.mxu0 0.0
        %3702 = vmatpush1.msra.mxu0 0.0
        %3703 = vmatprep.subr.mxu0 0.0
        %3704 = vmatpush1.msra.mxu0 0.0
        %3705 = vmatprep.subr.mxu0 0.0
        %3706 = vmatpush1.msra.mxu0 0.0
        %3707 = vmatprep.subr.mxu0 0.0
        %3708 = vmatpush1.msra.mxu0 0.0
        %3709 = vmatprep.subr.mxu0 0.0
        %3710 = vmatpush1.msra.mxu0 0.0
        %3711 = vmatprep.subr.mxu0 0.0
        %3712 = vmatpush1.msra.mxu0 0.0
        %3713 = vmatprep.subr.mxu0 0.0
        %3714 = vmatpush1.msra.mxu0 0.0
        %3715 = vmatprep.subr.mxu0 0.0
        %3716 = vmatpush1.msra.mxu0 0.0
        %3717 = vmatprep.subr.mxu0 0.0
        %3718 = vmatpush1.msra.mxu0 0.0
        %3719 = vmatprep.subr.mxu0 0.0
        %3720 = vmatpush1.msra.mxu0 0.0
        %3721 = vmatprep.mubr.f32.mxu0 0.0
        %3722 = vmatmul.mubr.f32.gmra.mrb[0].mxu0 %v3655
        %v3723 = vpop.f32.mrb[0].mxu0
        %v3724 = vadd.f32 0.0, %v3723
        %v3725 = vpop.f32.mrb[0].mxu0
        %3726 = vdwg.mxu0
        %v3727 = vmul.f32 %v3724, %v3651
        %v3728 = vmul.f32 %v3652, %v3652
        %v3729 = vsub.f32 %v3727, %v3728
        %v3730 = vadd.f32 %v3729, 1e-05
        %v3731 = vrsqrt.pop %v3730
        %v3733 = vsel %vm1915, %v3652, 0
        %3735 = vmatprep.subr.mxu0 0.0
        %3736 = vmatpush1.msra.mxu0 %v695
        %3737 = vmatprep.subr.mxu0 0.0
        %3738 = vmatpush1.msra.mxu0 0.0
        %3739 = vmatprep.subr.mxu0 0.0
        %3740 = vmatpush1.msra.mxu0 0.0
        %3741 = vmatprep.subr.mxu0 0.0
        %3742 = vmatpush1.msra.mxu0 0.0
        %3743 = vmatprep.subr.mxu0 0.0
        %3744 = vmatpush1.msra.mxu0 0.0
        %3745 = vmatprep.subr.mxu0 0.0
        %3746 = vmatpush1.msra.mxu0 0.0
        %3747 = vmatprep.subr.mxu0 0.0
        %3748 = vmatpush1.msra.mxu0 0.0
        %3749 = vmatprep.subr.mxu0 0.0
        %3750 = vmatpush1.msra.mxu0 0.0
        %3751 = vmatprep.subr.mxu0 0.0
        %3752 = vmatpush1.msra.mxu0 0.0
        %3753 = vmatprep.subr.mxu0 0.0
        %3754 = vmatpush1.msra.mxu0 0.0
        %3755 = vmatprep.subr.mxu0 0.0
        %3756 = vmatpush1.msra.mxu0 0.0
        %3757 = vmatprep.subr.mxu0 0.0
        %3758 = vmatpush1.msra.mxu0 0.0
        %3759 = vmatprep.subr.mxu0 0.0
        %3760 = vmatpush1.msra.mxu0 0.0
        %3761 = vmatprep.subr.mxu0 0.0
        %3762 = vmatpush1.msra.mxu0 0.0
        %3763 = vmatprep.subr.mxu0 0.0
        %3764 = vmatpush1.msra.mxu0 0.0
        %3765 = vmatprep.subr.mxu0 0.0
        %3766 = vmatpush1.msra.mxu0 0.0
        %3767 = vmatprep.subr.mxu0 0.0
        %3768 = vmatpush1.msra.mxu0 0.0
        %3769 = vmatprep.subr.mxu0 0.0
        %3770 = vmatpush1.msra.mxu0 0.0
        %3771 = vmatprep.subr.mxu0 0.0
        %3772 = vmatpush1.msra.mxu0 0.0
        %3773 = vmatprep.subr.mxu0 0.0
        %3774 = vmatpush1.msra.mxu0 0.0
        %3775 = vmatprep.subr.mxu0 0.0
        %3776 = vmatpush1.msra.mxu0 0.0
        %3777 = vmatprep.subr.mxu0 0.0
        %3778 = vmatpush1.msra.mxu0 0.0
        %3779 = vmatprep.subr.mxu0 0.0
        %3780 = vmatpush1.msra.mxu0 0.0
        %3781 = vmatprep.subr.mxu0 0.0
        %3782 = vmatpush1.msra.mxu0 0.0
        %3783 = vmatprep.subr.mxu0 0.0
        %3784 = vmatpush1.msra.mxu0 0.0
        %3785 = vmatprep.subr.mxu0 0.0
        %3786 = vmatpush1.msra.mxu0 0.0
        %3787 = vmatprep.subr.mxu0 0.0
        %3788 = vmatpush1.msra.mxu0 0.0
        %3789 = vmatprep.subr.mxu0 0.0
        %3790 = vmatpush1.msra.mxu0 0.0
        %3791 = vmatprep.subr.mxu0 0.0
        %3792 = vmatpush1.msra.mxu0 0.0
        %3793 = vmatprep.subr.mxu0 0.0
        %3794 = vmatpush1.msra.mxu0 0.0
        %3795 = vmatprep.subr.mxu0 0.0
        %3796 = vmatpush1.msra.mxu0 0.0
        %3797 = vmatprep.subr.mxu0 0.0
        %3798 = vmatpush1.msra.mxu0 0.0
        %3799 = vmatprep.mubr.f32.mxu0 0.0
        %3800 = vmatmul.mubr.f32.gmra.mrb[0].mxu0 %v3733
        %v3801 = vpop.f32.mrb[0].mxu0
        %v3802 = vadd.f32 0.0, %v3801
        %v3803 = vpop.f32.mrb[0].mxu0
        %3804 = vdwg.mxu0
        %v3806 = vsel %vm1915, %v3731, 0
        %3808 = vmatprep.subr.mxu0 0.0
        %3809 = vmatpush1.msra.mxu0 %v695
        %3810 = vmatprep.subr.mxu0 0.0
        %3811 = vmatpush1.msra.mxu0 0.0
        %3812 = vmatprep.subr.mxu0 0.0
        %3813 = vmatpush1.msra.mxu0 0.0
        %3814 = vmatprep.subr.mxu0 0.0
        %3815 = vmatpush1.msra.mxu0 0.0
        %3816 = vmatprep.subr.mxu0 0.0
        %3817 = vmatpush1.msra.mxu0 0.0
        %3818 = vmatprep.subr.mxu0 0.0
        %3819 = vmatpush1.msra.mxu0 0.0
        %3820 = vmatprep.subr.mxu0 0.0
        %3821 = vmatpush1.msra.mxu0 0.0
        %3822 = vmatprep.subr.mxu0 0.0
        %3823 = vmatpush1.msra.mxu0 0.0
        %3824 = vmatprep.subr.mxu0 0.0
        %3825 = vmatpush1.msra.mxu0 0.0
        %3826 = vmatprep.subr.mxu0 0.0
        %3827 = vmatpush1.msra.mxu0 0.0
        %3828 = vmatprep.subr.mxu0 0.0
        %3829 = vmatpush1.msra.mxu0 0.0
        %3830 = vmatprep.subr.mxu0 0.0
        %3831 = vmatpush1.msra.mxu0 0.0
        %3832 = vmatprep.subr.mxu0 0.0
        %3833 = vmatpush1.msra.mxu0 0.0
        %3834 = vmatprep.subr.mxu0 0.0
        %3835 = vmatpush1.msra.mxu0 0.0
        %3836 = vmatprep.subr.mxu0 0.0
        %3837 = vmatpush1.msra.mxu0 0.0
        %3838 = vmatprep.subr.mxu0 0.0
        %3839 = vmatpush1.msra.mxu0 0.0
        %3840 = vmatprep.subr.mxu0 0.0
        %3841 = vmatpush1.msra.mxu0 0.0
        %3842 = vmatprep.subr.mxu0 0.0
        %3843 = vmatpush1.msra.mxu0 0.0
        %3844 = vmatprep.subr.mxu0 0.0
        %3845 = vmatpush1.msra.mxu0 0.0
        %3846 = vmatprep.subr.mxu0 0.0
        %3847 = vmatpush1.msra.mxu0 0.0
        %3848 = vmatprep.subr.mxu0 0.0
        %3849 = vmatpush1.msra.mxu0 0.0
        %3850 = vmatprep.subr.mxu0 0.0
        %3851 = vmatpush1.msra.mxu0 0.0
        %3852 = vmatprep.subr.mxu0 0.0
        %3853 = vmatpush1.msra.mxu0 0.0
        %3854 = vmatprep.subr.mxu0 0.0
        %3855 = vmatpush1.msra.mxu0 0.0
        %3856 = vmatprep.subr.mxu0 0.0
        %3857 = vmatpush1.msra.mxu0 0.0
        %3858 = vmatprep.subr.mxu0 0.0
        %3859 = vmatpush1.msra.mxu0 0.0
        %3860 = vmatprep.subr.mxu0 0.0
        %3861 = vmatpush1.msra.mxu0 0.0
        %3862 = vmatprep.subr.mxu0 0.0
        %3863 = vmatpush1.msra.mxu0 0.0
        %3864 = vmatprep.subr.mxu0 0.0
        %3865 = vmatpush1.msra.mxu0 0.0
        %3866 = vmatprep.subr.mxu0 0.0
        %3867 = vmatpush1.msra.mxu0 0.0
        %3868 = vmatprep.subr.mxu0 0.0
        %3869 = vmatpush1.msra.mxu0 0.0
        %3870 = vmatprep.subr.mxu0 0.0
        %3871 = vmatpush1.msra.mxu0 0.0
        %3872 = vmatprep.mubr.f32.mxu0 0.0
        %3873 = vmatmul.mubr.f32.gmra.mrb[0].mxu0 %v3806
        %v3874 = vpop.f32.mrb[0].mxu0
        %v3875 = vadd.f32 0.0, %v3874
        %v3876 = vpop.f32.mrb[0].mxu0
        %3877 = vdwg.mxu0
        %v3880 = vunpack.c.l.s4 1966171168
        %v3881 = vunpack.c.0.s8 %v3880
        %v3882 = vlaneseq
        %v3883 = vshrl.u32 %v3882, 7
        %v3884 = vsub.s32 %v3881, %v3883
        %v3885 = vrot.slane %v3802, %v3884
        %v3886 = vcombine.high %v3885, %v3885
        %v3888 = vunpack.c.l.s4 1966171168
        %v3889 = vunpack.c.0.s8 %v3888
        %v3890 = vlaneseq
        %v3891 = vshrl.u32 %v3890, 7
        %v3892 = vsub.s32 %v3889, %v3891
        %v3893 = vrot.slane %v3885, %v3892
        %v3895 = vunpack.c.l.s4 1966171168
        %v3896 = vunpack.c.0.s8 %v3895
        %v3897 = vlaneseq
        %v3898 = vshrl.u32 %v3897, 7
        %v3899 = vsub.s32 %v3896, %v3898
        %v3900 = vrot.slane %v3886, %v3899
        %v3901 = vlaneseq
        %v3902 = vshrl.u32 %v3901, 7
        %v3903 = vsub.s32 0, %v3902
        %v3904 = vrot.slane %v3893, %v3903
        %v3905 = vlaneseq
        %v3906 = vshrl.u32 %v3905, 7
        %v3907 = vsub.s32 0, %v3906
        %v3908 = vrot.slane %v3900, %v3907
        %v3911 = vsub.f32 %v3491, %v3904
        %v3912 = vsub.f32 %v3492, %v3904
        %v3913 = vsub.f32 %v3493, %v3904
        %v3914 = vsub.f32 %v3494, %v3904
        %v3915 = vsub.f32 %v3495, %v3904
        %v3916 = vsub.f32 %v3496, %v3904
        %v3917 = vsub.f32 %v3497, %v3904
        %v3918 = vsub.f32 %v3498, %v3904
        %v3919 = vsub.f32 %v3499, %v3908
        %v3920 = vsub.f32 %v3500, %v3908
        %v3921 = vsub.f32 %v3501, %v3908
        %v3922 = vsub.f32 %v3502, %v3908
        %v3923 = vsub.f32 %v3503, %v3908
        %v3924 = vsub.f32 %v3504, %v3908
        %v3925 = vsub.f32 %v3505, %v3908
        %v3926 = vsub.f32 %v3506, %v3908
        %v3929 = vunpack.c.l.s4 1966171168
        %v3930 = vunpack.c.0.s8 %v3929
        %v3931 = vlaneseq
        %v3932 = vshrl.u32 %v3931, 7
        %v3933 = vsub.s32 %v3930, %v3932
        %v3934 = vrot.slane %v3875, %v3933
        %v3935 = vcombine.high %v3934, %v3934
        %v3937 = vunpack.c.l.s4 1966171168
        %v3938 = vunpack.c.0.s8 %v3937
        %v3939 = vlaneseq
        %v3940 = vshrl.u32 %v3939, 7
        %v3941 = vsub.s32 %v3938, %v3940
        %v3942 = vrot.slane %v3934, %v3941
        %v3944 = vunpack.c.l.s4 1966171168
        %v3945 = vunpack.c.0.s8 %v3944
        %v3946 = vlaneseq
        %v3947 = vshrl.u32 %v3946, 7
        %v3948 = vsub.s32 %v3945, %v3947
        %v3949 = vrot.slane %v3935, %v3948
        %v3950 = vlaneseq
        %v3951 = vshrl.u32 %v3950, 7
        %v3952 = vsub.s32 0, %v3951
        %v3953 = vrot.slane %v3942, %v3952
        %v3954 = vlaneseq
        %v3955 = vshrl.u32 %v3954, 7
        %v3956 = vsub.s32 0, %v3955
        %v3957 = vrot.slane %v3949, %v3956
        %v3960 = vmul.f32 %v3911, %v3953
        %v3961 = vmul.f32 %v3912, %v3953
        %v3962 = vmul.f32 %v3913, %v3953
        %v3963 = vmul.f32 %v3914, %v3953
        %v3964 = vmul.f32 %v3915, %v3953
        %v3965 = vmul.f32 %v3916, %v3953
        %v3966 = vmul.f32 %v3917, %v3953
        %v3967 = vmul.f32 %v3918, %v3953
        %v3968 = vmul.f32 %v3919, %v3957
        %v3969 = vmul.f32 %v3920, %v3957
        %v3970 = vmul.f32 %v3921, %v3957
        %v3971 = vmul.f32 %v3922, %v3957
        %v3972 = vmul.f32 %v3923, %v3957
        %v3973 = vmul.f32 %v3924, %v3957
        %v3974 = vmul.f32 %v3925, %v3957
        %v3975 = vmul.f32 %v3926, %v3957
        %v3976 = vlaneseq
        %v3977 = vshrl.u32 %v3976, 7
        %v3978 = vsub.s32 0, %v3977
        %v3979 = vrot.slane %v3507, %v3978
        %v3980 = vmul.f32 %v3960, %v3979
        %v3981 = vmul.f32 %v3961, %v3979
        %v3982 = vmul.f32 %v3962, %v3979
        %v3983 = vmul.f32 %v3963, %v3979
        %v3984 = vmul.f32 %v3964, %v3979
        %v3985 = vmul.f32 %v3965, %v3979
        %v3986 = vmul.f32 %v3966, %v3979
        %v3987 = vmul.f32 %v3967, %v3979
        %v3988 = vmul.f32 %v3968, %v3979
        %v3989 = vmul.f32 %v3969, %v3979
        %v3990 = vmul.f32 %v3970, %v3979
        %v3991 = vmul.f32 %v3971, %v3979
        %v3992 = vmul.f32 %v3972, %v3979
        %v3993 = vmul.f32 %v3973, %v3979
        %v3994 = vmul.f32 %v3974, %v3979
        %v3995 = vmul.f32 %v3975, %v3979
        %v3996 = vlaneseq
        %v3997 = vshrl.u32 %v3996, 7
        %v3998 = vsub.s32 0, %v3997
        %v3999 = vrot.slane %v3508, %v3998
        %v4000 = vadd.f32 %v3980, %v3999
        %v4001 = vadd.f32 %v3981, %v3999
        %v4002 = vadd.f32 %v3982, %v3999
        %v4003 = vadd.f32 %v3983, %v3999
        %v4004 = vadd.f32 %v3984, %v3999
        %v4005 = vadd.f32 %v3985, %v3999
        %v4006 = vadd.f32 %v3986, %v3999
        %v4007 = vadd.f32 %v3987, %v3999
        %v4008 = vadd.f32 %v3988, %v3999
        %v4009 = vadd.f32 %v3989, %v3999
        %v4010 = vadd.f32 %v3990, %v3999
        %v4011 = vadd.f32 %v3991, %v3999
        %v4012 = vadd.f32 %v3992, %v3999
        %v4013 = vadd.f32 %v3993, %v3999
        %v4014 = vadd.f32 %v3994, %v3999
        %v4015 = vadd.f32 %v3995, %v3999
        %s4016 = scalar_lea.vmem [#allocation3], 16
        %4017 = vst [vmem:[%s4016 + $0x1] sm:$0xff] %v4000
        %4018 = vst [vmem:[%s4016 + $0x11] sm:$0xff] %v4001
        %4019 = vst [vmem:[%s4016 + $0x21] sm:$0xff] %v4002
        %4020 = vst [vmem:[%s4016 + $0x31] sm:$0xff] %v4003
        %4021 = vst [vmem:[%s4016 + $0x41] sm:$0xff] %v4004
        %4022 = vst [vmem:[%s4016 + $0x51] sm:$0xff] %v4005
        %4023 = vst [vmem:[%s4016 + $0x61] sm:$0xff] %v4006
        %4024 = vst [vmem:[%s4016 + $0x71] sm:$0xff] %v4007
        %s4025 = scalar_lea.vmem [#allocation3], 176
        %4026 = vst [vmem:[%s4025 + $0x1] sm:$0xff] %v4008
        %4027 = vst [vmem:[%s4025 + $0x11] sm:$0xff] %v4009
        %4028 = vst [vmem:[%s4025 + $0x21] sm:$0xff] %v4010
        %4029 = vst [vmem:[%s4025 + $0x31] sm:$0xff] %v4011
        %4030 = vst [vmem:[%s4025 + $0x41] sm:$0xff] %v4012
        %4031 = vst [vmem:[%s4025 + $0x51] sm:$0xff] %v4013
        %4032 = vst [vmem:[%s4025 + $0x61] sm:$0xff] %v4014
        %4033 = vst [vmem:[%s4025 + $0x71] sm:$0xff] %v4015
        %v4034 = vld [vmem:[#allocation3] sm:$0xff]
        %v4035 = vld [vmem:[#allocation3 + $0x10] sm:$0xff]
        %v4036 = vld [vmem:[#allocation3 + $0x20] sm:$0xff]
        %v4037 = vld [vmem:[#allocation3 + $0x30] sm:$0xff]
        %v4038 = vld [vmem:[#allocation3 + $0x40] sm:$0xff]
        %v4039 = vld [vmem:[#allocation3 + $0x50] sm:$0xff]
        %v4040 = vld [vmem:[#allocation3 + $0x60] sm:$0xff]
        %v4041 = vld [vmem:[#allocation3 + $0x70] sm:$0xff]
        %s4042 = scalar_lea.vmem [#allocation3], 160
        %v4043 = vld [vmem:[%s4042] sm:$0xff]
        %v4044 = vld [vmem:[%s4042 + $0x10] sm:$0xff]
        %v4045 = vld [vmem:[%s4042 + $0x20] sm:$0xff]
        %v4046 = vld [vmem:[%s4042 + $0x30] sm:$0xff]
        %v4047 = vld [vmem:[%s4042 + $0x40] sm:$0xff]
        %v4048 = vld [vmem:[%s4042 + $0x50] sm:$0xff]
        %v4049 = vld [vmem:[%s4042 + $0x60] sm:$0xff]
        %v4050 = vld [vmem:[%s4042 + $0x70] sm:$0xff]
        %v4051 = vld [vmem:[#allocation3 + $0x1] sm:$0xff]
        %v4052 = vld [vmem:[#allocation3 + $0x11] sm:$0xff]
        %v4053 = vld [vmem:[#allocation3 + $0x21] sm:$0xff]
        %v4054 = vld [vmem:[#allocation3 + $0x31] sm:$0xff]
        %v4055 = vld [vmem:[#allocation3 + $0x41] sm:$0xff]
        %v4056 = vld [vmem:[#allocation3 + $0x51] sm:$0xff]
        %v4057 = vld [vmem:[#allocation3 + $0x61] sm:$0xff]
        %v4058 = vld [vmem:[#allocation3 + $0x71] sm:$0xff]
        %v4059 = vld [vmem:[%s4042 + $0x1] sm:$0xff]
        %v4060 = vld [vmem:[%s4042 + $0x11] sm:$0xff]
        %v4061 = vld [vmem:[%s4042 + $0x21] sm:$0xff]
        %v4062 = vld [vmem:[%s4042 + $0x31] sm:$0xff]
        %v4063 = vld [vmem:[%s4042 + $0x41] sm:$0xff]
        %v4064 = vld [vmem:[%s4042 + $0x51] sm:$0xff]
        %v4065 = vld [vmem:[%s4042 + $0x61] sm:$0xff]
        %v4066 = vld [vmem:[%s4042 + $0x71] sm:$0xff]
        %v4067 = vld [vmem:[#allocation3 + $0x2] sm:$0xff]
        %v4068 = vld [vmem:[#allocation3 + $0x12] sm:$0xff]
        %v4069 = vld [vmem:[#allocation3 + $0x22] sm:$0xff]
        %v4070 = vld [vmem:[#allocation3 + $0x32] sm:$0xff]
        %v4071 = vld [vmem:[#allocation3 + $0x42] sm:$0xff]
        %v4072 = vld [vmem:[#allocation3 + $0x52] sm:$0xff]
        %v4073 = vld [vmem:[#allocation3 + $0x62] sm:$0xff]
        %v4074 = vld [vmem:[#allocation3 + $0x72] sm:$0xff]
        %v4075 = vld [vmem:[%s4042 + $0x2] sm:$0xff]
        %v4076 = vld [vmem:[%s4042 + $0x12] sm:$0xff]
        %v4077 = vld [vmem:[%s4042 + $0x22] sm:$0xff]
        %v4078 = vld [vmem:[%s4042 + $0x32] sm:$0xff]
        %v4079 = vld [vmem:[%s4042 + $0x42] sm:$0xff]
        %v4080 = vld [vmem:[%s4042 + $0x52] sm:$0xff]
        %v4081 = vld [vmem:[%s4042 + $0x62] sm:$0xff]
        %v4082 = vld [vmem:[%s4042 + $0x72] sm:$0xff]
        %v4083 = vld [vmem:[%s4016] sm:$0xff]
        %v4084 = vld [vmem:[%s4016 + $0x10] sm:$0xff]
        %v4085 = vld [vmem:[%s4016 + $0x20] sm:$0xff]
        %v4086 = vld [vmem:[%s4016 + $0x30] sm:$0xff]
        %v4087 = vld [vmem:[%s4016 + $0x40] sm:$0xff]
        %v4088 = vld [vmem:[%s4016 + $0x50] sm:$0xff]
        %v4089 = vld [vmem:[%s4016 + $0x60] sm:$0xff]
        %v4090 = vld [vmem:[%s4016 + $0x70] sm:$0xff]
        %v4091 = vld [vmem:[%s4025] sm:$0xff]
        %v4092 = vld [vmem:[%s4025 + $0x10] sm:$0xff]
        %v4093 = vld [vmem:[%s4025 + $0x20] sm:$0xff]
        %v4094 = vld [vmem:[%s4025 + $0x30] sm:$0xff]
        %v4095 = vld [vmem:[%s4025 + $0x40] sm:$0xff]
        %v4096 = vld [vmem:[%s4025 + $0x50] sm:$0xff]
        %v4097 = vld [vmem:[%s4025 + $0x60] sm:$0xff]
        %v4098 = vld [vmem:[%s4025 + $0x70] sm:$0xff]
        %v4099 = vld [vmem:[%s4016 + $0x1] sm:$0xff]
        %v4100 = vld [vmem:[%s4016 + $0x11] sm:$0xff]
        %v4101 = vld [vmem:[%s4016 + $0x21] sm:$0xff]
        %v4102 = vld [vmem:[%s4016 + $0x31] sm:$0xff]
        %v4103 = vld [vmem:[%s4016 + $0x41] sm:$0xff]
        %v4104 = vld [vmem:[%s4016 + $0x51] sm:$0xff]
        %v4105 = vld [vmem:[%s4016 + $0x61] sm:$0xff]
        %v4106 = vld [vmem:[%s4016 + $0x71] sm:$0xff]
        %v4107 = vld [vmem:[%s4025 + $0x1] sm:$0xff]
        %v4108 = vld [vmem:[%s4025 + $0x11] sm:$0xff]
        %v4109 = vld [vmem:[%s4025 + $0x21] sm:$0xff]
        %v4110 = vld [vmem:[%s4025 + $0x31] sm:$0xff]
        %v4111 = vld [vmem:[%s4025 + $0x41] sm:$0xff]
        %v4112 = vld [vmem:[%s4025 + $0x51] sm:$0xff]
        %v4113 = vld [vmem:[%s4025 + $0x61] sm:$0xff]
        %v4114 = vld [vmem:[%s4025 + $0x71] sm:$0xff]
        %v4115 = vld [vmem:[%s4016 + $0x2] sm:$0xff]
        %v4116 = vld [vmem:[%s4016 + $0x12] sm:$0xff]
        %v4117 = vld [vmem:[%s4016 + $0x22] sm:$0xff]
        %v4118 = vld [vmem:[%s4016 + $0x32] sm:$0xff]
        %v4119 = vld [vmem:[%s4016 + $0x42] sm:$0xff]
        %v4120 = vld [vmem:[%s4016 + $0x52] sm:$0xff]
        %v4121 = vld [vmem:[%s4016 + $0x62] sm:$0xff]
        %v4122 = vld [vmem:[%s4016 + $0x72] sm:$0xff]
        %v4123 = vld [vmem:[%s4025 + $0x2] sm:$0xff]
        %v4124 = vld [vmem:[%s4025 + $0x12] sm:$0xff]
        %v4125 = vld [vmem:[%s4025 + $0x22] sm:$0xff]
        %v4126 = vld [vmem:[%s4025 + $0x32] sm:$0xff]
        %v4127 = vld [vmem:[%s4025 + $0x42] sm:$0xff]
        %v4128 = vld [vmem:[%s4025 + $0x52] sm:$0xff]
        %v4129 = vld [vmem:[%s4025 + $0x62] sm:$0xff]
        %v4130 = vld [vmem:[%s4025 + $0x72] sm:$0xff]
        %s4131 = scalar_lea.vmem [#allocation3], 32
        %v4132 = vld [vmem:[%s4131] sm:$0xff]
        %v4133 = vld [vmem:[%s4131 + $0x10] sm:$0xff]
        %v4134 = vld [vmem:[%s4131 + $0x20] sm:$0xff]
        %v4135 = vld [vmem:[%s4131 + $0x30] sm:$0xff]
        %v4136 = vld [vmem:[%s4131 + $0x40] sm:$0xff]
        %v4137 = vld [vmem:[%s4131 + $0x50] sm:$0xff]
        %v4138 = vld [vmem:[%s4131 + $0x60] sm:$0xff]
        %v4139 = vld [vmem:[%s4131 + $0x70] sm:$0xff]
        %s4140 = scalar_lea.vmem [#allocation3], 192
        %v4141 = vld [vmem:[%s4140] sm:$0xff]
        %v4142 = vld [vmem:[%s4140 + $0x10] sm:$0xff]
        %v4143 = vld [vmem:[%s4140 + $0x20] sm:$0xff]
        %v4144 = vld [vmem:[%s4140 + $0x30] sm:$0xff]
        %v4145 = vld [vmem:[%s4140 + $0x40] sm:$0xff]
        %v4146 = vld [vmem:[%s4140 + $0x50] sm:$0xff]
        %v4147 = vld [vmem:[%s4140 + $0x60] sm:$0xff]
        %v4148 = vld [vmem:[%s4140 + $0x70] sm:$0xff]
        %v4149 = vld [vmem:[%s4131 + $0x1] sm:$0xff]
        %v4150 = vld [vmem:[%s4131 + $0x11] sm:$0xff]
        %v4151 = vld [vmem:[%s4131 + $0x21] sm:$0xff]
        %v4152 = vld [vmem:[%s4131 + $0x31] sm:$0xff]
        %v4153 = vld [vmem:[%s4131 + $0x41] sm:$0xff]
        %v4154 = vld [vmem:[%s4131 + $0x51] sm:$0xff]
        %v4155 = vld [vmem:[%s4131 + $0x61] sm:$0xff]
        %v4156 = vld [vmem:[%s4131 + $0x71] sm:$0xff]
        %v4157 = vld [vmem:[%s4140 + $0x1] sm:$0xff]
        %v4158 = vld [vmem:[%s4140 + $0x11] sm:$0xff]
        %v4159 = vld [vmem:[%s4140 + $0x21] sm:$0xff]
        %v4160 = vld [vmem:[%s4140 + $0x31] sm:$0xff]
        %v4161 = vld [vmem:[%s4140 + $0x41] sm:$0xff]
        %v4162 = vld [vmem:[%s4140 + $0x51] sm:$0xff]
        %v4163 = vld [vmem:[%s4140 + $0x61] sm:$0xff]
        %v4164 = vld [vmem:[%s4140 + $0x71] sm:$0xff]
        %v4165 = vld [vmem:[%s4131 + $0x2] sm:$0xff]
        %v4166 = vld [vmem:[%s4131 + $0x12] sm:$0xff]
        %v4167 = vld [vmem:[%s4131 + $0x22] sm:$0xff]
        %v4168 = vld [vmem:[%s4131 + $0x32] sm:$0xff]
        %v4169 = vld [vmem:[%s4131 + $0x42] sm:$0xff]
        %v4170 = vld [vmem:[%s4131 + $0x52] sm:$0xff]
        %v4171 = vld [vmem:[%s4131 + $0x62] sm:$0xff]
        %v4172 = vld [vmem:[%s4131 + $0x72] sm:$0xff]
        %v4173 = vld [vmem:[%s4140 + $0x2] sm:$0xff]
        %v4174 = vld [vmem:[%s4140 + $0x12] sm:$0xff]
        %v4175 = vld [vmem:[%s4140 + $0x22] sm:$0xff]
        %v4176 = vld [vmem:[%s4140 + $0x32] sm:$0xff]
        %v4177 = vld [vmem:[%s4140 + $0x42] sm:$0xff]
        %v4178 = vld [vmem:[%s4140 + $0x52] sm:$0xff]
        %v4179 = vld [vmem:[%s4140 + $0x62] sm:$0xff]
        %v4180 = vld [vmem:[%s4140 + $0x72] sm:$0xff]
        %v4181 = vld [vmem:[%s5] sm:$0xff]
        %v4182 = vld [vmem:[%s5 + $0x8] sm:$0xff]
        %v4183 = vld [vmem:[%s5 + $0x10] sm:$0xff]
        %v4184 = vld [vmem:[%s5 + $0x18] sm:$0xff]
        %v4185 = vld [vmem:[%s5 + $0x20] sm:$0xff]
        %v4186 = vld [vmem:[%s5 + $0x28] sm:$0xff]
        %v4187 = vld [vmem:[%s5 + $0x30] sm:$0xff]
        %v4188 = vld [vmem:[%s5 + $0x38] sm:$0xff]
        %v4189 = vld [vmem:[%s5 + $0x40] sm:$0xff]
        %v4190 = vld [vmem:[%s5 + $0x48] sm:$0xff]
        %v4191 = vld [vmem:[%s5 + $0x50] sm:$0xff]
        %v4192 = vld [vmem:[%s5 + $0x58] sm:$0xff]
        %v4193 = vld [vmem:[%s5 + $0x60] sm:$0xff]
        %v4194 = vld [vmem:[%s5 + $0x68] sm:$0xff]
        %v4195 = vld [vmem:[%s5 + $0x70] sm:$0xff]
        %v4196 = vld [vmem:[%s5 + $0x78] sm:$0xff]
        %v4197 = vld [vmem:[%s5 + $0x80] sm:$0xff]
        %v4198 = vld [vmem:[%s5 + $0x88] sm:$0xff]
        %v4199 = vld [vmem:[%s5 + $0x90] sm:$0xff]
        %v4200 = vld [vmem:[%s5 + $0x98] sm:$0xff]
        %v4201 = vld [vmem:[%s5 + $0xa0] sm:$0xff]
        %v4202 = vld [vmem:[%s5 + $0xa8] sm:$0xff]
        %v4203 = vld [vmem:[%s5 + $0xb0] sm:$0xff]
        %v4204 = vld [vmem:[%s5 + $0xb8] sm:$0xff]
        %v4205 = vld [vmem:[%s5 + $0xc0] sm:$0xff]
        %v4206 = vld [vmem:[%s5 + $0xc8] sm:$0xff]
        %v4207 = vld [vmem:[%s5 + $0xd0] sm:$0xff]
        %v4208 = vld [vmem:[%s5 + $0xd8] sm:$0xff]
        %v4209 = vld [vmem:[%s5 + $0xe0] sm:$0xff]
        %v4210 = vld [vmem:[%s5 + $0xe8] sm:$0xff]
        %v4211 = vld [vmem:[%s5 + $0xf0] sm:$0xff]
        %v4212 = vld [vmem:[%s5 + $0xf8] sm:$0xff]
        %v4213 = vld [vmem:[%s5 + $0x100] sm:$0xff]
        %v4214 = vld [vmem:[%s5 + $0x108] sm:$0xff]
        %v4215 = vld [vmem:[%s5 + $0x110] sm:$0xff]
        %v4216 = vld [vmem:[%s5 + $0x118] sm:$0xff]
        %v4217 = vld [vmem:[%s5 + $0x120] sm:$0xff]
        %v4218 = vld [vmem:[%s5 + $0x128] sm:$0xff]
        %v4219 = vld [vmem:[%s5 + $0x130] sm:$0xff]
        %v4220 = vld [vmem:[%s5 + $0x138] sm:$0xff]
        %v4221 = vld [vmem:[%s5 + $0x140] sm:$0xff]
        %v4222 = vld [vmem:[%s5 + $0x148] sm:$0xff]
        %v4223 = vld [vmem:[%s5 + $0x150] sm:$0xff]
        %v4224 = vld [vmem:[%s5 + $0x158] sm:$0xff]
        %v4225 = vld [vmem:[%s5 + $0x160] sm:$0xff]
        %v4226 = vld [vmem:[%s5 + $0x168] sm:$0xff]
        %v4227 = vld [vmem:[%s5 + $0x170] sm:$0xff]
        %v4228 = vld [vmem:[%s5 + $0x178] sm:$0xff]
        %v4229 = vld [vmem:[%s5 + $0x180] sm:$0xff]
        %v4230 = vld [vmem:[%s5 + $0x188] sm:$0xff]
        %v4231 = vld [vmem:[%s5 + $0x190] sm:$0xff]
        %v4232 = vld [vmem:[%s5 + $0x198] sm:$0xff]
        %v4233 = vld [vmem:[%s5 + $0x1a0] sm:$0xff]
        %v4234 = vld [vmem:[%s5 + $0x1a8] sm:$0xff]
        %v4235 = vld [vmem:[%s5 + $0x1b0] sm:$0xff]
        %v4236 = vld [vmem:[%s5 + $0x1b8] sm:$0xff]
        %v4237 = vld [vmem:[%s5 + $0x1c0] sm:$0xff]
        %v4238 = vld [vmem:[%s5 + $0x1c8] sm:$0xff]
        %v4239 = vld [vmem:[%s5 + $0x1d0] sm:$0xff]
        %v4240 = vld [vmem:[%s5 + $0x1d8] sm:$0xff]
        %v4241 = vld [vmem:[%s5 + $0x1e0] sm:$0xff]
        %v4242 = vld [vmem:[%s5 + $0x1e8] sm:$0xff]
        %v4243 = vld [vmem:[%s5 + $0x1f0] sm:$0xff]
        %v4244 = vld [vmem:[%s5 + $0x1f8] sm:$0xff]
        %v4245 = vld [vmem:[%s5 + $0x200] sm:$0xff]
        %v4246 = vld [vmem:[%s5 + $0x208] sm:$0xff]
        %v4247 = vld [vmem:[%s5 + $0x210] sm:$0xff]
        %v4248 = vld [vmem:[%s5 + $0x218] sm:$0xff]
        %v4249 = vld [vmem:[%s5 + $0x220] sm:$0xff]
        %v4250 = vld [vmem:[%s5 + $0x228] sm:$0xff]
        %v4251 = vld [vmem:[%s5 + $0x230] sm:$0xff]
        %v4252 = vld [vmem:[%s5 + $0x238] sm:$0xff]
        %v4253 = vld [vmem:[%s5 + $0x240] sm:$0xff]
        %v4254 = vld [vmem:[%s5 + $0x248] sm:$0xff]
        %v4255 = vld [vmem:[%s5 + $0x250] sm:$0xff]
        %v4256 = vld [vmem:[%s5 + $0x258] sm:$0xff]
        %v4257 = vld [vmem:[%s5 + $0x260] sm:$0xff]
        %v4258 = vld [vmem:[%s5 + $0x268] sm:$0xff]
        %v4259 = vld [vmem:[%s5 + $0x270] sm:$0xff]
        %v4260 = vld [vmem:[%s5 + $0x278] sm:$0xff]
        %v4261 = vld [vmem:[%s5 + $0x280] sm:$0xff]
        %v4262 = vld [vmem:[%s5 + $0x288] sm:$0xff]
        %v4263 = vld [vmem:[%s5 + $0x290] sm:$0xff]
        %v4264 = vld [vmem:[%s5 + $0x298] sm:$0xff]
        %v4265 = vld [vmem:[%s5 + $0x2a0] sm:$0xff]
        %v4266 = vld [vmem:[%s5 + $0x2a8] sm:$0xff]
        %v4267 = vld [vmem:[%s5 + $0x2b0] sm:$0xff]
        %v4268 = vld [vmem:[%s5 + $0x2b8] sm:$0xff]
        %v4269 = vld [vmem:[%s5 + $0x2c0] sm:$0xff]
        %v4270 = vld [vmem:[%s5 + $0x2c8] sm:$0xff]
        %v4271 = vld [vmem:[%s5 + $0x2d0] sm:$0xff]
        %v4272 = vld [vmem:[%s5 + $0x2d8] sm:$0xff]
        %v4273 = vld [vmem:[%s5 + $0x2e0] sm:$0xff]
        %v4274 = vld [vmem:[%s5 + $0x2e8] sm:$0xff]
        %v4275 = vld [vmem:[%s5 + $0x2f0] sm:$0xff]
        %v4276 = vld [vmem:[%s5 + $0x2f8] sm:$0xff]
        %v4277 = vld [vmem:[%s5 + $0x300] sm:$0xff]
        %v4278 = vld [vmem:[%s5 + $0x308] sm:$0xff]
        %v4279 = vld [vmem:[%s5 + $0x310] sm:$0xff]
        %v4280 = vld [vmem:[%s5 + $0x318] sm:$0xff]
        %v4281 = vld [vmem:[%s5 + $0x320] sm:$0xff]
        %v4282 = vld [vmem:[%s5 + $0x328] sm:$0xff]
        %v4283 = vld [vmem:[%s5 + $0x330] sm:$0xff]
        %v4284 = vld [vmem:[%s5 + $0x338] sm:$0xff]
        %v4285 = vld [vmem:[%s5 + $0x340] sm:$0xff]
        %v4286 = vld [vmem:[%s5 + $0x348] sm:$0xff]
        %v4287 = vld [vmem:[%s5 + $0x350] sm:$0xff]
        %v4288 = vld [vmem:[%s5 + $0x358] sm:$0xff]
        %v4289 = vld [vmem:[%s5 + $0x360] sm:$0xff]
        %v4290 = vld [vmem:[%s5 + $0x368] sm:$0xff]
        %v4291 = vld [vmem:[%s5 + $0x370] sm:$0xff]
        %v4292 = vld [vmem:[%s5 + $0x378] sm:$0xff]
        %v4293 = vld [vmem:[%s5 + $0x380] sm:$0xff]
        %v4294 = vld [vmem:[%s5 + $0x388] sm:$0xff]
        %v4295 = vld [vmem:[%s5 + $0x390] sm:$0xff]
        %v4296 = vld [vmem:[%s5 + $0x398] sm:$0xff]
        %v4297 = vld [vmem:[%s5 + $0x3a0] sm:$0xff]
        %v4298 = vld [vmem:[%s5 + $0x3a8] sm:$0xff]
        %v4299 = vld [vmem:[%s5 + $0x3b0] sm:$0xff]
        %v4300 = vld [vmem:[%s5 + $0x3b8] sm:$0xff]
        %v4301 = vld [vmem:[%s5 + $0x3c0] sm:$0xff]
        %v4302 = vld [vmem:[%s5 + $0x3c8] sm:$0xff]
        %v4303 = vld [vmem:[%s5 + $0x3d0] sm:$0xff]
        %v4304 = vld [vmem:[%s5 + $0x3d8] sm:$0xff]
        %v4305 = vld [vmem:[%s5 + $0x3e0] sm:$0xff]
        %v4306 = vld [vmem:[%s5 + $0x3e8] sm:$0xff]
        %v4307 = vld [vmem:[%s5 + $0x3f0] sm:$0xff]
        %v4308 = vld [vmem:[%s5 + $0x3f8] sm:$0xff]
        %v4309 = vld [vmem:[%s5 + $0x400] sm:$0xff]
        %v4310 = vld [vmem:[%s5 + $0x408] sm:$0xff]
        %v4311 = vld [vmem:[%s5 + $0x410] sm:$0xff]
        %v4312 = vld [vmem:[%s5 + $0x418] sm:$0xff]
        %v4313 = vld [vmem:[%s5 + $0x420] sm:$0xff]
        %v4314 = vld [vmem:[%s5 + $0x428] sm:$0xff]
        %v4315 = vld [vmem:[%s5 + $0x430] sm:$0xff]
        %v4316 = vld [vmem:[%s5 + $0x438] sm:$0xff]
        %v4317 = vld [vmem:[%s5 + $0x440] sm:$0xff]
        %v4318 = vld [vmem:[%s5 + $0x448] sm:$0xff]
        %v4319 = vld [vmem:[%s5 + $0x450] sm:$0xff]
        %v4320 = vld [vmem:[%s5 + $0x458] sm:$0xff]
        %v4321 = vld [vmem:[%s5 + $0x460] sm:$0xff]
        %v4322 = vld [vmem:[%s5 + $0x468] sm:$0xff]
        %v4323 = vld [vmem:[%s5 + $0x470] sm:$0xff]
        %v4324 = vld [vmem:[%s5 + $0x478] sm:$0xff]
        %v4325 = vld [vmem:[%s6] sm:$0x1]
        %v4326 = vlaneseq
        %v4327 = vshrl.u32 %v4326, 7
        %v4328 = vsub.s32 0, %v4327
        %v4329 = vrot.slane %v4325, %v4328
        %4330 = vmatprep.subr.mxu0 0.0
        %4331 = vmatpush1.msra.mxu0 %v4181
        %4332 = vmatprep.subr.mxu0 0.0
        %4333 = vmatpush1.msra.mxu0 %v4182
        %4334 = vmatprep.subr.mxu0 0.0
        %4335 = vmatpush1.msra.mxu0 %v4183
        %4336 = vmatprep.subr.mxu0 0.0
        %4337 = vmatpush1.msra.mxu0 %v4184
        %4338 = vmatprep.subr.mxu0 0.0
        %4339 = vmatpush1.msra.mxu0 %v4185
        %4340 = vmatprep.subr.mxu0 0.0
        %4341 = vmatpush1.msra.mxu0 %v4186
        %4342 = vmatprep.subr.mxu0 0.0
        %4343 = vmatpush1.msra.mxu0 %v4187
        %4344 = vmatprep.subr.mxu0 0.0
        %4345 = vmatpush1.msra.mxu0 %v4188
        %4346 = vmatprep.subr.mxu0 0.0
        %4347 = vmatpush1.msra.mxu0 %v4189
        %4348 = vmatprep.subr.mxu0 0.0
        %4349 = vmatpush1.msra.mxu0 %v4190
        %4350 = vmatprep.subr.mxu0 0.0
        %4351 = vmatpush1.msra.mxu0 %v4191
        %4352 = vmatprep.subr.mxu0 0.0
        %4353 = vmatpush1.msra.mxu0 %v4192
        %4354 = vmatprep.subr.mxu0 0.0
        %4355 = vmatpush1.msra.mxu0 %v4193
        %4356 = vmatprep.subr.mxu0 0.0
        %4357 = vmatpush1.msra.mxu0 %v4194
        %4358 = vmatprep.subr.mxu0 0.0
        %4359 = vmatpush1.msra.mxu0 %v4195
        %4360 = vmatprep.subr.mxu0 0.0
        %4361 = vmatpush1.msra.mxu0 %v4196
        %4362 = vmatprep.subr.mxu0 0.0
        %4363 = vmatpush1.msra.mxu0 %v4197
        %4364 = vmatprep.subr.mxu0 0.0
        %4365 = vmatpush1.msra.mxu0 %v4198
        %4366 = vmatprep.subr.mxu0 0.0
        %4367 = vmatpush1.msra.mxu0 %v4199
        %4368 = vmatprep.subr.mxu0 0.0
        %4369 = vmatpush1.msra.mxu0 %v4200
        %4370 = vmatprep.subr.mxu0 0.0
        %4371 = vmatpush1.msra.mxu0 %v4201
        %4372 = vmatprep.subr.mxu0 0.0
        %4373 = vmatpush1.msra.mxu0 %v4202
        %4374 = vmatprep.subr.mxu0 0.0
        %4375 = vmatpush1.msra.mxu0 %v4203
        %4376 = vmatprep.subr.mxu0 0.0
        %4377 = vmatpush1.msra.mxu0 %v4204
        %4378 = vmatprep.subr.mxu0 0.0
        %4379 = vmatpush1.msra.mxu0 %v4205
        %4380 = vmatprep.subr.mxu0 0.0
        %4381 = vmatpush1.msra.mxu0 %v4206
        %4382 = vmatprep.subr.mxu0 0.0
        %4383 = vmatpush1.msra.mxu0 %v4207
        %4384 = vmatprep.subr.mxu0 0.0
        %4385 = vmatpush1.msra.mxu0 %v4208
        %4386 = vmatprep.subr.mxu0 0.0
        %4387 = vmatpush1.msra.mxu0 %v4209
        %4388 = vmatprep.subr.mxu0 0.0
        %4389 = vmatpush1.msra.mxu0 %v4210
        %4390 = vmatprep.subr.mxu0 0.0
        %4391 = vmatpush1.msra.mxu0 %v4211
        %4392 = vmatprep.subr.mxu0 0.0
        %4393 = vmatpush1.msra.mxu0 %v4212
        %4394 = vmatprep.mubr.f32.mxu0 %v4051
        %4395 = vmatmul.mubr.f32.gmra.mrb[0].mxu0 %v4034
        %v4396 = vpop.f32.mrb[0].mxu0
        %v4397 = vadd.f32 %v4329, %v4396
        %v4398 = vpop.f32.mrb[0].mxu0
        %4399 = vmatprep.mubr.f32.mxu0 %v4052
        %4400 = vmatmul.mubr.f32.gmra.mrb[0].mxu0 %v4035
        %v4401 = vpop.f32.mrb[0].mxu0
        %v4402 = vadd.f32 %v4329, %v4401
        %v4403 = vpop.f32.mrb[0].mxu0
        %4404 = vmatprep.mubr.f32.mxu0 %v4053
        %4405 = vmatmul.mubr.f32.gmra.mrb[0].mxu0 %v4036
        %v4406 = vpop.f32.mrb[0].mxu0
        %v4407 = vadd.f32 %v4329, %v4406
        %v4408 = vpop.f32.mrb[0].mxu0
        %4409 = vmatprep.mubr.f32.mxu0 %v4054
        %4410 = vmatmul.mubr.f32.gmra.mrb[0].mxu0 %v4037
        %v4411 = vpop.f32.mrb[0].mxu0
        %v4412 = vadd.f32 %v4329, %v4411
        %v4413 = vpop.f32.mrb[0].mxu0
        %4414 = vmatprep.mubr.f32.mxu0 %v4055
        %4415 = vmatmul.mubr.f32.gmra.mrb[0].mxu0 %v4038
        %v4416 = vpop.f32.mrb[0].mxu0
        %v4417 = vadd.f32 %v4329, %v4416
        %v4418 = vpop.f32.mrb[0].mxu0
        %4419 = vmatprep.mubr.f32.mxu0 %v4056
        %4420 = vmatmul.mubr.f32.gmra.mrb[0].mxu0 %v4039
        %v4421 = vpop.f32.mrb[0].mxu0
        %v4422 = vadd.f32 %v4329, %v4421
        %v4423 = vpop.f32.mrb[0].mxu0
        %4424 = vmatprep.mubr.f32.mxu0 %v4057
        %4425 = vmatmul.mubr.f32.gmra.mrb[0].mxu0 %v4040
        %v4426 = vpop.f32.mrb[0].mxu0
        %v4427 = vadd.f32 %v4329, %v4426
        %v4428 = vpop.f32.mrb[0].mxu0
        %4429 = vmatprep.mubr.f32.mxu0 %v4058
        %4430 = vmatmul.mubr.f32.gmra.mrb[0].mxu0 %v4041
        %v4431 = vpop.f32.mrb[0].mxu0
        %v4432 = vadd.f32 %v4329, %v4431
        %v4433 = vpop.f32.mrb[0].mxu0
        %4434 = vmatprep.mubr.f32.mxu0 %v4059
        %4435 = vmatmul.mubr.f32.gmra.mrb[0].mxu0 %v4043
        %v4436 = vpop.f32.mrb[0].mxu0
        %v4437 = vadd.f32 %v4329, %v4436
        %v4438 = vpop.f32.mrb[0].mxu0
        %4439 = vmatprep.mubr.f32.mxu0 %v4060
        %4440 = vmatmul.mubr.f32.gmra.mrb[0].mxu0 %v4044
        %v4441 = vpop.f32.mrb[0].mxu0
        %v4442 = vadd.f32 %v4329, %v4441
        %v4443 = vpop.f32.mrb[0].mxu0
        %4444 = vmatprep.mubr.f32.mxu0 %v4061
        %4445 = vmatmul.mubr.f32.gmra.mrb[0].mxu0 %v4045
        %v4446 = vpop.f32.mrb[0].mxu0
        %v4447 = vadd.f32 %v4329, %v4446
        %v4448 = vpop.f32.mrb[0].mxu0
        %4449 = vmatprep.mubr.f32.mxu0 %v4062
        %4450 = vmatmul.mubr.f32.gmra.mrb[0].mxu0 %v4046
        %v4451 = vpop.f32.mrb[0].mxu0
        %v4452 = vadd.f32 %v4329, %v4451
        %v4453 = vpop.f32.mrb[0].mxu0
        %4454 = vmatprep.mubr.f32.mxu0 %v4063
        %4455 = vmatmul.mubr.f32.gmra.mrb[0].mxu0 %v4047
        %v4456 = vpop.f32.mrb[0].mxu0
        %v4457 = vadd.f32 %v4329, %v4456
        %v4458 = vpop.f32.mrb[0].mxu0
        %4459 = vmatprep.mubr.f32.mxu0 %v4064
        %4460 = vmatmul.mubr.f32.gmra.mrb[0].mxu0 %v4048
        %v4461 = vpop.f32.mrb[0].mxu0
        %v4462 = vadd.f32 %v4329, %v4461
        %v4463 = vpop.f32.mrb[0].mxu0
        %4464 = vmatprep.mubr.f32.mxu0 %v4065
        %4465 = vmatmul.mubr.f32.gmra.mrb[0].mxu0 %v4049
        %v4466 = vpop.f32.mrb[0].mxu0
        %v4467 = vadd.f32 %v4329, %v4466
        %v4468 = vpop.f32.mrb[0].mxu0
        %4469 = vmatprep.mubr.f32.mxu0 %v4066
        %4470 = vmatmul.mubr.f32.gmra.mrb[0].mxu0 %v4050
        %v4471 = vpop.f32.mrb[0].mxu0
        %v4472 = vadd.f32 %v4329, %v4471
        %v4473 = vpop.f32.mrb[0].mxu0
        %4474 = vdwg.mxu0
        %4475 = vmatprep.subr.mxu0 0.0
        %4476 = vmatpush1.msra.mxu0 %v4213
        %4477 = vmatprep.subr.mxu0 0.0
        %4478 = vmatpush1.msra.mxu0 %v4214
        %4479 = vmatprep.subr.mxu0 0.0
        %4480 = vmatpush1.msra.mxu0 %v4215
        %4481 = vmatprep.subr.mxu0 0.0
        %4482 = vmatpush1.msra.mxu0 %v4216
        %4483 = vmatprep.subr.mxu0 0.0
        %4484 = vmatpush1.msra.mxu0 %v4217
        %4485 = vmatprep.subr.mxu0 0.0
        %4486 = vmatpush1.msra.mxu0 %v4218
        %4487 = vmatprep.subr.mxu0 0.0
        %4488 = vmatpush1.msra.mxu0 %v4219
        %4489 = vmatprep.subr.mxu0 0.0
        %4490 = vmatpush1.msra.mxu0 %v4220
        %4491 = vmatprep.subr.mxu0 0.0
        %4492 = vmatpush1.msra.mxu0 %v4221
        %4493 = vmatprep.subr.mxu0 0.0
        %4494 = vmatpush1.msra.mxu0 %v4222
        %4495 = vmatprep.subr.mxu0 0.0
        %4496 = vmatpush1.msra.mxu0 %v4223
        %4497 = vmatprep.subr.mxu0 0.0
        %4498 = vmatpush1.msra.mxu0 %v4224
        %4499 = vmatprep.subr.mxu0 0.0
        %4500 = vmatpush1.msra.mxu0 %v4225
        %4501 = vmatprep.subr.mxu0 0.0
        %4502 = vmatpush1.msra.mxu0 %v4226
        %4503 = vmatprep.subr.mxu0 0.0
        %4504 = vmatpush1.msra.mxu0 %v4227
        %4505 = vmatprep.subr.mxu0 0.0
        %4506 = vmatpush1.msra.mxu0 %v4228
        %4507 = vmatprep.subr.mxu0 0.0
        %4508 = vmatpush1.msra.mxu0 %v4229
        %4509 = vmatprep.subr.mxu0 0.0
        %4510 = vmatpush1.msra.mxu0 %v4230
        %4511 = vmatprep.subr.mxu0 0.0
        %4512 = vmatpush1.msra.mxu0 %v4231
        %4513 = vmatprep.subr.mxu0 0.0
        %4514 = vmatpush1.msra.mxu0 %v4232
        %4515 = vmatprep.subr.mxu0 0.0
        %4516 = vmatpush1.msra.mxu0 %v4233
        %4517 = vmatprep.subr.mxu0 0.0
        %4518 = vmatpush1.msra.mxu0 %v4234
        %4519 = vmatprep.subr.mxu0 0.0
        %4520 = vmatpush1.msra.mxu0 %v4235
        %4521 = vmatprep.subr.mxu0 0.0
        %4522 = vmatpush1.msra.mxu0 %v4236
        %4523 = vmatprep.subr.mxu0 0.0
        %4524 = vmatpush1.msra.mxu0 %v4237
        %4525 = vmatprep.subr.mxu0 0.0
        %4526 = vmatpush1.msra.mxu0 %v4238
        %4527 = vmatprep.subr.mxu0 0.0
        %4528 = vmatpush1.msra.mxu0 %v4239
        %4529 = vmatprep.subr.mxu0 0.0
        %4530 = vmatpush1.msra.mxu0 %v4240
        %4531 = vmatprep.subr.mxu0 0.0
        %4532 = vmatpush1.msra.mxu0 %v4241
        %4533 = vmatprep.subr.mxu0 0.0
        %4534 = vmatpush1.msra.mxu0 %v4242
        %4535 = vmatprep.subr.mxu0 0.0
        %4536 = vmatpush1.msra.mxu0 %v4243
        %4537 = vmatprep.subr.mxu0 0.0
        %4538 = vmatpush1.msra.mxu0 %v4244
        %4539 = vmatprep.mubr.f32.mxu0 %v4083
        %4540 = vmatmul.mubr.f32.gmra.mrb[0].mxu0 %v4067
        %v4541 = vpop.f32.mrb[0].mxu0
        %v4542 = vadd.f32 %v4397, %v4541
        %v4543 = vpop.f32.mrb[0].mxu0
        %4544 = vmatprep.mubr.f32.mxu0 %v4084
        %4545 = vmatmul.mubr.f32.gmra.mrb[0].mxu0 %v4068
        %v4546 = vpop.f32.mrb[0].mxu0
        %v4547 = vadd.f32 %v4402, %v4546
        %v4548 = vpop.f32.mrb[0].mxu0
        %4549 = vmatprep.mubr.f32.mxu0 %v4085
        %4550 = vmatmul.mubr.f32.gmra.mrb[0].mxu0 %v4069
        %v4551 = vpop.f32.mrb[0].mxu0
        %v4552 = vadd.f32 %v4407, %v4551
        %v4553 = vpop.f32.mrb[0].mxu0
        %4554 = vmatprep.mubr.f32.mxu0 %v4086
        %4555 = vmatmul.mubr.f32.gmra.mrb[0].mxu0 %v4070
        %v4556 = vpop.f32.mrb[0].mxu0
        %v4557 = vadd.f32 %v4412, %v4556
        %v4558 = vpop.f32.mrb[0].mxu0
        %4559 = vmatprep.mubr.f32.mxu0 %v4087
        %4560 = vmatmul.mubr.f32.gmra.mrb[0].mxu0 %v4071
        %v4561 = vpop.f32.mrb[0].mxu0
        %v4562 = vadd.f32 %v4417, %v4561
        %v4563 = vpop.f32.mrb[0].mxu0
        %4564 = vmatprep.mubr.f32.mxu0 %v4088
        %4565 = vmatmul.mubr.f32.gmra.mrb[0].mxu0 %v4072
        %v4566 = vpop.f32.mrb[0].mxu0
        %v4567 = vadd.f32 %v4422, %v4566
        %v4568 = vpop.f32.mrb[0].mxu0
        %4569 = vmatprep.mubr.f32.mxu0 %v4089
        %4570 = vmatmul.mubr.f32.gmra.mrb[0].mxu0 %v4073
        %v4571 = vpop.f32.mrb[0].mxu0
        %v4572 = vadd.f32 %v4427, %v4571
        %v4573 = vpop.f32.mrb[0].mxu0
        %4574 = vmatprep.mubr.f32.mxu0 %v4090
        %4575 = vmatmul.mubr.f32.gmra.mrb[0].mxu0 %v4074
        %v4576 = vpop.f32.mrb[0].mxu0
        %v4577 = vadd.f32 %v4432, %v4576
        %v4578 = vpop.f32.mrb[0].mxu0
        %4579 = vmatprep.mubr.f32.mxu0 %v4091
        %4580 = vmatmul.mubr.f32.gmra.mrb[0].mxu0 %v4075
        %v4581 = vpop.f32.mrb[0].mxu0
        %v4582 = vadd.f32 %v4437, %v4581
        %v4583 = vpop.f32.mrb[0].mxu0
        %4584 = vmatprep.mubr.f32.mxu0 %v4092
        %4585 = vmatmul.mubr.f32.gmra.mrb[0].mxu0 %v4076
        %v4586 = vpop.f32.mrb[0].mxu0
        %v4587 = vadd.f32 %v4442, %v4586
        %v4588 = vpop.f32.mrb[0].mxu0
        %4589 = vmatprep.mubr.f32.mxu0 %v4093
        %4590 = vmatmul.mubr.f32.gmra.mrb[0].mxu0 %v4077
        %v4591 = vpop.f32.mrb[0].mxu0
        %v4592 = vadd.f32 %v4447, %v4591
        %v4593 = vpop.f32.mrb[0].mxu0
        %4594 = vmatprep.mubr.f32.mxu0 %v4094
        %4595 = vmatmul.mubr.f32.gmra.mrb[0].mxu0 %v4078
        %v4596 = vpop.f32.mrb[0].mxu0
        %v4597 = vadd.f32 %v4452, %v4596
        %v4598 = vpop.f32.mrb[0].mxu0
        %4599 = vmatprep.mubr.f32.mxu0 %v4095
        %4600 = vmatmul.mubr.f32.gmra.mrb[0].mxu0 %v4079
        %v4601 = vpop.f32.mrb[0].mxu0
        %v4602 = vadd.f32 %v4457, %v4601
        %v4603 = vpop.f32.mrb[0].mxu0
        %4604 = vmatprep.mubr.f32.mxu0 %v4096
        %4605 = vmatmul.mubr.f32.gmra.mrb[0].mxu0 %v4080
        %v4606 = vpop.f32.mrb[0].mxu0
        %v4607 = vadd.f32 %v4462, %v4606
        %v4608 = vpop.f32.mrb[0].mxu0
        %4609 = vmatprep.mubr.f32.mxu0 %v4097
        %4610 = vmatmul.mubr.f32.gmra.mrb[0].mxu0 %v4081
        %v4611 = vpop.f32.mrb[0].mxu0
        %v4612 = vadd.f32 %v4467, %v4611
        %v4613 = vpop.f32.mrb[0].mxu0
        %4614 = vmatprep.mubr.f32.mxu0 %v4098
        %4615 = vmatmul.mubr.f32.gmra.mrb[0].mxu0 %v4082
        %v4616 = vpop.f32.mrb[0].mxu0
        %v4617 = vadd.f32 %v4472, %v4616
        %v4618 = vpop.f32.mrb[0].mxu0
        %4619 = vdwg.mxu0
        %4620 = vmatprep.subr.mxu0 0.0
        %4621 = vmatpush1.msra.mxu0 %v4245
        %4622 = vmatprep.subr.mxu0 0.0
        %4623 = vmatpush1.msra.mxu0 %v4246
        %4624 = vmatprep.subr.mxu0 0.0
        %4625 = vmatpush1.msra.mxu0 %v4247
        %4626 = vmatprep.subr.mxu0 0.0
        %4627 = vmatpush1.msra.mxu0 %v4248
        %4628 = vmatprep.subr.mxu0 0.0
        %4629 = vmatpush1.msra.mxu0 %v4249
        %4630 = vmatprep.subr.mxu0 0.0
        %4631 = vmatpush1.msra.mxu0 %v4250
        %4632 = vmatprep.subr.mxu0 0.0
        %4633 = vmatpush1.msra.mxu0 %v4251
        %4634 = vmatprep.subr.mxu0 0.0
        %4635 = vmatpush1.msra.mxu0 %v4252
        %4636 = vmatprep.subr.mxu0 0.0
        %4637 = vmatpush1.msra.mxu0 %v4253
        %4638 = vmatprep.subr.mxu0 0.0
        %4639 = vmatpush1.msra.mxu0 %v4254
        %4640 = vmatprep.subr.mxu0 0.0
        %4641 = vmatpush1.msra.mxu0 %v4255
        %4642 = vmatprep.subr.mxu0 0.0
        %4643 = vmatpush1.msra.mxu0 %v4256
        %4644 = vmatprep.subr.mxu0 0.0
        %4645 = vmatpush1.msra.mxu0 %v4257
        %4646 = vmatprep.subr.mxu0 0.0
        %4647 = vmatpush1.msra.mxu0 %v4258
        %4648 = vmatprep.subr.mxu0 0.0
        %4649 = vmatpush1.msra.mxu0 %v4259
        %4650 = vmatprep.subr.mxu0 0.0
        %4651 = vmatpush1.msra.mxu0 %v4260
        %4652 = vmatprep.subr.mxu0 0.0
        %4653 = vmatpush1.msra.mxu0 %v4261
        %4654 = vmatprep.subr.mxu0 0.0
        %4655 = vmatpush1.msra.mxu0 %v4262
        %4656 = vmatprep.subr.mxu0 0.0
        %4657 = vmatpush1.msra.mxu0 %v4263
        %4658 = vmatprep.subr.mxu0 0.0
        %4659 = vmatpush1.msra.mxu0 %v4264
        %4660 = vmatprep.subr.mxu0 0.0
        %4661 = vmatpush1.msra.mxu0 %v4265
        %4662 = vmatprep.subr.mxu0 0.0
        %4663 = vmatpush1.msra.mxu0 %v4266
        %4664 = vmatprep.subr.mxu0 0.0
        %4665 = vmatpush1.msra.mxu0 %v4267
        %4666 = vmatprep.subr.mxu0 0.0
        %4667 = vmatpush1.msra.mxu0 %v4268
        %4668 = vmatprep.subr.mxu0 0.0
        %4669 = vmatpush1.msra.mxu0 %v4269
        %4670 = vmatprep.subr.mxu0 0.0
        %4671 = vmatpush1.msra.mxu0 %v4270
        %4672 = vmatprep.subr.mxu0 0.0
        %4673 = vmatpush1.msra.mxu0 %v4271
        %4674 = vmatprep.subr.mxu0 0.0
        %4675 = vmatpush1.msra.mxu0 %v4272
        %4676 = vmatprep.subr.mxu0 0.0
        %4677 = vmatpush1.msra.mxu0 %v4273
        %4678 = vmatprep.subr.mxu0 0.0
        %4679 = vmatpush1.msra.mxu0 %v4274
        %4680 = vmatprep.subr.mxu0 0.0
        %4681 = vmatpush1.msra.mxu0 %v4275
        %4682 = vmatprep.subr.mxu0 0.0
        %4683 = vmatpush1.msra.mxu0 %v4276
        %4684 = vmatprep.mubr.f32.mxu0 %v4115
        %4685 = vmatmul.mubr.f32.gmra.mrb[0].mxu0 %v4099
        %v4686 = vpop.f32.mrb[0].mxu0
        %v4687 = vadd.f32 %v4542, %v4686
        %v4688 = vpop.f32.mrb[0].mxu0
        %4689 = vmatprep.mubr.f32.mxu0 %v4116
        %4690 = vmatmul.mubr.f32.gmra.mrb[0].mxu0 %v4100
        %v4691 = vpop.f32.mrb[0].mxu0
        %v4692 = vadd.f32 %v4547, %v4691
        %v4693 = vpop.f32.mrb[0].mxu0
        %4694 = vmatprep.mubr.f32.mxu0 %v4117
        %4695 = vmatmul.mubr.f32.gmra.mrb[0].mxu0 %v4101
        %v4696 = vpop.f32.mrb[0].mxu0
        %v4697 = vadd.f32 %v4552, %v4696
        %v4698 = vpop.f32.mrb[0].mxu0
        %4699 = vmatprep.mubr.f32.mxu0 %v4118
        %4700 = vmatmul.mubr.f32.gmra.mrb[0].mxu0 %v4102
        %v4701 = vpop.f32.mrb[0].mxu0
        %v4702 = vadd.f32 %v4557, %v4701
        %v4703 = vpop.f32.mrb[0].mxu0
        %4704 = vmatprep.mubr.f32.mxu0 %v4119
        %4705 = vmatmul.mubr.f32.gmra.mrb[0].mxu0 %v4103
        %v4706 = vpop.f32.mrb[0].mxu0
        %v4707 = vadd.f32 %v4562, %v4706
        %v4708 = vpop.f32.mrb[0].mxu0
        %4709 = vmatprep.mubr.f32.mxu0 %v4120
        %4710 = vmatmul.mubr.f32.gmra.mrb[0].mxu0 %v4104
        %v4711 = vpop.f32.mrb[0].mxu0
        %v4712 = vadd.f32 %v4567, %v4711
        %v4713 = vpop.f32.mrb[0].mxu0
        %4714 = vmatprep.mubr.f32.mxu0 %v4121
        %4715 = vmatmul.mubr.f32.gmra.mrb[0].mxu0 %v4105
        %v4716 = vpop.f32.mrb[0].mxu0
        %v4717 = vadd.f32 %v4572, %v4716
        %v4718 = vpop.f32.mrb[0].mxu0
        %4719 = vmatprep.mubr.f32.mxu0 %v4122
        %4720 = vmatmul.mubr.f32.gmra.mrb[0].mxu0 %v4106
        %v4721 = vpop.f32.mrb[0].mxu0
        %v4722 = vadd.f32 %v4577, %v4721
        %v4723 = vpop.f32.mrb[0].mxu0
        %4724 = vmatprep.mubr.f32.mxu0 %v4123
        %4725 = vmatmul.mubr.f32.gmra.mrb[0].mxu0 %v4107
        %v4726 = vpop.f32.mrb[0].mxu0
        %v4727 = vadd.f32 %v4582, %v4726
        %v4728 = vpop.f32.mrb[0].mxu0
        %4729 = vmatprep.mubr.f32.mxu0 %v4124
        %4730 = vmatmul.mubr.f32.gmra.mrb[0].mxu0 %v4108
        %v4731 = vpop.f32.mrb[0].mxu0
        %v4732 = vadd.f32 %v4587, %v4731
        %v4733 = vpop.f32.mrb[0].mxu0
        %4734 = vmatprep.mubr.f32.mxu0 %v4125
        %4735 = vmatmul.mubr.f32.gmra.mrb[0].mxu0 %v4109
        %v4736 = vpop.f32.mrb[0].mxu0
        %v4737 = vadd.f32 %v4592, %v4736
        %v4738 = vpop.f32.mrb[0].mxu0
        %4739 = vmatprep.mubr.f32.mxu0 %v4126
        %4740 = vmatmul.mubr.f32.gmra.mrb[0].mxu0 %v4110
        %v4741 = vpop.f32.mrb[0].mxu0
        %v4742 = vadd.f32 %v4597, %v4741
        %v4743 = vpop.f32.mrb[0].mxu0
        %4744 = vmatprep.mubr.f32.mxu0 %v4127
        %4745 = vmatmul.mubr.f32.gmra.mrb[0].mxu0 %v4111
        %v4746 = vpop.f32.mrb[0].mxu0
        %v4747 = vadd.f32 %v4602, %v4746
        %v4748 = vpop.f32.mrb[0].mxu0
        %4749 = vmatprep.mubr.f32.mxu0 %v4128
        %4750 = vmatmul.mubr.f32.gmra.mrb[0].mxu0 %v4112
        %v4751 = vpop.f32.mrb[0].mxu0
        %v4752 = vadd.f32 %v4607, %v4751
        %v4753 = vpop.f32.mrb[0].mxu0
        %4754 = vmatprep.mubr.f32.mxu0 %v4129
        %4755 = vmatmul.mubr.f32.gmra.mrb[0].mxu0 %v4113
        %v4756 = vpop.f32.mrb[0].mxu0
        %v4757 = vadd.f32 %v4612, %v4756
        %v4758 = vpop.f32.mrb[0].mxu0
        %4759 = vmatprep.mubr.f32.mxu0 %v4130
        %4760 = vmatmul.mubr.f32.gmra.mrb[0].mxu0 %v4114
        %v4761 = vpop.f32.mrb[0].mxu0
        %v4762 = vadd.f32 %v4617, %v4761
        %v4763 = vpop.f32.mrb[0].mxu0
        %4764 = vdwg.mxu0
        %4765 = vmatprep.subr.mxu0 0.0
        %4766 = vmatpush1.msra.mxu0 %v4277
        %4767 = vmatprep.subr.mxu0 0.0
        %4768 = vmatpush1.msra.mxu0 %v4278
        %4769 = vmatprep.subr.mxu0 0.0
        %4770 = vmatpush1.msra.mxu0 %v4279
        %4771 = vmatprep.subr.mxu0 0.0
        %4772 = vmatpush1.msra.mxu0 %v4280
        %4773 = vmatprep.subr.mxu0 0.0
        %4774 = vmatpush1.msra.mxu0 %v4281
        %4775 = vmatprep.subr.mxu0 0.0
        %4776 = vmatpush1.msra.mxu0 %v4282
        %4777 = vmatprep.subr.mxu0 0.0
        %4778 = vmatpush1.msra.mxu0 %v4283
        %4779 = vmatprep.subr.mxu0 0.0
        %4780 = vmatpush1.msra.mxu0 %v4284
        %4781 = vmatprep.subr.mxu0 0.0
        %4782 = vmatpush1.msra.mxu0 %v4285
        %4783 = vmatprep.subr.mxu0 0.0
        %4784 = vmatpush1.msra.mxu0 %v4286
        %4785 = vmatprep.subr.mxu0 0.0
        %4786 = vmatpush1.msra.mxu0 %v4287
        %4787 = vmatprep.subr.mxu0 0.0
        %4788 = vmatpush1.msra.mxu0 %v4288
        %4789 = vmatprep.subr.mxu0 0.0
        %4790 = vmatpush1.msra.mxu0 %v4289
        %4791 = vmatprep.subr.mxu0 0.0
        %4792 = vmatpush1.msra.mxu0 %v4290
        %4793 = vmatprep.subr.mxu0 0.0
        %4794 = vmatpush1.msra.mxu0 %v4291
        %4795 = vmatprep.subr.mxu0 0.0
        %4796 = vmatpush1.msra.mxu0 %v4292
        %4797 = vmatprep.subr.mxu0 0.0
        %4798 = vmatpush1.msra.mxu0 %v4293
        %4799 = vmatprep.subr.mxu0 0.0
        %4800 = vmatpush1.msra.mxu0 %v4294
        %4801 = vmatprep.subr.mxu0 0.0
        %4802 = vmatpush1.msra.mxu0 %v4295
        %4803 = vmatprep.subr.mxu0 0.0
        %4804 = vmatpush1.msra.mxu0 %v4296
        %4805 = vmatprep.subr.mxu0 0.0
        %4806 = vmatpush1.msra.mxu0 %v4297
        %4807 = vmatprep.subr.mxu0 0.0
        %4808 = vmatpush1.msra.mxu0 %v4298
        %4809 = vmatprep.subr.mxu0 0.0
        %4810 = vmatpush1.msra.mxu0 %v4299
        %4811 = vmatprep.subr.mxu0 0.0
        %4812 = vmatpush1.msra.mxu0 %v4300
        %4813 = vmatprep.subr.mxu0 0.0
        %4814 = vmatpush1.msra.mxu0 %v4301
        %4815 = vmatprep.subr.mxu0 0.0
        %4816 = vmatpush1.msra.mxu0 %v4302
        %4817 = vmatprep.subr.mxu0 0.0
        %4818 = vmatpush1.msra.mxu0 %v4303
        %4819 = vmatprep.subr.mxu0 0.0
        %4820 = vmatpush1.msra.mxu0 %v4304
        %4821 = vmatprep.subr.mxu0 0.0
        %4822 = vmatpush1.msra.mxu0 %v4305
        %4823 = vmatprep.subr.mxu0 0.0
        %4824 = vmatpush1.msra.mxu0 %v4306
        %4825 = vmatprep.subr.mxu0 0.0
        %4826 = vmatpush1.msra.mxu0 %v4307
        %4827 = vmatprep.subr.mxu0 0.0
        %4828 = vmatpush1.msra.mxu0 %v4308
        %4829 = vmatprep.mubr.f32.mxu0 %v4149
        %4830 = vmatmul.mubr.f32.gmra.mrb[0].mxu0 %v4132
        %v4831 = vpop.f32.mrb[0].mxu0
        %v4832 = vadd.f32 %v4687, %v4831
        %v4833 = vpop.f32.mrb[0].mxu0
        %4834 = vmatprep.mubr.f32.mxu0 %v4150
        %4835 = vmatmul.mubr.f32.gmra.mrb[0].mxu0 %v4133
        %v4836 = vpop.f32.mrb[0].mxu0
        %v4837 = vadd.f32 %v4692, %v4836
        %v4838 = vpop.f32.mrb[0].mxu0
        %4839 = vmatprep.mubr.f32.mxu0 %v4151
        %4840 = vmatmul.mubr.f32.gmra.mrb[0].mxu0 %v4134
        %v4841 = vpop.f32.mrb[0].mxu0
        %v4842 = vadd.f32 %v4697, %v4841
        %v4843 = vpop.f32.mrb[0].mxu0
        %4844 = vmatprep.mubr.f32.mxu0 %v4152
        %4845 = vmatmul.mubr.f32.gmra.mrb[0].mxu0 %v4135
        %v4846 = vpop.f32.mrb[0].mxu0
        %v4847 = vadd.f32 %v4702, %v4846
        %v4848 = vpop.f32.mrb[0].mxu0
        %4849 = vmatprep.mubr.f32.mxu0 %v4153
        %4850 = vmatmul.mubr.f32.gmra.mrb[0].mxu0 %v4136
        %v4851 = vpop.f32.mrb[0].mxu0
        %v4852 = vadd.f32 %v4707, %v4851
        %v4853 = vpop.f32.mrb[0].mxu0
        %4854 = vmatprep.mubr.f32.mxu0 %v4154
        %4855 = vmatmul.mubr.f32.gmra.mrb[0].mxu0 %v4137
        %v4856 = vpop.f32.mrb[0].mxu0
        %v4857 = vadd.f32 %v4712, %v4856
        %v4858 = vpop.f32.mrb[0].mxu0
        %4859 = vmatprep.mubr.f32.mxu0 %v4155
        %4860 = vmatmul.mubr.f32.gmra.mrb[0].mxu0 %v4138
        %v4861 = vpop.f32.mrb[0].mxu0
        %v4862 = vadd.f32 %v4717, %v4861
        %v4863 = vpop.f32.mrb[0].mxu0
        %4864 = vmatprep.mubr.f32.mxu0 %v4156
        %4865 = vmatmul.mubr.f32.gmra.mrb[0].mxu0 %v4139
        %v4866 = vpop.f32.mrb[0].mxu0
        %v4867 = vadd.f32 %v4722, %v4866
        %v4868 = vpop.f32.mrb[0].mxu0
        %4869 = vmatprep.mubr.f32.mxu0 %v4157
        %4870 = vmatmul.mubr.f32.gmra.mrb[0].mxu0 %v4141
        %v4871 = vpop.f32.mrb[0].mxu0
        %v4872 = vadd.f32 %v4727, %v4871
        %v4873 = vpop.f32.mrb[0].mxu0
        %4874 = vmatprep.mubr.f32.mxu0 %v4158
        %4875 = vmatmul.mubr.f32.gmra.mrb[0].mxu0 %v4142
        %v4876 = vpop.f32.mrb[0].mxu0
        %v4877 = vadd.f32 %v4732, %v4876
        %v4878 = vpop.f32.mrb[0].mxu0
        %4879 = vmatprep.mubr.f32.mxu0 %v4159
        %4880 = vmatmul.mubr.f32.gmra.mrb[0].mxu0 %v4143
        %v4881 = vpop.f32.mrb[0].mxu0
        %v4882 = vadd.f32 %v4737, %v4881
        %v4883 = vpop.f32.mrb[0].mxu0
        %4884 = vmatprep.mubr.f32.mxu0 %v4160
        %4885 = vmatmul.mubr.f32.gmra.mrb[0].mxu0 %v4144
        %v4886 = vpop.f32.mrb[0].mxu0
        %v4887 = vadd.f32 %v4742, %v4886
        %v4888 = vpop.f32.mrb[0].mxu0
        %4889 = vmatprep.mubr.f32.mxu0 %v4161
        %4890 = vmatmul.mubr.f32.gmra.mrb[0].mxu0 %v4145
        %v4891 = vpop.f32.mrb[0].mxu0
        %v4892 = vadd.f32 %v4747, %v4891
        %v4893 = vpop.f32.mrb[0].mxu0
        %4894 = vmatprep.mubr.f32.mxu0 %v4162
        %4895 = vmatmul.mubr.f32.gmra.mrb[0].mxu0 %v4146
        %v4896 = vpop.f32.mrb[0].mxu0
        %v4897 = vadd.f32 %v4752, %v4896
        %v4898 = vpop.f32.mrb[0].mxu0
        %4899 = vmatprep.mubr.f32.mxu0 %v4163
        %4900 = vmatmul.mubr.f32.gmra.mrb[0].mxu0 %v4147
        %v4901 = vpop.f32.mrb[0].mxu0
        %v4902 = vadd.f32 %v4757, %v4901
        %v4903 = vpop.f32.mrb[0].mxu0
        %4904 = vmatprep.mubr.f32.mxu0 %v4164
        %4905 = vmatmul.mubr.f32.gmra.mrb[0].mxu0 %v4148
        %v4906 = vpop.f32.mrb[0].mxu0
        %v4907 = vadd.f32 %v4762, %v4906
        %v4908 = vpop.f32.mrb[0].mxu0
        %4909 = vdwg.mxu0
        %4910 = vmatprep.subr.mxu0 0.0
        %4911 = vmatpush1.msra.mxu0 %v4309
        %4912 = vmatprep.subr.mxu0 0.0
        %4913 = vmatpush1.msra.mxu0 %v4310
        %4914 = vmatprep.subr.mxu0 0.0
        %4915 = vmatpush1.msra.mxu0 %v4311
        %4916 = vmatprep.subr.mxu0 0.0
        %4917 = vmatpush1.msra.mxu0 %v4312
        %4918 = vmatprep.subr.mxu0 0.0
        %4919 = vmatpush1.msra.mxu0 %v4313
        %4920 = vmatprep.subr.mxu0 0.0
        %4921 = vmatpush1.msra.mxu0 %v4314
        %4922 = vmatprep.subr.mxu0 0.0
        %4923 = vmatpush1.msra.mxu0 %v4315
        %4924 = vmatprep.subr.mxu0 0.0
        %4925 = vmatpush1.msra.mxu0 %v4316
        %4926 = vmatprep.subr.mxu0 0.0
        %4927 = vmatpush1.msra.mxu0 %v4317
        %4928 = vmatprep.subr.mxu0 0.0
        %4929 = vmatpush1.msra.mxu0 %v4318
        %4930 = vmatprep.subr.mxu0 0.0
        %4931 = vmatpush1.msra.mxu0 %v4319
        %4932 = vmatprep.subr.mxu0 0.0
        %4933 = vmatpush1.msra.mxu0 %v4320
        %4934 = vmatprep.subr.mxu0 0.0
        %4935 = vmatpush1.msra.mxu0 %v4321
        %4936 = vmatprep.subr.mxu0 0.0
        %4937 = vmatpush1.msra.mxu0 %v4322
        %4938 = vmatprep.subr.mxu0 0.0
        %4939 = vmatpush1.msra.mxu0 %v4323
        %4940 = vmatprep.subr.mxu0 0.0
        %4941 = vmatpush1.msra.mxu0 %v4324
        %4942 = vmatprep.subr.mxu0 0.0
        %4943 = vmatpush1.msra.mxu0 0.0
        %4944 = vmatprep.subr.mxu0 0.0
        %4945 = vmatpush1.msra.mxu0 0.0
        %4946 = vmatprep.subr.mxu0 0.0
        %4947 = vmatpush1.msra.mxu0 0.0
        %4948 = vmatprep.subr.mxu0 0.0
        %4949 = vmatpush1.msra.mxu0 0.0
        %4950 = vmatprep.subr.mxu0 0.0
        %4951 = vmatpush1.msra.mxu0 0.0
        %4952 = vmatprep.subr.mxu0 0.0
        %4953 = vmatpush1.msra.mxu0 0.0
        %4954 = vmatprep.subr.mxu0 0.0
        %4955 = vmatpush1.msra.mxu0 0.0
        %4956 = vmatprep.subr.mxu0 0.0
        %4957 = vmatpush1.msra.mxu0 0.0
        %4958 = vmatprep.subr.mxu0 0.0
        %4959 = vmatpush1.msra.mxu0 0.0
        %4960 = vmatprep.subr.mxu0 0.0
        %4961 = vmatpush1.msra.mxu0 0.0
        %4962 = vmatprep.subr.mxu0 0.0
        %4963 = vmatpush1.msra.mxu0 0.0
        %4964 = vmatprep.subr.mxu0 0.0
        %4965 = vmatpush1.msra.mxu0 0.0
        %4966 = vmatprep.subr.mxu0 0.0
        %4967 = vmatpush1.msra.mxu0 0.0
        %4968 = vmatprep.subr.mxu0 0.0
        %4969 = vmatpush1.msra.mxu0 0.0
        %4970 = vmatprep.subr.mxu0 0.0
        %4971 = vmatpush1.msra.mxu0 0.0
        %4972 = vmatprep.subr.mxu0 0.0
        %4973 = vmatpush1.msra.mxu0 0.0
        %4974 = vmatprep.mubr.f32.mxu0 0.0
        %4975 = vmatmul.mubr.f32.gmra.mrb[0].mxu0 %v4165
        %v4976 = vpop.f32.mrb[0].mxu0
        %v4977 = vadd.f32 %v4832, %v4976
        %v4978 = vpop.f32.mrb[0].mxu0
        %4979 = vmatprep.mubr.f32.mxu0 0.0
        %4980 = vmatmul.mubr.f32.gmra.mrb[0].mxu0 %v4166
        %v4981 = vpop.f32.mrb[0].mxu0
        %v4982 = vadd.f32 %v4837, %v4981
        %v4983 = vpop.f32.mrb[0].mxu0
        %4984 = vmatprep.mubr.f32.mxu0 0.0
        %4985 = vmatmul.mubr.f32.gmra.mrb[0].mxu0 %v4167
        %v4986 = vpop.f32.mrb[0].mxu0
        %v4987 = vadd.f32 %v4842, %v4986
        %v4988 = vpop.f32.mrb[0].mxu0
        %4989 = vmatprep.mubr.f32.mxu0 0.0
        %4990 = vmatmul.mubr.f32.gmra.mrb[0].mxu0 %v4168
        %v4991 = vpop.f32.mrb[0].mxu0
        %v4992 = vadd.f32 %v4847, %v4991
        %v4993 = vpop.f32.mrb[0].mxu0
        %4994 = vmatprep.mubr.f32.mxu0 0.0
        %4995 = vmatmul.mubr.f32.gmra.mrb[0].mxu0 %v4169
        %v4996 = vpop.f32.mrb[0].mxu0
        %v4997 = vadd.f32 %v4852, %v4996
        %v4998 = vpop.f32.mrb[0].mxu0
        %4999 = vmatprep.mubr.f32.mxu0 0.0
        %5000 = vmatmul.mubr.f32.gmra.mrb[0].mxu0 %v4170
        %v5001 = vpop.f32.mrb[0].mxu0
        %v5002 = vadd.f32 %v4857, %v5001
        %v5003 = vpop.f32.mrb[0].mxu0
        %5004 = vmatprep.mubr.f32.mxu0 0.0
        %5005 = vmatmul.mubr.f32.gmra.mrb[0].mxu0 %v4171
        %v5006 = vpop.f32.mrb[0].mxu0
        %v5007 = vadd.f32 %v4862, %v5006
        %v5008 = vpop.f32.mrb[0].mxu0
        %5009 = vmatprep.mubr.f32.mxu0 0.0
        %5010 = vmatmul.mubr.f32.gmra.mrb[0].mxu0 %v4172
        %v5011 = vpop.f32.mrb[0].mxu0
        %v5012 = vadd.f32 %v4867, %v5011
        %v5013 = vpop.f32.mrb[0].mxu0
        %5014 = vmatprep.mubr.f32.mxu0 0.0
        %5015 = vmatmul.mubr.f32.gmra.mrb[0].mxu0 %v4173
        %v5016 = vpop.f32.mrb[0].mxu0
        %v5017 = vadd.f32 %v4872, %v5016
        %v5018 = vpop.f32.mrb[0].mxu0
        %5019 = vmatprep.mubr.f32.mxu0 0.0
        %5020 = vmatmul.mubr.f32.gmra.mrb[0].mxu0 %v4174
        %v5021 = vpop.f32.mrb[0].mxu0
        %v5022 = vadd.f32 %v4877, %v5021
        %v5023 = vpop.f32.mrb[0].mxu0
        %5024 = vmatprep.mubr.f32.mxu0 0.0
        %5025 = vmatmul.mubr.f32.gmra.mrb[0].mxu0 %v4175
        %v5026 = vpop.f32.mrb[0].mxu0
        %v5027 = vadd.f32 %v4882, %v5026
        %v5028 = vpop.f32.mrb[0].mxu0
        %5029 = vmatprep.mubr.f32.mxu0 0.0
        %5030 = vmatmul.mubr.f32.gmra.mrb[0].mxu0 %v4176
        %v5031 = vpop.f32.mrb[0].mxu0
        %v5032 = vadd.f32 %v4887, %v5031
        %v5033 = vpop.f32.mrb[0].mxu0
        %5034 = vmatprep.mubr.f32.mxu0 0.0
        %5035 = vmatmul.mubr.f32.gmra.mrb[0].mxu0 %v4177
        %v5036 = vpop.f32.mrb[0].mxu0
        %v5037 = vadd.f32 %v4892, %v5036
        %v5038 = vpop.f32.mrb[0].mxu0
        %5039 = vmatprep.mubr.f32.mxu0 0.0
        %5040 = vmatmul.mubr.f32.gmra.mrb[0].mxu0 %v4178
        %v5041 = vpop.f32.mrb[0].mxu0
        %v5042 = vadd.f32 %v4897, %v5041
        %v5043 = vpop.f32.mrb[0].mxu0
        %5044 = vmatprep.mubr.f32.mxu0 0.0
        %5045 = vmatmul.mubr.f32.gmra.mrb[0].mxu0 %v4179
        %v5046 = vpop.f32.mrb[0].mxu0
        %v5047 = vadd.f32 %v4902, %v5046
        %v5048 = vpop.f32.mrb[0].mxu0
        %5049 = vmatprep.mubr.f32.mxu0 0.0
        %5050 = vmatmul.mubr.f32.gmra.mrb[0].mxu0 %v4180
        %v5051 = vpop.f32.mrb[0].mxu0
        %v5052 = vadd.f32 %v4907, %v5051
        %v5053 = vpop.f32.mrb[0].mxu0
        %5054 = vdwg.mxu0
        %v5055 = vmax.f32 %v4977, 0.0
        %v5056 = vmax.f32 %v4982, 0.0
        %v5057 = vmax.f32 %v4987, 0.0
        %v5058 = vmax.f32 %v4992, 0.0
        %v5059 = vmax.f32 %v4997, 0.0
        %v5060 = vmax.f32 %v5002, 0.0
        %v5061 = vmax.f32 %v5007, 0.0
        %v5062 = vmax.f32 %v5012, 0.0
        %v5063 = vmax.f32 %v5017, 0.0
        %v5064 = vmax.f32 %v5022, 0.0
        %v5065 = vmax.f32 %v5027, 0.0
        %v5066 = vmax.f32 %v5032, 0.0
        %v5067 = vmax.f32 %v5037, 0.0
        %v5068 = vmax.f32 %v5042, 0.0
        %v5069 = vmax.f32 %v5047, 0.0
        %v5070 = vmax.f32 %v5052, 0.0
        %v5071 = vld [vmem:[%s6 + $0x1] sm:$0x1]
        %v5072 = vld [vmem:[%s6 + $0x2] sm:$0x1]
        %v5073 = vadd.f32 %v5055, %v5056
        %v5074 = vadd.f32 %v5073, %v5057
        %v5075 = vadd.f32 %v5074, %v5058
        %v5076 = vadd.f32 %v5075, %v5059
        %v5077 = vadd.f32 %v5076, %v5060
        %v5078 = vadd.f32 %v5077, %v5061
        %v5079 = vadd.f32 %v5078, %v5062
        %v5080 = vrot.slane %v5079, 4
        %v5081 = vadd.f32 %v5079, %v5080
        %v5082 = vrot.slane %v5081, 2
        %v5083 = vadd.f32 %v5081, %v5082
        %v5084 = vrot.slane %v5083, 1
        %v5085 = vadd.f32 %v5083, %v5084
        %v5086 = vadd.f32 %v5063, %v5064
        %v5087 = vadd.f32 %v5086, %v5065
        %v5088 = vadd.f32 %v5087, %v5066
        %v5089 = vadd.f32 %v5088, %v5067
        %v5090 = vadd.f32 %v5089, %v5068
        %v5091 = vadd.f32 %v5090, %v5069
        %v5092 = vadd.f32 %v5091, %v5070
        %v5093 = vrot.slane %v5092, 4
        %v5094 = vadd.f32 %v5092, %v5093
        %v5095 = vrot.slane %v5094, 2
        %v5096 = vadd.f32 %v5094, %v5095
        %v5097 = vrot.slane %v5096, 1
        %v5098 = vadd.f32 %v5096, %v5097
        %v5099 = vmul.f32 %v5055, %v5055
        %v5100 = vmul.f32 %v5056, %v5056
        %v5101 = vmul.f32 %v5057, %v5057
        %v5102 = vmul.f32 %v5058, %v5058
        %v5103 = vmul.f32 %v5059, %v5059
        %v5104 = vmul.f32 %v5060, %v5060
        %v5105 = vmul.f32 %v5061, %v5061
        %v5106 = vmul.f32 %v5062, %v5062
        %v5107 = vmul.f32 %v5063, %v5063
        %v5108 = vmul.f32 %v5064, %v5064
        %v5109 = vmul.f32 %v5065, %v5065
        %v5110 = vmul.f32 %v5066, %v5066
        %v5111 = vmul.f32 %v5067, %v5067
        %v5112 = vmul.f32 %v5068, %v5068
        %v5113 = vmul.f32 %v5069, %v5069
        %v5114 = vmul.f32 %v5070, %v5070
        %v5115 = vadd.f32 %v5099, %v5100
        %v5116 = vadd.f32 %v5115, %v5101
        %v5117 = vadd.f32 %v5116, %v5102
        %v5118 = vadd.f32 %v5117, %v5103
        %v5119 = vadd.f32 %v5118, %v5104
        %v5120 = vadd.f32 %v5119, %v5105
        %v5121 = vadd.f32 %v5120, %v5106
        %v5122 = vrot.slane %v5121, 4
        %v5123 = vadd.f32 %v5121, %v5122
        %v5124 = vrot.slane %v5123, 2
        %v5125 = vadd.f32 %v5123, %v5124
        %v5126 = vrot.slane %v5125, 1
        %v5127 = vadd.f32 %v5125, %v5126
        %v5128 = vadd.f32 %v5107, %v5108
        %v5129 = vadd.f32 %v5128, %v5109
        %v5130 = vadd.f32 %v5129, %v5110
        %v5131 = vadd.f32 %v5130, %v5111
        %v5132 = vadd.f32 %v5131, %v5112
        %v5133 = vadd.f32 %v5132, %v5113
        %v5134 = vadd.f32 %v5133, %v5114
        %v5135 = vrot.slane %v5134, 4
        %v5136 = vadd.f32 %v5134, %v5135
        %v5137 = vrot.slane %v5136, 2
        %v5138 = vadd.f32 %v5136, %v5137
        %v5139 = vrot.slane %v5138, 1
        %v5140 = vadd.f32 %v5138, %v5139
        %v5143 = vsel %vm1759, %v5098, %v5085
        %5145 = vmatprep.subr.mxu0 0.0
        %5146 = vmatpush1.msra.mxu0 %v679
        %5147 = vmatprep.subr.mxu0 0.0
        %5148 = vmatpush1.msra.mxu0 %v680
        %5149 = vmatprep.subr.mxu0 0.0
        %5150 = vmatpush1.msra.mxu0 %v681
        %5151 = vmatprep.subr.mxu0 0.0
        %5152 = vmatpush1.msra.mxu0 %v682
        %5153 = vmatprep.subr.mxu0 0.0
        %5154 = vmatpush1.msra.mxu0 %v683
        %5155 = vmatprep.subr.mxu0 0.0
        %5156 = vmatpush1.msra.mxu0 %v684
        %5157 = vmatprep.subr.mxu0 0.0
        %5158 = vmatpush1.msra.mxu0 %v685
        %5159 = vmatprep.subr.mxu0 0.0
        %5160 = vmatpush1.msra.mxu0 %v686
        %5161 = vmatprep.subr.mxu0 0.0
        %5162 = vmatpush1.msra.mxu0 %v687
        %5163 = vmatprep.subr.mxu0 0.0
        %5164 = vmatpush1.msra.mxu0 %v688
        %5165 = vmatprep.subr.mxu0 0.0
        %5166 = vmatpush1.msra.mxu0 %v689
        %5167 = vmatprep.subr.mxu0 0.0
        %5168 = vmatpush1.msra.mxu0 %v690
        %5169 = vmatprep.subr.mxu0 0.0
        %5170 = vmatpush1.msra.mxu0 %v691
        %5171 = vmatprep.subr.mxu0 0.0
        %5172 = vmatpush1.msra.mxu0 %v692
        %5173 = vmatprep.subr.mxu0 0.0
        %5174 = vmatpush1.msra.mxu0 %v693
        %5175 = vmatprep.subr.mxu0 0.0
        %5176 = vmatpush1.msra.mxu0 %v694
        %5177 = vmatprep.subr.mxu0 0.0
        %5178 = vmatpush1.msra.mxu0 0.0
        %5179 = vmatprep.subr.mxu0 0.0
        %5180 = vmatpush1.msra.mxu0 0.0
        %5181 = vmatprep.subr.mxu0 0.0
        %5182 = vmatpush1.msra.mxu0 0.0
        %5183 = vmatprep.subr.mxu0 0.0
        %5184 = vmatpush1.msra.mxu0 0.0
        %5185 = vmatprep.subr.mxu0 0.0
        %5186 = vmatpush1.msra.mxu0 0.0
        %5187 = vmatprep.subr.mxu0 0.0
        %5188 = vmatpush1.msra.mxu0 0.0
        %5189 = vmatprep.subr.mxu0 0.0
        %5190 = vmatpush1.msra.mxu0 0.0
        %5191 = vmatprep.subr.mxu0 0.0
        %5192 = vmatpush1.msra.mxu0 0.0
        %5193 = vmatprep.subr.mxu0 0.0
        %5194 = vmatpush1.msra.mxu0 0.0
        %5195 = vmatprep.subr.mxu0 0.0
        %5196 = vmatpush1.msra.mxu0 0.0
        %5197 = vmatprep.subr.mxu0 0.0
        %5198 = vmatpush1.msra.mxu0 0.0
        %5199 = vmatprep.subr.mxu0 0.0
        %5200 = vmatpush1.msra.mxu0 0.0
        %5201 = vmatprep.subr.mxu0 0.0
        %5202 = vmatpush1.msra.mxu0 0.0
        %5203 = vmatprep.subr.mxu0 0.0
        %5204 = vmatpush1.msra.mxu0 0.0
        %5205 = vmatprep.subr.mxu0 0.0
        %5206 = vmatpush1.msra.mxu0 0.0
        %5207 = vmatprep.subr.mxu0 0.0
        %5208 = vmatpush1.msra.mxu0 0.0
        %5209 = vmatprep.mubr.f32.mxu0 0.0
        %5210 = vmatmul.mubr.f32.gmra.mrb[0].mxu0 %v5143
        %v5211 = vpop.f32.mrb[0].mxu0
        %v5212 = vadd.f32 0.0, %v5211
        %v5213 = vpop.f32.mrb[0].mxu0
        %5214 = vdwg.mxu0
        %v5215 = vmul.f32 %v5212, %v3651
        %v5218 = vsel %vm1759, %v5140, %v5127
        %5220 = vmatprep.subr.mxu0 0.0
        %5221 = vmatpush1.msra.mxu0 %v679
        %5222 = vmatprep.subr.mxu0 0.0
        %5223 = vmatpush1.msra.mxu0 %v680
        %5224 = vmatprep.subr.mxu0 0.0
        %5225 = vmatpush1.msra.mxu0 %v681
        %5226 = vmatprep.subr.mxu0 0.0
        %5227 = vmatpush1.msra.mxu0 %v682
        %5228 = vmatprep.subr.mxu0 0.0
        %5229 = vmatpush1.msra.mxu0 %v683
        %5230 = vmatprep.subr.mxu0 0.0
        %5231 = vmatpush1.msra.mxu0 %v684
        %5232 = vmatprep.subr.mxu0 0.0
        %5233 = vmatpush1.msra.mxu0 %v685
        %5234 = vmatprep.subr.mxu0 0.0
        %5235 = vmatpush1.msra.mxu0 %v686
        %5236 = vmatprep.subr.mxu0 0.0
        %5237 = vmatpush1.msra.mxu0 %v687
        %5238 = vmatprep.subr.mxu0 0.0
        %5239 = vmatpush1.msra.mxu0 %v688
        %5240 = vmatprep.subr.mxu0 0.0
        %5241 = vmatpush1.msra.mxu0 %v689
        %5242 = vmatprep.subr.mxu0 0.0
        %5243 = vmatpush1.msra.mxu0 %v690
        %5244 = vmatprep.subr.mxu0 0.0
        %5245 = vmatpush1.msra.mxu0 %v691
        %5246 = vmatprep.subr.mxu0 0.0
        %5247 = vmatpush1.msra.mxu0 %v692
        %5248 = vmatprep.subr.mxu0 0.0
        %5249 = vmatpush1.msra.mxu0 %v693
        %5250 = vmatprep.subr.mxu0 0.0
        %5251 = vmatpush1.msra.mxu0 %v694
        %5252 = vmatprep.subr.mxu0 0.0
        %5253 = vmatpush1.msra.mxu0 0.0
        %5254 = vmatprep.subr.mxu0 0.0
        %5255 = vmatpush1.msra.mxu0 0.0
        %5256 = vmatprep.subr.mxu0 0.0
        %5257 = vmatpush1.msra.mxu0 0.0
        %5258 = vmatprep.subr.mxu0 0.0
        %5259 = vmatpush1.msra.mxu0 0.0
        %5260 = vmatprep.subr.mxu0 0.0
        %5261 = vmatpush1.msra.mxu0 0.0
        %5262 = vmatprep.subr.mxu0 0.0
        %5263 = vmatpush1.msra.mxu0 0.0
        %5264 = vmatprep.subr.mxu0 0.0
        %5265 = vmatpush1.msra.mxu0 0.0
        %5266 = vmatprep.subr.mxu0 0.0
        %5267 = vmatpush1.msra.mxu0 0.0
        %5268 = vmatprep.subr.mxu0 0.0
        %5269 = vmatpush1.msra.mxu0 0.0
        %5270 = vmatprep.subr.mxu0 0.0
        %5271 = vmatpush1.msra.mxu0 0.0
        %5272 = vmatprep.subr.mxu0 0.0
        %5273 = vmatpush1.msra.mxu0 0.0
        %5274 = vmatprep.subr.mxu0 0.0
        %5275 = vmatpush1.msra.mxu0 0.0
        %5276 = vmatprep.subr.mxu0 0.0
        %5277 = vmatpush1.msra.mxu0 0.0
        %5278 = vmatprep.subr.mxu0 0.0
        %5279 = vmatpush1.msra.mxu0 0.0
        %5280 = vmatprep.subr.mxu0 0.0
        %5281 = vmatpush1.msra.mxu0 0.0
        %5282 = vmatprep.subr.mxu0 0.0
        %5283 = vmatpush1.msra.mxu0 0.0
        %5284 = vmatprep.mubr.f32.mxu0 0.0
        %5285 = vmatmul.mubr.f32.gmra.mrb[0].mxu0 %v5218
        %v5286 = vpop.f32.mrb[0].mxu0
        %v5287 = vadd.f32 0.0, %v5286
        %v5288 = vpop.f32.mrb[0].mxu0
        %5289 = vdwg.mxu0
        %v5290 = vmul.f32 %v5287, %v3651
        %v5291 = vmul.f32 %v5215, %v5215
        %v5292 = vsub.f32 %v5290, %v5291
        %v5293 = vadd.f32 %v5292, 1e-05
        %v5294 = vrsqrt.pop %v5293
        %v5296 = vsel %vm1915, %v5215, 0
        %5298 = vmatprep.subr.mxu0 0.0
        %5299 = vmatpush1.msra.mxu0 %v695
        %5300 = vmatprep.subr.mxu0 0.0
        %5301 = vmatpush1.msra.mxu0 0.0
        %5302 = vmatprep.subr.mxu0 0.0
        %5303 = vmatpush1.msra.mxu0 0.0
        %5304 = vmatprep.subr.mxu0 0.0
        %5305 = vmatpush1.msra.mxu0 0.0
        %5306 = vmatprep.subr.mxu0 0.0
        %5307 = vmatpush1.msra.mxu0 0.0
        %5308 = vmatprep.subr.mxu0 0.0
        %5309 = vmatpush1.msra.mxu0 0.0
        %5310 = vmatprep.subr.mxu0 0.0
        %5311 = vmatpush1.msra.mxu0 0.0
        %5312 = vmatprep.subr.mxu0 0.0
        %5313 = vmatpush1.msra.mxu0 0.0
        %5314 = vmatprep.subr.mxu0 0.0
        %5315 = vmatpush1.msra.mxu0 0.0
        %5316 = vmatprep.subr.mxu0 0.0
        %5317 = vmatpush1.msra.mxu0 0.0
        %5318 = vmatprep.subr.mxu0 0.0
        %5319 = vmatpush1.msra.mxu0 0.0
        %5320 = vmatprep.subr.mxu0 0.0
        %5321 = vmatpush1.msra.mxu0 0.0
        %5322 = vmatprep.subr.mxu0 0.0
        %5323 = vmatpush1.msra.mxu0 0.0
        %5324 = vmatprep.subr.mxu0 0.0
        %5325 = vmatpush1.msra.mxu0 0.0
        %5326 = vmatprep.subr.mxu0 0.0
        %5327 = vmatpush1.msra.mxu0 0.0
        %5328 = vmatprep.subr.mxu0 0.0
        %5329 = vmatpush1.msra.mxu0 0.0
        %5330 = vmatprep.subr.mxu0 0.0
        %5331 = vmatpush1.msra.mxu0 0.0
        %5332 = vmatprep.subr.mxu0 0.0
        %5333 = vmatpush1.msra.mxu0 0.0
        %5334 = vmatprep.subr.mxu0 0.0
        %5335 = vmatpush1.msra.mxu0 0.0
        %5336 = vmatprep.subr.mxu0 0.0
        %5337 = vmatpush1.msra.mxu0 0.0
        %5338 = vmatprep.subr.mxu0 0.0
        %5339 = vmatpush1.msra.mxu0 0.0
        %5340 = vmatprep.subr.mxu0 0.0
        %5341 = vmatpush1.msra.mxu0 0.0
        %5342 = vmatprep.subr.mxu0 0.0
        %5343 = vmatpush1.msra.mxu0 0.0
        %5344 = vmatprep.subr.mxu0 0.0
        %5345 = vmatpush1.msra.mxu0 0.0
        %5346 = vmatprep.subr.mxu0 0.0
        %5347 = vmatpush1.msra.mxu0 0.0
        %5348 = vmatprep.subr.mxu0 0.0
        %5349 = vmatpush1.msra.mxu0 0.0
        %5350 = vmatprep.subr.mxu0 0.0
        %5351 = vmatpush1.msra.mxu0 0.0
        %5352 = vmatprep.subr.mxu0 0.0
        %5353 = vmatpush1.msra.mxu0 0.0
        %5354 = vmatprep.subr.mxu0 0.0
        %5355 = vmatpush1.msra.mxu0 0.0
        %5356 = vmatprep.subr.mxu0 0.0
        %5357 = vmatpush1.msra.mxu0 0.0
        %5358 = vmatprep.subr.mxu0 0.0
        %5359 = vmatpush1.msra.mxu0 0.0
        %5360 = vmatprep.subr.mxu0 0.0
        %5361 = vmatpush1.msra.mxu0 0.0
        %5362 = vmatprep.mubr.f32.mxu0 0.0
        %5363 = vmatmul.mubr.f32.gmra.mrb[0].mxu0 %v5296
        %v5364 = vpop.f32.mrb[0].mxu0
        %v5365 = vadd.f32 0.0, %v5364
        %v5366 = vpop.f32.mrb[0].mxu0
        %5367 = vdwg.mxu0
        %v5369 = vsel %vm1915, %v5294, 0
        %5371 = vmatprep.subr.mxu0 0.0
        %5372 = vmatpush1.msra.mxu0 %v695
        %5373 = vmatprep.subr.mxu0 0.0
        %5374 = vmatpush1.msra.mxu0 0.0
        %5375 = vmatprep.subr.mxu0 0.0
        %5376 = vmatpush1.msra.mxu0 0.0
        %5377 = vmatprep.subr.mxu0 0.0
        %5378 = vmatpush1.msra.mxu0 0.0
        %5379 = vmatprep.subr.mxu0 0.0
        %5380 = vmatpush1.msra.mxu0 0.0
        %5381 = vmatprep.subr.mxu0 0.0
        %5382 = vmatpush1.msra.mxu0 0.0
        %5383 = vmatprep.subr.mxu0 0.0
        %5384 = vmatpush1.msra.mxu0 0.0
        %5385 = vmatprep.subr.mxu0 0.0
        %5386 = vmatpush1.msra.mxu0 0.0
        %5387 = vmatprep.subr.mxu0 0.0
        %5388 = vmatpush1.msra.mxu0 0.0
        %5389 = vmatprep.subr.mxu0 0.0
        %5390 = vmatpush1.msra.mxu0 0.0
        %5391 = vmatprep.subr.mxu0 0.0
        %5392 = vmatpush1.msra.mxu0 0.0
        %5393 = vmatprep.subr.mxu0 0.0
        %5394 = vmatpush1.msra.mxu0 0.0
        %5395 = vmatprep.subr.mxu0 0.0
        %5396 = vmatpush1.msra.mxu0 0.0
        %5397 = vmatprep.subr.mxu0 0.0
        %5398 = vmatpush1.msra.mxu0 0.0
        %5399 = vmatprep.subr.mxu0 0.0
        %5400 = vmatpush1.msra.mxu0 0.0
        %5401 = vmatprep.subr.mxu0 0.0
        %5402 = vmatpush1.msra.mxu0 0.0
        %5403 = vmatprep.subr.mxu0 0.0
        %5404 = vmatpush1.msra.mxu0 0.0
        %5405 = vmatprep.subr.mxu0 0.0
        %5406 = vmatpush1.msra.mxu0 0.0
        %5407 = vmatprep.subr.mxu0 0.0
        %5408 = vmatpush1.msra.mxu0 0.0
        %5409 = vmatprep.subr.mxu0 0.0
        %5410 = vmatpush1.msra.mxu0 0.0
        %5411 = vmatprep.subr.mxu0 0.0
        %5412 = vmatpush1.msra.mxu0 0.0
        %5413 = vmatprep.subr.mxu0 0.0
        %5414 = vmatpush1.msra.mxu0 0.0
        %5415 = vmatprep.subr.mxu0 0.0
        %5416 = vmatpush1.msra.mxu0 0.0
        %5417 = vmatprep.subr.mxu0 0.0
        %5418 = vmatpush1.msra.mxu0 0.0
        %5419 = vmatprep.subr.mxu0 0.0
        %5420 = vmatpush1.msra.mxu0 0.0
        %5421 = vmatprep.subr.mxu0 0.0
        %5422 = vmatpush1.msra.mxu0 0.0
        %5423 = vmatprep.subr.mxu0 0.0
        %5424 = vmatpush1.msra.mxu0 0.0
        %5425 = vmatprep.subr.mxu0 0.0
        %5426 = vmatpush1.msra.mxu0 0.0
        %5427 = vmatprep.subr.mxu0 0.0
        %5428 = vmatpush1.msra.mxu0 0.0
        %5429 = vmatprep.subr.mxu0 0.0
        %5430 = vmatpush1.msra.mxu0 0.0
        %5431 = vmatprep.subr.mxu0 0.0
        %5432 = vmatpush1.msra.mxu0 0.0
        %5433 = vmatprep.subr.mxu0 0.0
        %5434 = vmatpush1.msra.mxu0 0.0
        %5435 = vmatprep.mubr.f32.mxu0 0.0
        %5436 = vmatmul.mubr.f32.gmra.mrb[0].mxu0 %v5369
        %v5437 = vpop.f32.mrb[0].mxu0
        %v5438 = vadd.f32 0.0, %v5437
        %v5439 = vpop.f32.mrb[0].mxu0
        %5440 = vdwg.mxu0
        %v5443 = vunpack.c.l.s4 1966171168
        %v5444 = vunpack.c.0.s8 %v5443
        %v5445 = vlaneseq
        %v5446 = vshrl.u32 %v5445, 7
        %v5447 = vsub.s32 %v5444, %v5446
        %v5448 = vrot.slane %v5365, %v5447
        %v5449 = vcombine.high %v5448, %v5448
        %v5451 = vunpack.c.l.s4 1966171168
        %v5452 = vunpack.c.0.s8 %v5451
        %v5453 = vlaneseq
        %v5454 = vshrl.u32 %v5453, 7
        %v5455 = vsub.s32 %v5452, %v5454
        %v5456 = vrot.slane %v5448, %v5455
        %v5458 = vunpack.c.l.s4 1966171168
        %v5459 = vunpack.c.0.s8 %v5458
        %v5460 = vlaneseq
        %v5461 = vshrl.u32 %v5460, 7
        %v5462 = vsub.s32 %v5459, %v5461
        %v5463 = vrot.slane %v5449, %v5462
        %v5464 = vlaneseq
        %v5465 = vshrl.u32 %v5464, 7
        %v5466 = vsub.s32 0, %v5465
        %v5467 = vrot.slane %v5456, %v5466
        %v5468 = vlaneseq
        %v5469 = vshrl.u32 %v5468, 7
        %v5470 = vsub.s32 0, %v5469
        %v5471 = vrot.slane %v5463, %v5470
        %v5474 = vsub.f32 %v5055, %v5467
        %v5475 = vsub.f32 %v5056, %v5467
        %v5476 = vsub.f32 %v5057, %v5467
        %v5477 = vsub.f32 %v5058, %v5467
        %v5478 = vsub.f32 %v5059, %v5467
        %v5479 = vsub.f32 %v5060, %v5467
        %v5480 = vsub.f32 %v5061, %v5467
        %v5481 = vsub.f32 %v5062, %v5467
        %v5482 = vsub.f32 %v5063, %v5471
        %v5483 = vsub.f32 %v5064, %v5471
        %v5484 = vsub.f32 %v5065, %v5471
        %v5485 = vsub.f32 %v5066, %v5471
        %v5486 = vsub.f32 %v5067, %v5471
        %v5487 = vsub.f32 %v5068, %v5471
        %v5488 = vsub.f32 %v5069, %v5471
        %v5489 = vsub.f32 %v5070, %v5471
        %v5492 = vunpack.c.l.s4 1966171168
        %v5493 = vunpack.c.0.s8 %v5492
        %v5494 = vlaneseq
        %v5495 = vshrl.u32 %v5494, 7
        %v5496 = vsub.s32 %v5493, %v5495
        %v5497 = vrot.slane %v5438, %v5496
        %v5498 = vcombine.high %v5497, %v5497
        %v5500 = vunpack.c.l.s4 1966171168
        %v5501 = vunpack.c.0.s8 %v5500
        %v5502 = vlaneseq
        %v5503 = vshrl.u32 %v5502, 7
        %v5504 = vsub.s32 %v5501, %v5503
        %v5505 = vrot.slane %v5497, %v5504
        %v5507 = vunpack.c.l.s4 1966171168
        %v5508 = vunpack.c.0.s8 %v5507
        %v5509 = vlaneseq
        %v5510 = vshrl.u32 %v5509, 7
        %v5511 = vsub.s32 %v5508, %v5510
        %v5512 = vrot.slane %v5498, %v5511
        %v5513 = vlaneseq
        %v5514 = vshrl.u32 %v5513, 7
        %v5515 = vsub.s32 0, %v5514
        %v5516 = vrot.slane %v5505, %v5515
        %v5517 = vlaneseq
        %v5518 = vshrl.u32 %v5517, 7
        %v5519 = vsub.s32 0, %v5518
        %v5520 = vrot.slane %v5512, %v5519
        %v5523 = vmul.f32 %v5474, %v5516
        %v5524 = vmul.f32 %v5475, %v5516
        %v5525 = vmul.f32 %v5476, %v5516
        %v5526 = vmul.f32 %v5477, %v5516
        %v5527 = vmul.f32 %v5478, %v5516
        %v5528 = vmul.f32 %v5479, %v5516
        %v5529 = vmul.f32 %v5480, %v5516
        %v5530 = vmul.f32 %v5481, %v5516
        %v5531 = vmul.f32 %v5482, %v5520
        %v5532 = vmul.f32 %v5483, %v5520
        %v5533 = vmul.f32 %v5484, %v5520
        %v5534 = vmul.f32 %v5485, %v5520
        %v5535 = vmul.f32 %v5486, %v5520
        %v5536 = vmul.f32 %v5487, %v5520
        %v5537 = vmul.f32 %v5488, %v5520
        %v5538 = vmul.f32 %v5489, %v5520
        %v5539 = vlaneseq
        %v5540 = vshrl.u32 %v5539, 7
        %v5541 = vsub.s32 0, %v5540
        %v5542 = vrot.slane %v5071, %v5541
        %v5543 = vmul.f32 %v5523, %v5542
        %v5544 = vmul.f32 %v5524, %v5542
        %v5545 = vmul.f32 %v5525, %v5542
        %v5546 = vmul.f32 %v5526, %v5542
        %v5547 = vmul.f32 %v5527, %v5542
        %v5548 = vmul.f32 %v5528, %v5542
        %v5549 = vmul.f32 %v5529, %v5542
        %v5550 = vmul.f32 %v5530, %v5542
        %v5551 = vmul.f32 %v5531, %v5542
        %v5552 = vmul.f32 %v5532, %v5542
        %v5553 = vmul.f32 %v5533, %v5542
        %v5554 = vmul.f32 %v5534, %v5542
        %v5555 = vmul.f32 %v5535, %v5542
        %v5556 = vmul.f32 %v5536, %v5542
        %v5557 = vmul.f32 %v5537, %v5542
        %v5558 = vmul.f32 %v5538, %v5542
        %v5559 = vlaneseq
        %v5560 = vshrl.u32 %v5559, 7
        %v5561 = vsub.s32 0, %v5560
        %v5562 = vrot.slane %v5072, %v5561
        %v5563 = vadd.f32 %v5543, %v5562
        %v5564 = vadd.f32 %v5544, %v5562
        %v5565 = vadd.f32 %v5545, %v5562
        %v5566 = vadd.f32 %v5546, %v5562
        %v5567 = vadd.f32 %v5547, %v5562
        %v5568 = vadd.f32 %v5548, %v5562
        %v5569 = vadd.f32 %v5549, %v5562
        %v5570 = vadd.f32 %v5550, %v5562
        %v5571 = vadd.f32 %v5551, %v5562
        %v5572 = vadd.f32 %v5552, %v5562
        %v5573 = vadd.f32 %v5553, %v5562
        %v5574 = vadd.f32 %v5554, %v5562
        %v5575 = vadd.f32 %v5555, %v5562
        %v5576 = vadd.f32 %v5556, %v5562
        %v5577 = vadd.f32 %v5557, %v5562
        %v5578 = vadd.f32 %v5558, %v5562
        %s5579 = scalar_lea.vmem [#allocation4], 16
        %5580 = vst [vmem:[%s5579 + $0x1] sm:$0xff] %v5563
        %5581 = vst [vmem:[%s5579 + $0x11] sm:$0xff] %v5564
        %5582 = vst [vmem:[%s5579 + $0x21] sm:$0xff] %v5565
        %5583 = vst [vmem:[%s5579 + $0x31] sm:$0xff] %v5566
        %5584 = vst [vmem:[%s5579 + $0x41] sm:$0xff] %v5567
        %5585 = vst [vmem:[%s5579 + $0x51] sm:$0xff] %v5568
        %5586 = vst [vmem:[%s5579 + $0x61] sm:$0xff] %v5569
        %5587 = vst [vmem:[%s5579 + $0x71] sm:$0xff] %v5570
        %s5588 = scalar_lea.vmem [#allocation4], 176
        %5589 = vst [vmem:[%s5588 + $0x1] sm:$0xff] %v5571
        %5590 = vst [vmem:[%s5588 + $0x11] sm:$0xff] %v5572
        %5591 = vst [vmem:[%s5588 + $0x21] sm:$0xff] %v5573
        %5592 = vst [vmem:[%s5588 + $0x31] sm:$0xff] %v5574
        %5593 = vst [vmem:[%s5588 + $0x41] sm:$0xff] %v5575
        %5594 = vst [vmem:[%s5588 + $0x51] sm:$0xff] %v5576
        %5595 = vst [vmem:[%s5588 + $0x61] sm:$0xff] %v5577
        %5596 = vst [vmem:[%s5588 + $0x71] sm:$0xff] %v5578
        %v5597 = vld [vmem:[#allocation4] sm:$0xff]
        %v5598 = vld [vmem:[#allocation4 + $0x10] sm:$0xff]
        %v5599 = vld [vmem:[#allocation4 + $0x20] sm:$0xff]
        %v5600 = vld [vmem:[#allocation4 + $0x30] sm:$0xff]
        %v5601 = vld [vmem:[#allocation4 + $0x40] sm:$0xff]
        %v5602 = vld [vmem:[#allocation4 + $0x50] sm:$0xff]
        %v5603 = vld [vmem:[#allocation4 + $0x60] sm:$0xff]
        %v5604 = vld [vmem:[#allocation4 + $0x70] sm:$0xff]
        %s5605 = scalar_lea.vmem [#allocation4], 160
        %v5606 = vld [vmem:[%s5605] sm:$0xff]
        %v5607 = vld [vmem:[%s5605 + $0x10] sm:$0xff]
        %v5608 = vld [vmem:[%s5605 + $0x20] sm:$0xff]
        %v5609 = vld [vmem:[%s5605 + $0x30] sm:$0xff]
        %v5610 = vld [vmem:[%s5605 + $0x40] sm:$0xff]
        %v5611 = vld [vmem:[%s5605 + $0x50] sm:$0xff]
        %v5612 = vld [vmem:[%s5605 + $0x60] sm:$0xff]
        %v5613 = vld [vmem:[%s5605 + $0x70] sm:$0xff]
        %v5614 = vld [vmem:[#allocation4 + $0x1] sm:$0xff]
        %v5615 = vld [vmem:[#allocation4 + $0x11] sm:$0xff]
        %v5616 = vld [vmem:[#allocation4 + $0x21] sm:$0xff]
        %v5617 = vld [vmem:[#allocation4 + $0x31] sm:$0xff]
        %v5618 = vld [vmem:[#allocation4 + $0x41] sm:$0xff]
        %v5619 = vld [vmem:[#allocation4 + $0x51] sm:$0xff]
        %v5620 = vld [vmem:[#allocation4 + $0x61] sm:$0xff]
        %v5621 = vld [vmem:[#allocation4 + $0x71] sm:$0xff]
        %v5622 = vld [vmem:[%s5605 + $0x1] sm:$0xff]
        %v5623 = vld [vmem:[%s5605 + $0x11] sm:$0xff]
        %v5624 = vld [vmem:[%s5605 + $0x21] sm:$0xff]
        %v5625 = vld [vmem:[%s5605 + $0x31] sm:$0xff]
        %v5626 = vld [vmem:[%s5605 + $0x41] sm:$0xff]
        %v5627 = vld [vmem:[%s5605 + $0x51] sm:$0xff]
        %v5628 = vld [vmem:[%s5605 + $0x61] sm:$0xff]
        %v5629 = vld [vmem:[%s5605 + $0x71] sm:$0xff]
        %v5630 = vld [vmem:[#allocation4 + $0x2] sm:$0xff]
        %v5631 = vld [vmem:[#allocation4 + $0x12] sm:$0xff]
        %v5632 = vld [vmem:[#allocation4 + $0x22] sm:$0xff]
        %v5633 = vld [vmem:[#allocation4 + $0x32] sm:$0xff]
        %v5634 = vld [vmem:[#allocation4 + $0x42] sm:$0xff]
        %v5635 = vld [vmem:[#allocation4 + $0x52] sm:$0xff]
        %v5636 = vld [vmem:[#allocation4 + $0x62] sm:$0xff]
        %v5637 = vld [vmem:[#allocation4 + $0x72] sm:$0xff]
        %v5638 = vld [vmem:[%s5605 + $0x2] sm:$0xff]
        %v5639 = vld [vmem:[%s5605 + $0x12] sm:$0xff]
        %v5640 = vld [vmem:[%s5605 + $0x22] sm:$0xff]
        %v5641 = vld [vmem:[%s5605 + $0x32] sm:$0xff]
        %v5642 = vld [vmem:[%s5605 + $0x42] sm:$0xff]
        %v5643 = vld [vmem:[%s5605 + $0x52] sm:$0xff]
        %v5644 = vld [vmem:[%s5605 + $0x62] sm:$0xff]
        %v5645 = vld [vmem:[%s5605 + $0x72] sm:$0xff]
        %v5646 = vld [vmem:[%s5579] sm:$0xff]
        %v5647 = vld [vmem:[%s5579 + $0x10] sm:$0xff]
        %v5648 = vld [vmem:[%s5579 + $0x20] sm:$0xff]
        %v5649 = vld [vmem:[%s5579 + $0x30] sm:$0xff]
        %v5650 = vld [vmem:[%s5579 + $0x40] sm:$0xff]
        %v5651 = vld [vmem:[%s5579 + $0x50] sm:$0xff]
        %v5652 = vld [vmem:[%s5579 + $0x60] sm:$0xff]
        %v5653 = vld [vmem:[%s5579 + $0x70] sm:$0xff]
        %v5654 = vld [vmem:[%s5588] sm:$0xff]
        %v5655 = vld [vmem:[%s5588 + $0x10] sm:$0xff]
        %v5656 = vld [vmem:[%s5588 + $0x20] sm:$0xff]
        %v5657 = vld [vmem:[%s5588 + $0x30] sm:$0xff]
        %v5658 = vld [vmem:[%s5588 + $0x40] sm:$0xff]
        %v5659 = vld [vmem:[%s5588 + $0x50] sm:$0xff]
        %v5660 = vld [vmem:[%s5588 + $0x60] sm:$0xff]
        %v5661 = vld [vmem:[%s5588 + $0x70] sm:$0xff]
        %v5662 = vld [vmem:[%s5579 + $0x1] sm:$0xff]
        %v5663 = vld [vmem:[%s5579 + $0x11] sm:$0xff]
        %v5664 = vld [vmem:[%s5579 + $0x21] sm:$0xff]
        %v5665 = vld [vmem:[%s5579 + $0x31] sm:$0xff]
        %v5666 = vld [vmem:[%s5579 + $0x41] sm:$0xff]
        %v5667 = vld [vmem:[%s5579 + $0x51] sm:$0xff]
        %v5668 = vld [vmem:[%s5579 + $0x61] sm:$0xff]
        %v5669 = vld [vmem:[%s5579 + $0x71] sm:$0xff]
        %v5670 = vld [vmem:[%s5588 + $0x1] sm:$0xff]
        %v5671 = vld [vmem:[%s5588 + $0x11] sm:$0xff]
        %v5672 = vld [vmem:[%s5588 + $0x21] sm:$0xff]
        %v5673 = vld [vmem:[%s5588 + $0x31] sm:$0xff]
        %v5674 = vld [vmem:[%s5588 + $0x41] sm:$0xff]
        %v5675 = vld [vmem:[%s5588 + $0x51] sm:$0xff]
        %v5676 = vld [vmem:[%s5588 + $0x61] sm:$0xff]
        %v5677 = vld [vmem:[%s5588 + $0x71] sm:$0xff]
        %v5678 = vld [vmem:[%s5579 + $0x2] sm:$0xff]
        %v5679 = vld [vmem:[%s5579 + $0x12] sm:$0xff]
        %v5680 = vld [vmem:[%s5579 + $0x22] sm:$0xff]
        %v5681 = vld [vmem:[%s5579 + $0x32] sm:$0xff]
        %v5682 = vld [vmem:[%s5579 + $0x42] sm:$0xff]
        %v5683 = vld [vmem:[%s5579 + $0x52] sm:$0xff]
        %v5684 = vld [vmem:[%s5579 + $0x62] sm:$0xff]
        %v5685 = vld [vmem:[%s5579 + $0x72] sm:$0xff]
        %v5686 = vld [vmem:[%s5588 + $0x2] sm:$0xff]
        %v5687 = vld [vmem:[%s5588 + $0x12] sm:$0xff]
        %v5688 = vld [vmem:[%s5588 + $0x22] sm:$0xff]
        %v5689 = vld [vmem:[%s5588 + $0x32] sm:$0xff]
        %v5690 = vld [vmem:[%s5588 + $0x42] sm:$0xff]
        %v5691 = vld [vmem:[%s5588 + $0x52] sm:$0xff]
        %v5692 = vld [vmem:[%s5588 + $0x62] sm:$0xff]
        %v5693 = vld [vmem:[%s5588 + $0x72] sm:$0xff]
        %s5694 = scalar_lea.vmem [#allocation4], 32
        %v5695 = vld [vmem:[%s5694] sm:$0xff]
        %v5696 = vld [vmem:[%s5694 + $0x10] sm:$0xff]
        %v5697 = vld [vmem:[%s5694 + $0x20] sm:$0xff]
        %v5698 = vld [vmem:[%s5694 + $0x30] sm:$0xff]
        %v5699 = vld [vmem:[%s5694 + $0x40] sm:$0xff]
        %v5700 = vld [vmem:[%s5694 + $0x50] sm:$0xff]
        %v5701 = vld [vmem:[%s5694 + $0x60] sm:$0xff]
        %v5702 = vld [vmem:[%s5694 + $0x70] sm:$0xff]
        %s5703 = scalar_lea.vmem [#allocation4], 192
        %v5704 = vld [vmem:[%s5703] sm:$0xff]
        %v5705 = vld [vmem:[%s5703 + $0x10] sm:$0xff]
        %v5706 = vld [vmem:[%s5703 + $0x20] sm:$0xff]
        %v5707 = vld [vmem:[%s5703 + $0x30] sm:$0xff]
        %v5708 = vld [vmem:[%s5703 + $0x40] sm:$0xff]
        %v5709 = vld [vmem:[%s5703 + $0x50] sm:$0xff]
        %v5710 = vld [vmem:[%s5703 + $0x60] sm:$0xff]
        %v5711 = vld [vmem:[%s5703 + $0x70] sm:$0xff]
        %v5712 = vld [vmem:[%s5694 + $0x1] sm:$0xff]
        %v5713 = vld [vmem:[%s5694 + $0x11] sm:$0xff]
        %v5714 = vld [vmem:[%s5694 + $0x21] sm:$0xff]
        %v5715 = vld [vmem:[%s5694 + $0x31] sm:$0xff]
        %v5716 = vld [vmem:[%s5694 + $0x41] sm:$0xff]
        %v5717 = vld [vmem:[%s5694 + $0x51] sm:$0xff]
        %v5718 = vld [vmem:[%s5694 + $0x61] sm:$0xff]
        %v5719 = vld [vmem:[%s5694 + $0x71] sm:$0xff]
        %v5720 = vld [vmem:[%s5703 + $0x1] sm:$0xff]
        %v5721 = vld [vmem:[%s5703 + $0x11] sm:$0xff]
        %v5722 = vld [vmem:[%s5703 + $0x21] sm:$0xff]
        %v5723 = vld [vmem:[%s5703 + $0x31] sm:$0xff]
        %v5724 = vld [vmem:[%s5703 + $0x41] sm:$0xff]
        %v5725 = vld [vmem:[%s5703 + $0x51] sm:$0xff]
        %v5726 = vld [vmem:[%s5703 + $0x61] sm:$0xff]
        %v5727 = vld [vmem:[%s5703 + $0x71] sm:$0xff]
        %v5728 = vld [vmem:[%s5694 + $0x2] sm:$0xff]
        %v5729 = vld [vmem:[%s5694 + $0x12] sm:$0xff]
        %v5730 = vld [vmem:[%s5694 + $0x22] sm:$0xff]
        %v5731 = vld [vmem:[%s5694 + $0x32] sm:$0xff]
        %v5732 = vld [vmem:[%s5694 + $0x42] sm:$0xff]
        %v5733 = vld [vmem:[%s5694 + $0x52] sm:$0xff]
        %v5734 = vld [vmem:[%s5694 + $0x62] sm:$0xff]
        %v5735 = vld [vmem:[%s5694 + $0x72] sm:$0xff]
        %v5736 = vld [vmem:[%s5703 + $0x2] sm:$0xff]
        %v5737 = vld [vmem:[%s5703 + $0x12] sm:$0xff]
        %v5738 = vld [vmem:[%s5703 + $0x22] sm:$0xff]
        %v5739 = vld [vmem:[%s5703 + $0x32] sm:$0xff]
        %v5740 = vld [vmem:[%s5703 + $0x42] sm:$0xff]
        %v5741 = vld [vmem:[%s5703 + $0x52] sm:$0xff]
        %v5742 = vld [vmem:[%s5703 + $0x62] sm:$0xff]
        %v5743 = vld [vmem:[%s5703 + $0x72] sm:$0xff]
        %v5744 = vld [vmem:[%s7] sm:$0xff]
        %v5745 = vld [vmem:[%s7 + $0x8] sm:$0xff]
        %v5746 = vld [vmem:[%s7 + $0x10] sm:$0xff]
        %v5747 = vld [vmem:[%s7 + $0x18] sm:$0xff]
        %v5748 = vld [vmem:[%s7 + $0x20] sm:$0xff]
        %v5749 = vld [vmem:[%s7 + $0x28] sm:$0xff]
        %v5750 = vld [vmem:[%s7 + $0x30] sm:$0xff]
        %v5751 = vld [vmem:[%s7 + $0x38] sm:$0xff]
        %v5752 = vld [vmem:[%s7 + $0x40] sm:$0xff]
        %v5753 = vld [vmem:[%s7 + $0x48] sm:$0xff]
        %v5754 = vld [vmem:[%s7 + $0x50] sm:$0xff]
        %v5755 = vld [vmem:[%s7 + $0x58] sm:$0xff]
        %v5756 = vld [vmem:[%s7 + $0x60] sm:$0xff]
        %v5757 = vld [vmem:[%s7 + $0x68] sm:$0xff]
        %v5758 = vld [vmem:[%s7 + $0x70] sm:$0xff]
        %v5759 = vld [vmem:[%s7 + $0x78] sm:$0xff]
        %v5760 = vld [vmem:[%s7 + $0x80] sm:$0xff]
        %v5761 = vld [vmem:[%s7 + $0x88] sm:$0xff]
        %v5762 = vld [vmem:[%s7 + $0x90] sm:$0xff]
        %v5763 = vld [vmem:[%s7 + $0x98] sm:$0xff]
        %v5764 = vld [vmem:[%s7 + $0xa0] sm:$0xff]
        %v5765 = vld [vmem:[%s7 + $0xa8] sm:$0xff]
        %v5766 = vld [vmem:[%s7 + $0xb0] sm:$0xff]
        %v5767 = vld [vmem:[%s7 + $0xb8] sm:$0xff]
        %v5768 = vld [vmem:[%s7 + $0xc0] sm:$0xff]
        %v5769 = vld [vmem:[%s7 + $0xc8] sm:$0xff]
        %v5770 = vld [vmem:[%s7 + $0xd0] sm:$0xff]
        %v5771 = vld [vmem:[%s7 + $0xd8] sm:$0xff]
        %v5772 = vld [vmem:[%s7 + $0xe0] sm:$0xff]
        %v5773 = vld [vmem:[%s7 + $0xe8] sm:$0xff]
        %v5774 = vld [vmem:[%s7 + $0xf0] sm:$0xff]
        %v5775 = vld [vmem:[%s7 + $0xf8] sm:$0xff]
        %v5776 = vld [vmem:[%s7 + $0x100] sm:$0xff]
        %v5777 = vld [vmem:[%s7 + $0x108] sm:$0xff]
        %v5778 = vld [vmem:[%s7 + $0x110] sm:$0xff]
        %v5779 = vld [vmem:[%s7 + $0x118] sm:$0xff]
        %v5780 = vld [vmem:[%s7 + $0x120] sm:$0xff]
        %v5781 = vld [vmem:[%s7 + $0x128] sm:$0xff]
        %v5782 = vld [vmem:[%s7 + $0x130] sm:$0xff]
        %v5783 = vld [vmem:[%s7 + $0x138] sm:$0xff]
        %v5784 = vld [vmem:[%s7 + $0x140] sm:$0xff]
        %v5785 = vld [vmem:[%s7 + $0x148] sm:$0xff]
        %v5786 = vld [vmem:[%s7 + $0x150] sm:$0xff]
        %v5787 = vld [vmem:[%s7 + $0x158] sm:$0xff]
        %v5788 = vld [vmem:[%s7 + $0x160] sm:$0xff]
        %v5789 = vld [vmem:[%s7 + $0x168] sm:$0xff]
        %v5790 = vld [vmem:[%s7 + $0x170] sm:$0xff]
        %v5791 = vld [vmem:[%s7 + $0x178] sm:$0xff]
        %v5792 = vld [vmem:[%s7 + $0x180] sm:$0xff]
        %v5793 = vld [vmem:[%s7 + $0x188] sm:$0xff]
        %v5794 = vld [vmem:[%s7 + $0x190] sm:$0xff]
        %v5795 = vld [vmem:[%s7 + $0x198] sm:$0xff]
        %v5796 = vld [vmem:[%s7 + $0x1a0] sm:$0xff]
        %v5797 = vld [vmem:[%s7 + $0x1a8] sm:$0xff]
        %v5798 = vld [vmem:[%s7 + $0x1b0] sm:$0xff]
        %v5799 = vld [vmem:[%s7 + $0x1b8] sm:$0xff]
        %v5800 = vld [vmem:[%s7 + $0x1c0] sm:$0xff]
        %v5801 = vld [vmem:[%s7 + $0x1c8] sm:$0xff]
        %v5802 = vld [vmem:[%s7 + $0x1d0] sm:$0xff]
        %v5803 = vld [vmem:[%s7 + $0x1d8] sm:$0xff]
        %v5804 = vld [vmem:[%s7 + $0x1e0] sm:$0xff]
        %v5805 = vld [vmem:[%s7 + $0x1e8] sm:$0xff]
        %v5806 = vld [vmem:[%s7 + $0x1f0] sm:$0xff]
        %v5807 = vld [vmem:[%s7 + $0x1f8] sm:$0xff]
        %v5808 = vld [vmem:[%s7 + $0x200] sm:$0xff]
        %v5809 = vld [vmem:[%s7 + $0x208] sm:$0xff]
        %v5810 = vld [vmem:[%s7 + $0x210] sm:$0xff]
        %v5811 = vld [vmem:[%s7 + $0x218] sm:$0xff]
        %v5812 = vld [vmem:[%s7 + $0x220] sm:$0xff]
        %v5813 = vld [vmem:[%s7 + $0x228] sm:$0xff]
        %v5814 = vld [vmem:[%s7 + $0x230] sm:$0xff]
        %v5815 = vld [vmem:[%s7 + $0x238] sm:$0xff]
        %v5816 = vld [vmem:[%s7 + $0x240] sm:$0xff]
        %v5817 = vld [vmem:[%s7 + $0x248] sm:$0xff]
        %v5818 = vld [vmem:[%s7 + $0x250] sm:$0xff]
        %v5819 = vld [vmem:[%s7 + $0x258] sm:$0xff]
        %v5820 = vld [vmem:[%s7 + $0x260] sm:$0xff]
        %v5821 = vld [vmem:[%s7 + $0x268] sm:$0xff]
        %v5822 = vld [vmem:[%s7 + $0x270] sm:$0xff]
        %v5823 = vld [vmem:[%s7 + $0x278] sm:$0xff]
        %v5824 = vld [vmem:[%s7 + $0x280] sm:$0xff]
        %v5825 = vld [vmem:[%s7 + $0x288] sm:$0xff]
        %v5826 = vld [vmem:[%s7 + $0x290] sm:$0xff]
        %v5827 = vld [vmem:[%s7 + $0x298] sm:$0xff]
        %v5828 = vld [vmem:[%s7 + $0x2a0] sm:$0xff]
        %v5829 = vld [vmem:[%s7 + $0x2a8] sm:$0xff]
        %v5830 = vld [vmem:[%s7 + $0x2b0] sm:$0xff]
        %v5831 = vld [vmem:[%s7 + $0x2b8] sm:$0xff]
        %v5832 = vld [vmem:[%s7 + $0x2c0] sm:$0xff]
        %v5833 = vld [vmem:[%s7 + $0x2c8] sm:$0xff]
        %v5834 = vld [vmem:[%s7 + $0x2d0] sm:$0xff]
        %v5835 = vld [vmem:[%s7 + $0x2d8] sm:$0xff]
        %v5836 = vld [vmem:[%s7 + $0x2e0] sm:$0xff]
        %v5837 = vld [vmem:[%s7 + $0x2e8] sm:$0xff]
        %v5838 = vld [vmem:[%s7 + $0x2f0] sm:$0xff]
        %v5839 = vld [vmem:[%s7 + $0x2f8] sm:$0xff]
        %v5840 = vld [vmem:[%s7 + $0x300] sm:$0xff]
        %v5841 = vld [vmem:[%s7 + $0x308] sm:$0xff]
        %v5842 = vld [vmem:[%s7 + $0x310] sm:$0xff]
        %v5843 = vld [vmem:[%s7 + $0x318] sm:$0xff]
        %v5844 = vld [vmem:[%s7 + $0x320] sm:$0xff]
        %v5845 = vld [vmem:[%s7 + $0x328] sm:$0xff]
        %v5846 = vld [vmem:[%s7 + $0x330] sm:$0xff]
        %v5847 = vld [vmem:[%s7 + $0x338] sm:$0xff]
        %v5848 = vld [vmem:[%s7 + $0x340] sm:$0xff]
        %v5849 = vld [vmem:[%s7 + $0x348] sm:$0xff]
        %v5850 = vld [vmem:[%s7 + $0x350] sm:$0xff]
        %v5851 = vld [vmem:[%s7 + $0x358] sm:$0xff]
        %v5852 = vld [vmem:[%s7 + $0x360] sm:$0xff]
        %v5853 = vld [vmem:[%s7 + $0x368] sm:$0xff]
        %v5854 = vld [vmem:[%s7 + $0x370] sm:$0xff]
        %v5855 = vld [vmem:[%s7 + $0x378] sm:$0xff]
        %v5856 = vld [vmem:[%s7 + $0x380] sm:$0xff]
        %v5857 = vld [vmem:[%s7 + $0x388] sm:$0xff]
        %v5858 = vld [vmem:[%s7 + $0x390] sm:$0xff]
        %v5859 = vld [vmem:[%s7 + $0x398] sm:$0xff]
        %v5860 = vld [vmem:[%s7 + $0x3a0] sm:$0xff]
        %v5861 = vld [vmem:[%s7 + $0x3a8] sm:$0xff]
        %v5862 = vld [vmem:[%s7 + $0x3b0] sm:$0xff]
        %v5863 = vld [vmem:[%s7 + $0x3b8] sm:$0xff]
        %v5864 = vld [vmem:[%s7 + $0x3c0] sm:$0xff]
        %v5865 = vld [vmem:[%s7 + $0x3c8] sm:$0xff]
        %v5866 = vld [vmem:[%s7 + $0x3d0] sm:$0xff]
        %v5867 = vld [vmem:[%s7 + $0x3d8] sm:$0xff]
        %v5868 = vld [vmem:[%s7 + $0x3e0] sm:$0xff]
        %v5869 = vld [vmem:[%s7 + $0x3e8] sm:$0xff]
        %v5870 = vld [vmem:[%s7 + $0x3f0] sm:$0xff]
        %v5871 = vld [vmem:[%s7 + $0x3f8] sm:$0xff]
        %v5872 = vld [vmem:[%s7 + $0x400] sm:$0xff]
        %v5873 = vld [vmem:[%s7 + $0x408] sm:$0xff]
        %v5874 = vld [vmem:[%s7 + $0x410] sm:$0xff]
        %v5875 = vld [vmem:[%s7 + $0x418] sm:$0xff]
        %v5876 = vld [vmem:[%s7 + $0x420] sm:$0xff]
        %v5877 = vld [vmem:[%s7 + $0x428] sm:$0xff]
        %v5878 = vld [vmem:[%s7 + $0x430] sm:$0xff]
        %v5879 = vld [vmem:[%s7 + $0x438] sm:$0xff]
        %v5880 = vld [vmem:[%s7 + $0x440] sm:$0xff]
        %v5881 = vld [vmem:[%s7 + $0x448] sm:$0xff]
        %v5882 = vld [vmem:[%s7 + $0x450] sm:$0xff]
        %v5883 = vld [vmem:[%s7 + $0x458] sm:$0xff]
        %v5884 = vld [vmem:[%s7 + $0x460] sm:$0xff]
        %v5885 = vld [vmem:[%s7 + $0x468] sm:$0xff]
        %v5886 = vld [vmem:[%s7 + $0x470] sm:$0xff]
        %v5887 = vld [vmem:[%s7 + $0x478] sm:$0xff]
        %v5888 = vld [vmem:[%s8] sm:$0x1]
        %v5889 = vlaneseq
        %v5890 = vshrl.u32 %v5889, 7
        %v5891 = vsub.s32 0, %v5890
        %v5892 = vrot.slane %v5888, %v5891
        %5893 = vmatprep.subr.mxu0 0.0
        %5894 = vmatpush1.msra.mxu0 %v5744
        %5895 = vmatprep.subr.mxu0 0.0
        %5896 = vmatpush1.msra.mxu0 %v5745
        %5897 = vmatprep.subr.mxu0 0.0
        %5898 = vmatpush1.msra.mxu0 %v5746
        %5899 = vmatprep.subr.mxu0 0.0
        %5900 = vmatpush1.msra.mxu0 %v5747
        %5901 = vmatprep.subr.mxu0 0.0
        %5902 = vmatpush1.msra.mxu0 %v5748
        %5903 = vmatprep.subr.mxu0 0.0
        %5904 = vmatpush1.msra.mxu0 %v5749
        %5905 = vmatprep.subr.mxu0 0.0
        %5906 = vmatpush1.msra.mxu0 %v5750
        %5907 = vmatprep.subr.mxu0 0.0
        %5908 = vmatpush1.msra.mxu0 %v5751
        %5909 = vmatprep.subr.mxu0 0.0
        %5910 = vmatpush1.msra.mxu0 %v5752
        %5911 = vmatprep.subr.mxu0 0.0
        %5912 = vmatpush1.msra.mxu0 %v5753
        %5913 = vmatprep.subr.mxu0 0.0
        %5914 = vmatpush1.msra.mxu0 %v5754
        %5915 = vmatprep.subr.mxu0 0.0
        %5916 = vmatpush1.msra.mxu0 %v5755
        %5917 = vmatprep.subr.mxu0 0.0
        %5918 = vmatpush1.msra.mxu0 %v5756
        %5919 = vmatprep.subr.mxu0 0.0
        %5920 = vmatpush1.msra.mxu0 %v5757
        %5921 = vmatprep.subr.mxu0 0.0
        %5922 = vmatpush1.msra.mxu0 %v5758
        %5923 = vmatprep.subr.mxu0 0.0
        %5924 = vmatpush1.msra.mxu0 %v5759
        %5925 = vmatprep.subr.mxu0 0.0
        %5926 = vmatpush1.msra.mxu0 %v5760
        %5927 = vmatprep.subr.mxu0 0.0
        %5928 = vmatpush1.msra.mxu0 %v5761
        %5929 = vmatprep.subr.mxu0 0.0
        %5930 = vmatpush1.msra.mxu0 %v5762
        %5931 = vmatprep.subr.mxu0 0.0
        %5932 = vmatpush1.msra.mxu0 %v5763
        %5933 = vmatprep.subr.mxu0 0.0
        %5934 = vmatpush1.msra.mxu0 %v5764
        %5935 = vmatprep.subr.mxu0 0.0
        %5936 = vmatpush1.msra.mxu0 %v5765
        %5937 = vmatprep.subr.mxu0 0.0
        %5938 = vmatpush1.msra.mxu0 %v5766
        %5939 = vmatprep.subr.mxu0 0.0
        %5940 = vmatpush1.msra.mxu0 %v5767
        %5941 = vmatprep.subr.mxu0 0.0
        %5942 = vmatpush1.msra.mxu0 %v5768
        %5943 = vmatprep.subr.mxu0 0.0
        %5944 = vmatpush1.msra.mxu0 %v5769
        %5945 = vmatprep.subr.mxu0 0.0
        %5946 = vmatpush1.msra.mxu0 %v5770
        %5947 = vmatprep.subr.mxu0 0.0
        %5948 = vmatpush1.msra.mxu0 %v5771
        %5949 = vmatprep.subr.mxu0 0.0
        %5950 = vmatpush1.msra.mxu0 %v5772
        %5951 = vmatprep.subr.mxu0 0.0
        %5952 = vmatpush1.msra.mxu0 %v5773
        %5953 = vmatprep.subr.mxu0 0.0
        %5954 = vmatpush1.msra.mxu0 %v5774
        %5955 = vmatprep.subr.mxu0 0.0
        %5956 = vmatpush1.msra.mxu0 %v5775
        %5957 = vmatprep.mubr.f32.mxu0 %v5614
        %5958 = vmatmul.mubr.f32.gmra.mrb[0].mxu0 %v5597
        %v5959 = vpop.f32.mrb[0].mxu0
        %v5960 = vadd.f32 %v5892, %v5959
        %v5961 = vpop.f32.mrb[0].mxu0
        %5962 = vmatprep.mubr.f32.mxu0 %v5615
        %5963 = vmatmul.mubr.f32.gmra.mrb[0].mxu0 %v5598
        %v5964 = vpop.f32.mrb[0].mxu0
        %v5965 = vadd.f32 %v5892, %v5964
        %v5966 = vpop.f32.mrb[0].mxu0
        %5967 = vmatprep.mubr.f32.mxu0 %v5616
        %5968 = vmatmul.mubr.f32.gmra.mrb[0].mxu0 %v5599
        %v5969 = vpop.f32.mrb[0].mxu0
        %v5970 = vadd.f32 %v5892, %v5969
        %v5971 = vpop.f32.mrb[0].mxu0
        %5972 = vmatprep.mubr.f32.mxu0 %v5617
        %5973 = vmatmul.mubr.f32.gmra.mrb[0].mxu0 %v5600
        %v5974 = vpop.f32.mrb[0].mxu0
        %v5975 = vadd.f32 %v5892, %v5974
        %v5976 = vpop.f32.mrb[0].mxu0
        %5977 = vmatprep.mubr.f32.mxu0 %v5618
        %5978 = vmatmul.mubr.f32.gmra.mrb[0].mxu0 %v5601
        %v5979 = vpop.f32.mrb[0].mxu0
        %v5980 = vadd.f32 %v5892, %v5979
        %v5981 = vpop.f32.mrb[0].mxu0
        %5982 = vmatprep.mubr.f32.mxu0 %v5619
        %5983 = vmatmul.mubr.f32.gmra.mrb[0].mxu0 %v5602
        %v5984 = vpop.f32.mrb[0].mxu0
        %v5985 = vadd.f32 %v5892, %v5984
        %v5986 = vpop.f32.mrb[0].mxu0
        %5987 = vmatprep.mubr.f32.mxu0 %v5620
        %5988 = vmatmul.mubr.f32.gmra.mrb[0].mxu0 %v5603
        %v5989 = vpop.f32.mrb[0].mxu0
        %v5990 = vadd.f32 %v5892, %v5989
        %v5991 = vpop.f32.mrb[0].mxu0
        %5992 = vmatprep.mubr.f32.mxu0 %v5621
        %5993 = vmatmul.mubr.f32.gmra.mrb[0].mxu0 %v5604
        %v5994 = vpop.f32.mrb[0].mxu0
        %v5995 = vadd.f32 %v5892, %v5994
        %v5996 = vpop.f32.mrb[0].mxu0
        %5997 = vmatprep.mubr.f32.mxu0 %v5622
        %5998 = vmatmul.mubr.f32.gmra.mrb[0].mxu0 %v5606
        %v5999 = vpop.f32.mrb[0].mxu0
        %v6000 = vadd.f32 %v5892, %v5999
        %v6001 = vpop.f32.mrb[0].mxu0
        %6002 = vmatprep.mubr.f32.mxu0 %v5623
        %6003 = vmatmul.mubr.f32.gmra.mrb[0].mxu0 %v5607
        %v6004 = vpop.f32.mrb[0].mxu0
        %v6005 = vadd.f32 %v5892, %v6004
        %v6006 = vpop.f32.mrb[0].mxu0
        %6007 = vmatprep.mubr.f32.mxu0 %v5624
        %6008 = vmatmul.mubr.f32.gmra.mrb[0].mxu0 %v5608
        %v6009 = vpop.f32.mrb[0].mxu0
        %v6010 = vadd.f32 %v5892, %v6009
        %v6011 = vpop.f32.mrb[0].mxu0
        %6012 = vmatprep.mubr.f32.mxu0 %v5625
        %6013 = vmatmul.mubr.f32.gmra.mrb[0].mxu0 %v5609
        %v6014 = vpop.f32.mrb[0].mxu0
        %v6015 = vadd.f32 %v5892, %v6014
        %v6016 = vpop.f32.mrb[0].mxu0
        %6017 = vmatprep.mubr.f32.mxu0 %v5626
        %6018 = vmatmul.mubr.f32.gmra.mrb[0].mxu0 %v5610
        %v6019 = vpop.f32.mrb[0].mxu0
        %v6020 = vadd.f32 %v5892, %v6019
        %v6021 = vpop.f32.mrb[0].mxu0
        %6022 = vmatprep.mubr.f32.mxu0 %v5627
        %6023 = vmatmul.mubr.f32.gmra.mrb[0].mxu0 %v5611
        %v6024 = vpop.f32.mrb[0].mxu0
        %v6025 = vadd.f32 %v5892, %v6024
        %v6026 = vpop.f32.mrb[0].mxu0
        %6027 = vmatprep.mubr.f32.mxu0 %v5628
        %6028 = vmatmul.mubr.f32.gmra.mrb[0].mxu0 %v5612
        %v6029 = vpop.f32.mrb[0].mxu0
        %v6030 = vadd.f32 %v5892, %v6029
        %v6031 = vpop.f32.mrb[0].mxu0
        %6032 = vmatprep.mubr.f32.mxu0 %v5629
        %6033 = vmatmul.mubr.f32.gmra.mrb[0].mxu0 %v5613
        %v6034 = vpop.f32.mrb[0].mxu0
        %v6035 = vadd.f32 %v5892, %v6034
        %v6036 = vpop.f32.mrb[0].mxu0
        %6037 = vdwg.mxu0
        %6038 = vmatprep.subr.mxu0 0.0
        %6039 = vmatpush1.msra.mxu0 %v5776
        %6040 = vmatprep.subr.mxu0 0.0
        %6041 = vmatpush1.msra.mxu0 %v5777
        %6042 = vmatprep.subr.mxu0 0.0
        %6043 = vmatpush1.msra.mxu0 %v5778
        %6044 = vmatprep.subr.mxu0 0.0
        %6045 = vmatpush1.msra.mxu0 %v5779
        %6046 = vmatprep.subr.mxu0 0.0
        %6047 = vmatpush1.msra.mxu0 %v5780
        %6048 = vmatprep.subr.mxu0 0.0
        %6049 = vmatpush1.msra.mxu0 %v5781
        %6050 = vmatprep.subr.mxu0 0.0
        %6051 = vmatpush1.msra.mxu0 %v5782
        %6052 = vmatprep.subr.mxu0 0.0
        %6053 = vmatpush1.msra.mxu0 %v5783
        %6054 = vmatprep.subr.mxu0 0.0
        %6055 = vmatpush1.msra.mxu0 %v5784
        %6056 = vmatprep.subr.mxu0 0.0
        %6057 = vmatpush1.msra.mxu0 %v5785
        %6058 = vmatprep.subr.mxu0 0.0
        %6059 = vmatpush1.msra.mxu0 %v5786
        %6060 = vmatprep.subr.mxu0 0.0
        %6061 = vmatpush1.msra.mxu0 %v5787
        %6062 = vmatprep.subr.mxu0 0.0
        %6063 = vmatpush1.msra.mxu0 %v5788
        %6064 = vmatprep.subr.mxu0 0.0
        %6065 = vmatpush1.msra.mxu0 %v5789
        %6066 = vmatprep.subr.mxu0 0.0
        %6067 = vmatpush1.msra.mxu0 %v5790
        %6068 = vmatprep.subr.mxu0 0.0
        %6069 = vmatpush1.msra.mxu0 %v5791
        %6070 = vmatprep.subr.mxu0 0.0
        %6071 = vmatpush1.msra.mxu0 %v5792
        %6072 = vmatprep.subr.mxu0 0.0
        %6073 = vmatpush1.msra.mxu0 %v5793
        %6074 = vmatprep.subr.mxu0 0.0
        %6075 = vmatpush1.msra.mxu0 %v5794
        %6076 = vmatprep.subr.mxu0 0.0
        %6077 = vmatpush1.msra.mxu0 %v5795
        %6078 = vmatprep.subr.mxu0 0.0
        %6079 = vmatpush1.msra.mxu0 %v5796
        %6080 = vmatprep.subr.mxu0 0.0
        %6081 = vmatpush1.msra.mxu0 %v5797
        %6082 = vmatprep.subr.mxu0 0.0
        %6083 = vmatpush1.msra.mxu0 %v5798
        %6084 = vmatprep.subr.mxu0 0.0
        %6085 = vmatpush1.msra.mxu0 %v5799
        %6086 = vmatprep.subr.mxu0 0.0
        %6087 = vmatpush1.msra.mxu0 %v5800
        %6088 = vmatprep.subr.mxu0 0.0
        %6089 = vmatpush1.msra.mxu0 %v5801
        %6090 = vmatprep.subr.mxu0 0.0
        %6091 = vmatpush1.msra.mxu0 %v5802
        %6092 = vmatprep.subr.mxu0 0.0
        %6093 = vmatpush1.msra.mxu0 %v5803
        %6094 = vmatprep.subr.mxu0 0.0
        %6095 = vmatpush1.msra.mxu0 %v5804
        %6096 = vmatprep.subr.mxu0 0.0
        %6097 = vmatpush1.msra.mxu0 %v5805
        %6098 = vmatprep.subr.mxu0 0.0
        %6099 = vmatpush1.msra.mxu0 %v5806
        %6100 = vmatprep.subr.mxu0 0.0
        %6101 = vmatpush1.msra.mxu0 %v5807
        %6102 = vmatprep.mubr.f32.mxu0 %v5646
        %6103 = vmatmul.mubr.f32.gmra.mrb[0].mxu0 %v5630
        %v6104 = vpop.f32.mrb[0].mxu0
        %v6105 = vadd.f32 %v5960, %v6104
        %v6106 = vpop.f32.mrb[0].mxu0
        %6107 = vmatprep.mubr.f32.mxu0 %v5647
        %6108 = vmatmul.mubr.f32.gmra.mrb[0].mxu0 %v5631
        %v6109 = vpop.f32.mrb[0].mxu0
        %v6110 = vadd.f32 %v5965, %v6109
        %v6111 = vpop.f32.mrb[0].mxu0
        %6112 = vmatprep.mubr.f32.mxu0 %v5648
        %6113 = vmatmul.mubr.f32.gmra.mrb[0].mxu0 %v5632
        %v6114 = vpop.f32.mrb[0].mxu0
        %v6115 = vadd.f32 %v5970, %v6114
        %v6116 = vpop.f32.mrb[0].mxu0
        %6117 = vmatprep.mubr.f32.mxu0 %v5649
        %6118 = vmatmul.mubr.f32.gmra.mrb[0].mxu0 %v5633
        %v6119 = vpop.f32.mrb[0].mxu0
        %v6120 = vadd.f32 %v5975, %v6119
        %v6121 = vpop.f32.mrb[0].mxu0
        %6122 = vmatprep.mubr.f32.mxu0 %v5650
        %6123 = vmatmul.mubr.f32.gmra.mrb[0].mxu0 %v5634
        %v6124 = vpop.f32.mrb[0].mxu0
        %v6125 = vadd.f32 %v5980, %v6124
        %v6126 = vpop.f32.mrb[0].mxu0
        %6127 = vmatprep.mubr.f32.mxu0 %v5651
        %6128 = vmatmul.mubr.f32.gmra.mrb[0].mxu0 %v5635
        %v6129 = vpop.f32.mrb[0].mxu0
        %v6130 = vadd.f32 %v5985, %v6129
        %v6131 = vpop.f32.mrb[0].mxu0
        %6132 = vmatprep.mubr.f32.mxu0 %v5652
        %6133 = vmatmul.mubr.f32.gmra.mrb[0].mxu0 %v5636
        %v6134 = vpop.f32.mrb[0].mxu0
        %v6135 = vadd.f32 %v5990, %v6134
        %v6136 = vpop.f32.mrb[0].mxu0
        %6137 = vmatprep.mubr.f32.mxu0 %v5653
        %6138 = vmatmul.mubr.f32.gmra.mrb[0].mxu0 %v5637
        %v6139 = vpop.f32.mrb[0].mxu0
        %v6140 = vadd.f32 %v5995, %v6139
        %v6141 = vpop.f32.mrb[0].mxu0
        %6142 = vmatprep.mubr.f32.mxu0 %v5654
        %6143 = vmatmul.mubr.f32.gmra.mrb[0].mxu0 %v5638
        %v6144 = vpop.f32.mrb[0].mxu0
        %v6145 = vadd.f32 %v6000, %v6144
        %v6146 = vpop.f32.mrb[0].mxu0
        %6147 = vmatprep.mubr.f32.mxu0 %v5655
        %6148 = vmatmul.mubr.f32.gmra.mrb[0].mxu0 %v5639
        %v6149 = vpop.f32.mrb[0].mxu0
        %v6150 = vadd.f32 %v6005, %v6149
        %v6151 = vpop.f32.mrb[0].mxu0
        %6152 = vmatprep.mubr.f32.mxu0 %v5656
        %6153 = vmatmul.mubr.f32.gmra.mrb[0].mxu0 %v5640
        %v6154 = vpop.f32.mrb[0].mxu0
        %v6155 = vadd.f32 %v6010, %v6154
        %v6156 = vpop.f32.mrb[0].mxu0
        %6157 = vmatprep.mubr.f32.mxu0 %v5657
        %6158 = vmatmul.mubr.f32.gmra.mrb[0].mxu0 %v5641
        %v6159 = vpop.f32.mrb[0].mxu0
        %v6160 = vadd.f32 %v6015, %v6159
        %v6161 = vpop.f32.mrb[0].mxu0
        %6162 = vmatprep.mubr.f32.mxu0 %v5658
        %6163 = vmatmul.mubr.f32.gmra.mrb[0].mxu0 %v5642
        %v6164 = vpop.f32.mrb[0].mxu0
        %v6165 = vadd.f32 %v6020, %v6164
        %v6166 = vpop.f32.mrb[0].mxu0
        %6167 = vmatprep.mubr.f32.mxu0 %v5659
        %6168 = vmatmul.mubr.f32.gmra.mrb[0].mxu0 %v5643
        %v6169 = vpop.f32.mrb[0].mxu0
        %v6170 = vadd.f32 %v6025, %v6169
        %v6171 = vpop.f32.mrb[0].mxu0
        %6172 = vmatprep.mubr.f32.mxu0 %v5660
        %6173 = vmatmul.mubr.f32.gmra.mrb[0].mxu0 %v5644
        %v6174 = vpop.f32.mrb[0].mxu0
        %v6175 = vadd.f32 %v6030, %v6174
        %v6176 = vpop.f32.mrb[0].mxu0
        %6177 = vmatprep.mubr.f32.mxu0 %v5661
        %6178 = vmatmul.mubr.f32.gmra.mrb[0].mxu0 %v5645
        %v6179 = vpop.f32.mrb[0].mxu0
        %v6180 = vadd.f32 %v6035, %v6179
        %v6181 = vpop.f32.mrb[0].mxu0
        %6182 = vdwg.mxu0
        %6183 = vmatprep.subr.mxu0 0.0
        %6184 = vmatpush1.msra.mxu0 %v5808
        %6185 = vmatprep.subr.mxu0 0.0
        %6186 = vmatpush1.msra.mxu0 %v5809
        %6187 = vmatprep.subr.mxu0 0.0
        %6188 = vmatpush1.msra.mxu0 %v5810
        %6189 = vmatprep.subr.mxu0 0.0
        %6190 = vmatpush1.msra.mxu0 %v5811
        %6191 = vmatprep.subr.mxu0 0.0
        %6192 = vmatpush1.msra.mxu0 %v5812
        %6193 = vmatprep.subr.mxu0 0.0
        %6194 = vmatpush1.msra.mxu0 %v5813
        %6195 = vmatprep.subr.mxu0 0.0
        %6196 = vmatpush1.msra.mxu0 %v5814
        %6197 = vmatprep.subr.mxu0 0.0
        %6198 = vmatpush1.msra.mxu0 %v5815
        %6199 = vmatprep.subr.mxu0 0.0
        %6200 = vmatpush1.msra.mxu0 %v5816
        %6201 = vmatprep.subr.mxu0 0.0
        %6202 = vmatpush1.msra.mxu0 %v5817
        %6203 = vmatprep.subr.mxu0 0.0
        %6204 = vmatpush1.msra.mxu0 %v5818
        %6205 = vmatprep.subr.mxu0 0.0
        %6206 = vmatpush1.msra.mxu0 %v5819
        %6207 = vmatprep.subr.mxu0 0.0
        %6208 = vmatpush1.msra.mxu0 %v5820
        %6209 = vmatprep.subr.mxu0 0.0
        %6210 = vmatpush1.msra.mxu0 %v5821
        %6211 = vmatprep.subr.mxu0 0.0
        %6212 = vmatpush1.msra.mxu0 %v5822
        %6213 = vmatprep.subr.mxu0 0.0
        %6214 = vmatpush1.msra.mxu0 %v5823
        %6215 = vmatprep.subr.mxu0 0.0
        %6216 = vmatpush1.msra.mxu0 %v5824
        %6217 = vmatprep.subr.mxu0 0.0
        %6218 = vmatpush1.msra.mxu0 %v5825
        %6219 = vmatprep.subr.mxu0 0.0
        %6220 = vmatpush1.msra.mxu0 %v5826
        %6221 = vmatprep.subr.mxu0 0.0
        %6222 = vmatpush1.msra.mxu0 %v5827
        %6223 = vmatprep.subr.mxu0 0.0
        %6224 = vmatpush1.msra.mxu0 %v5828
        %6225 = vmatprep.subr.mxu0 0.0
        %6226 = vmatpush1.msra.mxu0 %v5829
        %6227 = vmatprep.subr.mxu0 0.0
        %6228 = vmatpush1.msra.mxu0 %v5830
        %6229 = vmatprep.subr.mxu0 0.0
        %6230 = vmatpush1.msra.mxu0 %v5831
        %6231 = vmatprep.subr.mxu0 0.0
        %6232 = vmatpush1.msra.mxu0 %v5832
        %6233 = vmatprep.subr.mxu0 0.0
        %6234 = vmatpush1.msra.mxu0 %v5833
        %6235 = vmatprep.subr.mxu0 0.0
        %6236 = vmatpush1.msra.mxu0 %v5834
        %6237 = vmatprep.subr.mxu0 0.0
        %6238 = vmatpush1.msra.mxu0 %v5835
        %6239 = vmatprep.subr.mxu0 0.0
        %6240 = vmatpush1.msra.mxu0 %v5836
        %6241 = vmatprep.subr.mxu0 0.0
        %6242 = vmatpush1.msra.mxu0 %v5837
        %6243 = vmatprep.subr.mxu0 0.0
        %6244 = vmatpush1.msra.mxu0 %v5838
        %6245 = vmatprep.subr.mxu0 0.0
        %6246 = vmatpush1.msra.mxu0 %v5839
        %6247 = vmatprep.mubr.f32.mxu0 %v5678
        %6248 = vmatmul.mubr.f32.gmra.mrb[0].mxu0 %v5662
        %v6249 = vpop.f32.mrb[0].mxu0
        %v6250 = vadd.f32 %v6105, %v6249
        %v6251 = vpop.f32.mrb[0].mxu0
        %6252 = vmatprep.mubr.f32.mxu0 %v5679
        %6253 = vmatmul.mubr.f32.gmra.mrb[0].mxu0 %v5663
        %v6254 = vpop.f32.mrb[0].mxu0
        %v6255 = vadd.f32 %v6110, %v6254
        %v6256 = vpop.f32.mrb[0].mxu0
        %6257 = vmatprep.mubr.f32.mxu0 %v5680
        %6258 = vmatmul.mubr.f32.gmra.mrb[0].mxu0 %v5664
        %v6259 = vpop.f32.mrb[0].mxu0
        %v6260 = vadd.f32 %v6115, %v6259
        %v6261 = vpop.f32.mrb[0].mxu0
        %6262 = vmatprep.mubr.f32.mxu0 %v5681
        %6263 = vmatmul.mubr.f32.gmra.mrb[0].mxu0 %v5665
        %v6264 = vpop.f32.mrb[0].mxu0
        %v6265 = vadd.f32 %v6120, %v6264
        %v6266 = vpop.f32.mrb[0].mxu0
        %6267 = vmatprep.mubr.f32.mxu0 %v5682
        %6268 = vmatmul.mubr.f32.gmra.mrb[0].mxu0 %v5666
        %v6269 = vpop.f32.mrb[0].mxu0
        %v6270 = vadd.f32 %v6125, %v6269
        %v6271 = vpop.f32.mrb[0].mxu0
        %6272 = vmatprep.mubr.f32.mxu0 %v5683
        %6273 = vmatmul.mubr.f32.gmra.mrb[0].mxu0 %v5667
        %v6274 = vpop.f32.mrb[0].mxu0
        %v6275 = vadd.f32 %v6130, %v6274
        %v6276 = vpop.f32.mrb[0].mxu0
        %6277 = vmatprep.mubr.f32.mxu0 %v5684
        %6278 = vmatmul.mubr.f32.gmra.mrb[0].mxu0 %v5668
        %v6279 = vpop.f32.mrb[0].mxu0
        %v6280 = vadd.f32 %v6135, %v6279
        %v6281 = vpop.f32.mrb[0].mxu0
        %6282 = vmatprep.mubr.f32.mxu0 %v5685
        %6283 = vmatmul.mubr.f32.gmra.mrb[0].mxu0 %v5669
        %v6284 = vpop.f32.mrb[0].mxu0
        %v6285 = vadd.f32 %v6140, %v6284
        %v6286 = vpop.f32.mrb[0].mxu0
        %6287 = vmatprep.mubr.f32.mxu0 %v5686
        %6288 = vmatmul.mubr.f32.gmra.mrb[0].mxu0 %v5670
        %v6289 = vpop.f32.mrb[0].mxu0
        %v6290 = vadd.f32 %v6145, %v6289
        %v6291 = vpop.f32.mrb[0].mxu0
        %6292 = vmatprep.mubr.f32.mxu0 %v5687
        %6293 = vmatmul.mubr.f32.gmra.mrb[0].mxu0 %v5671
        %v6294 = vpop.f32.mrb[0].mxu0
        %v6295 = vadd.f32 %v6150, %v6294
        %v6296 = vpop.f32.mrb[0].mxu0
        %6297 = vmatprep.mubr.f32.mxu0 %v5688
        %6298 = vmatmul.mubr.f32.gmra.mrb[0].mxu0 %v5672
        %v6299 = vpop.f32.mrb[0].mxu0
        %v6300 = vadd.f32 %v6155, %v6299
        %v6301 = vpop.f32.mrb[0].mxu0
        %6302 = vmatprep.mubr.f32.mxu0 %v5689
        %6303 = vmatmul.mubr.f32.gmra.mrb[0].mxu0 %v5673
        %v6304 = vpop.f32.mrb[0].mxu0
        %v6305 = vadd.f32 %v6160, %v6304
        %v6306 = vpop.f32.mrb[0].mxu0
        %6307 = vmatprep.mubr.f32.mxu0 %v5690
        %6308 = vmatmul.mubr.f32.gmra.mrb[0].mxu0 %v5674
        %v6309 = vpop.f32.mrb[0].mxu0
        %v6310 = vadd.f32 %v6165, %v6309
        %v6311 = vpop.f32.mrb[0].mxu0
        %6312 = vmatprep.mubr.f32.mxu0 %v5691
        %6313 = vmatmul.mubr.f32.gmra.mrb[0].mxu0 %v5675
        %v6314 = vpop.f32.mrb[0].mxu0
        %v6315 = vadd.f32 %v6170, %v6314
        %v6316 = vpop.f32.mrb[0].mxu0
        %6317 = vmatprep.mubr.f32.mxu0 %v5692
        %6318 = vmatmul.mubr.f32.gmra.mrb[0].mxu0 %v5676
        %v6319 = vpop.f32.mrb[0].mxu0
        %v6320 = vadd.f32 %v6175, %v6319
        %v6321 = vpop.f32.mrb[0].mxu0
        %6322 = vmatprep.mubr.f32.mxu0 %v5693
        %6323 = vmatmul.mubr.f32.gmra.mrb[0].mxu0 %v5677
        %v6324 = vpop.f32.mrb[0].mxu0
        %v6325 = vadd.f32 %v6180, %v6324
        %v6326 = vpop.f32.mrb[0].mxu0
        %6327 = vdwg.mxu0
        %6328 = vmatprep.subr.mxu0 0.0
        %6329 = vmatpush1.msra.mxu0 %v5840
        %6330 = vmatprep.subr.mxu0 0.0
        %6331 = vmatpush1.msra.mxu0 %v5841
        %6332 = vmatprep.subr.mxu0 0.0
        %6333 = vmatpush1.msra.mxu0 %v5842
        %6334 = vmatprep.subr.mxu0 0.0
        %6335 = vmatpush1.msra.mxu0 %v5843
        %6336 = vmatprep.subr.mxu0 0.0
        %6337 = vmatpush1.msra.mxu0 %v5844
        %6338 = vmatprep.subr.mxu0 0.0
        %6339 = vmatpush1.msra.mxu0 %v5845
        %6340 = vmatprep.subr.mxu0 0.0
        %6341 = vmatpush1.msra.mxu0 %v5846
        %6342 = vmatprep.subr.mxu0 0.0
        %6343 = vmatpush1.msra.mxu0 %v5847
        %6344 = vmatprep.subr.mxu0 0.0
        %6345 = vmatpush1.msra.mxu0 %v5848
        %6346 = vmatprep.subr.mxu0 0.0
        %6347 = vmatpush1.msra.mxu0 %v5849
        %6348 = vmatprep.subr.mxu0 0.0
        %6349 = vmatpush1.msra.mxu0 %v5850
        %6350 = vmatprep.subr.mxu0 0.0
        %6351 = vmatpush1.msra.mxu0 %v5851
        %6352 = vmatprep.subr.mxu0 0.0
        %6353 = vmatpush1.msra.mxu0 %v5852
        %6354 = vmatprep.subr.mxu0 0.0
        %6355 = vmatpush1.msra.mxu0 %v5853
        %6356 = vmatprep.subr.mxu0 0.0
        %6357 = vmatpush1.msra.mxu0 %v5854
        %6358 = vmatprep.subr.mxu0 0.0
        %6359 = vmatpush1.msra.mxu0 %v5855
        %6360 = vmatprep.subr.mxu0 0.0
        %6361 = vmatpush1.msra.mxu0 %v5856
        %6362 = vmatprep.subr.mxu0 0.0
        %6363 = vmatpush1.msra.mxu0 %v5857
        %6364 = vmatprep.subr.mxu0 0.0
        %6365 = vmatpush1.msra.mxu0 %v5858
        %6366 = vmatprep.subr.mxu0 0.0
        %6367 = vmatpush1.msra.mxu0 %v5859
        %6368 = vmatprep.subr.mxu0 0.0
        %6369 = vmatpush1.msra.mxu0 %v5860
        %6370 = vmatprep.subr.mxu0 0.0
        %6371 = vmatpush1.msra.mxu0 %v5861
        %6372 = vmatprep.subr.mxu0 0.0
        %6373 = vmatpush1.msra.mxu0 %v5862
        %6374 = vmatprep.subr.mxu0 0.0
        %6375 = vmatpush1.msra.mxu0 %v5863
        %6376 = vmatprep.subr.mxu0 0.0
        %6377 = vmatpush1.msra.mxu0 %v5864
        %6378 = vmatprep.subr.mxu0 0.0
        %6379 = vmatpush1.msra.mxu0 %v5865
        %6380 = vmatprep.subr.mxu0 0.0
        %6381 = vmatpush1.msra.mxu0 %v5866
        %6382 = vmatprep.subr.mxu0 0.0
        %6383 = vmatpush1.msra.mxu0 %v5867
        %6384 = vmatprep.subr.mxu0 0.0
        %6385 = vmatpush1.msra.mxu0 %v5868
        %6386 = vmatprep.subr.mxu0 0.0
        %6387 = vmatpush1.msra.mxu0 %v5869
        %6388 = vmatprep.subr.mxu0 0.0
        %6389 = vmatpush1.msra.mxu0 %v5870
        %6390 = vmatprep.subr.mxu0 0.0
        %6391 = vmatpush1.msra.mxu0 %v5871
        %6392 = vmatprep.mubr.f32.mxu0 %v5712
        %6393 = vmatmul.mubr.f32.gmra.mrb[0].mxu0 %v5695
        %v6394 = vpop.f32.mrb[0].mxu0
        %v6395 = vadd.f32 %v6250, %v6394
        %v6396 = vpop.f32.mrb[0].mxu0
        %6397 = vmatprep.mubr.f32.mxu0 %v5713
        %6398 = vmatmul.mubr.f32.gmra.mrb[0].mxu0 %v5696
        %v6399 = vpop.f32.mrb[0].mxu0
        %v6400 = vadd.f32 %v6255, %v6399
        %v6401 = vpop.f32.mrb[0].mxu0
        %6402 = vmatprep.mubr.f32.mxu0 %v5714
        %6403 = vmatmul.mubr.f32.gmra.mrb[0].mxu0 %v5697
        %v6404 = vpop.f32.mrb[0].mxu0
        %v6405 = vadd.f32 %v6260, %v6404
        %v6406 = vpop.f32.mrb[0].mxu0
        %6407 = vmatprep.mubr.f32.mxu0 %v5715
        %6408 = vmatmul.mubr.f32.gmra.mrb[0].mxu0 %v5698
        %v6409 = vpop.f32.mrb[0].mxu0
        %v6410 = vadd.f32 %v6265, %v6409
        %v6411 = vpop.f32.mrb[0].mxu0
        %6412 = vmatprep.mubr.f32.mxu0 %v5716
        %6413 = vmatmul.mubr.f32.gmra.mrb[0].mxu0 %v5699
        %v6414 = vpop.f32.mrb[0].mxu0
        %v6415 = vadd.f32 %v6270, %v6414
        %v6416 = vpop.f32.mrb[0].mxu0
        %6417 = vmatprep.mubr.f32.mxu0 %v5717
        %6418 = vmatmul.mubr.f32.gmra.mrb[0].mxu0 %v5700
        %v6419 = vpop.f32.mrb[0].mxu0
        %v6420 = vadd.f32 %v6275, %v6419
        %v6421 = vpop.f32.mrb[0].mxu0
        %6422 = vmatprep.mubr.f32.mxu0 %v5718
        %6423 = vmatmul.mubr.f32.gmra.mrb[0].mxu0 %v5701
        %v6424 = vpop.f32.mrb[0].mxu0
        %v6425 = vadd.f32 %v6280, %v6424
        %v6426 = vpop.f32.mrb[0].mxu0
        %6427 = vmatprep.mubr.f32.mxu0 %v5719
        %6428 = vmatmul.mubr.f32.gmra.mrb[0].mxu0 %v5702
        %v6429 = vpop.f32.mrb[0].mxu0
        %v6430 = vadd.f32 %v6285, %v6429
        %v6431 = vpop.f32.mrb[0].mxu0
        %6432 = vmatprep.mubr.f32.mxu0 %v5720
        %6433 = vmatmul.mubr.f32.gmra.mrb[0].mxu0 %v5704
        %v6434 = vpop.f32.mrb[0].mxu0
        %v6435 = vadd.f32 %v6290, %v6434
        %v6436 = vpop.f32.mrb[0].mxu0
        %6437 = vmatprep.mubr.f32.mxu0 %v5721
        %6438 = vmatmul.mubr.f32.gmra.mrb[0].mxu0 %v5705
        %v6439 = vpop.f32.mrb[0].mxu0
        %v6440 = vadd.f32 %v6295, %v6439
        %v6441 = vpop.f32.mrb[0].mxu0
        %6442 = vmatprep.mubr.f32.mxu0 %v5722
        %6443 = vmatmul.mubr.f32.gmra.mrb[0].mxu0 %v5706
        %v6444 = vpop.f32.mrb[0].mxu0
        %v6445 = vadd.f32 %v6300, %v6444
        %v6446 = vpop.f32.mrb[0].mxu0
        %6447 = vmatprep.mubr.f32.mxu0 %v5723
        %6448 = vmatmul.mubr.f32.gmra.mrb[0].mxu0 %v5707
        %v6449 = vpop.f32.mrb[0].mxu0
        %v6450 = vadd.f32 %v6305, %v6449
        %v6451 = vpop.f32.mrb[0].mxu0
        %6452 = vmatprep.mubr.f32.mxu0 %v5724
        %6453 = vmatmul.mubr.f32.gmra.mrb[0].mxu0 %v5708
        %v6454 = vpop.f32.mrb[0].mxu0
        %v6455 = vadd.f32 %v6310, %v6454
        %v6456 = vpop.f32.mrb[0].mxu0
        %6457 = vmatprep.mubr.f32.mxu0 %v5725
        %6458 = vmatmul.mubr.f32.gmra.mrb[0].mxu0 %v5709
        %v6459 = vpop.f32.mrb[0].mxu0
        %v6460 = vadd.f32 %v6315, %v6459
        %v6461 = vpop.f32.mrb[0].mxu0
        %6462 = vmatprep.mubr.f32.mxu0 %v5726
        %6463 = vmatmul.mubr.f32.gmra.mrb[0].mxu0 %v5710
        %v6464 = vpop.f32.mrb[0].mxu0
        %v6465 = vadd.f32 %v6320, %v6464
        %v6466 = vpop.f32.mrb[0].mxu0
        %6467 = vmatprep.mubr.f32.mxu0 %v5727
        %6468 = vmatmul.mubr.f32.gmra.mrb[0].mxu0 %v5711
        %v6469 = vpop.f32.mrb[0].mxu0
        %v6470 = vadd.f32 %v6325, %v6469
        %v6471 = vpop.f32.mrb[0].mxu0
        %6472 = vdwg.mxu0
        %6473 = vmatprep.subr.mxu0 0.0
        %6474 = vmatpush1.msra.mxu0 %v5872
        %6475 = vmatprep.subr.mxu0 0.0
        %6476 = vmatpush1.msra.mxu0 %v5873
        %6477 = vmatprep.subr.mxu0 0.0
        %6478 = vmatpush1.msra.mxu0 %v5874
        %6479 = vmatprep.subr.mxu0 0.0
        %6480 = vmatpush1.msra.mxu0 %v5875
        %6481 = vmatprep.subr.mxu0 0.0
        %6482 = vmatpush1.msra.mxu0 %v5876
        %6483 = vmatprep.subr.mxu0 0.0
        %6484 = vmatpush1.msra.mxu0 %v5877
        %6485 = vmatprep.subr.mxu0 0.0
        %6486 = vmatpush1.msra.mxu0 %v5878
        %6487 = vmatprep.subr.mxu0 0.0
        %6488 = vmatpush1.msra.mxu0 %v5879
        %6489 = vmatprep.subr.mxu0 0.0
        %6490 = vmatpush1.msra.mxu0 %v5880
        %6491 = vmatprep.subr.mxu0 0.0
        %6492 = vmatpush1.msra.mxu0 %v5881
        %6493 = vmatprep.subr.mxu0 0.0
        %6494 = vmatpush1.msra.mxu0 %v5882
        %6495 = vmatprep.subr.mxu0 0.0
        %6496 = vmatpush1.msra.mxu0 %v5883
        %6497 = vmatprep.subr.mxu0 0.0
        %6498 = vmatpush1.msra.mxu0 %v5884
        %6499 = vmatprep.subr.mxu0 0.0
        %6500 = vmatpush1.msra.mxu0 %v5885
        %6501 = vmatprep.subr.mxu0 0.0
        %6502 = vmatpush1.msra.mxu0 %v5886
        %6503 = vmatprep.subr.mxu0 0.0
        %6504 = vmatpush1.msra.mxu0 %v5887
        %6505 = vmatprep.subr.mxu0 0.0
        %6506 = vmatpush1.msra.mxu0 0.0
        %6507 = vmatprep.subr.mxu0 0.0
        %6508 = vmatpush1.msra.mxu0 0.0
        %6509 = vmatprep.subr.mxu0 0.0
        %6510 = vmatpush1.msra.mxu0 0.0
        %6511 = vmatprep.subr.mxu0 0.0
        %6512 = vmatpush1.msra.mxu0 0.0
        %6513 = vmatprep.subr.mxu0 0.0
        %6514 = vmatpush1.msra.mxu0 0.0
        %6515 = vmatprep.subr.mxu0 0.0
        %6516 = vmatpush1.msra.mxu0 0.0
        %6517 = vmatprep.subr.mxu0 0.0
        %6518 = vmatpush1.msra.mxu0 0.0
        %6519 = vmatprep.subr.mxu0 0.0
        %6520 = vmatpush1.msra.mxu0 0.0
        %6521 = vmatprep.subr.mxu0 0.0
        %6522 = vmatpush1.msra.mxu0 0.0
        %6523 = vmatprep.subr.mxu0 0.0
        %6524 = vmatpush1.msra.mxu0 0.0
        %6525 = vmatprep.subr.mxu0 0.0
        %6526 = vmatpush1.msra.mxu0 0.0
        %6527 = vmatprep.subr.mxu0 0.0
        %6528 = vmatpush1.msra.mxu0 0.0
        %6529 = vmatprep.subr.mxu0 0.0
        %6530 = vmatpush1.msra.mxu0 0.0
        %6531 = vmatprep.subr.mxu0 0.0
        %6532 = vmatpush1.msra.mxu0 0.0
        %6533 = vmatprep.subr.mxu0 0.0
        %6534 = vmatpush1.msra.mxu0 0.0
        %6535 = vmatprep.subr.mxu0 0.0
        %6536 = vmatpush1.msra.mxu0 0.0
        %6537 = vmatprep.mubr.f32.mxu0 0.0
        %6538 = vmatmul.mubr.f32.gmra.mrb[0].mxu0 %v5728
        %v6539 = vpop.f32.mrb[0].mxu0
        %v6540 = vadd.f32 %v6395, %v6539
        %v6541 = vpop.f32.mrb[0].mxu0
        %6542 = vmatprep.mubr.f32.mxu0 0.0
        %6543 = vmatmul.mubr.f32.gmra.mrb[0].mxu0 %v5729
        %v6544 = vpop.f32.mrb[0].mxu0
        %v6545 = vadd.f32 %v6400, %v6544
        %v6546 = vpop.f32.mrb[0].mxu0
        %6547 = vmatprep.mubr.f32.mxu0 0.0
        %6548 = vmatmul.mubr.f32.gmra.mrb[0].mxu0 %v5730
        %v6549 = vpop.f32.mrb[0].mxu0
        %v6550 = vadd.f32 %v6405, %v6549
        %v6551 = vpop.f32.mrb[0].mxu0
        %6552 = vmatprep.mubr.f32.mxu0 0.0
        %6553 = vmatmul.mubr.f32.gmra.mrb[0].mxu0 %v5731
        %v6554 = vpop.f32.mrb[0].mxu0
        %v6555 = vadd.f32 %v6410, %v6554
        %v6556 = vpop.f32.mrb[0].mxu0
        %6557 = vmatprep.mubr.f32.mxu0 0.0
        %6558 = vmatmul.mubr.f32.gmra.mrb[0].mxu0 %v5732
        %v6559 = vpop.f32.mrb[0].mxu0
        %v6560 = vadd.f32 %v6415, %v6559
        %v6561 = vpop.f32.mrb[0].mxu0
        %6562 = vmatprep.mubr.f32.mxu0 0.0
        %6563 = vmatmul.mubr.f32.gmra.mrb[0].mxu0 %v5733
        %v6564 = vpop.f32.mrb[0].mxu0
        %v6565 = vadd.f32 %v6420, %v6564
        %v6566 = vpop.f32.mrb[0].mxu0
        %6567 = vmatprep.mubr.f32.mxu0 0.0
        %6568 = vmatmul.mubr.f32.gmra.mrb[0].mxu0 %v5734
        %v6569 = vpop.f32.mrb[0].mxu0
        %v6570 = vadd.f32 %v6425, %v6569
        %v6571 = vpop.f32.mrb[0].mxu0
        %6572 = vmatprep.mubr.f32.mxu0 0.0
        %6573 = vmatmul.mubr.f32.gmra.mrb[0].mxu0 %v5735
        %v6574 = vpop.f32.mrb[0].mxu0
        %v6575 = vadd.f32 %v6430, %v6574
        %v6576 = vpop.f32.mrb[0].mxu0
        %6577 = vmatprep.mubr.f32.mxu0 0.0
        %6578 = vmatmul.mubr.f32.gmra.mrb[0].mxu0 %v5736
        %v6579 = vpop.f32.mrb[0].mxu0
        %v6580 = vadd.f32 %v6435, %v6579
        %v6581 = vpop.f32.mrb[0].mxu0
        %6582 = vmatprep.mubr.f32.mxu0 0.0
        %6583 = vmatmul.mubr.f32.gmra.mrb[0].mxu0 %v5737
        %v6584 = vpop.f32.mrb[0].mxu0
        %v6585 = vadd.f32 %v6440, %v6584
        %v6586 = vpop.f32.mrb[0].mxu0
        %6587 = vmatprep.mubr.f32.mxu0 0.0
        %6588 = vmatmul.mubr.f32.gmra.mrb[0].mxu0 %v5738
        %v6589 = vpop.f32.mrb[0].mxu0
        %v6590 = vadd.f32 %v6445, %v6589
        %v6591 = vpop.f32.mrb[0].mxu0
        %6592 = vmatprep.mubr.f32.mxu0 0.0
        %6593 = vmatmul.mubr.f32.gmra.mrb[0].mxu0 %v5739
        %v6594 = vpop.f32.mrb[0].mxu0
        %v6595 = vadd.f32 %v6450, %v6594
        %v6596 = vpop.f32.mrb[0].mxu0
        %6597 = vmatprep.mubr.f32.mxu0 0.0
        %6598 = vmatmul.mubr.f32.gmra.mrb[0].mxu0 %v5740
        %v6599 = vpop.f32.mrb[0].mxu0
        %v6600 = vadd.f32 %v6455, %v6599
        %v6601 = vpop.f32.mrb[0].mxu0
        %6602 = vmatprep.mubr.f32.mxu0 0.0
        %6603 = vmatmul.mubr.f32.gmra.mrb[0].mxu0 %v5741
        %v6604 = vpop.f32.mrb[0].mxu0
        %v6605 = vadd.f32 %v6460, %v6604
        %v6606 = vpop.f32.mrb[0].mxu0
        %6607 = vmatprep.mubr.f32.mxu0 0.0
        %6608 = vmatmul.mubr.f32.gmra.mrb[0].mxu0 %v5742
        %v6609 = vpop.f32.mrb[0].mxu0
        %v6610 = vadd.f32 %v6465, %v6609
        %v6611 = vpop.f32.mrb[0].mxu0
        %6612 = vmatprep.mubr.f32.mxu0 0.0
        %6613 = vmatmul.mubr.f32.gmra.mrb[0].mxu0 %v5743
        %v6614 = vpop.f32.mrb[0].mxu0
        %v6615 = vadd.f32 %v6470, %v6614
        %v6616 = vpop.f32.mrb[0].mxu0
        %6617 = vdwg.mxu0
        %v6618 = vmax.f32 %v6540, 0.0
        %v6619 = vmax.f32 %v6545, 0.0
        %v6620 = vmax.f32 %v6550, 0.0
        %v6621 = vmax.f32 %v6555, 0.0
        %v6622 = vmax.f32 %v6560, 0.0
        %v6623 = vmax.f32 %v6565, 0.0
        %v6624 = vmax.f32 %v6570, 0.0
        %v6625 = vmax.f32 %v6575, 0.0
        %v6626 = vmax.f32 %v6580, 0.0
        %v6627 = vmax.f32 %v6585, 0.0
        %v6628 = vmax.f32 %v6590, 0.0
        %v6629 = vmax.f32 %v6595, 0.0
        %v6630 = vmax.f32 %v6600, 0.0
        %v6631 = vmax.f32 %v6605, 0.0
        %v6632 = vmax.f32 %v6610, 0.0
        %v6633 = vmax.f32 %v6615, 0.0
        %v6634 = vld [vmem:[%s8 + $0x1] sm:$0x1]
        %v6635 = vld [vmem:[%s8 + $0x2] sm:$0x1]
        %v6636 = vadd.f32 %v6618, %v6619
        %v6637 = vadd.f32 %v6636, %v6620
        %v6638 = vadd.f32 %v6637, %v6621
        %v6639 = vadd.f32 %v6638, %v6622
        %v6640 = vadd.f32 %v6639, %v6623
        %v6641 = vadd.f32 %v6640, %v6624
        %v6642 = vadd.f32 %v6641, %v6625
        %v6643 = vrot.slane %v6642, 4
        %v6644 = vadd.f32 %v6642, %v6643
        %v6645 = vrot.slane %v6644, 2
        %v6646 = vadd.f32 %v6644, %v6645
        %v6647 = vrot.slane %v6646, 1
        %v6648 = vadd.f32 %v6646, %v6647
        %v6649 = vadd.f32 %v6626, %v6627
        %v6650 = vadd.f32 %v6649, %v6628
        %v6651 = vadd.f32 %v6650, %v6629
        %v6652 = vadd.f32 %v6651, %v6630
        %v6653 = vadd.f32 %v6652, %v6631
        %v6654 = vadd.f32 %v6653, %v6632
        %v6655 = vadd.f32 %v6654, %v6633
        %v6656 = vrot.slane %v6655, 4
        %v6657 = vadd.f32 %v6655, %v6656
        %v6658 = vrot.slane %v6657, 2
        %v6659 = vadd.f32 %v6657, %v6658
        %v6660 = vrot.slane %v6659, 1
        %v6661 = vadd.f32 %v6659, %v6660
        %v6662 = vmul.f32 %v6618, %v6618
        %v6663 = vmul.f32 %v6619, %v6619
        %v6664 = vmul.f32 %v6620, %v6620
        %v6665 = vmul.f32 %v6621, %v6621
        %v6666 = vmul.f32 %v6622, %v6622
        %v6667 = vmul.f32 %v6623, %v6623
        %v6668 = vmul.f32 %v6624, %v6624
        %v6669 = vmul.f32 %v6625, %v6625
        %v6670 = vmul.f32 %v6626, %v6626
        %v6671 = vmul.f32 %v6627, %v6627
        %v6672 = vmul.f32 %v6628, %v6628
        %v6673 = vmul.f32 %v6629, %v6629
        %v6674 = vmul.f32 %v6630, %v6630
        %v6675 = vmul.f32 %v6631, %v6631
        %v6676 = vmul.f32 %v6632, %v6632
        %v6677 = vmul.f32 %v6633, %v6633
        %v6678 = vadd.f32 %v6662, %v6663
        %v6679 = vadd.f32 %v6678, %v6664
        %v6680 = vadd.f32 %v6679, %v6665
        %v6681 = vadd.f32 %v6680, %v6666
        %v6682 = vadd.f32 %v6681, %v6667
        %v6683 = vadd.f32 %v6682, %v6668
        %v6684 = vadd.f32 %v6683, %v6669
        %v6685 = vrot.slane %v6684, 4
        %v6686 = vadd.f32 %v6684, %v6685
        %v6687 = vrot.slane %v6686, 2
        %v6688 = vadd.f32 %v6686, %v6687
        %v6689 = vrot.slane %v6688, 1
        %v6690 = vadd.f32 %v6688, %v6689
        %v6691 = vadd.f32 %v6670, %v6671
        %v6692 = vadd.f32 %v6691, %v6672
        %v6693 = vadd.f32 %v6692, %v6673
        %v6694 = vadd.f32 %v6693, %v6674
        %v6695 = vadd.f32 %v6694, %v6675
        %v6696 = vadd.f32 %v6695, %v6676
        %v6697 = vadd.f32 %v6696, %v6677
        %v6698 = vrot.slane %v6697, 4
        %v6699 = vadd.f32 %v6697, %v6698
        %v6700 = vrot.slane %v6699, 2
        %v6701 = vadd.f32 %v6699, %v6700
        %v6702 = vrot.slane %v6701, 1
        %v6703 = vadd.f32 %v6701, %v6702
        %v6706 = vsel %vm1759, %v6661, %v6648
        %6708 = vmatprep.subr.mxu0 0.0
        %6709 = vmatpush1.msra.mxu0 %v679
        %6710 = vmatprep.subr.mxu0 0.0
        %6711 = vmatpush1.msra.mxu0 %v680
        %6712 = vmatprep.subr.mxu0 0.0
        %6713 = vmatpush1.msra.mxu0 %v681
        %6714 = vmatprep.subr.mxu0 0.0
        %6715 = vmatpush1.msra.mxu0 %v682
        %6716 = vmatprep.subr.mxu0 0.0
        %6717 = vmatpush1.msra.mxu0 %v683
        %6718 = vmatprep.subr.mxu0 0.0
        %6719 = vmatpush1.msra.mxu0 %v684
        %6720 = vmatprep.subr.mxu0 0.0
        %6721 = vmatpush1.msra.mxu0 %v685
        %6722 = vmatprep.subr.mxu0 0.0
        %6723 = vmatpush1.msra.mxu0 %v686
        %6724 = vmatprep.subr.mxu0 0.0
        %6725 = vmatpush1.msra.mxu0 %v687
        %6726 = vmatprep.subr.mxu0 0.0
        %6727 = vmatpush1.msra.mxu0 %v688
        %6728 = vmatprep.subr.mxu0 0.0
        %6729 = vmatpush1.msra.mxu0 %v689
        %6730 = vmatprep.subr.mxu0 0.0
        %6731 = vmatpush1.msra.mxu0 %v690
        %6732 = vmatprep.subr.mxu0 0.0
        %6733 = vmatpush1.msra.mxu0 %v691
        %6734 = vmatprep.subr.mxu0 0.0
        %6735 = vmatpush1.msra.mxu0 %v692
        %6736 = vmatprep.subr.mxu0 0.0
        %6737 = vmatpush1.msra.mxu0 %v693
        %6738 = vmatprep.subr.mxu0 0.0
        %6739 = vmatpush1.msra.mxu0 %v694
        %6740 = vmatprep.subr.mxu0 0.0
        %6741 = vmatpush1.msra.mxu0 0.0
        %6742 = vmatprep.subr.mxu0 0.0
        %6743 = vmatpush1.msra.mxu0 0.0
        %6744 = vmatprep.subr.mxu0 0.0
        %6745 = vmatpush1.msra.mxu0 0.0
        %6746 = vmatprep.subr.mxu0 0.0
        %6747 = vmatpush1.msra.mxu0 0.0
        %6748 = vmatprep.subr.mxu0 0.0
        %6749 = vmatpush1.msra.mxu0 0.0
        %6750 = vmatprep.subr.mxu0 0.0
        %6751 = vmatpush1.msra.mxu0 0.0
        %6752 = vmatprep.subr.mxu0 0.0
        %6753 = vmatpush1.msra.mxu0 0.0
        %6754 = vmatprep.subr.mxu0 0.0
        %6755 = vmatpush1.msra.mxu0 0.0
        %6756 = vmatprep.subr.mxu0 0.0
        %6757 = vmatpush1.msra.mxu0 0.0
        %6758 = vmatprep.subr.mxu0 0.0
        %6759 = vmatpush1.msra.mxu0 0.0
        %6760 = vmatprep.subr.mxu0 0.0
        %6761 = vmatpush1.msra.mxu0 0.0
        %6762 = vmatprep.subr.mxu0 0.0
        %6763 = vmatpush1.msra.mxu0 0.0
        %6764 = vmatprep.subr.mxu0 0.0
        %6765 = vmatpush1.msra.mxu0 0.0
        %6766 = vmatprep.subr.mxu0 0.0
        %6767 = vmatpush1.msra.mxu0 0.0
        %6768 = vmatprep.subr.mxu0 0.0
        %6769 = vmatpush1.msra.mxu0 0.0
        %6770 = vmatprep.subr.mxu0 0.0
        %6771 = vmatpush1.msra.mxu0 0.0
        %6772 = vmatprep.mubr.f32.mxu0 0.0
        %6773 = vmatmul.mubr.f32.gmra.mrb[0].mxu0 %v6706
        %v6774 = vpop.f32.mrb[0].mxu0
        %v6775 = vadd.f32 0.0, %v6774
        %v6776 = vpop.f32.mrb[0].mxu0
        %6777 = vdwg.mxu0
        %v6778 = vmul.f32 %v6775, %v3651
        %v6781 = vsel %vm1759, %v6703, %v6690
        %6783 = vmatprep.subr.mxu0 0.0
        %6784 = vmatpush1.msra.mxu0 %v679
        %6785 = vmatprep.subr.mxu0 0.0
        %6786 = vmatpush1.msra.mxu0 %v680
        %6787 = vmatprep.subr.mxu0 0.0
        %6788 = vmatpush1.msra.mxu0 %v681
        %6789 = vmatprep.subr.mxu0 0.0
        %6790 = vmatpush1.msra.mxu0 %v682
        %6791 = vmatprep.subr.mxu0 0.0
        %6792 = vmatpush1.msra.mxu0 %v683
        %6793 = vmatprep.subr.mxu0 0.0
        %6794 = vmatpush1.msra.mxu0 %v684
        %6795 = vmatprep.subr.mxu0 0.0
        %6796 = vmatpush1.msra.mxu0 %v685
        %6797 = vmatprep.subr.mxu0 0.0
        %6798 = vmatpush1.msra.mxu0 %v686
        %6799 = vmatprep.subr.mxu0 0.0
        %6800 = vmatpush1.msra.mxu0 %v687
        %6801 = vmatprep.subr.mxu0 0.0
        %6802 = vmatpush1.msra.mxu0 %v688
        %6803 = vmatprep.subr.mxu0 0.0
        %6804 = vmatpush1.msra.mxu0 %v689
        %6805 = vmatprep.subr.mxu0 0.0
        %6806 = vmatpush1.msra.mxu0 %v690
        %6807 = vmatprep.subr.mxu0 0.0
        %6808 = vmatpush1.msra.mxu0 %v691
        %6809 = vmatprep.subr.mxu0 0.0
        %6810 = vmatpush1.msra.mxu0 %v692
        %6811 = vmatprep.subr.mxu0 0.0
        %6812 = vmatpush1.msra.mxu0 %v693
        %6813 = vmatprep.subr.mxu0 0.0
        %6814 = vmatpush1.msra.mxu0 %v694
        %6815 = vmatprep.subr.mxu0 0.0
        %6816 = vmatpush1.msra.mxu0 0.0
        %6817 = vmatprep.subr.mxu0 0.0
        %6818 = vmatpush1.msra.mxu0 0.0
        %6819 = vmatprep.subr.mxu0 0.0
        %6820 = vmatpush1.msra.mxu0 0.0
        %6821 = vmatprep.subr.mxu0 0.0
        %6822 = vmatpush1.msra.mxu0 0.0
        %6823 = vmatprep.subr.mxu0 0.0
        %6824 = vmatpush1.msra.mxu0 0.0
        %6825 = vmatprep.subr.mxu0 0.0
        %6826 = vmatpush1.msra.mxu0 0.0
        %6827 = vmatprep.subr.mxu0 0.0
        %6828 = vmatpush1.msra.mxu0 0.0
        %6829 = vmatprep.subr.mxu0 0.0
        %6830 = vmatpush1.msra.mxu0 0.0
        %6831 = vmatprep.subr.mxu0 0.0
        %6832 = vmatpush1.msra.mxu0 0.0
        %6833 = vmatprep.subr.mxu0 0.0
        %6834 = vmatpush1.msra.mxu0 0.0
        %6835 = vmatprep.subr.mxu0 0.0
        %6836 = vmatpush1.msra.mxu0 0.0
        %6837 = vmatprep.subr.mxu0 0.0
        %6838 = vmatpush1.msra.mxu0 0.0
        %6839 = vmatprep.subr.mxu0 0.0
        %6840 = vmatpush1.msra.mxu0 0.0
        %6841 = vmatprep.subr.mxu0 0.0
        %6842 = vmatpush1.msra.mxu0 0.0
        %6843 = vmatprep.subr.mxu0 0.0
        %6844 = vmatpush1.msra.mxu0 0.0
        %6845 = vmatprep.subr.mxu0 0.0
        %6846 = vmatpush1.msra.mxu0 0.0
        %6847 = vmatprep.mubr.f32.mxu0 0.0
        %6848 = vmatmul.mubr.f32.gmra.mrb[0].mxu0 %v6781
        %v6849 = vpop.f32.mrb[0].mxu0
        %v6850 = vadd.f32 0.0, %v6849
        %v6851 = vpop.f32.mrb[0].mxu0
        %6852 = vdwg.mxu0
        %v6853 = vmul.f32 %v6850, %v3651
        %v6854 = vmul.f32 %v6778, %v6778
        %v6855 = vsub.f32 %v6853, %v6854
        %v6856 = vadd.f32 %v6855, 1e-05
        %v6857 = vrsqrt.pop %v6856
        %v6859 = vsel %vm1915, %v6778, 0
        %6861 = vmatprep.subr.mxu0 0.0
        %6862 = vmatpush1.msra.mxu0 %v695
        %6863 = vmatprep.subr.mxu0 0.0
        %6864 = vmatpush1.msra.mxu0 0.0
        %6865 = vmatprep.subr.mxu0 0.0
        %6866 = vmatpush1.msra.mxu0 0.0
        %6867 = vmatprep.subr.mxu0 0.0
        %6868 = vmatpush1.msra.mxu0 0.0
        %6869 = vmatprep.subr.mxu0 0.0
        %6870 = vmatpush1.msra.mxu0 0.0
        %6871 = vmatprep.subr.mxu0 0.0
        %6872 = vmatpush1.msra.mxu0 0.0
        %6873 = vmatprep.subr.mxu0 0.0
        %6874 = vmatpush1.msra.mxu0 0.0
        %6875 = vmatprep.subr.mxu0 0.0
        %6876 = vmatpush1.msra.mxu0 0.0
        %6877 = vmatprep.subr.mxu0 0.0
        %6878 = vmatpush1.msra.mxu0 0.0
        %6879 = vmatprep.subr.mxu0 0.0
        %6880 = vmatpush1.msra.mxu0 0.0
        %6881 = vmatprep.subr.mxu0 0.0
        %6882 = vmatpush1.msra.mxu0 0.0
        %6883 = vmatprep.subr.mxu0 0.0
        %6884 = vmatpush1.msra.mxu0 0.0
        %6885 = vmatprep.subr.mxu0 0.0
        %6886 = vmatpush1.msra.mxu0 0.0
        %6887 = vmatprep.subr.mxu0 0.0
        %6888 = vmatpush1.msra.mxu0 0.0
        %6889 = vmatprep.subr.mxu0 0.0
        %6890 = vmatpush1.msra.mxu0 0.0
        %6891 = vmatprep.subr.mxu0 0.0
        %6892 = vmatpush1.msra.mxu0 0.0
        %6893 = vmatprep.subr.mxu0 0.0
        %6894 = vmatpush1.msra.mxu0 0.0
        %6895 = vmatprep.subr.mxu0 0.0
        %6896 = vmatpush1.msra.mxu0 0.0
        %6897 = vmatprep.subr.mxu0 0.0
        %6898 = vmatpush1.msra.mxu0 0.0
        %6899 = vmatprep.subr.mxu0 0.0
        %6900 = vmatpush1.msra.mxu0 0.0
        %6901 = vmatprep.subr.mxu0 0.0
        %6902 = vmatpush1.msra.mxu0 0.0
        %6903 = vmatprep.subr.mxu0 0.0
        %6904 = vmatpush1.msra.mxu0 0.0
        %6905 = vmatprep.subr.mxu0 0.0
        %6906 = vmatpush1.msra.mxu0 0.0
        %6907 = vmatprep.subr.mxu0 0.0
        %6908 = vmatpush1.msra.mxu0 0.0
        %6909 = vmatprep.subr.mxu0 0.0
        %6910 = vmatpush1.msra.mxu0 0.0
        %6911 = vmatprep.subr.mxu0 0.0
        %6912 = vmatpush1.msra.mxu0 0.0
        %6913 = vmatprep.subr.mxu0 0.0
        %6914 = vmatpush1.msra.mxu0 0.0
        %6915 = vmatprep.subr.mxu0 0.0
        %6916 = vmatpush1.msra.mxu0 0.0
        %6917 = vmatprep.subr.mxu0 0.0
        %6918 = vmatpush1.msra.mxu0 0.0
        %6919 = vmatprep.subr.mxu0 0.0
        %6920 = vmatpush1.msra.mxu0 0.0
        %6921 = vmatprep.subr.mxu0 0.0
        %6922 = vmatpush1.msra.mxu0 0.0
        %6923 = vmatprep.subr.mxu0 0.0
        %6924 = vmatpush1.msra.mxu0 0.0
        %6925 = vmatprep.mubr.f32.mxu0 0.0
        %6926 = vmatmul.mubr.f32.gmra.mrb[0].mxu0 %v6859
        %v6927 = vpop.f32.mrb[0].mxu0
        %v6928 = vadd.f32 0.0, %v6927
        %v6929 = vpop.f32.mrb[0].mxu0
        %6930 = vdwg.mxu0
        %v6932 = vsel %vm1915, %v6857, 0
        %6934 = vmatprep.subr.mxu0 0.0
        %6935 = vmatpush1.msra.mxu0 %v695
        %6936 = vmatprep.subr.mxu0 0.0
        %6937 = vmatpush1.msra.mxu0 0.0
        %6938 = vmatprep.subr.mxu0 0.0
        %6939 = vmatpush1.msra.mxu0 0.0
        %6940 = vmatprep.subr.mxu0 0.0
        %6941 = vmatpush1.msra.mxu0 0.0
        %6942 = vmatprep.subr.mxu0 0.0
        %6943 = vmatpush1.msra.mxu0 0.0
        %6944 = vmatprep.subr.mxu0 0.0
        %6945 = vmatpush1.msra.mxu0 0.0
        %6946 = vmatprep.subr.mxu0 0.0
        %6947 = vmatpush1.msra.mxu0 0.0
        %6948 = vmatprep.subr.mxu0 0.0
        %6949 = vmatpush1.msra.mxu0 0.0
        %6950 = vmatprep.subr.mxu0 0.0
        %6951 = vmatpush1.msra.mxu0 0.0
        %6952 = vmatprep.subr.mxu0 0.0
        %6953 = vmatpush1.msra.mxu0 0.0
        %6954 = vmatprep.subr.mxu0 0.0
        %6955 = vmatpush1.msra.mxu0 0.0
        %6956 = vmatprep.subr.mxu0 0.0
        %6957 = vmatpush1.msra.mxu0 0.0
        %6958 = vmatprep.subr.mxu0 0.0
        %6959 = vmatpush1.msra.mxu0 0.0
        %6960 = vmatprep.subr.mxu0 0.0
        %6961 = vmatpush1.msra.mxu0 0.0
        %6962 = vmatprep.subr.mxu0 0.0
        %6963 = vmatpush1.msra.mxu0 0.0
        %6964 = vmatprep.subr.mxu0 0.0
        %6965 = vmatpush1.msra.mxu0 0.0
        %6966 = vmatprep.subr.mxu0 0.0
        %6967 = vmatpush1.msra.mxu0 0.0
        %6968 = vmatprep.subr.mxu0 0.0
        %6969 = vmatpush1.msra.mxu0 0.0
        %6970 = vmatprep.subr.mxu0 0.0
        %6971 = vmatpush1.msra.mxu0 0.0
        %6972 = vmatprep.subr.mxu0 0.0
        %6973 = vmatpush1.msra.mxu0 0.0
        %6974 = vmatprep.subr.mxu0 0.0
        %6975 = vmatpush1.msra.mxu0 0.0
        %6976 = vmatprep.subr.mxu0 0.0
        %6977 = vmatpush1.msra.mxu0 0.0
        %6978 = vmatprep.subr.mxu0 0.0
        %6979 = vmatpush1.msra.mxu0 0.0
        %6980 = vmatprep.subr.mxu0 0.0
        %6981 = vmatpush1.msra.mxu0 0.0
        %6982 = vmatprep.subr.mxu0 0.0
        %6983 = vmatpush1.msra.mxu0 0.0
        %6984 = vmatprep.subr.mxu0 0.0
        %6985 = vmatpush1.msra.mxu0 0.0
        %6986 = vmatprep.subr.mxu0 0.0
        %6987 = vmatpush1.msra.mxu0 0.0
        %6988 = vmatprep.subr.mxu0 0.0
        %6989 = vmatpush1.msra.mxu0 0.0
        %6990 = vmatprep.subr.mxu0 0.0
        %6991 = vmatpush1.msra.mxu0 0.0
        %6992 = vmatprep.subr.mxu0 0.0
        %6993 = vmatpush1.msra.mxu0 0.0
        %6994 = vmatprep.subr.mxu0 0.0
        %6995 = vmatpush1.msra.mxu0 0.0
        %6996 = vmatprep.subr.mxu0 0.0
        %6997 = vmatpush1.msra.mxu0 0.0
        %6998 = vmatprep.mubr.f32.mxu0 0.0
        %6999 = vmatmul.mubr.f32.gmra.mrb[0].mxu0 %v6932
        %v7000 = vpop.f32.mrb[0].mxu0
        %v7001 = vadd.f32 0.0, %v7000
        %v7002 = vpop.f32.mrb[0].mxu0
        %7003 = vdwg.mxu0
        %v7006 = vunpack.c.l.s4 1966171168
        %v7007 = vunpack.c.0.s8 %v7006
        %v7008 = vlaneseq
        %v7009 = vshrl.u32 %v7008, 7
        %v7010 = vsub.s32 %v7007, %v7009
        %v7011 = vrot.slane %v6928, %v7010
        %v7012 = vcombine.high %v7011, %v7011
        %v7014 = vunpack.c.l.s4 1966171168
        %v7015 = vunpack.c.0.s8 %v7014
        %v7016 = vlaneseq
        %v7017 = vshrl.u32 %v7016, 7
        %v7018 = vsub.s32 %v7015, %v7017
        %v7019 = vrot.slane %v7011, %v7018
        %v7021 = vunpack.c.l.s4 1966171168
        %v7022 = vunpack.c.0.s8 %v7021
        %v7023 = vlaneseq
        %v7024 = vshrl.u32 %v7023, 7
        %v7025 = vsub.s32 %v7022, %v7024
        %v7026 = vrot.slane %v7012, %v7025
        %v7027 = vlaneseq
        %v7028 = vshrl.u32 %v7027, 7
        %v7029 = vsub.s32 0, %v7028
        %v7030 = vrot.slane %v7019, %v7029
        %v7031 = vlaneseq
        %v7032 = vshrl.u32 %v7031, 7
        %v7033 = vsub.s32 0, %v7032
        %v7034 = vrot.slane %v7026, %v7033
        %v7037 = vsub.f32 %v6618, %v7030
        %v7038 = vsub.f32 %v6619, %v7030
        %v7039 = vsub.f32 %v6620, %v7030
        %v7040 = vsub.f32 %v6621, %v7030
        %v7041 = vsub.f32 %v6622, %v7030
        %v7042 = vsub.f32 %v6623, %v7030
        %v7043 = vsub.f32 %v6624, %v7030
        %v7044 = vsub.f32 %v6625, %v7030
        %v7045 = vsub.f32 %v6626, %v7034
        %v7046 = vsub.f32 %v6627, %v7034
        %v7047 = vsub.f32 %v6628, %v7034
        %v7048 = vsub.f32 %v6629, %v7034
        %v7049 = vsub.f32 %v6630, %v7034
        %v7050 = vsub.f32 %v6631, %v7034
        %v7051 = vsub.f32 %v6632, %v7034
        %v7052 = vsub.f32 %v6633, %v7034
        %v7055 = vunpack.c.l.s4 1966171168
        %v7056 = vunpack.c.0.s8 %v7055
        %v7057 = vlaneseq
        %v7058 = vshrl.u32 %v7057, 7
        %v7059 = vsub.s32 %v7056, %v7058
        %v7060 = vrot.slane %v7001, %v7059
        %v7061 = vcombine.high %v7060, %v7060
        %v7063 = vunpack.c.l.s4 1966171168
        %v7064 = vunpack.c.0.s8 %v7063
        %v7065 = vlaneseq
        %v7066 = vshrl.u32 %v7065, 7
        %v7067 = vsub.s32 %v7064, %v7066
        %v7068 = vrot.slane %v7060, %v7067
        %v7070 = vunpack.c.l.s4 1966171168
        %v7071 = vunpack.c.0.s8 %v7070
        %v7072 = vlaneseq
        %v7073 = vshrl.u32 %v7072, 7
        %v7074 = vsub.s32 %v7071, %v7073
        %v7075 = vrot.slane %v7061, %v7074
        %v7076 = vlaneseq
        %v7077 = vshrl.u32 %v7076, 7
        %v7078 = vsub.s32 0, %v7077
        %v7079 = vrot.slane %v7068, %v7078
        %v7080 = vlaneseq
        %v7081 = vshrl.u32 %v7080, 7
        %v7082 = vsub.s32 0, %v7081
        %v7083 = vrot.slane %v7075, %v7082
        %v7086 = vmul.f32 %v7037, %v7079
        %v7087 = vmul.f32 %v7038, %v7079
        %v7088 = vmul.f32 %v7039, %v7079
        %v7089 = vmul.f32 %v7040, %v7079
        %v7090 = vmul.f32 %v7041, %v7079
        %v7091 = vmul.f32 %v7042, %v7079
        %v7092 = vmul.f32 %v7043, %v7079
        %v7093 = vmul.f32 %v7044, %v7079
        %v7094 = vmul.f32 %v7045, %v7083
        %v7095 = vmul.f32 %v7046, %v7083
        %v7096 = vmul.f32 %v7047, %v7083
        %v7097 = vmul.f32 %v7048, %v7083
        %v7098 = vmul.f32 %v7049, %v7083
        %v7099 = vmul.f32 %v7050, %v7083
        %v7100 = vmul.f32 %v7051, %v7083
        %v7101 = vmul.f32 %v7052, %v7083
        %v7102 = vlaneseq
        %v7103 = vshrl.u32 %v7102, 7
        %v7104 = vsub.s32 0, %v7103
        %v7105 = vrot.slane %v6634, %v7104
        %v7106 = vmul.f32 %v7086, %v7105
        %v7107 = vmul.f32 %v7087, %v7105
        %v7108 = vmul.f32 %v7088, %v7105
        %v7109 = vmul.f32 %v7089, %v7105
        %v7110 = vmul.f32 %v7090, %v7105
        %v7111 = vmul.f32 %v7091, %v7105
        %v7112 = vmul.f32 %v7092, %v7105
        %v7113 = vmul.f32 %v7093, %v7105
        %v7114 = vmul.f32 %v7094, %v7105
        %v7115 = vmul.f32 %v7095, %v7105
        %v7116 = vmul.f32 %v7096, %v7105
        %v7117 = vmul.f32 %v7097, %v7105
        %v7118 = vmul.f32 %v7098, %v7105
        %v7119 = vmul.f32 %v7099, %v7105
        %v7120 = vmul.f32 %v7100, %v7105
        %v7121 = vmul.f32 %v7101, %v7105
        %v7122 = vlaneseq
        %v7123 = vshrl.u32 %v7122, 7
        %v7124 = vsub.s32 0, %v7123
        %v7125 = vrot.slane %v6635, %v7124
        %v7126 = vadd.f32 %v7106, %v7125
        %v7127 = vadd.f32 %v7107, %v7125
        %v7128 = vadd.f32 %v7108, %v7125
        %v7129 = vadd.f32 %v7109, %v7125
        %v7130 = vadd.f32 %v7110, %v7125
        %v7131 = vadd.f32 %v7111, %v7125
        %v7132 = vadd.f32 %v7112, %v7125
        %v7133 = vadd.f32 %v7113, %v7125
        %v7134 = vadd.f32 %v7114, %v7125
        %v7135 = vadd.f32 %v7115, %v7125
        %v7136 = vadd.f32 %v7116, %v7125
        %v7137 = vadd.f32 %v7117, %v7125
        %v7138 = vadd.f32 %v7118, %v7125
        %v7139 = vadd.f32 %v7119, %v7125
        %v7140 = vadd.f32 %v7120, %v7125
        %v7141 = vadd.f32 %v7121, %v7125
        %v7142 = vadd.f32 %v7126, %v7127
        %v7143 = vadd.f32 %v7142, %v7128
        %v7144 = vadd.f32 %v7143, %v7129
        %v7145 = vadd.f32 %v7144, %v7130
        %v7146 = vadd.f32 %v7145, %v7131
        %v7147 = vadd.f32 %v7146, %v7132
        %v7148 = vadd.f32 %v7147, %v7133
        %v7149 = vrot.slane %v7148, 4
        %v7150 = vadd.f32 %v7148, %v7149
        %v7151 = vrot.slane %v7150, 2
        %v7152 = vadd.f32 %v7150, %v7151
        %v7153 = vrot.slane %v7152, 1
        %v7154 = vadd.f32 %v7152, %v7153
        %v7155 = vadd.f32 %v7134, %v7135
        %v7156 = vadd.f32 %v7155, %v7136
        %v7157 = vadd.f32 %v7156, %v7137
        %v7158 = vadd.f32 %v7157, %v7138
        %v7159 = vadd.f32 %v7158, %v7139
        %v7160 = vadd.f32 %v7159, %v7140
        %v7161 = vadd.f32 %v7160, %v7141
        %v7162 = vrot.slane %v7161, 4
        %v7163 = vadd.f32 %v7161, %v7162
        %v7164 = vrot.slane %v7163, 2
        %v7165 = vadd.f32 %v7163, %v7164
        %v7166 = vrot.slane %v7165, 1
        %v7167 = vadd.f32 %v7165, %v7166
        %v7168 = vrcp.pop 64.0
        %v7169 = vmul.f32 %v7154, %v7168
        %v7170 = vmul.f32 %v7167, %v7168
        %v7173 = vsel %vm1759, %v7170, %v7169
        %7175 = vst [vmem:[%s436] sm:$0x3] %v7173
        %s7176 = sand.u32 %s313, 1
        %s7177 = scalar_lea.sflag [#allocation6], %s7176
        %s7178 = sand.u32 %s313, 1
        %s7179 = smul.addr %s7178, 2
        %s7180 = scalar_lea.vmem [#allocation5], %s7179
        // Predicated region
        $region73: #{mnist_cnn_forward.1} parent=71 // pred_check
          %p7181 = pneg %p323
        $region74: #{mnist_cnn_forward.1} parent=71 // pred_check_branch
          %7183 = sbr.rel (%p7181) target = $region76
        $region75: #{mnist_cnn_forward.1} parent=71 // pred_region
          %s7185 = ssub.s32 32, 32
          %7186 = vsyncadd %s7177, %s7185
          %s7187 = smul.addr %s27, 32
          %s7188 = scalar_lea.hbm %s13, %s7187
          %s7190 = sshll.u32 %s7180, 4
          %s7191 = int_to_ptr.vmem [resolvable:$true] %s7190
          %7193 = dma.vmem_to_hbm [thread:$0]  %s7191, 32, %s7188, %s7177
        $region76: #{mnist_cnn_forward.1} parent=71 // pred_fallthru
          _
      $region72: #{mnist_cnn_forward.1} parent=5 // pred_fallthru
        _
      %p7194 = scmp.le.s32.totalorder 2, %s22
      // Predicated region
      $region77: #{mnist_cnn_forward.1} parent=5 // pred_check
        %p7195 = pneg %p7194
      $region78: #{mnist_cnn_forward.1} parent=5 // pred_check_branch
        %7197 = sbr.rel (%p7195) target = $region80
      $region79: #{mnist_cnn_forward.1} parent=5 // pred_region
        %s7198 = ssub.s32 %s22, 2
        // Predicated region
        $region81: #{mnist_cnn_forward.1} parent=79 // pred_check
          %p7199 = pneg %p329
        $region82: #{mnist_cnn_forward.1} parent=79 // pred_check_branch
          %7201 = sbr.rel (%p7199) target = $region84
        $region83: #{mnist_cnn_forward.1} parent=79 // pred_region
          %s7202 = sand.u32 %s314, 1
          %s7203 = scalar_lea.sflag [#allocation6], %s7202
          %s7204 = sand.u32 %s314, 1
          %s7205 = smul.addr %s7204, 2
          %s7206 = scalar_lea.vmem [#allocation5], %s7205
          %7207 = dma.done %s7203, 32
        $region84: #{mnist_cnn_forward.1} parent=79 // pred_fallthru
          _
      $region80: #{mnist_cnn_forward.1} parent=5 // pred_fallthru
        _
    $region6: #{mnist_cnn_forward.1} parent=1 // loop_footer
      %s26 = sadd.s32 1, %s22
    $region7: #{mnist_cnn_forward.1} parent=1 // loop_footer_branch
      %21 = sbr.rel target = $region3
    $region8: #{mnist_cnn_forward.1} parent=1 // loop_exit
      _
    %7208 = vsyncpa [#allocation6], 1
    %s7209 = scalar_lea.sflag [#allocation6], 1
    %7210 = vsyncpa %s7209, 1

</llo_original>
